<compile_context>
chip_gen: v5e
topology: v5e:2x2
jax: 0.10.0
libtpu: 0.0.40
codegen_flags: <defaults>
</compile_context>

<pallas_src>
import functools
import math

import jax
import jax.numpy as jnp
from jax import lax
from jax.experimental import pallas as pl
from jax.experimental.pallas import tpu as pltpu


LN_EPS = 1e-12
NEG_INF = -1e30  # finite "-inf" for the online-softmax running max


def _default_vmem_limit():
    # Per-chip VMEM limit (feedback: 48 MiB leaves half of v5e/v6e idle).
    try:
        info = pltpu.get_tpu_info()
        cap = getattr(info, "vmem_capacity_bytes", None)
        if cap:
            return int(cap * 3 // 4)          # 96 MiB on 128 MiB parts, 48 MiB on v7x
    except Exception:
        pass
    return 48 * 1024 * 1024                   # safe everywhere


_VMEM_LIMIT = _default_vmem_limit()


def _pick_tile(dim, pref):
    """Largest convenient tile <= pref that evenly divides dim (or full dim)."""
    if dim <= pref:
        return dim
    for t in (pref, pref // 2, 256, 128, 64, 8):
        if t >= 8 and dim % t == 0:
            return t
    return dim


def _pick_out_tile(n):
    """(tile, padded_N) for the lane (output) dim of a matmul."""
    if n <= 512:
        return n, n
    for t in (512, 256, 128):
        if n % t == 0:
            return t, n
    t = 256
    return t, ((n + t - 1) // t) * t


def _pick_kv_tile(lk):
    if lk <= 1024:
        return lk
    for t in (1024, 512, 256, 128):
        if lk % t == 0:
            return t
    return lk


# ----------------------------------------------------------------------------
# Kernels
# ----------------------------------------------------------------------------
def _linear_kernel(x_ref, w_ref, b_ref, o_ref, acc_ref):
    k = pl.program_id(2)

    @pl.when(k == 0)
    def _():
        acc_ref[...] = jnp.zeros_like(acc_ref)

    acc_ref[...] += jnp.dot(x_ref[...], w_ref[...],
                            preferred_element_type=jnp.float32)

    @pl.when(k == pl.num_programs(2) - 1)
    def _():
        o_ref[...] = (acc_ref[...] + b_ref[...].astype(jnp.float32)
                      ).astype(o_ref.dtype)


def _linear_add_ln_kernel(x_ref, w_ref, b_ref, res_ref, g_ref, be_ref,
                          o_ref, acc_ref, *, eps):
    # y = LayerNorm((x @ w + b) + residual); LN fused into the matmul epilogue.
    k = pl.program_id(1)

    @pl.when(k == 0)
    def _():
        acc_ref[...] = jnp.zeros_like(acc_ref)

    acc_ref[...] += jnp.dot(x_ref[...], w_ref[...],
                            preferred_element_type=jnp.float32)

    @pl.when(k == pl.num_programs(1) - 1)
    def _():
        y = (acc_ref[...] + b_ref[...].astype(jnp.float32)
             + res_ref[...].astype(jnp.float32))
        mean = jnp.mean(y, axis=-1, keepdims=True)
        var = jnp.mean((y - mean) ** 2, axis=-1, keepdims=True)
        y = (y - mean) * lax.rsqrt(var + eps)
        o_ref[...] = (g_ref[...].astype(jnp.float32) * y
                      + be_ref[...].astype(jnp.float32)).astype(o_ref.dtype)


def _ffn_add_ln_kernel(x_ref, w1_ref, b1_ref, w2_ref, b2_ref, res_ref,
                       g_ref, be_ref, o_ref, acc_ref, *, eps):
    # Fully fused FFN sublayer, tiled over the hidden dim F:
    #   acc += relu(x @ W1[:,f] + b1[f]) @ W2[f,:]
    # finalize: + b2 + residual, LayerNorm.
    f = pl.program_id(1)

    @pl.when(f == 0)
    def _():
        acc_ref[...] = jnp.zeros_like(acc_ref)

    h = jnp.dot(x_ref[...], w1_ref[...], preferred_element_type=jnp.float32)
    h = jnp.maximum(h + b1_ref[...].astype(jnp.float32), 0.0)
    h = h.astype(jnp.bfloat16)                      # bf16 hidden (feedback)
    acc_ref[...] += jnp.dot(h, w2_ref[...], preferred_element_type=jnp.float32)

    @pl.when(f == pl.num_programs(1) - 1)
    def _():
        y = (acc_ref[...] + b2_ref[...].astype(jnp.float32)
             + res_ref[...].astype(jnp.float32))
        mean = jnp.mean(y, axis=-1, keepdims=True)
        var = jnp.mean((y - mean) ** 2, axis=-1, keepdims=True)
        y = (y - mean) * lax.rsqrt(var + eps)
        o_ref[...] = (g_ref[...].astype(jnp.float32) * y
                      + be_ref[...].astype(jnp.float32)).astype(o_ref.dtype)


def _flash_attn_kernel(q_ref, kv_ref, m_ref, o_ref, m_sc, l_sc, acc_sc, *,
                       n_head, d_head, d_model, kv_lane_off, scale):
    # q_ref : (1, Lq, Wq)  bf16   (Q lives in lanes [0, D))
    # kv_ref: (1, tk, Wkv) bf16   (K in lanes [off, off+D), V in [off+D, off+2D))
    # m_ref : (1, mq, tk)  int32  (mq == 1 or Lq;  mask==0 -> score := -10000)
    # o_ref : (1, Lq, D)   bf16   lane-dense output (heads merged in VMEM)
    ki = pl.program_id(1)

    @pl.when(ki == 0)
    def _():
        m_sc[...] = jnp.full_like(m_sc, NEG_INF)
        l_sc[...] = jnp.zeros_like(l_sc)
        acc_sc[...] = jnp.zeros_like(acc_sc)

    q = q_ref[0]           # (Lq, Wq)
    kv = kv_ref[0]         # (tk, Wkv)
    mask = m_ref[0]        # (mq, tk)

    for h in range(n_head):
        qs = h * d_head
        ks = kv_lane_off + h * d_head
        vs = kv_lane_off + d_model + h * d_head
        q_h = q[:, qs:qs + d_head]                 # (Lq, Dk) bf16
        k_h = kv[:, ks:ks + d_head]                # (tk, Dk) bf16
        v_h = kv[:, vs:vs + d_head]                # (tk, Dk) bf16

        s = lax.dot_general(q_h, k_h, (((1,), (1,)), ((), ())),
                            preferred_element_type=jnp.float32) * scale
        s = jnp.where(mask == 0, jnp.float32(-10000.0), s)   # masked_fill

        m_prev = m_sc[h]                                     # (Lq, 1)
        m_new = jnp.maximum(m_prev, jnp.max(s, axis=-1, keepdims=True))
        alpha = jnp.exp(m_prev - m_new)
        p = jnp.exp(s - m_new)
        l_sc[h] = alpha * l_sc[h] + jnp.sum(p, axis=-1, keepdims=True)
        acc_sc[:, qs:qs + d_head] = (
            alpha * acc_sc[:, qs:qs + d_head]
            + jnp.dot(p.astype(v_h.dtype), v_h,
                      preferred_element_type=jnp.float32))
        m_sc[h] = m_new

    @pl.when(ki == pl.num_programs(1) - 1)
    def _():
        for h in range(n_head):
            qs = h * d_head
            inv = pl.reciprocal(l_sc[h], approx=True)        # (Lq, 1)
            acc_sc[:, qs:qs + d_head] = acc_sc[:, qs:qs + d_head] * inv
        o_ref[0] = acc_sc[...].astype(o_ref.dtype)           # lane-dense store


# ----------------------------------------------------------------------------
# pallas_call wrappers
# ----------------------------------------------------------------------------
def pallas_linear(x2d, w, b, out_dtype=jnp.bfloat16):
    """Tiled y = x @ w + b (bf16 operands, f32 accumulation, bf16/f32 out)."""
    M, K = x2d.shape
    N = w.shape[1]
    tm = _pick_tile(M, 512)
    tk = _pick_tile(K, 512)
    tn, n_pad = _pick_out_tile(N)
    if n_pad != N:
        w = jnp.pad(w, ((0, 0), (0, n_pad - N)))
        b = jnp.pad(b, ((0, 0), (0, n_pad - N)))
    out = pl.pallas_call(
        _linear_kernel,
        out_shape=jax.ShapeDtypeStruct((M, n_pad), out_dtype),
        grid=(M // tm, n_pad // tn, K // tk),
        in_specs=[
            pl.BlockSpec((tm, tk), lambda i, j, k: (i, k)),
            pl.BlockSpec((tk, tn), lambda i, j, k: (k, j)),
            pl.BlockSpec((1, tn), lambda i, j, k: (0, j)),
        ],
        out_specs=pl.BlockSpec((tm, tn), lambda i, j, k: (i, j)),
        scratch_shapes=[pltpu.VMEM((tm, tn), jnp.float32)],
        compiler_params=pltpu.CompilerParams(
            dimension_semantics=("parallel", "parallel", "arbitrary"),
            vmem_limit_bytes=_VMEM_LIMIT),
    )(x2d, w, b)
    if n_pad != N:
        out = out[:, :N]
    return out


def pallas_linear_add_ln(x2d, w, b, res2d, g, beta, eps=LN_EPS):
    """LayerNorm(x @ w + b + residual) with add+LN fused in the epilogue."""
    M, K = x2d.shape
    D = w.shape[1]
    tm = _pick_tile(M, 512)
    tk = _pick_tile(K, 512)
    kern = functools.partial(_linear_add_ln_kernel, eps=eps)
    return pl.pallas_call(
        kern,
        out_shape=jax.ShapeDtypeStruct((M, D), jnp.bfloat16),
        grid=(M // tm, K // tk),
        in_specs=[
            pl.BlockSpec((tm, tk), lambda i, k: (i, k)),
            pl.BlockSpec((tk, D), lambda i, k: (k, 0)),
            pl.BlockSpec((1, D), lambda i, k: (0, 0)),
            pl.BlockSpec((tm, D), lambda i, k: (i, 0)),
            pl.BlockSpec((1, D), lambda i, k: (0, 0)),
            pl.BlockSpec((1, D), lambda i, k: (0, 0)),
        ],
        out_specs=pl.BlockSpec((tm, D), lambda i, k: (i, 0)),
        scratch_shapes=[pltpu.VMEM((tm, D), jnp.float32)],
        compiler_params=pltpu.CompilerParams(
            dimension_semantics=("parallel", "arbitrary"),
            vmem_limit_bytes=_VMEM_LIMIT),
    )(x2d, w, b, res2d, g, beta)


def pallas_ffn_add_ln(x2d, w1, b1, w2, b2, res2d, g, beta, eps=LN_EPS):
    """LayerNorm(relu(x@W1+b1)@W2 + b2 + residual), tiled over hidden dim F."""
    M, D = x2d.shape
    F = w1.shape[1]
    tm = _pick_tile(M, 256)
    tf = _pick_tile(F, 512)
    kern = functools.partial(_ffn_add_ln_kernel, eps=eps)
    return pl.pallas_call(
        kern,
        out_shape=jax.ShapeDtypeStruct((M, D), jnp.bfloat16),
        grid=(M // tm, F // tf),
        in_specs=[
            pl.BlockSpec((tm, D), lambda i, f: (i, 0)),
            pl.BlockSpec((D, tf), lambda i, f: (0, f)),
            pl.BlockSpec((1, tf), lambda i, f: (0, f)),
            pl.BlockSpec((tf, D), lambda i, f: (f, 0)),
            pl.BlockSpec((1, D), lambda i, f: (0, 0)),
            pl.BlockSpec((tm, D), lambda i, f: (i, 0)),
            pl.BlockSpec((1, D), lambda i, f: (0, 0)),
            pl.BlockSpec((1, D), lambda i, f: (0, 0)),
        ],
        out_specs=pl.BlockSpec((tm, D), lambda i, f: (i, 0)),
        scratch_shapes=[pltpu.VMEM((tm, D), jnp.float32)],
        compiler_params=pltpu.CompilerParams(
            dimension_semantics=("parallel", "arbitrary"),
            vmem_limit_bytes=_VMEM_LIMIT),
    )(x2d, w1, b1, w2, b2, res2d, g, beta)


def pallas_attention(q3d, kv3d, mask, *, n_head, d_model, kv_lane_off):
    """Flash-style multi-head attention.

    q3d : (B, Lq, Wq)  bf16 — Q occupies lanes [0, D) (Wq is D or 3D).
    kv3d: (B, Lk, Wkv) bf16 — K at [kv_lane_off, +D), V at [kv_lane_off+D, +D).
    mask: (B, 1|Lq, Lk) int32.
    Returns (B, Lq, D) bf16, heads merged (lane-dense).
    """
    B, Lq, Wq = q3d.shape
    _, Lk, Wkv = kv3d.shape
    mq = mask.shape[1]
    d_head = d_model // n_head
    scale = 1.0 / math.sqrt(d_head)
    tk = _pick_kv_tile(Lk)
    kern = functools.partial(_flash_attn_kernel, n_head=n_head, d_head=d_head,
                             d_model=d_model, kv_lane_off=kv_lane_off,
                             scale=scale)
    return pl.pallas_call(
        kern,
        out_shape=jax.ShapeDtypeStruct((B, Lq, d_model), jnp.bfloat16),
        grid=(B, Lk // tk),
        in_specs=[
            pl.BlockSpec((1, Lq, Wq), lambda b, k: (b, 0, 0)),
            pl.BlockSpec((1, tk, Wkv), lambda b, k: (b, k, 0)),
            pl.BlockSpec((1, mq, tk), lambda b, k: (b, 0, k)),
        ],
        out_specs=pl.BlockSpec((1, Lq, d_model), lambda b, k: (b, 0, 0)),
        scratch_shapes=[pltpu.VMEM((n_head, Lq, 1), jnp.float32),
                        pltpu.VMEM((n_head, Lq, 1), jnp.float32),
                        pltpu.VMEM((Lq, d_model), jnp.float32)],
        compiler_params=pltpu.CompilerParams(
            dimension_semantics=("parallel", "arbitrary"),
            vmem_limit_bytes=_VMEM_LIMIT),
    )(q3d, kv3d, mask)


# ----------------------------------------------------------------------------
# Parameter construction (deterministic).  Fusions / bf16 casts happen ONCE.
# ----------------------------------------------------------------------------
def _init_linear_raw(key, d_in, d_out):
    w = jax.random.normal(key, (d_in, d_out), jnp.float32) * 0.02
    b = jnp.zeros((1, d_out), jnp.float32)
    return w, b


def _init_ln(d):
    return {"g": jnp.ones((1, d), jnp.float32),
            "b": jnp.zeros((1, d), jnp.float32)}


def _pack_self_mha(key, d_model):
    kq, kk, kv, ko = jax.random.split(key, 4)
    wq, bq = _init_linear_raw(kq, d_model, d_model)
    wk, bk = _init_linear_raw(kk, d_model, d_model)
    wv, bv = _init_linear_raw(kv, d_model, d_model)
    wo, bo = _init_linear_raw(ko, d_model, d_model)
    return {"w_qkv": jnp.concatenate([wq, wk, wv], 1).astype(jnp.bfloat16),
            "b_qkv": jnp.concatenate([bq, bk, bv], 1),
            "w_o": wo.astype(jnp.bfloat16), "b_o": bo}


def _pack_cross_mha(key, d_model):
    kq, kk, kv, ko = jax.random.split(key, 4)
    wq, bq = _init_linear_raw(kq, d_model, d_model)
    wk, bk = _init_linear_raw(kk, d_model, d_model)
    wv, bv = _init_linear_raw(kv, d_model, d_model)
    wo, bo = _init_linear_raw(ko, d_model, d_model)
    return {"w_q": wq.astype(jnp.bfloat16), "b_q": bq,
            "w_kv": jnp.concatenate([wk, wv], 1).astype(jnp.bfloat16),
            "b_kv": jnp.concatenate([bk, bv], 1),
            "w_o": wo.astype(jnp.bfloat16), "b_o": bo}


def _pack_ffn(key, d_model, ffn_hidden):
    k1, k2 = jax.random.split(key)
    w1, b1 = _init_linear_raw(k1, d_model, ffn_hidden)
    w2, b2 = _init_linear_raw(k2, ffn_hidden, d_model)
    return {"w1": w1.astype(jnp.bfloat16), "b1": b1,
            "w2": w2.astype(jnp.bfloat16), "b2": b2}


def _init_enc_layer(key, d_model, ffn_hidden):
    k1, k2 = jax.random.split(key)
    return {"attn": _pack_self_mha(k1, d_model), "ln1": _init_ln(d_model),
            "ffn": _pack_ffn(k2, d_model, ffn_hidden), "ln2": _init_ln(d_model)}


def _init_dec_layer(key, d_model, ffn_hidden):
    k1, k2, k3 = jax.random.split(key, 3)
    return {"self_attn": _pack_self_mha(k1, d_model), "ln1": _init_ln(d_model),
            "cross_attn": _pack_cross_mha(k2, d_model), "ln2": _init_ln(d_model),
            "ffn": _pack_ffn(k3, d_model, ffn_hidden), "ln3": _init_ln(d_model)}


def _init_embedding(key, vocab, d_model, padding_idx=1):
    emb = jax.random.normal(key, (vocab, d_model), jnp.float32) * 0.02
    emb = emb.at[padding_idx].set(0.0)   # nn.Embedding(padding_idx=1)
    return emb


def sinusoidal_pos_encoding(max_len, d_model):
    pos = jnp.arange(max_len, dtype=jnp.float32)[:, None]
    i = jnp.arange(0, d_model, 2, dtype=jnp.float32)
    angle = pos / jnp.power(10000.0, i / d_model)
    pe = jnp.zeros((max_len, d_model), jnp.float32)
    pe = pe.at[:, 0::2].set(jnp.sin(angle))
    pe = pe.at[:, 1::2].set(jnp.cos(angle))
    return pe


def init_transformer_params(key, enc_voc, dec_voc, d_model, ffn_hidden,
                            n_layers, max_len):
    keys = jax.random.split(key, 2 * n_layers + 3)
    wo, bo = _init_linear_raw(keys[-1], d_model, dec_voc)
    return {
        "enc_emb": _init_embedding(keys[0], enc_voc, d_model),
        "dec_emb": _init_embedding(keys[1], dec_voc, d_model),
        "enc_layers": [_init_enc_layer(keys[2 + i], d_model, ffn_hidden)
                       for i in range(n_layers)],
        "dec_layers": [_init_dec_layer(keys[2 + n_layers + i], d_model, ffn_hidden)
                       for i in range(n_layers)],
        "out_proj": {"w": wo.astype(jnp.bfloat16), "b": bo},
        "pe": sinusoidal_pos_encoding(max_len, d_model),
    }


# ----------------------------------------------------------------------------
# Forward pass (glue in JAX, compute in Pallas kernels)
# ----------------------------------------------------------------------------
def mha_self(p, x, mask, n_head):
    B, L, D = x.shape
    qkv = pallas_linear(x.reshape(-1, D), p["w_qkv"], p["b_qkv"]
                        ).reshape(B, L, 3 * D)
    # Fused (B,L,3D) fed straight to attention; Q/K/V split happens in VMEM.
    return pallas_attention(qkv, qkv, mask, n_head=n_head, d_model=D,
                            kv_lane_off=D)


def mha_cross(p, x_q, x_kv, mask, n_head):
    B, Lq, D = x_q.shape
    Lk = x_kv.shape[1]
    q = pallas_linear(x_q.reshape(-1, D), p["w_q"], p["b_q"]).reshape(B, Lq, D)
    kv = pallas_linear(x_kv.reshape(-1, D), p["w_kv"], p["b_kv"]
                       ).reshape(B, Lk, 2 * D)
    return pallas_attention(q, kv, mask, n_head=n_head, d_model=D,
                            kv_lane_off=0)


def encoder_layer(p, x, src_mask, n_head):
    B, L, D = x.shape
    ao = mha_self(p["attn"], x, src_mask, n_head)
    x = pallas_linear_add_ln(ao.reshape(-1, D), p["attn"]["w_o"],
                             p["attn"]["b_o"], x.reshape(-1, D),
                             p["ln1"]["g"], p["ln1"]["b"]).reshape(B, L, D)
    x = pallas_ffn_add_ln(x.reshape(-1, D), p["ffn"]["w1"], p["ffn"]["b1"],
                          p["ffn"]["w2"], p["ffn"]["b2"], x.reshape(-1, D),
                          p["ln2"]["g"], p["ln2"]["b"]).reshape(B, L, D)
    return x


def decoder_layer(p, x, enc, trg_mask, cross_mask, n_head):
    B, L, D = x.shape
    ao = mha_self(p["self_attn"], x, trg_mask, n_head)
    x = pallas_linear_add_ln(ao.reshape(-1, D), p["self_attn"]["w_o"],
                             p["self_attn"]["b_o"], x.reshape(-1, D),
                             p["ln1"]["g"], p["ln1"]["b"]).reshape(B, L, D)
    ao = mha_cross(p["cross_attn"], x, enc, cross_mask, n_head)
    x = pallas_linear_add_ln(ao.reshape(-1, D), p["cross_attn"]["w_o"],
                             p["cross_attn"]["b_o"], x.reshape(-1, D),
                             p["ln2"]["g"], p["ln2"]["b"]).reshape(B, L, D)
    x = pallas_ffn_add_ln(x.reshape(-1, D), p["ffn"]["w1"], p["ffn"]["b1"],
                          p["ffn"]["w2"], p["ffn"]["b2"], x.reshape(-1, D),
                          p["ln3"]["g"], p["ln3"]["b"]).reshape(B, L, D)
    return x


def transformer_forward(params, src, trg, src_mask, trg_mask, n_head):
    """src/trg: (B, L) int32; src_mask: (B,1,1,Ls); trg_mask: (B,1,Lt,Lt)."""
    B, Ls = src.shape
    Lt = trg.shape[1]
    pe = params["pe"]

    # Compact masks (B, 1|Lq, Lk) int32; attention broadcasts over heads/rows.
    enc_self_mask = src_mask[:, 0].astype(jnp.int32)   # (B, 1, Ls)
    dec_self_mask = trg_mask[:, 0].astype(jnp.int32)   # (B, Lt, Lt)
    cross_mask = src_mask[:, 0].astype(jnp.int32)      # (B, 1, Ls)

    # TODO(synk): token-embedding gather + positional add stay in XLA
    # (data-dependent gather; not worth a Pallas DMA-gather at these sizes).
    x = (jnp.take(params["enc_emb"], src, axis=0) + pe[:Ls][None]
         ).astype(jnp.bfloat16)
    for lp in params["enc_layers"]:
        x = encoder_layer(lp, x, enc_self_mask, n_head)
    enc_src = x

    y = (jnp.take(params["dec_emb"], trg, axis=0) + pe[:Lt][None]
         ).astype(jnp.bfloat16)
    for lp in params["dec_layers"]:
        y = decoder_layer(lp, y, enc_src, dec_self_mask, cross_mask, n_head)

    D = y.shape[-1]
    logits = pallas_linear(y.reshape(-1, D), params["out_proj"]["w"],
                           params["out_proj"]["b"], out_dtype=jnp.float32)
    return logits.reshape(B, Lt, -1)


# ----------------------------------------------------------------------------
if __name__ == "__main__":
    # Hyperparameters (small, consistent with the module's __init__).
    enc_voc_size, dec_voc_size = 50, 60
    d_model, n_head, max_len = 32, 4, 16
    ffn_hidden, n_layers = 64, 2
    pad_idx = 1
    B, Ls, Lt = 2, 8, 8

    key = jax.random.PRNGKey(0)
    kp, ks, kt = jax.random.split(key, 3)
    params = init_transformer_params(kp, enc_voc_size, dec_voc_size, d_model,
                                     ffn_hidden, n_layers, max_len)

    src = jax.random.randint(ks, (B, Ls), 2, enc_voc_size, dtype=jnp.int32)
    trg = jax.random.randint(kt, (B, Lt), 2, dec_voc_size, dtype=jnp.int32)
    # A couple of pad tokens to exercise the mask path.
    src = src.at[0, -2:].set(pad_idx)
    trg = trg.at[1, -1].set(pad_idx)

    src_mask = (src != pad_idx)[:, None, None, :]                   # (B,1,1,Ls)
    pad_m = (trg != pad_idx)[:, None, :, None]                      # (B,1,Lt,1)
    causal = jnp.tril(jnp.ones((Lt, Lt), jnp.bool_))[None, None]    # (1,1,Lt,Lt)
    trg_mask = pad_m & causal                                       # (B,1,Lt,Lt)

    fwd = jax.jit(functools.partial(transformer_forward, n_head=n_head))
    out = fwd(params, src, trg, src_mask, trg_mask)
    jax.block_until_ready(out)

    assert out.shape == (B, Lt, dec_voc_size)
    assert bool(jnp.all(jnp.isfinite(out)))
    print("KERNEL_OK")
</pallas_src>

<mosaic_0001>
module attributes {stable_mosaic.version = 11 : i64} {
  func.func @_linear_kernel(%arg0: i32, %arg1: i32, %arg2: i32, %arg3: memref<16x32xbf16, #tpu.memory_space<vmem>>, %arg4: memref<32x96xbf16, #tpu.memory_space<vmem>>, %arg5: memref<1x96xf32, #tpu.memory_space<vmem>>, %arg6: memref<16x96xbf16, #tpu.memory_space<vmem>>, %arg7: memref<16x96xf32, #tpu.memory_space<vmem>>) attributes {dimension_semantics = [#tpu.dimension_semantics<parallel>, #tpu.dimension_semantics<parallel>, #tpu.dimension_semantics<arbitrary>], iteration_bounds = array<i64: 1, 1, 1>, scalar_prefetch = 0 : i64, scratch_operands = 1 : i64, tpu.core_type = #tpu.core_type<tc>, window_params = [{transform_indices = @transform_0, window_bounds = array<i64: 16, 32>}, {transform_indices = @transform_1, window_bounds = array<i64: 32, 96>}, {transform_indices = @transform_2, window_bounds = array<i64: 1, 96>}, {transform_indices = @transform_3, window_bounds = array<i64: 16, 96>}]} {
    %c0_i32 = arith.constant 0 : i32
    %0 = arith.cmpi eq, %arg2, %c0_i32 : i32
    %1 = arith.extui %0 : i1 to i32
    %c0_i32_0 = arith.constant 0 : i32
    %2 = arith.cmpi ne, %1, %c0_i32_0 : i32
    scf.if %2 {
      %cst_10 = arith.constant 0.000000e+00 : f32
      %12 = vector.broadcast %cst_10 : f32 to vector<16x96xf32>
      %c0_11 = arith.constant 0 : index
      %c0_12 = arith.constant 0 : index
      %13 = vector.load %arg7[%c0_11, %c0_12] : memref<16x96xf32, #tpu.memory_space<vmem>>, vector<16x96xf32>
      tpu.vector_store %arg7[%c0_11, %c0_12], %12 {strides = array<i32>} : memref<16x96xf32, #tpu.memory_space<vmem>>, vector<16x96xf32>,
    } else {
    }
    %c0 = arith.constant 0 : index
    %c0_1 = arith.constant 0 : index
    %3 = vector.load %arg7[%c0, %c0_1] : memref<16x96xf32, #tpu.memory_space<vmem>>, vector<16x96xf32>
    %c0_2 = arith.constant 0 : index
    %c0_3 = arith.constant 0 : index
    %4 = vector.load %arg3[%c0_2, %c0_3] : memref<16x32xbf16, #tpu.memory_space<vmem>>, vector<16x32xbf16>
    %c0_4 = arith.constant 0 : index
    %c0_5 = arith.constant 0 : index
    %5 = vector.load %arg4[%c0_4, %c0_5] : memref<32x96xbf16, #tpu.memory_space<vmem>>, vector<32x96xbf16>
    %cst = arith.constant dense<0.000000e+00> : vector<16x96xf32>
    %6 = tpu.matmul %4, %5, %cst {dimension_numbers = #tpu.dot_dimension_numbers<[1], [0], [0], [1], [0, 0, 1, 1], [], []>} : vector<16x32xbf16>, vector<32x96xbf16>, vector<16x96xf32> -> vector<16x96xf32>
    %7 = arith.addf %3, %6 : vector<16x96xf32>
    %c0_6 = arith.constant 0 : index
    %c0_7 = arith.constant 0 : index
    %8 = vector.load %arg7[%c0_6, %c0_7] : memref<16x96xf32, #tpu.memory_space<vmem>>, vector<16x96xf32>
    tpu.vector_store %arg7[%c0_6, %c0_7], %7 {strides = array<i32>} : memref<16x96xf32, #tpu.memory_space<vmem>>, vector<16x96xf32>,
    %c0_i32_8 = arith.constant 0 : i32
    %9 = arith.cmpi eq, %arg2, %c0_i32_8 : i32
    %10 = arith.extui %9 : i1 to i32
    %c0_i32_9 = arith.constant 0 : i32
    %11 = arith.cmpi ne, %10, %c0_i32_9 : i32
    scf.if %11 {
      %c0_10 = arith.constant 0 : index
      %c0_11 = arith.constant 0 : index
      %12 = vector.load %arg7[%c0_10, %c0_11] : memref<16x96xf32, #tpu.memory_space<vmem>>, vector<16x96xf32>
      %c0_12 = arith.constant 0 : index
      %c0_13 = arith.constant 0 : index
      %13 = vector.load %arg5[%c0_12, %c0_13] : memref<1x96xf32, #tpu.memory_space<vmem>>, vector<1x96xf32>
      %14 = vector.broadcast %13 : vector<1x96xf32> to vector<16x96xf32>
      %15 = arith.addf %12, %14 : vector<16x96xf32>
      %16 = arith.truncf %15 : vector<16x96xf32> to vector<16x96xbf16>
      %c0_14 = arith.constant 0 : index
      %c0_15 = arith.constant 0 : index
      %17 = vector.load %arg6[%c0_14, %c0_15] : memref<16x96xbf16, #tpu.memory_space<vmem>>, vector<16x96xbf16>
      tpu.vector_store %arg6[%c0_14, %c0_15], %16 {strides = array<i32>} : memref<16x96xbf16, #tpu.memory_space<vmem>>, vector<16x96xbf16>,
    } else {
    }
    return
  }
  func.func @transform_0(%arg0: i32, %arg1: i32, %arg2: i32) -> (i32, i32) {
    %c0_i32 = arith.constant 0 : i32
    return %arg0, %arg2 : i32, i32
  }
  func.func @transform_1(%arg0: i32, %arg1: i32, %arg2: i32) -> (i32, i32) {
    %c0_i32 = arith.constant 0 : i32
    return %arg2, %arg1 : i32, i32
  }
  func.func @transform_2(%arg0: i32, %arg1: i32, %arg2: i32) -> (i32, i32) {
    %c0_i32 = arith.constant 0 : i32
    %c0_i32_0 = arith.constant 0 : i32
    return %c0_i32, %arg1 : i32, i32
  }
  func.func @transform_3(%arg0: i32, %arg1: i32, %arg2: i32) -> (i32, i32) {
    %c0_i32 = arith.constant 0 : i32
    return %arg0, %arg1 : i32, i32
  }
}

module attributes {stable_mosaic.version = 11 : i64} {
  func.func @_linear_add_ln_kernel(%arg0: i32, %arg1: i32, %arg2: memref<16x32xbf16, #tpu.memory_space<vmem>>, %arg3: memref<32x32xbf16, #tpu.memory_space<vmem>>, %arg4: memref<1x32xf32, #tpu.memory_space<vmem>>, %arg5: memref<16x32xbf16, #tpu.memory_space<vmem>>, %arg6: memref<1x32xf32, #tpu.memory_space<vmem>>, %arg7: memref<1x32xf32, #tpu.memory_space<vmem>>, %arg8: memref<16x32xbf16, #tpu.memory_space<vmem>>, %arg9: memref<16x32xf32, #tpu.memory_space<vmem>>) attributes {dimension_semantics = [#tpu.dimension_semantics<parallel>, #tpu.dimension_semantics<arbitrary>], iteration_bounds = array<i64: 1, 1>, scalar_prefetch = 0 : i64, scratch_operands = 1 : i64, tpu.core_type = #tpu.core_type<tc>, window_params = [{transform_indices = @transform_0, window_bounds = array<i64: 16, 32>}, {transform_indices = @transform_1, window_bounds = array<i64: 32, 32>}, {pipeline_mode = #tpu.pipeline_mode<synchronous>, transform_indices = @transform_2, window_bounds = array<i64: 1, 32>}, {transform_indices = @transform_3, window_bounds = array<i64: 16, 32>}, {pipeline_mode = #tpu.pipeline_mode<synchronous>, transform_indices = @transform_4, window_bounds = array<i64: 1, 32>}, {pipeline_mode = #tpu.pipeline_mode<synchronous>, transform_indices = @transform_5, window_bounds = array<i64: 1, 32>}, {transform_indices = @transform_6, window_bounds = array<i64: 16, 32>}]} {
    %c0_i32 = arith.constant 0 : i32
    %0 = arith.cmpi eq, %arg1, %c0_i32 : i32
    %1 = arith.extui %0 : i1 to i32
    %c0_i32_0 = arith.constant 0 : i32
    %2 = arith.cmpi ne, %1, %c0_i32_0 : i32
    scf.if %2 {
      %cst_10 = arith.constant 0.000000e+00 : f32
      %12 = vector.broadcast %cst_10 : f32 to vector<16x32xf32>
      %c0_11 = arith.constant 0 : index
      %c0_12 = arith.constant 0 : index
      %13 = vector.load %arg9[%c0_11, %c0_12] : memref<16x32xf32, #tpu.memory_space<vmem>>, vector<16x32xf32>
      tpu.vector_store %arg9[%c0_11, %c0_12], %12 {strides = array<i32>} : memref<16x32xf32, #tpu.memory_space<vmem>>, vector<16x32xf32>,
    } else {
    }
    %c0 = arith.constant 0 : index
    %c0_1 = arith.constant 0 : index
    %3 = vector.load %arg9[%c0, %c0_1] : memref<16x32xf32, #tpu.memory_space<vmem>>, vector<16x32xf32>
    %c0_2 = arith.constant 0 : index
    %c0_3 = arith.constant 0 : index
    %4 = vector.load %arg2[%c0_2, %c0_3] : memref<16x32xbf16, #tpu.memory_space<vmem>>, vector<16x32xbf16>
    %c0_4 = arith.constant 0 : index
    %c0_5 = arith.constant 0 : index
    %5 = vector.load %arg3[%c0_4, %c0_5] : memref<32x32xbf16, #tpu.memory_space<vmem>>, vector<32x32xbf16>
    %cst = arith.constant dense<0.000000e+00> : vector<16x32xf32>
    %6 = tpu.matmul %4, %5, %cst {dimension_numbers = #tpu.dot_dimension_numbers<[1], [0], [0], [1], [0, 0, 1, 1], [], []>} : vector<16x32xbf16>, vector<32x32xbf16>, vector<16x32xf32> -> vector<16x32xf32>
    %7 = arith.addf %3, %6 : vector<16x32xf32>
    %c0_6 = arith.constant 0 : index
    %c0_7 = arith.constant 0 : index
    %8 = vector.load %arg9[%c0_6, %c0_7] : memref<16x32xf32, #tpu.memory_space<vmem>>, vector<16x32xf32>
    tpu.vector_store %arg9[%c0_6, %c0_7], %7 {strides = array<i32>} : memref<16x32xf32, #tpu.memory_space<vmem>>, vector<16x32xf32>,
    %c0_i32_8 = arith.constant 0 : i32
    %9 = arith.cmpi eq, %arg1, %c0_i32_8 : i32
    %10 = arith.extui %9 : i1 to i32
    %c0_i32_9 = arith.constant 0 : i32
    %11 = arith.cmpi ne, %10, %c0_i32_9 : i32
    scf.if %11 {
      %c0_10 = arith.constant 0 : index
      %c0_11 = arith.constant 0 : index
      %12 = vector.load %arg9[%c0_10, %c0_11] : memref<16x32xf32, #tpu.memory_space<vmem>>, vector<16x32xf32>
      %c0_12 = arith.constant 0 : index
      %c0_13 = arith.constant 0 : index
      %13 = vector.load %arg4[%c0_12, %c0_13] : memref<1x32xf32, #tpu.memory_space<vmem>>, vector<1x32xf32>
      %14 = vector.broadcast %13 : vector<1x32xf32> to vector<16x32xf32>
      %15 = arith.addf %12, %14 : vector<16x32xf32>
      %c0_14 = arith.constant 0 : index
      %c0_15 = arith.constant 0 : index
      %16 = vector.load %arg5[%c0_14, %c0_15] : memref<16x32xbf16, #tpu.memory_space<vmem>>, vector<16x32xbf16>
      %17 = arith.extf %16 : vector<16x32xbf16> to vector<16x32xf32>
      %18 = arith.addf %15, %17 : vector<16x32xf32>
      %cst_16 = arith.constant dense<0.000000e+00> : vector<16xf32>
      %19 = vector.multi_reduction <add>, %18, %cst_16 [1] : vector<16x32xf32> to vector<16xf32>
      %20 = vector.shape_cast %19 : vector<16xf32> to vector<16x1xf32>
      %cst_17 = arith.constant 3.200000e+01 : f32
      %21 = vector.broadcast %cst_17 : f32 to vector<16x1xf32>
      %22 = arith.divf %20, %21 : vector<16x1xf32>
      %23 = vector.broadcast %22 : vector<16x1xf32> to vector<16x32xf32>
      %24 = arith.subf %18, %23 : vector<16x32xf32>
      %25 = arith.mulf %24, %24 : vector<16x32xf32>
      %cst_18 = arith.constant dense<0.000000e+00> : vector<16xf32>
      %26 = vector.multi_reduction <add>, %25, %cst_18 [1] : vector<16x32xf32> to vector<16xf32>
      %27 = vector.shape_cast %26 : vector<16xf32> to vector<16x1xf32>
      %cst_19 = arith.constant 3.200000e+01 : f32
      %28 = vector.broadcast %cst_19 : f32 to vector<16x1xf32>
      %29 = arith.divf %27, %28 : vector<16x1xf32>
      %30 = vector.broadcast %22 : vector<16x1xf32> to vector<16x32xf32>
      %31 = arith.subf %18, %30 : vector<16x32xf32>
      %cst_20 = arith.constant 9.99999996E-13 : f32
      %32 = vector.broadcast %cst_20 : f32 to vector<16x1xf32>
      %33 = arith.addf %29, %32 : vector<16x1xf32>
      %34 = math.rsqrt %33 : vector<16x1xf32>
      %35 = vector.broadcast %34 : vector<16x1xf32> to vector<16x32xf32>
      %36 = arith.mulf %31, %35 : vector<16x32xf32>
      %c0_21 = arith.constant 0 : index
      %c0_22 = arith.constant 0 : index
      %37 = vector.load %arg6[%c0_21, %c0_22] : memref<1x32xf32, #tpu.memory_space<vmem>>, vector<1x32xf32>
      %38 = vector.broadcast %37 : vector<1x32xf32> to vector<16x32xf32>
      %39 = arith.mulf %38, %36 : vector<16x32xf32>
      %c0_23 = arith.constant 0 : index
      %c0_24 = arith.constant 0 : index
      %40 = vector.load %arg7[%c0_23, %c0_24] : memref<1x32xf32, #tpu.memory_space<vmem>>, vector<1x32xf32>
      %41 = vector.broadcast %40 : vector<1x32xf32> to vector<16x32xf32>
      %42 = arith.addf %39, %41 : vector<16x32xf32>
      %43 = arith.truncf %42 : vector<16x32xf32> to vector<16x32xbf16>
      %c0_25 = arith.constant 0 : index
      %c0_26 = arith.constant 0 : index
      %44 = vector.load %arg8[%c0_25, %c0_26] : memref<16x32xbf16, #tpu.memory_space<vmem>>, vector<16x32xbf16>
      tpu.vector_store %arg8[%c0_25, %c0_26], %43 {strides = array<i32>} : memref<16x32xbf16, #tpu.memory_space<vmem>>, vector<16x32xbf16>,
    } else {
    }
    return
  }
  func.func @transform_0(%arg0: i32, %arg1: i32) -> (i32, i32) {
    %c0_i32 = arith.constant 0 : i32
    return %arg0, %arg1 : i32, i32
  }
  func.func @transform_1(%arg0: i32, %arg1: i32) -> (i32, i32) {
    %c0_i32 = arith.constant 0 : i32
    %c0_i32_0 = arith.constant 0 : i32
    return %arg1, %c0_i32 : i32, i32
  }
  func.func @transform_2(%arg0: i32, %arg1: i32) -> (i32, i32) {
    %c0_i32 = arith.constant 0 : i32
    %c0_i32_0 = arith.constant 0 : i32
    %c0_i32_1 = arith.constant 0 : i32
    return %c0_i32, %c0_i32_0 : i32, i32
  }
  func.func @transform_3(%arg0: i32, %arg1: i32) -> (i32, i32) {
    %c0_i32 = arith.constant 0 : i32
    %c0_i32_0 = arith.constant 0 : i32
    return %arg0, %c0_i32 : i32, i32
  }
  func.func @transform_4(%arg0: i32, %arg1: i32) -> (i32, i32) {
    %c0_i32 = arith.constant 0 : i32
    %c0_i32_0 = arith.constant 0 : i32
    %c0_i32_1 = arith.constant 0 : i32
    return %c0_i32, %c0_i32_0 : i32, i32
  }
  func.func @transform_5(%arg0: i32, %arg1: i32) -> (i32, i32) {
    %c0_i32 = arith.constant 0 : i32
    %c0_i32_0 = arith.constant 0 : i32
    %c0_i32_1 = arith.constant 0 : i32
    return %c0_i32, %c0_i32_0 : i32, i32
  }
  func.func @transform_6(%arg0: i32, %arg1: i32) -> (i32, i32) {
    %c0_i32 = arith.constant 0 : i32
    %c0_i32_0 = arith.constant 0 : i32
    return %arg0, %c0_i32 : i32, i32
  }
}

module attributes {stable_mosaic.version = 11 : i64} {
  func.func @_flash_attn_kernel(%arg0: i32, %arg1: i32, %arg2: memref<1x8x96xbf16, #tpu.memory_space<vmem>>, %arg3: memref<1x8x96xbf16, #tpu.memory_space<vmem>>, %arg4: memref<1x1x8xi32, #tpu.memory_space<vmem>>, %arg5: memref<1x8x32xbf16, #tpu.memory_space<vmem>>, %arg6: memref<4x8x1xf32, #tpu.memory_space<vmem>>, %arg7: memref<4x8x1xf32, #tpu.memory_space<vmem>>, %arg8: memref<8x32xf32, #tpu.memory_space<vmem>>) attributes {dimension_semantics = [#tpu.dimension_semantics<parallel>, #tpu.dimension_semantics<arbitrary>], iteration_bounds = array<i64: 2, 1>, scalar_prefetch = 0 : i64, scratch_operands = 3 : i64, tpu.core_type = #tpu.core_type<tc>, window_params = [{transform_indices = @transform_0, window_bounds = array<i64: 1, 8, 96>}, {transform_indices = @transform_1, window_bounds = array<i64: 1, 8, 96>}, {transform_indices = @transform_2, window_bounds = array<i64: 1, 1, 8>}, {transform_indices = @transform_3, window_bounds = array<i64: 1, 8, 32>}]} {
    %c0_i32 = arith.constant 0 : i32
    %0 = arith.cmpi eq, %arg1, %c0_i32 : i32
    %1 = arith.extui %0 : i1 to i32
    %c0_i32_0 = arith.constant 0 : i32
    %2 = arith.cmpi ne, %1, %c0_i32_0 : i32
    scf.if %2 {
      %cst_96 = arith.constant -1.000000e+30 : f32
      %176 = vector.broadcast %cst_96 : f32 to vector<4x8x1xf32>
      %c0_97 = arith.constant 0 : index
      %c0_98 = arith.constant 0 : index
      %c0_99 = arith.constant 0 : index
      %177 = vector.load %arg6[%c0_97, %c0_98, %c0_99] : memref<4x8x1xf32, #tpu.memory_space<vmem>>, vector<4x8x1xf32>
      tpu.vector_store %arg6[%c0_97, %c0_98, %c0_99], %176 {strides = array<i32>} : memref<4x8x1xf32, #tpu.memory_space<vmem>>, vector<4x8x1xf32>,
      %cst_100 = arith.constant 0.000000e+00 : f32
      %178 = vector.broadcast %cst_100 : f32 to vector<4x8x1xf32>
      %c0_101 = arith.constant 0 : index
      %c0_102 = arith.constant 0 : index
      %c0_103 = arith.constant 0 : index
      %179 = vector.load %arg7[%c0_101, %c0_102, %c0_103] : memref<4x8x1xf32, #tpu.memory_space<vmem>>, vector<4x8x1xf32>
      tpu.vector_store %arg7[%c0_101, %c0_102, %c0_103], %178 {strides = array<i32>} : memref<4x8x1xf32, #tpu.memory_space<vmem>>, vector<4x8x1xf32>,
      %cst_104 = arith.constant 0.000000e+00 : f32
      %180 = vector.broadcast %cst_104 : f32 to vector<8x32xf32>
      %c0_105 = arith.constant 0 : index
      %c0_106 = arith.constant 0 : index
      %181 = vector.load %arg8[%c0_105, %c0_106] : memref<8x32xf32, #tpu.memory_space<vmem>>, vector<8x32xf32>
      tpu.vector_store %arg8[%c0_105, %c0_106], %180 {strides = array<i32>} : memref<8x32xf32, #tpu.memory_space<vmem>>, vector<8x32xf32>,
    } else {
    }
    %c0 = arith.constant 0 : index
    %c0_1 = arith.constant 0 : index
    %c0_2 = arith.constant 0 : index
    %3 = vector.load %arg2[%c0, %c0_1, %c0_2] : memref<1x8x96xbf16, #tpu.memory_space<vmem>>, vector<1x8x96xbf16>
    %4 = vector.shape_cast %3 : vector<1x8x96xbf16> to vector<8x96xbf16>
    %c0_3 = arith.constant 0 : index
    %c0_4 = arith.constant 0 : index
    %c0_5 = arith.constant 0 : index
    %5 = vector.load %arg3[%c0_3, %c0_4, %c0_5] : memref<1x8x96xbf16, #tpu.memory_space<vmem>>, vector<1x8x96xbf16>
    %6 = vector.shape_cast %5 : vector<1x8x96xbf16> to vector<8x96xbf16>
    %c0_6 = arith.constant 0 : index
    %c0_7 = arith.constant 0 : index
    %c0_8 = arith.constant 0 : index
    %7 = vector.load %arg4[%c0_6, %c0_7, %c0_8] : memref<1x1x8xi32, #tpu.memory_space<vmem>>, vector<1x1x8xi32>
    %8 = vector.shape_cast %7 : vector<1x1x8xi32> to vector<1x8xi32>
    %9 = vector.extract_strided_slice %4 {offsets = [0, 0], sizes = [8, 8], strides = [1, 1]} : vector<8x96xbf16> to vector<8x8xbf16>
    %10 = vector.extract_strided_slice %6 {offsets = [0, 32], sizes = [8, 8], strides = [1, 1]} : vector<8x96xbf16> to vector<8x8xbf16>
    %11 = vector.extract_strided_slice %6 {offsets = [0, 64], sizes = [8, 8], strides = [1, 1]} : vector<8x96xbf16> to vector<8x8xbf16>
    %cst = arith.constant dense<0.000000e+00> : vector<8x8xf32>
    %12 = tpu.matmul %9, %10, %cst {dimension_numbers = #tpu.dot_dimension_numbers<[1], [1], [0], [0], [0, 0, 1, 0], [], []>} : vector<8x8xbf16>, vector<8x8xbf16>, vector<8x8xf32> -> vector<8x8xf32>
    %cst_9 = arith.constant 0.353553385 : f32
    %13 = vector.broadcast %cst_9 : f32 to vector<8x8xf32>
    %14 = arith.mulf %12, %13 : vector<8x8xf32>
    %c0_i32_10 = arith.constant 0 : i32
    %15 = vector.broadcast %c0_i32_10 : i32 to vector<1x8xi32>
    %16 = arith.cmpi eq, %8, %15 : vector<1x8xi32>
    %cst_11 = arith.constant -1.000000e+04 : f32
    %17 = vector.shape_cast %16 : vector<1x8xi1> to vector<1x8xi1>
    %18 = vector.broadcast %17 : vector<1x8xi1> to vector<8x8xi1>
    %19 = vector.broadcast %cst_11 : f32 to vector<8x8xf32>
    %20 = arith.select %18, %19, %14 : vector<8x8xi1>, vector<8x8xf32>
    %c0_12 = arith.constant 0 : index
    %c0_13 = arith.constant 0 : index
    %c0_14 = arith.constant 0 : index
    %21 = vector.load %arg6[%c0_12, %c0_13, %c0_14] : memref<4x8x1xf32, #tpu.memory_space<vmem>>, vector<1x8x1xf32>
    %22 = vector.shape_cast %21 : vector<1x8x1xf32> to vector<8x1xf32>
    %cst_15 = arith.constant dense<0xFF800000> : vector<8xf32>
    %23 = vector.multi_reduction <maximumf>, %20, %cst_15 [1] : vector<8x8xf32> to vector<8xf32>
    %24 = vector.shape_cast %23 : vector<8xf32> to vector<8x1xf32>
    %25 = arith.maximumf %22, %24 : vector<8x1xf32>
    %26 = arith.subf %22, %25 : vector<8x1xf32>
    %27 = math.exp %26 : vector<8x1xf32>
    %28 = vector.broadcast %25 : vector<8x1xf32> to vector<8x8xf32>
    %29 = arith.subf %20, %28 : vector<8x8xf32>
    %30 = math.exp %29 : vector<8x8xf32>
    %c0_16 = arith.constant 0 : index
    %c0_17 = arith.constant 0 : index
    %c0_18 = arith.constant 0 : index
    %31 = vector.load %arg7[%c0_16, %c0_17, %c0_18] : memref<4x8x1xf32, #tpu.memory_space<vmem>>, vector<1x8x1xf32>
    %32 = vector.shape_cast %31 : vector<1x8x1xf32> to vector<8x1xf32>
    %33 = arith.mulf %27, %32 : vector<8x1xf32>
    %cst_19 = arith.constant dense<0.000000e+00> : vector<8xf32>
    %34 = vector.multi_reduction <add>, %30, %cst_19 [1] : vector<8x8xf32> to vector<8xf32>
    %35 = vector.shape_cast %34 : vector<8xf32> to vector<8x1xf32>
    %36 = arith.addf %33, %35 : vector<8x1xf32>
    %c0_20 = arith.constant 0 : index
    %c0_21 = arith.constant 0 : index
    %c0_22 = arith.constant 0 : index
    %37 = vector.load %arg7[%c0_20, %c0_21, %c0_22] : memref<4x8x1xf32, #tpu.memory_space<vmem>>, vector<1x8x1xf32>
    %38 = vector.shape_cast %37 : vector<1x8x1xf32> to vector<8x1xf32>
    %39 = vector.shape_cast %36 : vector<8x1xf32> to vector<1x8x1xf32>
    tpu.vector_store %arg7[%c0_20, %c0_21, %c0_22], %39 {strides = array<i32>} : memref<4x8x1xf32, #tpu.memory_space<vmem>>, vector<1x8x1xf32>,
    %c0_23 = arith.constant 0 : index
    %c0_24 = arith.constant 0 : index
    %40 = vector.load %arg8[%c0_23, %c0_24] : memref<8x32xf32, #tpu.memory_space<vmem>>, vector<8x8xf32>
    %41 = vector.broadcast %27 : vector<8x1xf32> to vector<8x8xf32>
    %42 = arith.mulf %41, %40 : vector<8x8xf32>
    %43 = arith.truncf %30 : vector<8x8xf32> to vector<8x8xbf16>
    %cst_25 = arith.constant dense<0.000000e+00> : vector<8x8xf32>
    %44 = tpu.matmul %43, %11, %cst_25 {dimension_numbers = #tpu.dot_dimension_numbers<[1], [0], [0], [1], [0, 0, 1, 1], [], []>} : vector<8x8xbf16>, vector<8x8xbf16>, vector<8x8xf32> -> vector<8x8xf32>
    %45 = arith.addf %42, %44 : vector<8x8xf32>
    %c0_26 = arith.constant 0 : index
    %c0_27 = arith.constant 0 : index
    %46 = vector.load %arg8[%c0_26, %c0_27] : memref<8x32xf32, #tpu.memory_space<vmem>>, vector<8x8xf32>
    tpu.vector_store %arg8[%c0_26, %c0_27], %45 {strides = array<i32>} : memref<8x32xf32, #tpu.memory_space<vmem>>, vector<8x8xf32>,
    %c0_28 = arith.constant 0 : index
    %c0_29 = arith.constant 0 : index
    %c0_30 = arith.constant 0 : index
    %47 = vector.load %arg6[%c0_28, %c0_29, %c0_30] : memref<4x8x1xf32, #tpu.memory_space<vmem>>, vector<1x8x1xf32>
    %48 = vector.shape_cast %47 : vector<1x8x1xf32> to vector<8x1xf32>
    %49 = vector.shape_cast %25 : vector<8x1xf32> to vector<1x8x1xf32>
    tpu.vector_store %arg6[%c0_28, %c0_29, %c0_30], %49 {strides = array<i32>} : memref<4x8x1xf32, #tpu.memory_space<vmem>>, vector<1x8x1xf32>,
    %50 = vector.extract_strided_slice %4 {offsets = [0, 8], sizes = [8, 8], strides = [1, 1]} : vector<8x96xbf16> to vector<8x8xbf16>
    %51 = vector.extract_strided_slice %6 {offsets = [0, 40], sizes = [8, 8], strides = [1, 1]} : vector<8x96xbf16> to vector<8x8xbf16>
    %52 = vector.extract_strided_slice %6 {offsets = [0, 72], sizes = [8, 8], strides = [1, 1]} : vector<8x96xbf16> to vector<8x8xbf16>
    %cst_31 = arith.constant dense<0.000000e+00> : vector<8x8xf32>
    %53 = tpu.matmul %50, %51, %cst_31 {dimension_numbers = #tpu.dot_dimension_numbers<[1], [1], [0], [0], [0, 0, 1, 0], [], []>} : vector<8x8xbf16>, vector<8x8xbf16>, vector<8x8xf32> -> vector<8x8xf32>
    %cst_32 = arith.constant 0.353553385 : f32
    %54 = vector.broadcast %cst_32 : f32 to vector<8x8xf32>
    %55 = arith.mulf %53, %54 : vector<8x8xf32>
    %c0_i32_33 = arith.constant 0 : i32
    %56 = vector.broadcast %c0_i32_33 : i32 to vector<1x8xi32>
    %57 = arith.cmpi eq, %8, %56 : vector<1x8xi32>
    %cst_34 = arith.constant -1.000000e+04 : f32
    %58 = vector.shape_cast %57 : vector<1x8xi1> to vector<1x8xi1>
    %59 = vector.broadcast %58 : vector<1x8xi1> to vector<8x8xi1>
    %60 = vector.broadcast %cst_34 : f32 to vector<8x8xf32>
    %61 = arith.select %59, %60, %55 : vector<8x8xi1>, vector<8x8xf32>
    %c1 = arith.constant 1 : index
    %c0_35 = arith.constant 0 : index
    %c0_36 = arith.constant 0 : index
    %62 = vector.load %arg6[%c1, %c0_35, %c0_36] : memref<4x8x1xf32, #tpu.memory_space<vmem>>, vector<1x8x1xf32>
    %63 = vector.shape_cast %62 : vector<1x8x1xf32> to vector<8x1xf32>
    %cst_37 = arith.constant dense<0xFF800000> : vector<8xf32>
    %64 = vector.multi_reduction <maximumf>, %61, %cst_37 [1] : vector<8x8xf32> to vector<8xf32>
    %65 = vector.shape_cast %64 : vector<8xf32> to vector<8x1xf32>
    %66 = arith.maximumf %63, %65 : vector<8x1xf32>
    %67 = arith.subf %63, %66 : vector<8x1xf32>
    %68 = math.exp %67 : vector<8x1xf32>
    %69 = vector.broadcast %66 : vector<8x1xf32> to vector<8x8xf32>
    %70 = arith.subf %61, %69 : vector<8x8xf32>
    %71 = math.exp %70 : vector<8x8xf32>
    %c1_38 = arith.constant 1 : index
    %c0_39 = arith.constant 0 : index
    %c0_40 = arith.constant 0 : index
    %72 = vector.load %arg7[%c1_38, %c0_39, %c0_40] : memref<4x8x1xf32, #tpu.memory_space<vmem>>, vector<1x8x1xf32>
    %73 = vector.shape_cast %72 : vector<1x8x1xf32> to vector<8x1xf32>
    %74 = arith.mulf %68, %73 : vector<8x1xf32>
    %cst_41 = arith.constant dense<0.000000e+00> : vector<8xf32>
    %75 = vector.multi_reduction <add>, %71, %cst_41 [1] : vector<8x8xf32> to vector<8xf32>
    %76 = vector.shape_cast %75 : vector<8xf32> to vector<8x1xf32>
    %77 = arith.addf %74, %76 : vector<8x1xf32>
    %c1_42 = arith.constant 1 : index
    %c0_43 = arith.constant 0 : index
    %c0_44 = arith.constant 0 : index
    %78 = vector.load %arg7[%c1_42, %c0_43, %c0_44] : memref<4x8x1xf32, #tpu.memory_space<vmem>>, vector<1x8x1xf32>
    %79 = vector.shape_cast %78 : vector<1x8x1xf32> to vector<8x1xf32>
    %80 = vector.shape_cast %77 : vector<8x1xf32> to vector<1x8x1xf32>
    tpu.vector_store %arg7[%c1_42, %c0_43, %c0_44], %80 {strides = array<i32>} : memref<4x8x1xf32, #tpu.memory_space<vmem>>, vector<1x8x1xf32>,
    %c0_45 = arith.constant 0 : index
    %c8 = arith.constant 8 : index
    %81 = vector.load %arg8[%c0_45, %c8] : memref<8x32xf32, #tpu.memory_space<vmem>>, vector<8x8xf32>
    %82 = vector.broadcast %68 : vector<8x1xf32> to vector<8x8xf32>
    %83 = arith.mulf %82, %81 : vector<8x8xf32>
    %84 = arith.truncf %71 : vector<8x8xf32> to vector<8x8xbf16>
    %cst_46 = arith.constant dense<0.000000e+00> : vector<8x8xf32>
    %85 = tpu.matmul %84, %52, %cst_46 {dimension_numbers = #tpu.dot_dimension_numbers<[1], [0], [0], [1], [0, 0, 1, 1], [], []>} : vector<8x8xbf16>, vector<8x8xbf16>, vector<8x8xf32> -> vector<8x8xf32>
    %86 = arith.addf %83, %85 : vector<8x8xf32>
    %c0_47 = arith.constant 0 : index
    %c8_48 = arith.constant 8 : index
    %87 = vector.load %arg8[%c0_47, %c8_48] : memref<8x32xf32, #tpu.memory_space<vmem>>, vector<8x8xf32>
    tpu.vector_store %arg8[%c0_47, %c8_48], %86 {strides = array<i32>} : memref<8x32xf32, #tpu.memory_space<vmem>>, vector<8x8xf32>,
    %c1_49 = arith.constant 1 : index
    %c0_50 = arith.constant 0 : index
    %c0_51 = arith.constant 0 : index
    %88 = vector.load %arg6[%c1_49, %c0_50, %c0_51] : memref<4x8x1xf32, #tpu.memory_space<vmem>>, vector<1x8x1xf32>
    %89 = vector.shape_cast %88 : vector<1x8x1xf32> to vector<8x1xf32>
    %90 = vector.shape_cast %66 : vector<8x1xf32> to vector<1x8x1xf32>
    tpu.vector_store %arg6[%c1_49, %c0_50, %c0_51], %90 {strides = array<i32>} : memref<4x8x1xf32, #tpu.memory_space<vmem>>, vector<1x8x1xf32>,
    %91 = vector.extract_strided_slice %4 {offsets = [0, 16], sizes = [8, 8], strides = [1, 1]} : vector<8x96xbf16> to vector<8x8xbf16>
    %92 = vector.extract_strided_slice %6 {offsets = [0, 48], sizes = [8, 8], strides = [1, 1]} : vector<8x96xbf16> to vector<8x8xbf16>
    %93 = vector.extract_strided_slice %6 {offsets = [0, 80], sizes = [8, 8], strides = [1, 1]} : vector<8x96xbf16> to vector<8x8xbf16>
    %cst_52 = arith.constant dense<0.000000e+00> : vector<8x8xf32>
    %94 = tpu.matmul %91, %92, %cst_52 {dimension_numbers = #tpu.dot_dimension_numbers<[1], [1], [0], [0], [0, 0, 1, 0], [], []>} : vector<8x8xbf16>, vector<8x8xbf16>, vector<8x8xf32> -> vector<8x8xf32>
    %cst_53 = arith.constant 0.353553385 : f32
    %95 = vector.broadcast %cst_53 : f32 to vector<8x8xf32>
    %96 = arith.mulf %94, %95 : vector<8x8xf32>
    %c0_i32_54 = arith.constant 0 : i32
    %97 = vector.broadcast %c0_i32_54 : i32 to vector<1x8xi32>
    %98 = arith.cmpi eq, %8, %97 : vector<1x8xi32>
    %cst_55 = arith.constant -1.000000e+04 : f32
    %99 = vector.shape_cast %98 : vector<1x8xi1> to vector<1x8xi1>
    %100 = vector.broadcast %99 : vector<1x8xi1> to vector<8x8xi1>
    %101 = vector.broadcast %cst_55 : f32 to vector<8x8xf32>
    %102 = arith.select %100, %101, %96 : vector<8x8xi1>, vector<8x8xf32>
    %c2 = arith.constant 2 : index
    %c0_56 = arith.constant 0 : index
    %c0_57 = arith.constant 0 : index
    %103 = vector.load %arg6[%c2, %c0_56, %c0_57] : memref<4x8x1xf32, #tpu.memory_space<vmem>>, vector<1x8x1xf32>
    %104 = vector.shape_cast %103 : vector<1x8x1xf32> to vector<8x1xf32>
    %cst_58 = arith.constant dense<0xFF800000> : vector<8xf32>
    %105 = vector.multi_reduction <maximumf>, %102, %cst_58 [1] : vector<8x8xf32> to vector<8xf32>
    %106 = vector.shape_cast %105 : vector<8xf32> to vector<8x1xf32>
    %107 = arith.maximumf %104, %106 : vector<8x1xf32>
    %108 = arith.subf %104, %107 : vector<8x1xf32>
    %109 = math.exp %108 : vector<8x1xf32>
    %110 = vector.broadcast %107 : vector<8x1xf32> to vector<8x8xf32>
    %111 = arith.subf %102, %110 : vector<8x8xf32>
    %112 = math.exp %111 : vector<8x8xf32>
    %c2_59 = arith.constant 2 : index
    %c0_60 = arith.constant 0 : index
    %c0_61 = arith.constant 0 : index
    %113 = vector.load %arg7[%c2_59, %c0_60, %c0_61] : memref<4x8x1xf32, #tpu.memory_space<vmem>>, vector<1x8x1xf32>
    %114 = vector.shape_cast %113 : vector<1x8x1xf32> to vector<8x1xf32>
    %115 = arith.mulf %109, %114 : vector<8x1xf32>
    %cst_62 = arith.constant dense<0.000000e+00> : vector<8xf32>
    %116 = vector.multi_reduction <add>, %112, %cst_62 [1] : vector<8x8xf32> to vector<8xf32>
    %117 = vector.shape_cast %116 : vector<8xf32> to vector<8x1xf32>
    %118 = arith.addf %115, %117 : vector<8x1xf32>
    %c2_63 = arith.constant 2 : index
    %c0_64 = arith.constant 0 : index
    %c0_65 = arith.constant 0 : index
    %119 = vector.load %arg7[%c2_63, %c0_64, %c0_65] : memref<4x8x1xf32, #tpu.memory_space<vmem>>, vector<1x8x1xf32>
    %120 = vector.shape_cast %119 : vector<1x8x1xf32> to vector<8x1xf32>
    %121 = vector.shape_cast %118 : vector<8x1xf32> to vector<1x8x1xf32>
    tpu.vector_store %arg7[%c2_63, %c0_64, %c0_65], %121 {strides = array<i32>} : memref<4x8x1xf32, #tpu.memory_space<vmem>>, vector<1x8x1xf32>,
    %c0_66 = arith.constant 0 : index
    %c16 = arith.constant 16 : index
    %122 = vector.load %arg8[%c0_66, %c16] : memref<8x32xf32, #tpu.memory_space<vmem>>, vector<8x8xf32>
    %123 = vector.broadcast %109 : vector<8x1xf32> to vector<8x8xf32>
    %124 = arith.mulf %123, %122 : vector<8x8xf32>
    %125 = arith.truncf %112 : vector<8x8xf32> to vector<8x8xbf16>
    %cst_67 = arith.constant dense<0.000000e+00> : vector<8x8xf32>
    %126 = tpu.matmul %125, %93, %cst_67 {dimension_numbers = #tpu.dot_dimension_numbers<[1], [0], [0], [1], [0, 0, 1, 1], [], []>} : vector<8x8xbf16>, vector<8x8xbf16>, vector<8x8xf32> -> vector<8x8xf32>
    %127 = arith.addf %124, %126 : vector<8x8xf32>
    %c0_68 = arith.constant 0 : index
    %c16_69 = arith.constant 16 : index
    %128 = vector.load %arg8[%c0_68, %c16_69] : memref<8x32xf32, #tpu.memory_space<vmem>>, vector<8x8xf32>
    tpu.vector_store %arg8[%c0_68, %c16_69], %127 {strides = array<i32>} : memref<8x32xf32, #tpu.memory_space<vmem>>, vector<8x8xf32>,
    %c2_70 = arith.constant 2 : index
    %c0_71 = arith.constant 0 : index
    %c0_72 = arith.constant 0 : index
    %129 = vector.load %arg6[%c2_70, %c0_71, %c0_72] : memref<4x8x1xf32, #tpu.memory_space<vmem>>, vector<1x8x1xf32>
    %130 = vector.shape_cast %129 : vector<1x8x1xf32> to vector<8x1xf32>
    %131 = vector.shape_cast %107 : vector<8x1xf32> to vector<1x8x1xf32>
    tpu.vector_store %arg6[%c2_70, %c0_71, %c0_72], %131 {strides = array<i32>} : memref<4x8x1xf32, #tpu.memory_space<vmem>>, vector<1x8x1xf32>,
    %132 = vector.extract_strided_slice %4 {offsets = [0, 24], sizes = [8, 8], strides = [1, 1]} : vector<8x96xbf16> to vector<8x8xbf16>
    %133 = vector.extract_strided_slice %6 {offsets = [0, 56], sizes = [8, 8], strides = [1, 1]} : vector<8x96xbf16> to vector<8x8xbf16>
    %134 = vector.extract_strided_slice %6 {offsets = [0, 88], sizes = [8, 8], strides = [1, 1]} : vector<8x96xbf16> to vector<8x8xbf16>
    %cst_73 = arith.constant dense<0.000000e+00> : vector<8x8xf32>
    %135 = tpu.matmul %132, %133, %cst_73 {dimension_numbers = #tpu.dot_dimension_numbers<[1], [1], [0], [0], [0, 0, 1, 0], [], []>} : vector<8x8xbf16>, vector<8x8xbf16>, vector<8x8xf32> -> vector<8x8xf32>
    %cst_74 = arith.constant 0.353553385 : f32
    %136 = vector.broadcast %cst_74 : f32 to vector<8x8xf32>
    %137 = arith.mulf %135, %136 : vector<8x8xf32>
    %c0_i32_75 = arith.constant 0 : i32
    %138 = vector.broadcast %c0_i32_75 : i32 to vector<1x8xi32>
    %139 = arith.cmpi eq, %8, %138 : vector<1x8xi32>
    %cst_76 = arith.constant -1.000000e+04 : f32
    %140 = vector.shape_cast %139 : vector<1x8xi1> to vector<1x8xi1>
    %141 = vector.broadcast %140 : vector<1x8xi1> to vector<8x8xi1>
    %142 = vector.broadcast %cst_76 : f32 to vector<8x8xf32>
    %143 = arith.select %141, %142, %137 : vector<8x8xi1>, vector<8x8xf32>
    %c3 = arith.constant 3 : index
    %c0_77 = arith.constant 0 : index
    %c0_78 = arith.constant 0 : index
    %144 = vector.load %arg6[%c3, %c0_77, %c0_78] : memref<4x8x1xf32, #tpu.memory_space<vmem>>, vector<1x8x1xf32>
    %145 = vector.shape_cast %144 : vector<1x8x1xf32> to vector<8x1xf32>
    %cst_79 = arith.constant dense<0xFF800000> : vector<8xf32>
    %146 = vector.multi_reduction <maximumf>, %143, %cst_79 [1] : vector<8x8xf32> to vector<8xf32>
    %147 = vector.shape_cast %146 : vector<8xf32> to vector<8x1xf32>
    %148 = arith.maximumf %145, %147 : vector<8x1xf32>
    %149 = arith.subf %145, %148 : vector<8x1xf32>
    %150 = math.exp %149 : vector<8x1xf32>
    %151 = vector.broadcast %148 : vector<8x1xf32> to vector<8x8xf32>
    %152 = arith.subf %143, %151 : vector<8x8xf32>
    %153 = math.exp %152 : vector<8x8xf32>
    %c3_80 = arith.constant 3 : index
    %c0_81 = arith.constant 0 : index
    %c0_82 = arith.constant 0 : index
    %154 = vector.load %arg7[%c3_80, %c0_81, %c0_82] : memref<4x8x1xf32, #tpu.memory_space<vmem>>, vector<1x8x1xf32>
    %155 = vector.shape_cast %154 : vector<1x8x1xf32> to vector<8x1xf32>
    %156 = arith.mulf %150, %155 : vector<8x1xf32>
    %cst_83 = arith.constant dense<0.000000e+00> : vector<8xf32>
    %157 = vector.multi_reduction <add>, %153, %cst_83 [1] : vector<8x8xf32> to vector<8xf32>
    %158 = vector.shape_cast %157 : vector<8xf32> to vector<8x1xf32>
    %159 = arith.addf %156, %158 : vector<8x1xf32>
    %c3_84 = arith.constant 3 : index
    %c0_85 = arith.constant 0 : index
    %c0_86 = arith.constant 0 : index
    %160 = vector.load %arg7[%c3_84, %c0_85, %c0_86] : memref<4x8x1xf32, #tpu.memory_space<vmem>>, vector<1x8x1xf32>
    %161 = vector.shape_cast %160 : vector<1x8x1xf32> to vector<8x1xf32>
    %162 = vector.shape_cast %159 : vector<8x1xf32> to vector<1x8x1xf32>
    tpu.vector_store %arg7[%c3_84, %c0_85, %c0_86], %162 {strides = array<i32>} : memref<4x8x1xf32, #tpu.memory_space<vmem>>, vector<1x8x1xf32>,
    %c0_87 = arith.constant 0 : index
    %c24 = arith.constant 24 : index
    %163 = vector.load %arg8[%c0_87, %c24] : memref<8x32xf32, #tpu.memory_space<vmem>>, vector<8x8xf32>
    %164 = vector.broadcast %150 : vector<8x1xf32> to vector<8x8xf32>
    %165 = arith.mulf %164, %163 : vector<8x8xf32>
    %166 = arith.truncf %153 : vector<8x8xf32> to vector<8x8xbf16>
    %cst_88 = arith.constant dense<0.000000e+00> : vector<8x8xf32>
    %167 = tpu.matmul %166, %134, %cst_88 {dimension_numbers = #tpu.dot_dimension_numbers<[1], [0], [0], [1], [0, 0, 1, 1], [], []>} : vector<8x8xbf16>, vector<8x8xbf16>, vector<8x8xf32> -> vector<8x8xf32>
    %168 = arith.addf %165, %167 : vector<8x8xf32>
    %c0_89 = arith.constant 0 : index
    %c24_90 = arith.constant 24 : index
    %169 = vector.load %arg8[%c0_89, %c24_90] : memref<8x32xf32, #tpu.memory_space<vmem>>, vector<8x8xf32>
    tpu.vector_store %arg8[%c0_89, %c24_90], %168 {strides = array<i32>} : memref<8x32xf32, #tpu.memory_space<vmem>>, vector<8x8xf32>,
    %c3_91 = arith.constant 3 : index
    %c0_92 = arith.constant 0 : index
    %c0_93 = arith.constant 0 : index
    %170 = vector.load %arg6[%c3_91, %c0_92, %c0_93] : memref<4x8x1xf32, #tpu.memory_space<vmem>>, vector<1x8x1xf32>
    %171 = vector.shape_cast %170 : vector<1x8x1xf32> to vector<8x1xf32>
    %172 = vector.shape_cast %148 : vector<8x1xf32> to vector<1x8x1xf32>
    tpu.vector_store %arg6[%c3_91, %c0_92, %c0_93], %172 {strides = array<i32>} : memref<4x8x1xf32, #tpu.memory_space<vmem>>, vector<1x8x1xf32>,
    %c0_i32_94 = arith.constant 0 : i32
    %173 = arith.cmpi eq, %arg1, %c0_i32_94 : i32
    %174 = arith.extui %173 : i1 to i32
    %c0_i32_95 = arith.constant 0 : i32
    %175 = arith.cmpi ne, %174, %c0_i32_95 : i32
    scf.if %175 {
      %c0_96 = arith.constant 0 : index
      %c0_97 = arith.constant 0 : index
      %c0_98 = arith.constant 0 : index
      %176 = vector.load %arg7[%c0_96, %c0_97, %c0_98] : memref<4x8x1xf32, #tpu.memory_space<vmem>>, vector<1x8x1xf32>
      %177 = vector.shape_cast %176 : vector<1x8x1xf32> to vector<8x1xf32>
      %178 = tpu.reciprocal %177 {approx = true} : vector<8x1xf32> -> vector<8x1xf32>
      %c0_99 = arith.constant 0 : index
      %c0_100 = arith.constant 0 : index
      %179 = vector.load %arg8[%c0_99, %c0_100] : memref<8x32xf32, #tpu.memory_space<vmem>>, vector<8x8xf32>
      %180 = vector.broadcast %178 : vector<8x1xf32> to vector<8x8xf32>
      %181 = arith.mulf %179, %180 : vector<8x8xf32>
      %c0_101 = arith.constant 0 : index
      %c0_102 = arith.constant 0 : index
      %182 = vector.load %arg8[%c0_101, %c0_102] : memref<8x32xf32, #tpu.memory_space<vmem>>, vector<8x8xf32>
      tpu.vector_store %arg8[%c0_101, %c0_102], %181 {strides = array<i32>} : memref<8x32xf32, #tpu.memory_space<vmem>>, vector<8x8xf32>,
      %c1_103 = arith.constant 1 : index
      %c0_104 = arith.constant 0 : index
      %c0_105 = arith.constant 0 : index
      %183 = vector.load %arg7[%c1_103, %c0_104, %c0_105] : memref<4x8x1xf32, #tpu.memory_space<vmem>>, vector<1x8x1xf32>
      %184 = vector.shape_cast %183 : vector<1x8x1xf32> to vector<8x1xf32>
      %185 = tpu.reciprocal %184 {approx = true} : vector<8x1xf32> -> vector<8x1xf32>
      %c0_106 = arith.constant 0 : index
      %c8_107 = arith.constant 8 : index
      %186 = vector.load %arg8[%c0_106, %c8_107] : memref<8x32xf32, #tpu.memory_space<vmem>>, vector<8x8xf32>
      %187 = vector.broadcast %185 : vector<8x1xf32> to vector<8x8xf32>
      %188 = arith.mulf %186, %187 : vector<8x8xf32>
      %c0_108 = arith.constant 0 : index
      %c8_109 = arith.constant 8 : index
      %189 = vector.load %arg8[%c0_108, %c8_109] : memref<8x32xf32, #tpu.memory_space<vmem>>, vector<8x8xf32>
      tpu.vector_store %arg8[%c0_108, %c8_109], %188 {strides = array<i32>} : memref<8x32xf32, #tpu.memory_space<vmem>>, vector<8x8xf32>,
      %c2_110 = arith.constant 2 : index
      %c0_111 = arith.constant 0 : index
      %c0_112 = arith.constant 0 : index
      %190 = vector.load %arg7[%c2_110, %c0_111, %c0_112] : memref<4x8x1xf32, #tpu.memory_space<vmem>>, vector<1x8x1xf32>
      %191 = vector.shape_cast %190 : vector<1x8x1xf32> to vector<8x1xf32>
      %192 = tpu.reciprocal %191 {approx = true} : vector<8x1xf32> -> vector<8x1xf32>
      %c0_113 = arith.constant 0 : index
      %c16_114 = arith.constant 16 : index
      %193 = vector.load %arg8[%c0_113, %c16_114] : memref<8x32xf32, #tpu.memory_space<vmem>>, vector<8x8xf32>
      %194 = vector.broadcast %192 : vector<8x1xf32> to vector<8x8xf32>
      %195 = arith.mulf %193, %194 : vector<8x8xf32>
      %c0_115 = arith.constant 0 : index
      %c16_116 = arith.constant 16 : index
      %196 = vector.load %arg8[%c0_115, %c16_116] : memref<8x32xf32, #tpu.memory_space<vmem>>, vector<8x8xf32>
      tpu.vector_store %arg8[%c0_115, %c16_116], %195 {strides = array<i32>} : memref<8x32xf32, #tpu.memory_space<vmem>>, vector<8x8xf32>,
      %c3_117 = arith.constant 3 : index
      %c0_118 = arith.constant 0 : index
      %c0_119 = arith.constant 0 : index
      %197 = vector.load %arg7[%c3_117, %c0_118, %c0_119] : memref<4x8x1xf32, #tpu.memory_space<vmem>>, vector<1x8x1xf32>
      %198 = vector.shape_cast %197 : vector<1x8x1xf32> to vector<8x1xf32>
      %199 = tpu.reciprocal %198 {approx = true} : vector<8x1xf32> -> vector<8x1xf32>
      %c0_120 = arith.constant 0 : index
      %c24_121 = arith.constant 24 : index
      %200 = vector.load %arg8[%c0_120, %c24_121] : memref<8x32xf32, #tpu.memory_space<vmem>>, vector<8x8xf32>
      %201 = vector.broadcast %199 : vector<8x1xf32> to vector<8x8xf32>
      %202 = arith.mulf %200, %201 : vector<8x8xf32>
      %c0_122 = arith.constant 0 : index
      %c24_123 = arith.constant 24 : index
      %203 = vector.load %arg8[%c0_122, %c24_123] : memref<8x32xf32, #tpu.memory_space<vmem>>, vector<8x8xf32>
      tpu.vector_store %arg8[%c0_122, %c24_123], %202 {strides = array<i32>} : memref<8x32xf32, #tpu.memory_space<vmem>>, vector<8x8xf32>,
      %c0_124 = arith.constant 0 : index
      %c0_125 = arith.constant 0 : index
      %204 = vector.load %arg8[%c0_124, %c0_125] : memref<8x32xf32, #tpu.memory_space<vmem>>, vector<8x32xf32>
      %205 = arith.truncf %204 : vector<8x32xf32> to vector<8x32xbf16>
      %c0_126 = arith.constant 0 : index
      %c0_127 = arith.constant 0 : index
      %c0_128 = arith.constant 0 : index
      %206 = vector.load %arg5[%c0_126, %c0_127, %c0_128] : memref<1x8x32xbf16, #tpu.memory_space<vmem>>, vector<1x8x32xbf16>
      %207 = vector.shape_cast %206 : vector<1x8x32xbf16> to vector<8x32xbf16>
      %208 = vector.shape_cast %205 : vector<8x32xbf16> to vector<1x8x32xbf16>
      tpu.vector_store %arg5[%c0_126, %c0_127, %c0_128], %208 {strides = array<i32>} : memref<1x8x32xbf16, #tpu.memory_space<vmem>>, vector<1x8x32xbf16>,
    } else {
    }
    return
  }
  func.func @transform_0(%arg0: i32, %arg1: i32) -> (i32, i32, i32) {
    %c0_i32 = arith.constant 0 : i32
    %c0_i32_0 = arith.constant 0 : i32
    %c0_i32_1 = arith.constant 0 : i32
    return %arg0, %c0_i32, %c0_i32_0 : i32, i32, i32
  }
  func.func @transform_1(%arg0: i32, %arg1: i32) -> (i32, i32, i32) {
    %c0_i32 = arith.constant 0 : i32
    %c0_i32_0 = arith.constant 0 : i32
    return %arg0, %arg1, %c0_i32 : i32, i32, i32
  }
  func.func @transform_2(%arg0: i32, %arg1: i32) -> (i32, i32, i32) {
    %c0_i32 = arith.constant 0 : i32
    %c0_i32_0 = arith.constant 0 : i32
    return %arg0, %c0_i32, %arg1 : i32, i32, i32
  }
  func.func @transform_3(%arg0: i32, %arg1: i32) -> (i32, i32, i32) {
    %c0_i32 = arith.constant 0 : i32
    %c0_i32_0 = arith.constant 0 : i32
    %c0_i32_1 = arith.constant 0 : i32
    return %arg0, %c0_i32, %c0_i32_0 : i32, i32, i32
  }
}

module attributes {stable_mosaic.version = 11 : i64} {
  func.func @_ffn_add_ln_kernel(%arg0: i32, %arg1: i32, %arg2: memref<16x32xbf16, #tpu.memory_space<vmem>>, %arg3: memref<32x64xbf16, #tpu.memory_space<vmem>>, %arg4: memref<1x64xf32, #tpu.memory_space<vmem>>, %arg5: memref<64x32xbf16, #tpu.memory_space<vmem>>, %arg6: memref<1x32xf32, #tpu.memory_space<vmem>>, %arg7: memref<16x32xbf16, #tpu.memory_space<vmem>>, %arg8: memref<1x32xf32, #tpu.memory_space<vmem>>, %arg9: memref<1x32xf32, #tpu.memory_space<vmem>>, %arg10: memref<16x32xbf16, #tpu.memory_space<vmem>>, %arg11: memref<16x32xf32, #tpu.memory_space<vmem>>) attributes {dimension_semantics = [#tpu.dimension_semantics<parallel>, #tpu.dimension_semantics<arbitrary>], iteration_bounds = array<i64: 1, 1>, scalar_prefetch = 0 : i64, scratch_operands = 1 : i64, tpu.core_type = #tpu.core_type<tc>, window_params = [{transform_indices = @transform_0, window_bounds = array<i64: 16, 32>}, {transform_indices = @transform_1, window_bounds = array<i64: 32, 64>}, {transform_indices = @transform_2, window_bounds = array<i64: 1, 64>}, {transform_indices = @transform_3, window_bounds = array<i64: 64, 32>}, {pipeline_mode = #tpu.pipeline_mode<synchronous>, transform_indices = @transform_4, window_bounds = array<i64: 1, 32>}, {transform_indices = @transform_5, window_bounds = array<i64: 16, 32>}, {pipeline_mode = #tpu.pipeline_mode<synchronous>, transform_indices = @transform_6, window_bounds = array<i64: 1, 32>}, {pipeline_mode = #tpu.pipeline_mode<synchronous>, transform_indices = @transform_7, window_bounds = array<i64: 1, 32>}, {transform_indices = @transform_8, window_bounds = array<i64: 16, 32>}]} {
    %c0_i32 = arith.constant 0 : i32
    %0 = arith.cmpi eq, %arg1, %c0_i32 : i32
    %1 = arith.extui %0 : i1 to i32
    %c0_i32_0 = arith.constant 0 : i32
    %2 = arith.cmpi ne, %1, %c0_i32_0 : i32
    scf.if %2 {
      %cst_16 = arith.constant 0.000000e+00 : f32
      %20 = vector.broadcast %cst_16 : f32 to vector<16x32xf32>
      %c0_17 = arith.constant 0 : index
      %c0_18 = arith.constant 0 : index
      %21 = vector.load %arg11[%c0_17, %c0_18] : memref<16x32xf32, #tpu.memory_space<vmem>>, vector<16x32xf32>
      tpu.vector_store %arg11[%c0_17, %c0_18], %20 {strides = array<i32>} : memref<16x32xf32, #tpu.memory_space<vmem>>, vector<16x32xf32>,
    } else {
    }
    %c0 = arith.constant 0 : index
    %c0_1 = arith.constant 0 : index
    %3 = vector.load %arg2[%c0, %c0_1] : memref<16x32xbf16, #tpu.memory_space<vmem>>, vector<16x32xbf16>
    %c0_2 = arith.constant 0 : index
    %c0_3 = arith.constant 0 : index
    %4 = vector.load %arg3[%c0_2, %c0_3] : memref<32x64xbf16, #tpu.memory_space<vmem>>, vector<32x64xbf16>
    %cst = arith.constant dense<0.000000e+00> : vector<16x64xf32>
    %5 = tpu.matmul %3, %4, %cst {dimension_numbers = #tpu.dot_dimension_numbers<[1], [0], [0], [1], [0, 0, 1, 1], [], []>} : vector<16x32xbf16>, vector<32x64xbf16>, vector<16x64xf32> -> vector<16x64xf32>
    %c0_4 = arith.constant 0 : index
    %c0_5 = arith.constant 0 : index
    %6 = vector.load %arg4[%c0_4, %c0_5] : memref<1x64xf32, #tpu.memory_space<vmem>>, vector<1x64xf32>
    %7 = vector.broadcast %6 : vector<1x64xf32> to vector<16x64xf32>
    %8 = arith.addf %5, %7 : vector<16x64xf32>
    %cst_6 = arith.constant 0.000000e+00 : f32
    %9 = vector.broadcast %cst_6 : f32 to vector<16x64xf32>
    %10 = arith.maximumf %8, %9 : vector<16x64xf32>
    %11 = arith.truncf %10 : vector<16x64xf32> to vector<16x64xbf16>
    %c0_7 = arith.constant 0 : index
    %c0_8 = arith.constant 0 : index
    %12 = vector.load %arg11[%c0_7, %c0_8] : memref<16x32xf32, #tpu.memory_space<vmem>>, vector<16x32xf32>
    %c0_9 = arith.constant 0 : index
    %c0_10 = arith.constant 0 : index
    %13 = vector.load %arg5[%c0_9, %c0_10] : memref<64x32xbf16, #tpu.memory_space<vmem>>, vector<64x32xbf16>
    %cst_11 = arith.constant dense<0.000000e+00> : vector<16x32xf32>
    %14 = tpu.matmul %11, %13, %cst_11 {dimension_numbers = #tpu.dot_dimension_numbers<[1], [0], [0], [1], [0, 0, 1, 1], [], []>} : vector<16x64xbf16>, vector<64x32xbf16>, vector<16x32xf32> -> vector<16x32xf32>
    %15 = arith.addf %12, %14 : vector<16x32xf32>
    %c0_12 = arith.constant 0 : index
    %c0_13 = arith.constant 0 : index
    %16 = vector.load %arg11[%c0_12, %c0_13] : memref<16x32xf32, #tpu.memory_space<vmem>>, vector<16x32xf32>
    tpu.vector_store %arg11[%c0_12, %c0_13], %15 {strides = array<i32>} : memref<16x32xf32, #tpu.memory_space<vmem>>, vector<16x32xf32>,
    %c0_i32_14 = arith.constant 0 : i32
    %17 = arith.cmpi eq, %arg1, %c0_i32_14 : i32
    %18 = arith.extui %17 : i1 to i32
    %c0_i32_15 = arith.constant 0 : i32
    %19 = arith.cmpi ne, %18, %c0_i32_15 : i32
    scf.if %19 {
      %c0_16 = arith.constant 0 : index
      %c0_17 = arith.constant 0 : index
      %20 = vector.load %arg11[%c0_16, %c0_17] : memref<16x32xf32, #tpu.memory_space<vmem>>, vector<16x32xf32>
      %c0_18 = arith.constant 0 : index
      %c0_19 = arith.constant 0 : index
      %21 = vector.load %arg6[%c0_18, %c0_19] : memref<1x32xf32, #tpu.memory_space<vmem>>, vector<1x32xf32>
      %22 = vector.broadcast %21 : vector<1x32xf32> to vector<16x32xf32>
      %23 = arith.addf %20, %22 : vector<16x32xf32>
      %c0_20 = arith.constant 0 : index
      %c0_21 = arith.constant 0 : index
      %24 = vector.load %arg7[%c0_20, %c0_21] : memref<16x32xbf16, #tpu.memory_space<vmem>>, vector<16x32xbf16>
      %25 = arith.extf %24 : vector<16x32xbf16> to vector<16x32xf32>
      %26 = arith.addf %23, %25 : vector<16x32xf32>
      %cst_22 = arith.constant dense<0.000000e+00> : vector<16xf32>
      %27 = vector.multi_reduction <add>, %26, %cst_22 [1] : vector<16x32xf32> to vector<16xf32>
      %28 = vector.shape_cast %27 : vector<16xf32> to vector<16x1xf32>
      %cst_23 = arith.constant 3.200000e+01 : f32
      %29 = vector.broadcast %cst_23 : f32 to vector<16x1xf32>
      %30 = arith.divf %28, %29 : vector<16x1xf32>
      %31 = vector.broadcast %30 : vector<16x1xf32> to vector<16x32xf32>
      %32 = arith.subf %26, %31 : vector<16x32xf32>
      %33 = arith.mulf %32, %32 : vector<16x32xf32>
      %cst_24 = arith.constant dense<0.000000e+00> : vector<16xf32>
      %34 = vector.multi_reduction <add>, %33, %cst_24 [1] : vector<16x32xf32> to vector<16xf32>
      %35 = vector.shape_cast %34 : vector<16xf32> to vector<16x1xf32>
      %cst_25 = arith.constant 3.200000e+01 : f32
      %36 = vector.broadcast %cst_25 : f32 to vector<16x1xf32>
      %37 = arith.divf %35, %36 : vector<16x1xf32>
      %38 = vector.broadcast %30 : vector<16x1xf32> to vector<16x32xf32>
      %39 = arith.subf %26, %38 : vector<16x32xf32>
      %cst_26 = arith.constant 9.99999996E-13 : f32
      %40 = vector.broadcast %cst_26 : f32 to vector<16x1xf32>
      %41 = arith.addf %37, %40 : vector<16x1xf32>
      %42 = math.rsqrt %41 : vector<16x1xf32>
      %43 = vector.broadcast %42 : vector<16x1xf32> to vector<16x32xf32>
      %44 = arith.mulf %39, %43 : vector<16x32xf32>
      %c0_27 = arith.constant 0 : index
      %c0_28 = arith.constant 0 : index
      %45 = vector.load %arg8[%c0_27, %c0_28] : memref<1x32xf32, #tpu.memory_space<vmem>>, vector<1x32xf32>
      %46 = vector.broadcast %45 : vector<1x32xf32> to vector<16x32xf32>
      %47 = arith.mulf %46, %44 : vector<16x32xf32>
      %c0_29 = arith.constant 0 : index
      %c0_30 = arith.constant 0 : index
      %48 = vector.load %arg9[%c0_29, %c0_30] : memref<1x32xf32, #tpu.memory_space<vmem>>, vector<1x32xf32>
      %49 = vector.broadcast %48 : vector<1x32xf32> to vector<16x32xf32>
      %50 = arith.addf %47, %49 : vector<16x32xf32>
      %51 = arith.truncf %50 : vector<16x32xf32> to vector<16x32xbf16>
      %c0_31 = arith.constant 0 : index
      %c0_32 = arith.constant 0 : index
      %52 = vector.load %arg10[%c0_31, %c0_32] : memref<16x32xbf16, #tpu.memory_space<vmem>>, vector<16x32xbf16>
      tpu.vector_store %arg10[%c0_31, %c0_32], %51 {strides = array<i32>} : memref<16x32xbf16, #tpu.memory_space<vmem>>, vector<16x32xbf16>,
    } else {
    }
    return
  }
  func.func @transform_0(%arg0: i32, %arg1: i32) -> (i32, i32) {
    %c0_i32 = arith.constant 0 : i32
    %c0_i32_0 = arith.constant 0 : i32
    return %arg0, %c0_i32 : i32, i32
  }
  func.func @transform_1(%arg0: i32, %arg1: i32) -> (i32, i32) {
    %c0_i32 = arith.constant 0 : i32
    %c0_i32_0 = arith.constant 0 : i32
    return %c0_i32, %arg1 : i32, i32
  }
  func.func @transform_2(%arg0: i32, %arg1: i32) -> (i32, i32) {
    %c0_i32 = arith.constant 0 : i32
    %c0_i32_0 = arith.constant 0 : i32
    return %c0_i32, %arg1 : i32, i32
  }
  func.func @transform_3(%arg0: i32, %arg1: i32) -> (i32, i32) {
    %c0_i32 = arith.constant 0 : i32
    %c0_i32_0 = arith.constant 0 : i32
    return %arg1, %c0_i32 : i32, i32
  }
  func.func @transform_4(%arg0: i32, %arg1: i32) -> (i32, i32) {
    %c0_i32 = arith.constant 0 : i32
    %c0_i32_0 = arith.constant 0 : i32
    %c0_i32_1 = arith.constant 0 : i32
    return %c0_i32, %c0_i32_0 : i32, i32
  }
  func.func @transform_5(%arg0: i32, %arg1: i32) -> (i32, i32) {
    %c0_i32 = arith.constant 0 : i32
    %c0_i32_0 = arith.constant 0 : i32
    return %arg0, %c0_i32 : i32, i32
  }
  func.func @transform_6(%arg0: i32, %arg1: i32) -> (i32, i32) {
    %c0_i32 = arith.constant 0 : i32
    %c0_i32_0 = arith.constant 0 : i32
    %c0_i32_1 = arith.constant 0 : i32
    return %c0_i32, %c0_i32_0 : i32, i32
  }
  func.func @transform_7(%arg0: i32, %arg1: i32) -> (i32, i32) {
    %c0_i32 = arith.constant 0 : i32
    %c0_i32_0 = arith.constant 0 : i32
    %c0_i32_1 = arith.constant 0 : i32
    return %c0_i32, %c0_i32_0 : i32, i32
  }
  func.func @transform_8(%arg0: i32, %arg1: i32) -> (i32, i32) {
    %c0_i32 = arith.constant 0 : i32
    %c0_i32_0 = arith.constant 0 : i32
    return %arg0, %c0_i32 : i32, i32
  }
}

module attributes {stable_mosaic.version = 11 : i64} {
  func.func @_linear_kernel(%arg0: i32, %arg1: i32, %arg2: i32, %arg3: memref<16x32xbf16, #tpu.memory_space<vmem>>, %arg4: memref<32x64xbf16, #tpu.memory_space<vmem>>, %arg5: memref<1x64xf32, #tpu.memory_space<vmem>>, %arg6: memref<16x64xbf16, #tpu.memory_space<vmem>>, %arg7: memref<16x64xf32, #tpu.memory_space<vmem>>) attributes {dimension_semantics = [#tpu.dimension_semantics<parallel>, #tpu.dimension_semantics<parallel>, #tpu.dimension_semantics<arbitrary>], iteration_bounds = array<i64: 1, 1, 1>, scalar_prefetch = 0 : i64, scratch_operands = 1 : i64, tpu.core_type = #tpu.core_type<tc>, window_params = [{transform_indices = @transform_0, window_bounds = array<i64: 16, 32>}, {transform_indices = @transform_1, window_bounds = array<i64: 32, 64>}, {transform_indices = @transform_2, window_bounds = array<i64: 1, 64>}, {transform_indices = @transform_3, window_bounds = array<i64: 16, 64>}]} {
    %c0_i32 = arith.constant 0 : i32
    %0 = arith.cmpi eq, %arg2, %c0_i32 : i32
    %1 = arith.extui %0 : i1 to i32
    %c0_i32_0 = arith.constant 0 : i32
    %2 = arith.cmpi ne, %1, %c0_i32_0 : i32
    scf.if %2 {
      %cst_10 = arith.constant 0.000000e+00 : f32
      %12 = vector.broadcast %cst_10 : f32 to vector<16x64xf32>
      %c0_11 = arith.constant 0 : index
      %c0_12 = arith.constant 0 : index
      %13 = vector.load %arg7[%c0_11, %c0_12] : memref<16x64xf32, #tpu.memory_space<vmem>>, vector<16x64xf32>
      tpu.vector_store %arg7[%c0_11, %c0_12], %12 {strides = array<i32>} : memref<16x64xf32, #tpu.memory_space<vmem>>, vector<16x64xf32>,
    } else {
    }
    %c0 = arith.constant 0 : index
    %c0_1 = arith.constant 0 : index
    %3 = vector.load %arg7[%c0, %c0_1] : memref<16x64xf32, #tpu.memory_space<vmem>>, vector<16x64xf32>
    %c0_2 = arith.constant 0 : index
    %c0_3 = arith.constant 0 : index
    %4 = vector.load %arg3[%c0_2, %c0_3] : memref<16x32xbf16, #tpu.memory_space<vmem>>, vector<16x32xbf16>
    %c0_4 = arith.constant 0 : index
    %c0_5 = arith.constant 0 : index
    %5 = vector.load %arg4[%c0_4, %c0_5] : memref<32x64xbf16, #tpu.memory_space<vmem>>, vector<32x64xbf16>
    %cst = arith.constant dense<0.000000e+00> : vector<16x64xf32>
    %6 = tpu.matmul %4, %5, %cst {dimension_numbers = #tpu.dot_dimension_numbers<[1], [0], [0], [1], [0, 0, 1, 1], [], []>} : vector<16x32xbf16>, vector<32x64xbf16>, vector<16x64xf32> -> vector<16x64xf32>
    %7 = arith.addf %3, %6 : vector<16x64xf32>
    %c0_6 = arith.constant 0 : index
    %c0_7 = arith.constant 0 : index
    %8 = vector.load %arg7[%c0_6, %c0_7] : memref<16x64xf32, #tpu.memory_space<vmem>>, vector<16x64xf32>
    tpu.vector_store %arg7[%c0_6, %c0_7], %7 {strides = array<i32>} : memref<16x64xf32, #tpu.memory_space<vmem>>, vector<16x64xf32>,
    %c0_i32_8 = arith.constant 0 : i32
    %9 = arith.cmpi eq, %arg2, %c0_i32_8 : i32
    %10 = arith.extui %9 : i1 to i32
    %c0_i32_9 = arith.constant 0 : i32
    %11 = arith.cmpi ne, %10, %c0_i32_9 : i32
    scf.if %11 {
      %c0_10 = arith.constant 0 : index
      %c0_11 = arith.constant 0 : index
      %12 = vector.load %arg7[%c0_10, %c0_11] : memref<16x64xf32, #tpu.memory_space<vmem>>, vector<16x64xf32>
      %c0_12 = arith.constant 0 : index
      %c0_13 = arith.constant 0 : index
      %13 = vector.load %arg5[%c0_12, %c0_13] : memref<1x64xf32, #tpu.memory_space<vmem>>, vector<1x64xf32>
      %14 = vector.broadcast %13 : vector<1x64xf32> to vector<16x64xf32>
      %15 = arith.addf %12, %14 : vector<16x64xf32>
      %16 = arith.truncf %15 : vector<16x64xf32> to vector<16x64xbf16>
      %c0_14 = arith.constant 0 : index
      %c0_15 = arith.constant 0 : index
      %17 = vector.load %arg6[%c0_14, %c0_15] : memref<16x64xbf16, #tpu.memory_space<vmem>>, vector<16x64xbf16>
      tpu.vector_store %arg6[%c0_14, %c0_15], %16 {strides = array<i32>} : memref<16x64xbf16, #tpu.memory_space<vmem>>, vector<16x64xbf16>,
    } else {
    }
    return
  }
  func.func @transform_0(%arg0: i32, %arg1: i32, %arg2: i32) -> (i32, i32) {
    %c0_i32 = arith.constant 0 : i32
    return %arg0, %arg2 : i32, i32
  }
  func.func @transform_1(%arg0: i32, %arg1: i32, %arg2: i32) -> (i32, i32) {
    %c0_i32 = arith.constant 0 : i32
    return %arg2, %arg1 : i32, i32
  }
  func.func @transform_2(%arg0: i32, %arg1: i32, %arg2: i32) -> (i32, i32) {
    %c0_i32 = arith.constant 0 : i32
    %c0_i32_0 = arith.constant 0 : i32
    return %c0_i32, %arg1 : i32, i32
  }
  func.func @transform_3(%arg0: i32, %arg1: i32, %arg2: i32) -> (i32, i32) {
    %c0_i32 = arith.constant 0 : i32
    return %arg0, %arg1 : i32, i32
  }
}

module attributes {stable_mosaic.version = 11 : i64} {
  func.func @_flash_attn_kernel(%arg0: i32, %arg1: i32, %arg2: memref<1x8x96xbf16, #tpu.memory_space<vmem>>, %arg3: memref<1x8x96xbf16, #tpu.memory_space<vmem>>, %arg4: memref<1x8x8xi32, #tpu.memory_space<vmem>>, %arg5: memref<1x8x32xbf16, #tpu.memory_space<vmem>>, %arg6: memref<4x8x1xf32, #tpu.memory_space<vmem>>, %arg7: memref<4x8x1xf32, #tpu.memory_space<vmem>>, %arg8: memref<8x32xf32, #tpu.memory_space<vmem>>) attributes {dimension_semantics = [#tpu.dimension_semantics<parallel>, #tpu.dimension_semantics<arbitrary>], iteration_bounds = array<i64: 2, 1>, scalar_prefetch = 0 : i64, scratch_operands = 3 : i64, tpu.core_type = #tpu.core_type<tc>, window_params = [{transform_indices = @transform_0, window_bounds = array<i64: 1, 8, 96>}, {transform_indices = @transform_1, window_bounds = array<i64: 1, 8, 96>}, {transform_indices = @transform_2, window_bounds = array<i64: 1, 8, 8>}, {transform_indices = @transform_3, window_bounds = array<i64: 1, 8, 32>}]} {
    %c0_i32 = arith.constant 0 : i32
    %0 = arith.cmpi eq, %arg1, %c0_i32 : i32
    %1 = arith.extui %0 : i1 to i32
    %c0_i32_0 = arith.constant 0 : i32
    %2 = arith.cmpi ne, %1, %c0_i32_0 : i32
    scf.if %2 {
      %cst_96 = arith.constant -1.000000e+30 : f32
      %168 = vector.broadcast %cst_96 : f32 to vector<4x8x1xf32>
      %c0_97 = arith.constant 0 : index
      %c0_98 = arith.constant 0 : index
      %c0_99 = arith.constant 0 : index
      %169 = vector.load %arg6[%c0_97, %c0_98, %c0_99] : memref<4x8x1xf32, #tpu.memory_space<vmem>>, vector<4x8x1xf32>
      tpu.vector_store %arg6[%c0_97, %c0_98, %c0_99], %168 {strides = array<i32>} : memref<4x8x1xf32, #tpu.memory_space<vmem>>, vector<4x8x1xf32>,
      %cst_100 = arith.constant 0.000000e+00 : f32
      %170 = vector.broadcast %cst_100 : f32 to vector<4x8x1xf32>
      %c0_101 = arith.constant 0 : index
      %c0_102 = arith.constant 0 : index
      %c0_103 = arith.constant 0 : index
      %171 = vector.load %arg7[%c0_101, %c0_102, %c0_103] : memref<4x8x1xf32, #tpu.memory_space<vmem>>, vector<4x8x1xf32>
      tpu.vector_store %arg7[%c0_101, %c0_102, %c0_103], %170 {strides = array<i32>} : memref<4x8x1xf32, #tpu.memory_space<vmem>>, vector<4x8x1xf32>,
      %cst_104 = arith.constant 0.000000e+00 : f32
      %172 = vector.broadcast %cst_104 : f32 to vector<8x32xf32>
      %c0_105 = arith.constant 0 : index
      %c0_106 = arith.constant 0 : index
      %173 = vector.load %arg8[%c0_105, %c0_106] : memref<8x32xf32, #tpu.memory_space<vmem>>, vector<8x32xf32>
      tpu.vector_store %arg8[%c0_105, %c0_106], %172 {strides = array<i32>} : memref<8x32xf32, #tpu.memory_space<vmem>>, vector<8x32xf32>,
    } else {
    }
    %c0 = arith.constant 0 : index
    %c0_1 = arith.constant 0 : index
    %c0_2 = arith.constant 0 : index
    %3 = vector.load %arg2[%c0, %c0_1, %c0_2] : memref<1x8x96xbf16, #tpu.memory_space<vmem>>, vector<1x8x96xbf16>
    %4 = vector.shape_cast %3 : vector<1x8x96xbf16> to vector<8x96xbf16>
    %c0_3 = arith.constant 0 : index
    %c0_4 = arith.constant 0 : index
    %c0_5 = arith.constant 0 : index
    %5 = vector.load %arg3[%c0_3, %c0_4, %c0_5] : memref<1x8x96xbf16, #tpu.memory_space<vmem>>, vector<1x8x96xbf16>
    %6 = vector.shape_cast %5 : vector<1x8x96xbf16> to vector<8x96xbf16>
    %c0_6 = arith.constant 0 : index
    %c0_7 = arith.constant 0 : index
    %c0_8 = arith.constant 0 : index
    %7 = vector.load %arg4[%c0_6, %c0_7, %c0_8] : memref<1x8x8xi32, #tpu.memory_space<vmem>>, vector<1x8x8xi32>
    %8 = vector.shape_cast %7 : vector<1x8x8xi32> to vector<8x8xi32>
    %9 = vector.extract_strided_slice %4 {offsets = [0, 0], sizes = [8, 8], strides = [1, 1]} : vector<8x96xbf16> to vector<8x8xbf16>
    %10 = vector.extract_strided_slice %6 {offsets = [0, 32], sizes = [8, 8], strides = [1, 1]} : vector<8x96xbf16> to vector<8x8xbf16>
    %11 = vector.extract_strided_slice %6 {offsets = [0, 64], sizes = [8, 8], strides = [1, 1]} : vector<8x96xbf16> to vector<8x8xbf16>
    %cst = arith.constant dense<0.000000e+00> : vector<8x8xf32>
    %12 = tpu.matmul %9, %10, %cst {dimension_numbers = #tpu.dot_dimension_numbers<[1], [1], [0], [0], [0, 0, 1, 0], [], []>} : vector<8x8xbf16>, vector<8x8xbf16>, vector<8x8xf32> -> vector<8x8xf32>
    %cst_9 = arith.constant 0.353553385 : f32
    %13 = vector.broadcast %cst_9 : f32 to vector<8x8xf32>
    %14 = arith.mulf %12, %13 : vector<8x8xf32>
    %c0_i32_10 = arith.constant 0 : i32
    %15 = vector.broadcast %c0_i32_10 : i32 to vector<8x8xi32>
    %16 = arith.cmpi eq, %8, %15 : vector<8x8xi32>
    %cst_11 = arith.constant -1.000000e+04 : f32
    %17 = vector.broadcast %cst_11 : f32 to vector<8x8xf32>
    %18 = arith.select %16, %17, %14 : vector<8x8xi1>, vector<8x8xf32>
    %c0_12 = arith.constant 0 : index
    %c0_13 = arith.constant 0 : index
    %c0_14 = arith.constant 0 : index
    %19 = vector.load %arg6[%c0_12, %c0_13, %c0_14] : memref<4x8x1xf32, #tpu.memory_space<vmem>>, vector<1x8x1xf32>
    %20 = vector.shape_cast %19 : vector<1x8x1xf32> to vector<8x1xf32>
    %cst_15 = arith.constant dense<0xFF800000> : vector<8xf32>
    %21 = vector.multi_reduction <maximumf>, %18, %cst_15 [1] : vector<8x8xf32> to vector<8xf32>
    %22 = vector.shape_cast %21 : vector<8xf32> to vector<8x1xf32>
    %23 = arith.maximumf %20, %22 : vector<8x1xf32>
    %24 = arith.subf %20, %23 : vector<8x1xf32>
    %25 = math.exp %24 : vector<8x1xf32>
    %26 = vector.broadcast %23 : vector<8x1xf32> to vector<8x8xf32>
    %27 = arith.subf %18, %26 : vector<8x8xf32>
    %28 = math.exp %27 : vector<8x8xf32>
    %c0_16 = arith.constant 0 : index
    %c0_17 = arith.constant 0 : index
    %c0_18 = arith.constant 0 : index
    %29 = vector.load %arg7[%c0_16, %c0_17, %c0_18] : memref<4x8x1xf32, #tpu.memory_space<vmem>>, vector<1x8x1xf32>
    %30 = vector.shape_cast %29 : vector<1x8x1xf32> to vector<8x1xf32>
    %31 = arith.mulf %25, %30 : vector<8x1xf32>
    %cst_19 = arith.constant dense<0.000000e+00> : vector<8xf32>
    %32 = vector.multi_reduction <add>, %28, %cst_19 [1] : vector<8x8xf32> to vector<8xf32>
    %33 = vector.shape_cast %32 : vector<8xf32> to vector<8x1xf32>
    %34 = arith.addf %31, %33 : vector<8x1xf32>
    %c0_20 = arith.constant 0 : index
    %c0_21 = arith.constant 0 : index
    %c0_22 = arith.constant 0 : index
    %35 = vector.load %arg7[%c0_20, %c0_21, %c0_22] : memref<4x8x1xf32, #tpu.memory_space<vmem>>, vector<1x8x1xf32>
    %36 = vector.shape_cast %35 : vector<1x8x1xf32> to vector<8x1xf32>
    %37 = vector.shape_cast %34 : vector<8x1xf32> to vector<1x8x1xf32>
    tpu.vector_store %arg7[%c0_20, %c0_21, %c0_22], %37 {strides = array<i32>} : memref<4x8x1xf32, #tpu.memory_space<vmem>>, vector<1x8x1xf32>,
    %c0_23 = arith.constant 0 : index
    %c0_24 = arith.constant 0 : index
    %38 = vector.load %arg8[%c0_23, %c0_24] : memref<8x32xf32, #tpu.memory_space<vmem>>, vector<8x8xf32>
    %39 = vector.broadcast %25 : vector<8x1xf32> to vector<8x8xf32>
    %40 = arith.mulf %39, %38 : vector<8x8xf32>
    %41 = arith.truncf %28 : vector<8x8xf32> to vector<8x8xbf16>
    %cst_25 = arith.constant dense<0.000000e+00> : vector<8x8xf32>
    %42 = tpu.matmul %41, %11, %cst_25 {dimension_numbers = #tpu.dot_dimension_numbers<[1], [0], [0], [1], [0, 0, 1, 1], [], []>} : vector<8x8xbf16>, vector<8x8xbf16>, vector<8x8xf32> -> vector<8x8xf32>
    %43 = arith.addf %40, %42 : vector<8x8xf32>
    %c0_26 = arith.constant 0 : index
    %c0_27 = arith.constant 0 : index
    %44 = vector.load %arg8[%c0_26, %c0_27] : memref<8x32xf32, #tpu.memory_space<vmem>>, vector<8x8xf32>
    tpu.vector_store %arg8[%c0_26, %c0_27], %43 {strides = array<i32>} : memref<8x32xf32, #tpu.memory_space<vmem>>, vector<8x8xf32>,
    %c0_28 = arith.constant 0 : index
    %c0_29 = arith.constant 0 : index
    %c0_30 = arith.constant 0 : index
    %45 = vector.load %arg6[%c0_28, %c0_29, %c0_30] : memref<4x8x1xf32, #tpu.memory_space<vmem>>, vector<1x8x1xf32>
    %46 = vector.shape_cast %45 : vector<1x8x1xf32> to vector<8x1xf32>
    %47 = vector.shape_cast %23 : vector<8x1xf32> to vector<1x8x1xf32>
    tpu.vector_store %arg6[%c0_28, %c0_29, %c0_30], %47 {strides = array<i32>} : memref<4x8x1xf32, #tpu.memory_space<vmem>>, vector<1x8x1xf32>,
    %48 = vector.extract_strided_slice %4 {offsets = [0, 8], sizes = [8, 8], strides = [1, 1]} : vector<8x96xbf16> to vector<8x8xbf16>
    %49 = vector.extract_strided_slice %6 {offsets = [0, 40], sizes = [8, 8], strides = [1, 1]} : vector<8x96xbf16> to vector<8x8xbf16>
    %50 = vector.extract_strided_slice %6 {offsets = [0, 72], sizes = [8, 8], strides = [1, 1]} : vector<8x96xbf16> to vector<8x8xbf16>
    %cst_31 = arith.constant dense<0.000000e+00> : vector<8x8xf32>
    %51 = tpu.matmul %48, %49, %cst_31 {dimension_numbers = #tpu.dot_dimension_numbers<[1], [1], [0], [0], [0, 0, 1, 0], [], []>} : vector<8x8xbf16>, vector<8x8xbf16>, vector<8x8xf32> -> vector<8x8xf32>
    %cst_32 = arith.constant 0.353553385 : f32
    %52 = vector.broadcast %cst_32 : f32 to vector<8x8xf32>
    %53 = arith.mulf %51, %52 : vector<8x8xf32>
    %c0_i32_33 = arith.constant 0 : i32
    %54 = vector.broadcast %c0_i32_33 : i32 to vector<8x8xi32>
    %55 = arith.cmpi eq, %8, %54 : vector<8x8xi32>
    %cst_34 = arith.constant -1.000000e+04 : f32
    %56 = vector.broadcast %cst_34 : f32 to vector<8x8xf32>
    %57 = arith.select %55, %56, %53 : vector<8x8xi1>, vector<8x8xf32>
    %c1 = arith.constant 1 : index
    %c0_35 = arith.constant 0 : index
    %c0_36 = arith.constant 0 : index
    %58 = vector.load %arg6[%c1, %c0_35, %c0_36] : memref<4x8x1xf32, #tpu.memory_space<vmem>>, vector<1x8x1xf32>
    %59 = vector.shape_cast %58 : vector<1x8x1xf32> to vector<8x1xf32>
    %cst_37 = arith.constant dense<0xFF800000> : vector<8xf32>
    %60 = vector.multi_reduction <maximumf>, %57, %cst_37 [1] : vector<8x8xf32> to vector<8xf32>
    %61 = vector.shape_cast %60 : vector<8xf32> to vector<8x1xf32>
    %62 = arith.maximumf %59, %61 : vector<8x1xf32>
    %63 = arith.subf %59, %62 : vector<8x1xf32>
    %64 = math.exp %63 : vector<8x1xf32>
    %65 = vector.broadcast %62 : vector<8x1xf32> to vector<8x8xf32>
    %66 = arith.subf %57, %65 : vector<8x8xf32>
    %67 = math.exp %66 : vector<8x8xf32>
    %c1_38 = arith.constant 1 : index
    %c0_39 = arith.constant 0 : index
    %c0_40 = arith.constant 0 : index
    %68 = vector.load %arg7[%c1_38, %c0_39, %c0_40] : memref<4x8x1xf32, #tpu.memory_space<vmem>>, vector<1x8x1xf32>
    %69 = vector.shape_cast %68 : vector<1x8x1xf32> to vector<8x1xf32>
    %70 = arith.mulf %64, %69 : vector<8x1xf32>
    %cst_41 = arith.constant dense<0.000000e+00> : vector<8xf32>
    %71 = vector.multi_reduction <add>, %67, %cst_41 [1] : vector<8x8xf32> to vector<8xf32>
    %72 = vector.shape_cast %71 : vector<8xf32> to vector<8x1xf32>
    %73 = arith.addf %70, %72 : vector<8x1xf32>
    %c1_42 = arith.constant 1 : index
    %c0_43 = arith.constant 0 : index
    %c0_44 = arith.constant 0 : index
    %74 = vector.load %arg7[%c1_42, %c0_43, %c0_44] : memref<4x8x1xf32, #tpu.memory_space<vmem>>, vector<1x8x1xf32>
    %75 = vector.shape_cast %74 : vector<1x8x1xf32> to vector<8x1xf32>
    %76 = vector.shape_cast %73 : vector<8x1xf32> to vector<1x8x1xf32>
    tpu.vector_store %arg7[%c1_42, %c0_43, %c0_44], %76 {strides = array<i32>} : memref<4x8x1xf32, #tpu.memory_space<vmem>>, vector<1x8x1xf32>,
    %c0_45 = arith.constant 0 : index
    %c8 = arith.constant 8 : index
    %77 = vector.load %arg8[%c0_45, %c8] : memref<8x32xf32, #tpu.memory_space<vmem>>, vector<8x8xf32>
    %78 = vector.broadcast %64 : vector<8x1xf32> to vector<8x8xf32>
    %79 = arith.mulf %78, %77 : vector<8x8xf32>
    %80 = arith.truncf %67 : vector<8x8xf32> to vector<8x8xbf16>
    %cst_46 = arith.constant dense<0.000000e+00> : vector<8x8xf32>
    %81 = tpu.matmul %80, %50, %cst_46 {dimension_numbers = #tpu.dot_dimension_numbers<[1], [0], [0], [1], [0, 0, 1, 1], [], []>} : vector<8x8xbf16>, vector<8x8xbf16>, vector<8x8xf32> -> vector<8x8xf32>
    %82 = arith.addf %79, %81 : vector<8x8xf32>
    %c0_47 = arith.constant 0 : index
    %c8_48 = arith.constant 8 : index
    %83 = vector.load %arg8[%c0_47, %c8_48] : memref<8x32xf32, #tpu.memory_space<vmem>>, vector<8x8xf32>
    tpu.vector_store %arg8[%c0_47, %c8_48], %82 {strides = array<i32>} : memref<8x32xf32, #tpu.memory_space<vmem>>, vector<8x8xf32>,
    %c1_49 = arith.constant 1 : index
    %c0_50 = arith.constant 0 : index
    %c0_51 = arith.constant 0 : index
    %84 = vector.load %arg6[%c1_49, %c0_50, %c0_51] : memref<4x8x1xf32, #tpu.memory_space<vmem>>, vector<1x8x1xf32>
    %85 = vector.shape_cast %84 : vector<1x8x1xf32> to vector<8x1xf32>
    %86 = vector.shape_cast %62 : vector<8x1xf32> to vector<1x8x1xf32>
    tpu.vector_store %arg6[%c1_49, %c0_50, %c0_51], %86 {strides = array<i32>} : memref<4x8x1xf32, #tpu.memory_space<vmem>>, vector<1x8x1xf32>,
    %87 = vector.extract_strided_slice %4 {offsets = [0, 16], sizes = [8, 8], strides = [1, 1]} : vector<8x96xbf16> to vector<8x8xbf16>
    %88 = vector.extract_strided_slice %6 {offsets = [0, 48], sizes = [8, 8], strides = [1, 1]} : vector<8x96xbf16> to vector<8x8xbf16>
    %89 = vector.extract_strided_slice %6 {offsets = [0, 80], sizes = [8, 8], strides = [1, 1]} : vector<8x96xbf16> to vector<8x8xbf16>
    %cst_52 = arith.constant dense<0.000000e+00> : vector<8x8xf32>
    %90 = tpu.matmul %87, %88, %cst_52 {dimension_numbers = #tpu.dot_dimension_numbers<[1], [1], [0], [0], [0, 0, 1, 0], [], []>} : vector<8x8xbf16>, vector<8x8xbf16>, vector<8x8xf32> -> vector<8x8xf32>
    %cst_53 = arith.constant 0.353553385 : f32
    %91 = vector.broadcast %cst_53 : f32 to vector<8x8xf32>
    %92 = arith.mulf %90, %91 : vector<8x8xf32>
    %c0_i32_54 = arith.constant 0 : i32
    %93 = vector.broadcast %c0_i32_54 : i32 to vector<8x8xi32>
    %94 = arith.cmpi eq, %8, %93 : vector<8x8xi32>
    %cst_55 = arith.constant -1.000000e+04 : f32
    %95 = vector.broadcast %cst_55 : f32 to vector<8x8xf32>
    %96 = arith.select %94, %95, %92 : vector<8x8xi1>, vector<8x8xf32>
    %c2 = arith.constant 2 : index
    %c0_56 = arith.constant 0 : index
    %c0_57 = arith.constant 0 : index
    %97 = vector.load %arg6[%c2, %c0_56, %c0_57] : memref<4x8x1xf32, #tpu.memory_space<vmem>>, vector<1x8x1xf32>
    %98 = vector.shape_cast %97 : vector<1x8x1xf32> to vector<8x1xf32>
    %cst_58 = arith.constant dense<0xFF800000> : vector<8xf32>
    %99 = vector.multi_reduction <maximumf>, %96, %cst_58 [1] : vector<8x8xf32> to vector<8xf32>
    %100 = vector.shape_cast %99 : vector<8xf32> to vector<8x1xf32>
    %101 = arith.maximumf %98, %100 : vector<8x1xf32>
    %102 = arith.subf %98, %101 : vector<8x1xf32>
    %103 = math.exp %102 : vector<8x1xf32>
    %104 = vector.broadcast %101 : vector<8x1xf32> to vector<8x8xf32>
    %105 = arith.subf %96, %104 : vector<8x8xf32>
    %106 = math.exp %105 : vector<8x8xf32>
    %c2_59 = arith.constant 2 : index
    %c0_60 = arith.constant 0 : index
    %c0_61 = arith.constant 0 : index
    %107 = vector.load %arg7[%c2_59, %c0_60, %c0_61] : memref<4x8x1xf32, #tpu.memory_space<vmem>>, vector<1x8x1xf32>
    %108 = vector.shape_cast %107 : vector<1x8x1xf32> to vector<8x1xf32>
    %109 = arith.mulf %103, %108 : vector<8x1xf32>
    %cst_62 = arith.constant dense<0.000000e+00> : vector<8xf32>
    %110 = vector.multi_reduction <add>, %106, %cst_62 [1] : vector<8x8xf32> to vector<8xf32>
    %111 = vector.shape_cast %110 : vector<8xf32> to vector<8x1xf32>
    %112 = arith.addf %109, %111 : vector<8x1xf32>
    %c2_63 = arith.constant 2 : index
    %c0_64 = arith.constant 0 : index
    %c0_65 = arith.constant 0 : index
    %113 = vector.load %arg7[%c2_63, %c0_64, %c0_65] : memref<4x8x1xf32, #tpu.memory_space<vmem>>, vector<1x8x1xf32>
    %114 = vector.shape_cast %113 : vector<1x8x1xf32> to vector<8x1xf32>
    %115 = vector.shape_cast %112 : vector<8x1xf32> to vector<1x8x1xf32>
    tpu.vector_store %arg7[%c2_63, %c0_64, %c0_65], %115 {strides = array<i32>} : memref<4x8x1xf32, #tpu.memory_space<vmem>>, vector<1x8x1xf32>,
    %c0_66 = arith.constant 0 : index
    %c16 = arith.constant 16 : index
    %116 = vector.load %arg8[%c0_66, %c16] : memref<8x32xf32, #tpu.memory_space<vmem>>, vector<8x8xf32>
    %117 = vector.broadcast %103 : vector<8x1xf32> to vector<8x8xf32>
    %118 = arith.mulf %117, %116 : vector<8x8xf32>
    %119 = arith.truncf %106 : vector<8x8xf32> to vector<8x8xbf16>
    %cst_67 = arith.constant dense<0.000000e+00> : vector<8x8xf32>
    %120 = tpu.matmul %119, %89, %cst_67 {dimension_numbers = #tpu.dot_dimension_numbers<[1], [0], [0], [1], [0, 0, 1, 1], [], []>} : vector<8x8xbf16>, vector<8x8xbf16>, vector<8x8xf32> -> vector<8x8xf32>
    %121 = arith.addf %118, %120 : vector<8x8xf32>
    %c0_68 = arith.constant 0 : index
    %c16_69 = arith.constant 16 : index
    %122 = vector.load %arg8[%c0_68, %c16_69] : memref<8x32xf32, #tpu.memory_space<vmem>>, vector<8x8xf32>
    tpu.vector_store %arg8[%c0_68, %c16_69], %121 {strides = array<i32>} : memref<8x32xf32, #tpu.memory_space<vmem>>, vector<8x8xf32>,
    %c2_70 = arith.constant 2 : index
    %c0_71 = arith.constant 0 : index
    %c0_72 = arith.constant 0 : index
    %123 = vector.load %arg6[%c2_70, %c0_71, %c0_72] : memref<4x8x1xf32, #tpu.memory_space<vmem>>, vector<1x8x1xf32>
    %124 = vector.shape_cast %123 : vector<1x8x1xf32> to vector<8x1xf32>
    %125 = vector.shape_cast %101 : vector<8x1xf32> to vector<1x8x1xf32>
    tpu.vector_store %arg6[%c2_70, %c0_71, %c0_72], %125 {strides = array<i32>} : memref<4x8x1xf32, #tpu.memory_space<vmem>>, vector<1x8x1xf32>,
    %126 = vector.extract_strided_slice %4 {offsets = [0, 24], sizes = [8, 8], strides = [1, 1]} : vector<8x96xbf16> to vector<8x8xbf16>
    %127 = vector.extract_strided_slice %6 {offsets = [0, 56], sizes = [8, 8], strides = [1, 1]} : vector<8x96xbf16> to vector<8x8xbf16>
    %128 = vector.extract_strided_slice %6 {offsets = [0, 88], sizes = [8, 8], strides = [1, 1]} : vector<8x96xbf16> to vector<8x8xbf16>
    %cst_73 = arith.constant dense<0.000000e+00> : vector<8x8xf32>
    %129 = tpu.matmul %126, %127, %cst_73 {dimension_numbers = #tpu.dot_dimension_numbers<[1], [1], [0], [0], [0, 0, 1, 0], [], []>} : vector<8x8xbf16>, vector<8x8xbf16>, vector<8x8xf32> -> vector<8x8xf32>
    %cst_74 = arith.constant 0.353553385 : f32
    %130 = vector.broadcast %cst_74 : f32 to vector<8x8xf32>
    %131 = arith.mulf %129, %130 : vector<8x8xf32>
    %c0_i32_75 = arith.constant 0 : i32
    %132 = vector.broadcast %c0_i32_75 : i32 to vector<8x8xi32>
    %133 = arith.cmpi eq, %8, %132 : vector<8x8xi32>
    %cst_76 = arith.constant -1.000000e+04 : f32
    %134 = vector.broadcast %cst_76 : f32 to vector<8x8xf32>
    %135 = arith.select %133, %134, %131 : vector<8x8xi1>, vector<8x8xf32>
    %c3 = arith.constant 3 : index
    %c0_77 = arith.constant 0 : index
    %c0_78 = arith.constant 0 : index
    %136 = vector.load %arg6[%c3, %c0_77, %c0_78] : memref<4x8x1xf32, #tpu.memory_space<vmem>>, vector<1x8x1xf32>
    %137 = vector.shape_cast %136 : vector<1x8x1xf32> to vector<8x1xf32>
    %cst_79 = arith.constant dense<0xFF800000> : vector<8xf32>
    %138 = vector.multi_reduction <maximumf>, %135, %cst_79 [1] : vector<8x8xf32> to vector<8xf32>
    %139 = vector.shape_cast %138 : vector<8xf32> to vector<8x1xf32>
    %140 = arith.maximumf %137, %139 : vector<8x1xf32>
    %141 = arith.subf %137, %140 : vector<8x1xf32>
    %142 = math.exp %141 : vector<8x1xf32>
    %143 = vector.broadcast %140 : vector<8x1xf32> to vector<8x8xf32>
    %144 = arith.subf %135, %143 : vector<8x8xf32>
    %145 = math.exp %144 : vector<8x8xf32>
    %c3_80 = arith.constant 3 : index
    %c0_81 = arith.constant 0 : index
    %c0_82 = arith.constant 0 : index
    %146 = vector.load %arg7[%c3_80, %c0_81, %c0_82] : memref<4x8x1xf32, #tpu.memory_space<vmem>>, vector<1x8x1xf32>
    %147 = vector.shape_cast %146 : vector<1x8x1xf32> to vector<8x1xf32>
    %148 = arith.mulf %142, %147 : vector<8x1xf32>
    %cst_83 = arith.constant dense<0.000000e+00> : vector<8xf32>
    %149 = vector.multi_reduction <add>, %145, %cst_83 [1] : vector<8x8xf32> to vector<8xf32>
    %150 = vector.shape_cast %149 : vector<8xf32> to vector<8x1xf32>
    %151 = arith.addf %148, %150 : vector<8x1xf32>
    %c3_84 = arith.constant 3 : index
    %c0_85 = arith.constant 0 : index
    %c0_86 = arith.constant 0 : index
    %152 = vector.load %arg7[%c3_84, %c0_85, %c0_86] : memref<4x8x1xf32, #tpu.memory_space<vmem>>, vector<1x8x1xf32>
    %153 = vector.shape_cast %152 : vector<1x8x1xf32> to vector<8x1xf32>
    %154 = vector.shape_cast %151 : vector<8x1xf32> to vector<1x8x1xf32>
    tpu.vector_store %arg7[%c3_84, %c0_85, %c0_86], %154 {strides = array<i32>} : memref<4x8x1xf32, #tpu.memory_space<vmem>>, vector<1x8x1xf32>,
    %c0_87 = arith.constant 0 : index
    %c24 = arith.constant 24 : index
    %155 = vector.load %arg8[%c0_87, %c24] : memref<8x32xf32, #tpu.memory_space<vmem>>, vector<8x8xf32>
    %156 = vector.broadcast %142 : vector<8x1xf32> to vector<8x8xf32>
    %157 = arith.mulf %156, %155 : vector<8x8xf32>
    %158 = arith.truncf %145 : vector<8x8xf32> to vector<8x8xbf16>
    %cst_88 = arith.constant dense<0.000000e+00> : vector<8x8xf32>
    %159 = tpu.matmul %158, %128, %cst_88 {dimension_numbers = #tpu.dot_dimension_numbers<[1], [0], [0], [1], [0, 0, 1, 1], [], []>} : vector<8x8xbf16>, vector<8x8xbf16>, vector<8x8xf32> -> vector<8x8xf32>
    %160 = arith.addf %157, %159 : vector<8x8xf32>
    %c0_89 = arith.constant 0 : index
    %c24_90 = arith.constant 24 : index
    %161 = vector.load %arg8[%c0_89, %c24_90] : memref<8x32xf32, #tpu.memory_space<vmem>>, vector<8x8xf32>
    tpu.vector_store %arg8[%c0_89, %c24_90], %160 {strides = array<i32>} : memref<8x32xf32, #tpu.memory_space<vmem>>, vector<8x8xf32>,
    %c3_91 = arith.constant 3 : index
    %c0_92 = arith.constant 0 : index
    %c0_93 = arith.constant 0 : index
    %162 = vector.load %arg6[%c3_91, %c0_92, %c0_93] : memref<4x8x1xf32, #tpu.memory_space<vmem>>, vector<1x8x1xf32>
    %163 = vector.shape_cast %162 : vector<1x8x1xf32> to vector<8x1xf32>
    %164 = vector.shape_cast %140 : vector<8x1xf32> to vector<1x8x1xf32>
    tpu.vector_store %arg6[%c3_91, %c0_92, %c0_93], %164 {strides = array<i32>} : memref<4x8x1xf32, #tpu.memory_space<vmem>>, vector<1x8x1xf32>,
    %c0_i32_94 = arith.constant 0 : i32
    %165 = arith.cmpi eq, %arg1, %c0_i32_94 : i32
    %166 = arith.extui %165 : i1 to i32
    %c0_i32_95 = arith.constant 0 : i32
    %167 = arith.cmpi ne, %166, %c0_i32_95 : i32
    scf.if %167 {
      %c0_96 = arith.constant 0 : index
      %c0_97 = arith.constant 0 : index
      %c0_98 = arith.constant 0 : index
      %168 = vector.load %arg7[%c0_96, %c0_97, %c0_98] : memref<4x8x1xf32, #tpu.memory_space<vmem>>, vector<1x8x1xf32>
      %169 = vector.shape_cast %168 : vector<1x8x1xf32> to vector<8x1xf32>
      %170 = tpu.reciprocal %169 {approx = true} : vector<8x1xf32> -> vector<8x1xf32>
      %c0_99 = arith.constant 0 : index
      %c0_100 = arith.constant 0 : index
      %171 = vector.load %arg8[%c0_99, %c0_100] : memref<8x32xf32, #tpu.memory_space<vmem>>, vector<8x8xf32>
      %172 = vector.broadcast %170 : vector<8x1xf32> to vector<8x8xf32>
      %173 = arith.mulf %171, %172 : vector<8x8xf32>
      %c0_101 = arith.constant 0 : index
      %c0_102 = arith.constant 0 : index
      %174 = vector.load %arg8[%c0_101, %c0_102] : memref<8x32xf32, #tpu.memory_space<vmem>>, vector<8x8xf32>
      tpu.vector_store %arg8[%c0_101, %c0_102], %173 {strides = array<i32>} : memref<8x32xf32, #tpu.memory_space<vmem>>, vector<8x8xf32>,
      %c1_103 = arith.constant 1 : index
      %c0_104 = arith.constant 0 : index
      %c0_105 = arith.constant 0 : index
      %175 = vector.load %arg7[%c1_103, %c0_104, %c0_105] : memref<4x8x1xf32, #tpu.memory_space<vmem>>, vector<1x8x1xf32>
      %176 = vector.shape_cast %175 : vector<1x8x1xf32> to vector<8x1xf32>
      %177 = tpu.reciprocal %176 {approx = true} : vector<8x1xf32> -> vector<8x1xf32>
      %c0_106 = arith.constant 0 : index
      %c8_107 = arith.constant 8 : index
      %178 = vector.load %arg8[%c0_106, %c8_107] : memref<8x32xf32, #tpu.memory_space<vmem>>, vector<8x8xf32>
      %179 = vector.broadcast %177 : vector<8x1xf32> to vector<8x8xf32>
      %180 = arith.mulf %178, %179 : vector<8x8xf32>
      %c0_108 = arith.constant 0 : index
      %c8_109 = arith.constant 8 : index
      %181 = vector.load %arg8[%c0_108, %c8_109] : memref<8x32xf32, #tpu.memory_space<vmem>>, vector<8x8xf32>
      tpu.vector_store %arg8[%c0_108, %c8_109], %180 {strides = array<i32>} : memref<8x32xf32, #tpu.memory_space<vmem>>, vector<8x8xf32>,
      %c2_110 = arith.constant 2 : index
      %c0_111 = arith.constant 0 : index
      %c0_112 = arith.constant 0 : index
      %182 = vector.load %arg7[%c2_110, %c0_111, %c0_112] : memref<4x8x1xf32, #tpu.memory_space<vmem>>, vector<1x8x1xf32>
      %183 = vector.shape_cast %182 : vector<1x8x1xf32> to vector<8x1xf32>
      %184 = tpu.reciprocal %183 {approx = true} : vector<8x1xf32> -> vector<8x1xf32>
      %c0_113 = arith.constant 0 : index
      %c16_114 = arith.constant 16 : index
      %185 = vector.load %arg8[%c0_113, %c16_114] : memref<8x32xf32, #tpu.memory_space<vmem>>, vector<8x8xf32>
      %186 = vector.broadcast %184 : vector<8x1xf32> to vector<8x8xf32>
      %187 = arith.mulf %185, %186 : vector<8x8xf32>
      %c0_115 = arith.constant 0 : index
      %c16_116 = arith.constant 16 : index
      %188 = vector.load %arg8[%c0_115, %c16_116] : memref<8x32xf32, #tpu.memory_space<vmem>>, vector<8x8xf32>
      tpu.vector_store %arg8[%c0_115, %c16_116], %187 {strides = array<i32>} : memref<8x32xf32, #tpu.memory_space<vmem>>, vector<8x8xf32>,
      %c3_117 = arith.constant 3 : index
      %c0_118 = arith.constant 0 : index
      %c0_119 = arith.constant 0 : index
      %189 = vector.load %arg7[%c3_117, %c0_118, %c0_119] : memref<4x8x1xf32, #tpu.memory_space<vmem>>, vector<1x8x1xf32>
      %190 = vector.shape_cast %189 : vector<1x8x1xf32> to vector<8x1xf32>
      %191 = tpu.reciprocal %190 {approx = true} : vector<8x1xf32> -> vector<8x1xf32>
      %c0_120 = arith.constant 0 : index
      %c24_121 = arith.constant 24 : index
      %192 = vector.load %arg8[%c0_120, %c24_121] : memref<8x32xf32, #tpu.memory_space<vmem>>, vector<8x8xf32>
      %193 = vector.broadcast %191 : vector<8x1xf32> to vector<8x8xf32>
      %194 = arith.mulf %192, %193 : vector<8x8xf32>
      %c0_122 = arith.constant 0 : index
      %c24_123 = arith.constant 24 : index
      %195 = vector.load %arg8[%c0_122, %c24_123] : memref<8x32xf32, #tpu.memory_space<vmem>>, vector<8x8xf32>
      tpu.vector_store %arg8[%c0_122, %c24_123], %194 {strides = array<i32>} : memref<8x32xf32, #tpu.memory_space<vmem>>, vector<8x8xf32>,
      %c0_124 = arith.constant 0 : index
      %c0_125 = arith.constant 0 : index
      %196 = vector.load %arg8[%c0_124, %c0_125] : memref<8x32xf32, #tpu.memory_space<vmem>>, vector<8x32xf32>
      %197 = arith.truncf %196 : vector<8x32xf32> to vector<8x32xbf16>
      %c0_126 = arith.constant 0 : index
      %c0_127 = arith.constant 0 : index
      %c0_128 = arith.constant 0 : index
      %198 = vector.load %arg5[%c0_126, %c0_127, %c0_128] : memref<1x8x32xbf16, #tpu.memory_space<vmem>>, vector<1x8x32xbf16>
      %199 = vector.shape_cast %198 : vector<1x8x32xbf16> to vector<8x32xbf16>
      %200 = vector.shape_cast %197 : vector<8x32xbf16> to vector<1x8x32xbf16>
      tpu.vector_store %arg5[%c0_126, %c0_127, %c0_128], %200 {strides = array<i32>} : memref<1x8x32xbf16, #tpu.memory_space<vmem>>, vector<1x8x32xbf16>,
    } else {
    }
    return
  }
  func.func @transform_0(%arg0: i32, %arg1: i32) -> (i32, i32, i32) {
    %c0_i32 = arith.constant 0 : i32
    %c0_i32_0 = arith.constant 0 : i32
    %c0_i32_1 = arith.constant 0 : i32
    return %arg0, %c0_i32, %c0_i32_0 : i32, i32, i32
  }
  func.func @transform_1(%arg0: i32, %arg1: i32) -> (i32, i32, i32) {
    %c0_i32 = arith.constant 0 : i32
    %c0_i32_0 = arith.constant 0 : i32
    return %arg0, %arg1, %c0_i32 : i32, i32, i32
  }
  func.func @transform_2(%arg0: i32, %arg1: i32) -> (i32, i32, i32) {
    %c0_i32 = arith.constant 0 : i32
    %c0_i32_0 = arith.constant 0 : i32
    return %arg0, %c0_i32, %arg1 : i32, i32, i32
  }
  func.func @transform_3(%arg0: i32, %arg1: i32) -> (i32, i32, i32) {
    %c0_i32 = arith.constant 0 : i32
    %c0_i32_0 = arith.constant 0 : i32
    %c0_i32_1 = arith.constant 0 : i32
    return %arg0, %c0_i32, %c0_i32_0 : i32, i32, i32
  }
}

module attributes {stable_mosaic.version = 11 : i64} {
  func.func @_linear_kernel(%arg0: i32, %arg1: i32, %arg2: i32, %arg3: memref<16x32xbf16, #tpu.memory_space<vmem>>, %arg4: memref<32x32xbf16, #tpu.memory_space<vmem>>, %arg5: memref<1x32xf32, #tpu.memory_space<vmem>>, %arg6: memref<16x32xbf16, #tpu.memory_space<vmem>>, %arg7: memref<16x32xf32, #tpu.memory_space<vmem>>) attributes {dimension_semantics = [#tpu.dimension_semantics<parallel>, #tpu.dimension_semantics<parallel>, #tpu.dimension_semantics<arbitrary>], iteration_bounds = array<i64: 1, 1, 1>, scalar_prefetch = 0 : i64, scratch_operands = 1 : i64, tpu.core_type = #tpu.core_type<tc>, window_params = [{transform_indices = @transform_0, window_bounds = array<i64: 16, 32>}, {transform_indices = @transform_1, window_bounds = array<i64: 32, 32>}, {transform_indices = @transform_2, window_bounds = array<i64: 1, 32>}, {transform_indices = @transform_3, window_bounds = array<i64: 16, 32>}]} {
    %c0_i32 = arith.constant 0 : i32
    %0 = arith.cmpi eq, %arg2, %c0_i32 : i32
    %1 = arith.extui %0 : i1 to i32
    %c0_i32_0 = arith.constant 0 : i32
    %2 = arith.cmpi ne, %1, %c0_i32_0 : i32
    scf.if %2 {
      %cst_10 = arith.constant 0.000000e+00 : f32
      %12 = vector.broadcast %cst_10 : f32 to vector<16x32xf32>
      %c0_11 = arith.constant 0 : index
      %c0_12 = arith.constant 0 : index
      %13 = vector.load %arg7[%c0_11, %c0_12] : memref<16x32xf32, #tpu.memory_space<vmem>>, vector<16x32xf32>
      tpu.vector_store %arg7[%c0_11, %c0_12], %12 {strides = array<i32>} : memref<16x32xf32, #tpu.memory_space<vmem>>, vector<16x32xf32>,
    } else {
    }
    %c0 = arith.constant 0 : index
    %c0_1 = arith.constant 0 : index
    %3 = vector.load %arg7[%c0, %c0_1] : memref<16x32xf32, #tpu.memory_space<vmem>>, vector<16x32xf32>
    %c0_2 = arith.constant 0 : index
    %c0_3 = arith.constant 0 : index
    %4 = vector.load %arg3[%c0_2, %c0_3] : memref<16x32xbf16, #tpu.memory_space<vmem>>, vector<16x32xbf16>
    %c0_4 = arith.constant 0 : index
    %c0_5 = arith.constant 0 : index
    %5 = vector.load %arg4[%c0_4, %c0_5] : memref<32x32xbf16, #tpu.memory_space<vmem>>, vector<32x32xbf16>
    %cst = arith.constant dense<0.000000e+00> : vector<16x32xf32>
    %6 = tpu.matmul %4, %5, %cst {dimension_numbers = #tpu.dot_dimension_numbers<[1], [0], [0], [1], [0, 0, 1, 1], [], []>} : vector<16x32xbf16>, vector<32x32xbf16>, vector<16x32xf32> -> vector<16x32xf32>
    %7 = arith.addf %3, %6 : vector<16x32xf32>
    %c0_6 = arith.constant 0 : index
    %c0_7 = arith.constant 0 : index
    %8 = vector.load %arg7[%c0_6, %c0_7] : memref<16x32xf32, #tpu.memory_space<vmem>>, vector<16x32xf32>
    tpu.vector_store %arg7[%c0_6, %c0_7], %7 {strides = array<i32>} : memref<16x32xf32, #tpu.memory_space<vmem>>, vector<16x32xf32>,
    %c0_i32_8 = arith.constant 0 : i32
    %9 = arith.cmpi eq, %arg2, %c0_i32_8 : i32
    %10 = arith.extui %9 : i1 to i32
    %c0_i32_9 = arith.constant 0 : i32
    %11 = arith.cmpi ne, %10, %c0_i32_9 : i32
    scf.if %11 {
      %c0_10 = arith.constant 0 : index
      %c0_11 = arith.constant 0 : index
      %12 = vector.load %arg7[%c0_10, %c0_11] : memref<16x32xf32, #tpu.memory_space<vmem>>, vector<16x32xf32>
      %c0_12 = arith.constant 0 : index
      %c0_13 = arith.constant 0 : index
      %13 = vector.load %arg5[%c0_12, %c0_13] : memref<1x32xf32, #tpu.memory_space<vmem>>, vector<1x32xf32>
      %14 = vector.broadcast %13 : vector<1x32xf32> to vector<16x32xf32>
      %15 = arith.addf %12, %14 : vector<16x32xf32>
      %16 = arith.truncf %15 : vector<16x32xf32> to vector<16x32xbf16>
      %c0_14 = arith.constant 0 : index
      %c0_15 = arith.constant 0 : index
      %17 = vector.load %arg6[%c0_14, %c0_15] : memref<16x32xbf16, #tpu.memory_space<vmem>>, vector<16x32xbf16>
      tpu.vector_store %arg6[%c0_14, %c0_15], %16 {strides = array<i32>} : memref<16x32xbf16, #tpu.memory_space<vmem>>, vector<16x32xbf16>,
    } else {
    }
    return
  }
  func.func @transform_0(%arg0: i32, %arg1: i32, %arg2: i32) -> (i32, i32) {
    %c0_i32 = arith.constant 0 : i32
    return %arg0, %arg2 : i32, i32
  }
  func.func @transform_1(%arg0: i32, %arg1: i32, %arg2: i32) -> (i32, i32) {
    %c0_i32 = arith.constant 0 : i32
    return %arg2, %arg1 : i32, i32
  }
  func.func @transform_2(%arg0: i32, %arg1: i32, %arg2: i32) -> (i32, i32) {
    %c0_i32 = arith.constant 0 : i32
    %c0_i32_0 = arith.constant 0 : i32
    return %c0_i32, %arg1 : i32, i32
  }
  func.func @transform_3(%arg0: i32, %arg1: i32, %arg2: i32) -> (i32, i32) {
    %c0_i32 = arith.constant 0 : i32
    return %arg0, %arg1 : i32, i32
  }
}

module attributes {stable_mosaic.version = 11 : i64} {
  func.func @_flash_attn_kernel(%arg0: i32, %arg1: i32, %arg2: memref<1x8x32xbf16, #tpu.memory_space<vmem>>, %arg3: memref<1x8x64xbf16, #tpu.memory_space<vmem>>, %arg4: memref<1x1x8xi32, #tpu.memory_space<vmem>>, %arg5: memref<1x8x32xbf16, #tpu.memory_space<vmem>>, %arg6: memref<4x8x1xf32, #tpu.memory_space<vmem>>, %arg7: memref<4x8x1xf32, #tpu.memory_space<vmem>>, %arg8: memref<8x32xf32, #tpu.memory_space<vmem>>) attributes {dimension_semantics = [#tpu.dimension_semantics<parallel>, #tpu.dimension_semantics<arbitrary>], iteration_bounds = array<i64: 2, 1>, scalar_prefetch = 0 : i64, scratch_operands = 3 : i64, tpu.core_type = #tpu.core_type<tc>, window_params = [{transform_indices = @transform_0, window_bounds = array<i64: 1, 8, 32>}, {transform_indices = @transform_1, window_bounds = array<i64: 1, 8, 64>}, {transform_indices = @transform_2, window_bounds = array<i64: 1, 1, 8>}, {transform_indices = @transform_3, window_bounds = array<i64: 1, 8, 32>}]} {
    %c0_i32 = arith.constant 0 : i32
    %0 = arith.cmpi eq, %arg1, %c0_i32 : i32
    %1 = arith.extui %0 : i1 to i32
    %c0_i32_0 = arith.constant 0 : i32
    %2 = arith.cmpi ne, %1, %c0_i32_0 : i32
    scf.if %2 {
      %cst_96 = arith.constant -1.000000e+30 : f32
      %176 = vector.broadcast %cst_96 : f32 to vector<4x8x1xf32>
      %c0_97 = arith.constant 0 : index
      %c0_98 = arith.constant 0 : index
      %c0_99 = arith.constant 0 : index
      %177 = vector.load %arg6[%c0_97, %c0_98, %c0_99] : memref<4x8x1xf32, #tpu.memory_space<vmem>>, vector<4x8x1xf32>
      tpu.vector_store %arg6[%c0_97, %c0_98, %c0_99], %176 {strides = array<i32>} : memref<4x8x1xf32, #tpu.memory_space<vmem>>, vector<4x8x1xf32>,
      %cst_100 = arith.constant 0.000000e+00 : f32
      %178 = vector.broadcast %cst_100 : f32 to vector<4x8x1xf32>
      %c0_101 = arith.constant 0 : index
      %c0_102 = arith.constant 0 : index
      %c0_103 = arith.constant 0 : index
      %179 = vector.load %arg7[%c0_101, %c0_102, %c0_103] : memref<4x8x1xf32, #tpu.memory_space<vmem>>, vector<4x8x1xf32>
      tpu.vector_store %arg7[%c0_101, %c0_102, %c0_103], %178 {strides = array<i32>} : memref<4x8x1xf32, #tpu.memory_space<vmem>>, vector<4x8x1xf32>,
      %cst_104 = arith.constant 0.000000e+00 : f32
      %180 = vector.broadcast %cst_104 : f32 to vector<8x32xf32>
      %c0_105 = arith.constant 0 : index
      %c0_106 = arith.constant 0 : index
      %181 = vector.load %arg8[%c0_105, %c0_106] : memref<8x32xf32, #tpu.memory_space<vmem>>, vector<8x32xf32>
      tpu.vector_store %arg8[%c0_105, %c0_106], %180 {strides = array<i32>} : memref<8x32xf32, #tpu.memory_space<vmem>>, vector<8x32xf32>,
    } else {
    }
    %c0 = arith.constant 0 : index
    %c0_1 = arith.constant 0 : index
    %c0_2 = arith.constant 0 : index
    %3 = vector.load %arg2[%c0, %c0_1, %c0_2] : memref<1x8x32xbf16, #tpu.memory_space<vmem>>, vector<1x8x32xbf16>
    %4 = vector.shape_cast %3 : vector<1x8x32xbf16> to vector<8x32xbf16>
    %c0_3 = arith.constant 0 : index
    %c0_4 = arith.constant 0 : index
    %c0_5 = arith.constant 0 : index
    %5 = vector.load %arg3[%c0_3, %c0_4, %c0_5] : memref<1x8x64xbf16, #tpu.memory_space<vmem>>, vector<1x8x64xbf16>
    %6 = vector.shape_cast %5 : vector<1x8x64xbf16> to vector<8x64xbf16>
    %c0_6 = arith.constant 0 : index
    %c0_7 = arith.constant 0 : index
    %c0_8 = arith.constant 0 : index
    %7 = vector.load %arg4[%c0_6, %c0_7, %c0_8] : memref<1x1x8xi32, #tpu.memory_space<vmem>>, vector<1x1x8xi32>
    %8 = vector.shape_cast %7 : vector<1x1x8xi32> to vector<1x8xi32>
    %9 = vector.extract_strided_slice %4 {offsets = [0, 0], sizes = [8, 8], strides = [1, 1]} : vector<8x32xbf16> to vector<8x8xbf16>
    %10 = vector.extract_strided_slice %6 {offsets = [0, 0], sizes = [8, 8], strides = [1, 1]} : vector<8x64xbf16> to vector<8x8xbf16>
    %11 = vector.extract_strided_slice %6 {offsets = [0, 32], sizes = [8, 8], strides = [1, 1]} : vector<8x64xbf16> to vector<8x8xbf16>
    %cst = arith.constant dense<0.000000e+00> : vector<8x8xf32>
    %12 = tpu.matmul %9, %10, %cst {dimension_numbers = #tpu.dot_dimension_numbers<[1], [1], [0], [0], [0, 0, 1, 0], [], []>} : vector<8x8xbf16>, vector<8x8xbf16>, vector<8x8xf32> -> vector<8x8xf32>
    %cst_9 = arith.constant 0.353553385 : f32
    %13 = vector.broadcast %cst_9 : f32 to vector<8x8xf32>
    %14 = arith.mulf %12, %13 : vector<8x8xf32>
    %c0_i32_10 = arith.constant 0 : i32
    %15 = vector.broadcast %c0_i32_10 : i32 to vector<1x8xi32>
    %16 = arith.cmpi eq, %8, %15 : vector<1x8xi32>
    %cst_11 = arith.constant -1.000000e+04 : f32
    %17 = vector.shape_cast %16 : vector<1x8xi1> to vector<1x8xi1>
    %18 = vector.broadcast %17 : vector<1x8xi1> to vector<8x8xi1>
    %19 = vector.broadcast %cst_11 : f32 to vector<8x8xf32>
    %20 = arith.select %18, %19, %14 : vector<8x8xi1>, vector<8x8xf32>
    %c0_12 = arith.constant 0 : index
    %c0_13 = arith.constant 0 : index
    %c0_14 = arith.constant 0 : index
    %21 = vector.load %arg6[%c0_12, %c0_13, %c0_14] : memref<4x8x1xf32, #tpu.memory_space<vmem>>, vector<1x8x1xf32>
    %22 = vector.shape_cast %21 : vector<1x8x1xf32> to vector<8x1xf32>
    %cst_15 = arith.constant dense<0xFF800000> : vector<8xf32>
    %23 = vector.multi_reduction <maximumf>, %20, %cst_15 [1] : vector<8x8xf32> to vector<8xf32>
    %24 = vector.shape_cast %23 : vector<8xf32> to vector<8x1xf32>
    %25 = arith.maximumf %22, %24 : vector<8x1xf32>
    %26 = arith.subf %22, %25 : vector<8x1xf32>
    %27 = math.exp %26 : vector<8x1xf32>
    %28 = vector.broadcast %25 : vector<8x1xf32> to vector<8x8xf32>
    %29 = arith.subf %20, %28 : vector<8x8xf32>
    %30 = math.exp %29 : vector<8x8xf32>
    %c0_16 = arith.constant 0 : index
    %c0_17 = arith.constant 0 : index
    %c0_18 = arith.constant 0 : index
    %31 = vector.load %arg7[%c0_16, %c0_17, %c0_18] : memref<4x8x1xf32, #tpu.memory_space<vmem>>, vector<1x8x1xf32>
    %32 = vector.shape_cast %31 : vector<1x8x1xf32> to vector<8x1xf32>
    %33 = arith.mulf %27, %32 : vector<8x1xf32>
    %cst_19 = arith.constant dense<0.000000e+00> : vector<8xf32>
    %34 = vector.multi_reduction <add>, %30, %cst_19 [1] : vector<8x8xf32> to vector<8xf32>
    %35 = vector.shape_cast %34 : vector<8xf32> to vector<8x1xf32>
    %36 = arith.addf %33, %35 : vector<8x1xf32>
    %c0_20 = arith.constant 0 : index
    %c0_21 = arith.constant 0 : index
    %c0_22 = arith.constant 0 : index
    %37 = vector.load %arg7[%c0_20, %c0_21, %c0_22] : memref<4x8x1xf32, #tpu.memory_space<vmem>>, vector<1x8x1xf32>
    %38 = vector.shape_cast %37 : vector<1x8x1xf32> to vector<8x1xf32>
    %39 = vector.shape_cast %36 : vector<8x1xf32> to vector<1x8x1xf32>
    tpu.vector_store %arg7[%c0_20, %c0_21, %c0_22], %39 {strides = array<i32>} : memref<4x8x1xf32, #tpu.memory_space<vmem>>, vector<1x8x1xf32>,
    %c0_23 = arith.constant 0 : index
    %c0_24 = arith.constant 0 : index
    %40 = vector.load %arg8[%c0_23, %c0_24] : memref<8x32xf32, #tpu.memory_space<vmem>>, vector<8x8xf32>
    %41 = vector.broadcast %27 : vector<8x1xf32> to vector<8x8xf32>
    %42 = arith.mulf %41, %40 : vector<8x8xf32>
    %43 = arith.truncf %30 : vector<8x8xf32> to vector<8x8xbf16>
    %cst_25 = arith.constant dense<0.000000e+00> : vector<8x8xf32>
    %44 = tpu.matmul %43, %11, %cst_25 {dimension_numbers = #tpu.dot_dimension_numbers<[1], [0], [0], [1], [0, 0, 1, 1], [], []>} : vector<8x8xbf16>, vector<8x8xbf16>, vector<8x8xf32> -> vector<8x8xf32>
    %45 = arith.addf %42, %44 : vector<8x8xf32>
    %c0_26 = arith.constant 0 : index
    %c0_27 = arith.constant 0 : index
    %46 = vector.load %arg8[%c0_26, %c0_27] : memref<8x32xf32, #tpu.memory_space<vmem>>, vector<8x8xf32>
    tpu.vector_store %arg8[%c0_26, %c0_27], %45 {strides = array<i32>} : memref<8x32xf32, #tpu.memory_space<vmem>>, vector<8x8xf32>,
    %c0_28 = arith.constant 0 : index
    %c0_29 = arith.constant 0 : index
    %c0_30 = arith.constant 0 : index
    %47 = vector.load %arg6[%c0_28, %c0_29, %c0_30] : memref<4x8x1xf32, #tpu.memory_space<vmem>>, vector<1x8x1xf32>
    %48 = vector.shape_cast %47 : vector<1x8x1xf32> to vector<8x1xf32>
    %49 = vector.shape_cast %25 : vector<8x1xf32> to vector<1x8x1xf32>
    tpu.vector_store %arg6[%c0_28, %c0_29, %c0_30], %49 {strides = array<i32>} : memref<4x8x1xf32, #tpu.memory_space<vmem>>, vector<1x8x1xf32>,
    %50 = vector.extract_strided_slice %4 {offsets = [0, 8], sizes = [8, 8], strides = [1, 1]} : vector<8x32xbf16> to vector<8x8xbf16>
    %51 = vector.extract_strided_slice %6 {offsets = [0, 8], sizes = [8, 8], strides = [1, 1]} : vector<8x64xbf16> to vector<8x8xbf16>
    %52 = vector.extract_strided_slice %6 {offsets = [0, 40], sizes = [8, 8], strides = [1, 1]} : vector<8x64xbf16> to vector<8x8xbf16>
    %cst_31 = arith.constant dense<0.000000e+00> : vector<8x8xf32>
    %53 = tpu.matmul %50, %51, %cst_31 {dimension_numbers = #tpu.dot_dimension_numbers<[1], [1], [0], [0], [0, 0, 1, 0], [], []>} : vector<8x8xbf16>, vector<8x8xbf16>, vector<8x8xf32> -> vector<8x8xf32>
    %cst_32 = arith.constant 0.353553385 : f32
    %54 = vector.broadcast %cst_32 : f32 to vector<8x8xf32>
    %55 = arith.mulf %53, %54 : vector<8x8xf32>
    %c0_i32_33 = arith.constant 0 : i32
    %56 = vector.broadcast %c0_i32_33 : i32 to vector<1x8xi32>
    %57 = arith.cmpi eq, %8, %56 : vector<1x8xi32>
    %cst_34 = arith.constant -1.000000e+04 : f32
    %58 = vector.shape_cast %57 : vector<1x8xi1> to vector<1x8xi1>
    %59 = vector.broadcast %58 : vector<1x8xi1> to vector<8x8xi1>
    %60 = vector.broadcast %cst_34 : f32 to vector<8x8xf32>
    %61 = arith.select %59, %60, %55 : vector<8x8xi1>, vector<8x8xf32>
    %c1 = arith.constant 1 : index
    %c0_35 = arith.constant 0 : index
    %c0_36 = arith.constant 0 : index
    %62 = vector.load %arg6[%c1, %c0_35, %c0_36] : memref<4x8x1xf32, #tpu.memory_space<vmem>>, vector<1x8x1xf32>
    %63 = vector.shape_cast %62 : vector<1x8x1xf32> to vector<8x1xf32>
    %cst_37 = arith.constant dense<0xFF800000> : vector<8xf32>
    %64 = vector.multi_reduction <maximumf>, %61, %cst_37 [1] : vector<8x8xf32> to vector<8xf32>
    %65 = vector.shape_cast %64 : vector<8xf32> to vector<8x1xf32>
    %66 = arith.maximumf %63, %65 : vector<8x1xf32>
    %67 = arith.subf %63, %66 : vector<8x1xf32>
    %68 = math.exp %67 : vector<8x1xf32>
    %69 = vector.broadcast %66 : vector<8x1xf32> to vector<8x8xf32>
    %70 = arith.subf %61, %69 : vector<8x8xf32>
    %71 = math.exp %70 : vector<8x8xf32>
    %c1_38 = arith.constant 1 : index
    %c0_39 = arith.constant 0 : index
    %c0_40 = arith.constant 0 : index
    %72 = vector.load %arg7[%c1_38, %c0_39, %c0_40] : memref<4x8x1xf32, #tpu.memory_space<vmem>>, vector<1x8x1xf32>
    %73 = vector.shape_cast %72 : vector<1x8x1xf32> to vector<8x1xf32>
    %74 = arith.mulf %68, %73 : vector<8x1xf32>
    %cst_41 = arith.constant dense<0.000000e+00> : vector<8xf32>
    %75 = vector.multi_reduction <add>, %71, %cst_41 [1] : vector<8x8xf32> to vector<8xf32>
    %76 = vector.shape_cast %75 : vector<8xf32> to vector<8x1xf32>
    %77 = arith.addf %74, %76 : vector<8x1xf32>
    %c1_42 = arith.constant 1 : index
    %c0_43 = arith.constant 0 : index
    %c0_44 = arith.constant 0 : index
    %78 = vector.load %arg7[%c1_42, %c0_43, %c0_44] : memref<4x8x1xf32, #tpu.memory_space<vmem>>, vector<1x8x1xf32>
    %79 = vector.shape_cast %78 : vector<1x8x1xf32> to vector<8x1xf32>
    %80 = vector.shape_cast %77 : vector<8x1xf32> to vector<1x8x1xf32>
    tpu.vector_store %arg7[%c1_42, %c0_43, %c0_44], %80 {strides = array<i32>} : memref<4x8x1xf32, #tpu.memory_space<vmem>>, vector<1x8x1xf32>,
    %c0_45 = arith.constant 0 : index
    %c8 = arith.constant 8 : index
    %81 = vector.load %arg8[%c0_45, %c8] : memref<8x32xf32, #tpu.memory_space<vmem>>, vector<8x8xf32>
    %82 = vector.broadcast %68 : vector<8x1xf32> to vector<8x8xf32>
    %83 = arith.mulf %82, %81 : vector<8x8xf32>
    %84 = arith.truncf %71 : vector<8x8xf32> to vector<8x8xbf16>
    %cst_46 = arith.constant dense<0.000000e+00> : vector<8x8xf32>
    %85 = tpu.matmul %84, %52, %cst_46 {dimension_numbers = #tpu.dot_dimension_numbers<[1], [0], [0], [1], [0, 0, 1, 1], [], []>} : vector<8x8xbf16>, vector<8x8xbf16>, vector<8x8xf32> -> vector<8x8xf32>
    %86 = arith.addf %83, %85 : vector<8x8xf32>
    %c0_47 = arith.constant 0 : index
    %c8_48 = arith.constant 8 : index
    %87 = vector.load %arg8[%c0_47, %c8_48] : memref<8x32xf32, #tpu.memory_space<vmem>>, vector<8x8xf32>
    tpu.vector_store %arg8[%c0_47, %c8_48], %86 {strides = array<i32>} : memref<8x32xf32, #tpu.memory_space<vmem>>, vector<8x8xf32>,
    %c1_49 = arith.constant 1 : index
    %c0_50 = arith.constant 0 : index
    %c0_51 = arith.constant 0 : index
    %88 = vector.load %arg6[%c1_49, %c0_50, %c0_51] : memref<4x8x1xf32, #tpu.memory_space<vmem>>, vector<1x8x1xf32>
    %89 = vector.shape_cast %88 : vector<1x8x1xf32> to vector<8x1xf32>
    %90 = vector.shape_cast %66 : vector<8x1xf32> to vector<1x8x1xf32>
    tpu.vector_store %arg6[%c1_49, %c0_50, %c0_51], %90 {strides = array<i32>} : memref<4x8x1xf32, #tpu.memory_space<vmem>>, vector<1x8x1xf32>,
    %91 = vector.extract_strided_slice %4 {offsets = [0, 16], sizes = [8, 8], strides = [1, 1]} : vector<8x32xbf16> to vector<8x8xbf16>
    %92 = vector.extract_strided_slice %6 {offsets = [0, 16], sizes = [8, 8], strides = [1, 1]} : vector<8x64xbf16> to vector<8x8xbf16>
    %93 = vector.extract_strided_slice %6 {offsets = [0, 48], sizes = [8, 8], strides = [1, 1]} : vector<8x64xbf16> to vector<8x8xbf16>
    %cst_52 = arith.constant dense<0.000000e+00> : vector<8x8xf32>
    %94 = tpu.matmul %91, %92, %cst_52 {dimension_numbers = #tpu.dot_dimension_numbers<[1], [1], [0], [0], [0, 0, 1, 0], [], []>} : vector<8x8xbf16>, vector<8x8xbf16>, vector<8x8xf32> -> vector<8x8xf32>
    %cst_53 = arith.constant 0.353553385 : f32
    %95 = vector.broadcast %cst_53 : f32 to vector<8x8xf32>
    %96 = arith.mulf %94, %95 : vector<8x8xf32>
    %c0_i32_54 = arith.constant 0 : i32
    %97 = vector.broadcast %c0_i32_54 : i32 to vector<1x8xi32>
    %98 = arith.cmpi eq, %8, %97 : vector<1x8xi32>
    %cst_55 = arith.constant -1.000000e+04 : f32
    %99 = vector.shape_cast %98 : vector<1x8xi1> to vector<1x8xi1>
    %100 = vector.broadcast %99 : vector<1x8xi1> to vector<8x8xi1>
    %101 = vector.broadcast %cst_55 : f32 to vector<8x8xf32>
    %102 = arith.select %100, %101, %96 : vector<8x8xi1>, vector<8x8xf32>
    %c2 = arith.constant 2 : index
    %c0_56 = arith.constant 0 : index
    %c0_57 = arith.constant 0 : index
    %103 = vector.load %arg6[%c2, %c0_56, %c0_57] : memref<4x8x1xf32, #tpu.memory_space<vmem>>, vector<1x8x1xf32>
    %104 = vector.shape_cast %103 : vector<1x8x1xf32> to vector<8x1xf32>
    %cst_58 = arith.constant dense<0xFF800000> : vector<8xf32>
    %105 = vector.multi_reduction <maximumf>, %102, %cst_58 [1] : vector<8x8xf32> to vector<8xf32>
    %106 = vector.shape_cast %105 : vector<8xf32> to vector<8x1xf32>
    %107 = arith.maximumf %104, %106 : vector<8x1xf32>
    %108 = arith.subf %104, %107 : vector<8x1xf32>
    %109 = math.exp %108 : vector<8x1xf32>
    %110 = vector.broadcast %107 : vector<8x1xf32> to vector<8x8xf32>
    %111 = arith.subf %102, %110 : vector<8x8xf32>
    %112 = math.exp %111 : vector<8x8xf32>
    %c2_59 = arith.constant 2 : index
    %c0_60 = arith.constant 0 : index
    %c0_61 = arith.constant 0 : index
    %113 = vector.load %arg7[%c2_59, %c0_60, %c0_61] : memref<4x8x1xf32, #tpu.memory_space<vmem>>, vector<1x8x1xf32>
    %114 = vector.shape_cast %113 : vector<1x8x1xf32> to vector<8x1xf32>
    %115 = arith.mulf %109, %114 : vector<8x1xf32>
    %cst_62 = arith.constant dense<0.000000e+00> : vector<8xf32>
    %116 = vector.multi_reduction <add>, %112, %cst_62 [1] : vector<8x8xf32> to vector<8xf32>
    %117 = vector.shape_cast %116 : vector<8xf32> to vector<8x1xf32>
    %118 = arith.addf %115, %117 : vector<8x1xf32>
    %c2_63 = arith.constant 2 : index
    %c0_64 = arith.constant 0 : index
    %c0_65 = arith.constant 0 : index
    %119 = vector.load %arg7[%c2_63, %c0_64, %c0_65] : memref<4x8x1xf32, #tpu.memory_space<vmem>>, vector<1x8x1xf32>
    %120 = vector.shape_cast %119 : vector<1x8x1xf32> to vector<8x1xf32>
    %121 = vector.shape_cast %118 : vector<8x1xf32> to vector<1x8x1xf32>
    tpu.vector_store %arg7[%c2_63, %c0_64, %c0_65], %121 {strides = array<i32>} : memref<4x8x1xf32, #tpu.memory_space<vmem>>, vector<1x8x1xf32>,
    %c0_66 = arith.constant 0 : index
    %c16 = arith.constant 16 : index
    %122 = vector.load %arg8[%c0_66, %c16] : memref<8x32xf32, #tpu.memory_space<vmem>>, vector<8x8xf32>
    %123 = vector.broadcast %109 : vector<8x1xf32> to vector<8x8xf32>
    %124 = arith.mulf %123, %122 : vector<8x8xf32>
    %125 = arith.truncf %112 : vector<8x8xf32> to vector<8x8xbf16>
    %cst_67 = arith.constant dense<0.000000e+00> : vector<8x8xf32>
    %126 = tpu.matmul %125, %93, %cst_67 {dimension_numbers = #tpu.dot_dimension_numbers<[1], [0], [0], [1], [0, 0, 1, 1], [], []>} : vector<8x8xbf16>, vector<8x8xbf16>, vector<8x8xf32> -> vector<8x8xf32>
    %127 = arith.addf %124, %126 : vector<8x8xf32>
    %c0_68 = arith.constant 0 : index
    %c16_69 = arith.constant 16 : index
    %128 = vector.load %arg8[%c0_68, %c16_69] : memref<8x32xf32, #tpu.memory_space<vmem>>, vector<8x8xf32>
    tpu.vector_store %arg8[%c0_68, %c16_69], %127 {strides = array<i32>} : memref<8x32xf32, #tpu.memory_space<vmem>>, vector<8x8xf32>,
    %c2_70 = arith.constant 2 : index
    %c0_71 = arith.constant 0 : index
    %c0_72 = arith.constant 0 : index
    %129 = vector.load %arg6[%c2_70, %c0_71, %c0_72] : memref<4x8x1xf32, #tpu.memory_space<vmem>>, vector<1x8x1xf32>
    %130 = vector.shape_cast %129 : vector<1x8x1xf32> to vector<8x1xf32>
    %131 = vector.shape_cast %107 : vector<8x1xf32> to vector<1x8x1xf32>
    tpu.vector_store %arg6[%c2_70, %c0_71, %c0_72], %131 {strides = array<i32>} : memref<4x8x1xf32, #tpu.memory_space<vmem>>, vector<1x8x1xf32>,
    %132 = vector.extract_strided_slice %4 {offsets = [0, 24], sizes = [8, 8], strides = [1, 1]} : vector<8x32xbf16> to vector<8x8xbf16>
    %133 = vector.extract_strided_slice %6 {offsets = [0, 24], sizes = [8, 8], strides = [1, 1]} : vector<8x64xbf16> to vector<8x8xbf16>
    %134 = vector.extract_strided_slice %6 {offsets = [0, 56], sizes = [8, 8], strides = [1, 1]} : vector<8x64xbf16> to vector<8x8xbf16>
    %cst_73 = arith.constant dense<0.000000e+00> : vector<8x8xf32>
    %135 = tpu.matmul %132, %133, %cst_73 {dimension_numbers = #tpu.dot_dimension_numbers<[1], [1], [0], [0], [0, 0, 1, 0], [], []>} : vector<8x8xbf16>, vector<8x8xbf16>, vector<8x8xf32> -> vector<8x8xf32>
    %cst_74 = arith.constant 0.353553385 : f32
    %136 = vector.broadcast %cst_74 : f32 to vector<8x8xf32>
    %137 = arith.mulf %135, %136 : vector<8x8xf32>
    %c0_i32_75 = arith.constant 0 : i32
    %138 = vector.broadcast %c0_i32_75 : i32 to vector<1x8xi32>
    %139 = arith.cmpi eq, %8, %138 : vector<1x8xi32>
    %cst_76 = arith.constant -1.000000e+04 : f32
    %140 = vector.shape_cast %139 : vector<1x8xi1> to vector<1x8xi1>
    %141 = vector.broadcast %140 : vector<1x8xi1> to vector<8x8xi1>
    %142 = vector.broadcast %cst_76 : f32 to vector<8x8xf32>
    %143 = arith.select %141, %142, %137 : vector<8x8xi1>, vector<8x8xf32>
    %c3 = arith.constant 3 : index
    %c0_77 = arith.constant 0 : index
    %c0_78 = arith.constant 0 : index
    %144 = vector.load %arg6[%c3, %c0_77, %c0_78] : memref<4x8x1xf32, #tpu.memory_space<vmem>>, vector<1x8x1xf32>
    %145 = vector.shape_cast %144 : vector<1x8x1xf32> to vector<8x1xf32>
    %cst_79 = arith.constant dense<0xFF800000> : vector<8xf32>
    %146 = vector.multi_reduction <maximumf>, %143, %cst_79 [1] : vector<8x8xf32> to vector<8xf32>
    %147 = vector.shape_cast %146 : vector<8xf32> to vector<8x1xf32>
    %148 = arith.maximumf %145, %147 : vector<8x1xf32>
    %149 = arith.subf %145, %148 : vector<8x1xf32>
    %150 = math.exp %149 : vector<8x1xf32>
    %151 = vector.broadcast %148 : vector<8x1xf32> to vector<8x8xf32>
    %152 = arith.subf %143, %151 : vector<8x8xf32>
    %153 = math.exp %152 : vector<8x8xf32>
    %c3_80 = arith.constant 3 : index
    %c0_81 = arith.constant 0 : index
    %c0_82 = arith.constant 0 : index
    %154 = vector.load %arg7[%c3_80, %c0_81, %c0_82] : memref<4x8x1xf32, #tpu.memory_space<vmem>>, vector<1x8x1xf32>
    %155 = vector.shape_cast %154 : vector<1x8x1xf32> to vector<8x1xf32>
    %156 = arith.mulf %150, %155 : vector<8x1xf32>
    %cst_83 = arith.constant dense<0.000000e+00> : vector<8xf32>
    %157 = vector.multi_reduction <add>, %153, %cst_83 [1] : vector<8x8xf32> to vector<8xf32>
    %158 = vector.shape_cast %157 : vector<8xf32> to vector<8x1xf32>
    %159 = arith.addf %156, %158 : vector<8x1xf32>
    %c3_84 = arith.constant 3 : index
    %c0_85 = arith.constant 0 : index
    %c0_86 = arith.constant 0 : index
    %160 = vector.load %arg7[%c3_84, %c0_85, %c0_86] : memref<4x8x1xf32, #tpu.memory_space<vmem>>, vector<1x8x1xf32>
    %161 = vector.shape_cast %160 : vector<1x8x1xf32> to vector<8x1xf32>
    %162 = vector.shape_cast %159 : vector<8x1xf32> to vector<1x8x1xf32>
    tpu.vector_store %arg7[%c3_84, %c0_85, %c0_86], %162 {strides = array<i32>} : memref<4x8x1xf32, #tpu.memory_space<vmem>>, vector<1x8x1xf32>,
    %c0_87 = arith.constant 0 : index
    %c24 = arith.constant 24 : index
    %163 = vector.load %arg8[%c0_87, %c24] : memref<8x32xf32, #tpu.memory_space<vmem>>, vector<8x8xf32>
    %164 = vector.broadcast %150 : vector<8x1xf32> to vector<8x8xf32>
    %165 = arith.mulf %164, %163 : vector<8x8xf32>
    %166 = arith.truncf %153 : vector<8x8xf32> to vector<8x8xbf16>
    %cst_88 = arith.constant dense<0.000000e+00> : vector<8x8xf32>
    %167 = tpu.matmul %166, %134, %cst_88 {dimension_numbers = #tpu.dot_dimension_numbers<[1], [0], [0], [1], [0, 0, 1, 1], [], []>} : vector<8x8xbf16>, vector<8x8xbf16>, vector<8x8xf32> -> vector<8x8xf32>
    %168 = arith.addf %165, %167 : vector<8x8xf32>
    %c0_89 = arith.constant 0 : index
    %c24_90 = arith.constant 24 : index
    %169 = vector.load %arg8[%c0_89, %c24_90] : memref<8x32xf32, #tpu.memory_space<vmem>>, vector<8x8xf32>
    tpu.vector_store %arg8[%c0_89, %c24_90], %168 {strides = array<i32>} : memref<8x32xf32, #tpu.memory_space<vmem>>, vector<8x8xf32>,
    %c3_91 = arith.constant 3 : index
    %c0_92 = arith.constant 0 : index
    %c0_93 = arith.constant 0 : index
    %170 = vector.load %arg6[%c3_91, %c0_92, %c0_93] : memref<4x8x1xf32, #tpu.memory_space<vmem>>, vector<1x8x1xf32>
    %171 = vector.shape_cast %170 : vector<1x8x1xf32> to vector<8x1xf32>
    %172 = vector.shape_cast %148 : vector<8x1xf32> to vector<1x8x1xf32>
    tpu.vector_store %arg6[%c3_91, %c0_92, %c0_93], %172 {strides = array<i32>} : memref<4x8x1xf32, #tpu.memory_space<vmem>>, vector<1x8x1xf32>,
    %c0_i32_94 = arith.constant 0 : i32
    %173 = arith.cmpi eq, %arg1, %c0_i32_94 : i32
    %174 = arith.extui %173 : i1 to i32
    %c0_i32_95 = arith.constant 0 : i32
    %175 = arith.cmpi ne, %174, %c0_i32_95 : i32
    scf.if %175 {
      %c0_96 = arith.constant 0 : index
      %c0_97 = arith.constant 0 : index
      %c0_98 = arith.constant 0 : index
      %176 = vector.load %arg7[%c0_96, %c0_97, %c0_98] : memref<4x8x1xf32, #tpu.memory_space<vmem>>, vector<1x8x1xf32>
      %177 = vector.shape_cast %176 : vector<1x8x1xf32> to vector<8x1xf32>
      %178 = tpu.reciprocal %177 {approx = true} : vector<8x1xf32> -> vector<8x1xf32>
      %c0_99 = arith.constant 0 : index
      %c0_100 = arith.constant 0 : index
      %179 = vector.load %arg8[%c0_99, %c0_100] : memref<8x32xf32, #tpu.memory_space<vmem>>, vector<8x8xf32>
      %180 = vector.broadcast %178 : vector<8x1xf32> to vector<8x8xf32>
      %181 = arith.mulf %179, %180 : vector<8x8xf32>
      %c0_101 = arith.constant 0 : index
      %c0_102 = arith.constant 0 : index
      %182 = vector.load %arg8[%c0_101, %c0_102] : memref<8x32xf32, #tpu.memory_space<vmem>>, vector<8x8xf32>
      tpu.vector_store %arg8[%c0_101, %c0_102], %181 {strides = array<i32>} : memref<8x32xf32, #tpu.memory_space<vmem>>, vector<8x8xf32>,
      %c1_103 = arith.constant 1 : index
      %c0_104 = arith.constant 0 : index
      %c0_105 = arith.constant 0 : index
      %183 = vector.load %arg7[%c1_103, %c0_104, %c0_105] : memref<4x8x1xf32, #tpu.memory_space<vmem>>, vector<1x8x1xf32>
      %184 = vector.shape_cast %183 : vector<1x8x1xf32> to vector<8x1xf32>
      %185 = tpu.reciprocal %184 {approx = true} : vector<8x1xf32> -> vector<8x1xf32>
      %c0_106 = arith.constant 0 : index
      %c8_107 = arith.constant 8 : index
      %186 = vector.load %arg8[%c0_106, %c8_107] : memref<8x32xf32, #tpu.memory_space<vmem>>, vector<8x8xf32>
      %187 = vector.broadcast %185 : vector<8x1xf32> to vector<8x8xf32>
      %188 = arith.mulf %186, %187 : vector<8x8xf32>
      %c0_108 = arith.constant 0 : index
      %c8_109 = arith.constant 8 : index
      %189 = vector.load %arg8[%c0_108, %c8_109] : memref<8x32xf32, #tpu.memory_space<vmem>>, vector<8x8xf32>
      tpu.vector_store %arg8[%c0_108, %c8_109], %188 {strides = array<i32>} : memref<8x32xf32, #tpu.memory_space<vmem>>, vector<8x8xf32>,
      %c2_110 = arith.constant 2 : index
      %c0_111 = arith.constant 0 : index
      %c0_112 = arith.constant 0 : index
      %190 = vector.load %arg7[%c2_110, %c0_111, %c0_112] : memref<4x8x1xf32, #tpu.memory_space<vmem>>, vector<1x8x1xf32>
      %191 = vector.shape_cast %190 : vector<1x8x1xf32> to vector<8x1xf32>
      %192 = tpu.reciprocal %191 {approx = true} : vector<8x1xf32> -> vector<8x1xf32>
      %c0_113 = arith.constant 0 : index
      %c16_114 = arith.constant 16 : index
      %193 = vector.load %arg8[%c0_113, %c16_114] : memref<8x32xf32, #tpu.memory_space<vmem>>, vector<8x8xf32>
      %194 = vector.broadcast %192 : vector<8x1xf32> to vector<8x8xf32>
      %195 = arith.mulf %193, %194 : vector<8x8xf32>
      %c0_115 = arith.constant 0 : index
      %c16_116 = arith.constant 16 : index
      %196 = vector.load %arg8[%c0_115, %c16_116] : memref<8x32xf32, #tpu.memory_space<vmem>>, vector<8x8xf32>
      tpu.vector_store %arg8[%c0_115, %c16_116], %195 {strides = array<i32>} : memref<8x32xf32, #tpu.memory_space<vmem>>, vector<8x8xf32>,
      %c3_117 = arith.constant 3 : index
      %c0_118 = arith.constant 0 : index
      %c0_119 = arith.constant 0 : index
      %197 = vector.load %arg7[%c3_117, %c0_118, %c0_119] : memref<4x8x1xf32, #tpu.memory_space<vmem>>, vector<1x8x1xf32>
      %198 = vector.shape_cast %197 : vector<1x8x1xf32> to vector<8x1xf32>
      %199 = tpu.reciprocal %198 {approx = true} : vector<8x1xf32> -> vector<8x1xf32>
      %c0_120 = arith.constant 0 : index
      %c24_121 = arith.constant 24 : index
      %200 = vector.load %arg8[%c0_120, %c24_121] : memref<8x32xf32, #tpu.memory_space<vmem>>, vector<8x8xf32>
      %201 = vector.broadcast %199 : vector<8x1xf32> to vector<8x8xf32>
      %202 = arith.mulf %200, %201 : vector<8x8xf32>
      %c0_122 = arith.constant 0 : index
      %c24_123 = arith.constant 24 : index
      %203 = vector.load %arg8[%c0_122, %c24_123] : memref<8x32xf32, #tpu.memory_space<vmem>>, vector<8x8xf32>
      tpu.vector_store %arg8[%c0_122, %c24_123], %202 {strides = array<i32>} : memref<8x32xf32, #tpu.memory_space<vmem>>, vector<8x8xf32>,
      %c0_124 = arith.constant 0 : index
      %c0_125 = arith.constant 0 : index
      %204 = vector.load %arg8[%c0_124, %c0_125] : memref<8x32xf32, #tpu.memory_space<vmem>>, vector<8x32xf32>
      %205 = arith.truncf %204 : vector<8x32xf32> to vector<8x32xbf16>
      %c0_126 = arith.constant 0 : index
      %c0_127 = arith.constant 0 : index
      %c0_128 = arith.constant 0 : index
      %206 = vector.load %arg5[%c0_126, %c0_127, %c0_128] : memref<1x8x32xbf16, #tpu.memory_space<vmem>>, vector<1x8x32xbf16>
      %207 = vector.shape_cast %206 : vector<1x8x32xbf16> to vector<8x32xbf16>
      %208 = vector.shape_cast %205 : vector<8x32xbf16> to vector<1x8x32xbf16>
      tpu.vector_store %arg5[%c0_126, %c0_127, %c0_128], %208 {strides = array<i32>} : memref<1x8x32xbf16, #tpu.memory_space<vmem>>, vector<1x8x32xbf16>,
    } else {
    }
    return
  }
  func.func @transform_0(%arg0: i32, %arg1: i32) -> (i32, i32, i32) {
    %c0_i32 = arith.constant 0 : i32
    %c0_i32_0 = arith.constant 0 : i32
    %c0_i32_1 = arith.constant 0 : i32
    return %arg0, %c0_i32, %c0_i32_0 : i32, i32, i32
  }
  func.func @transform_1(%arg0: i32, %arg1: i32) -> (i32, i32, i32) {
    %c0_i32 = arith.constant 0 : i32
    %c0_i32_0 = arith.constant 0 : i32
    return %arg0, %arg1, %c0_i32 : i32, i32, i32
  }
  func.func @transform_2(%arg0: i32, %arg1: i32) -> (i32, i32, i32) {
    %c0_i32 = arith.constant 0 : i32
    %c0_i32_0 = arith.constant 0 : i32
    return %arg0, %c0_i32, %arg1 : i32, i32, i32
  }
  func.func @transform_3(%arg0: i32, %arg1: i32) -> (i32, i32, i32) {
    %c0_i32 = arith.constant 0 : i32
    %c0_i32_0 = arith.constant 0 : i32
    %c0_i32_1 = arith.constant 0 : i32
    return %arg0, %c0_i32, %c0_i32_0 : i32, i32, i32
  }
}

module attributes {stable_mosaic.version = 11 : i64} {
  func.func @_ffn_add_ln_kernel(%arg0: i32, %arg1: i32, %arg2: memref<16x32xbf16, #tpu.memory_space<vmem>>, %arg3: memref<32x64xbf16, #tpu.memory_space<vmem>>, %arg4: memref<1x64xf32, #tpu.memory_space<vmem>>, %arg5: memref<64x32xbf16, #tpu.memory_space<vmem>>, %arg6: memref<1x32xf32, #tpu.memory_space<vmem>>, %arg7: memref<16x32xbf16, #tpu.memory_space<vmem>>, %arg8: memref<1x32xf32, #tpu.memory_space<vmem>>, %arg9: memref<1x32xf32, #tpu.memory_space<vmem>>, %arg10: memref<16x32xbf16, #tpu.memory_space<vmem>>, %arg11: memref<16x32xf32, #tpu.memory_space<vmem>>) attributes {dimension_semantics = [#tpu.dimension_semantics<parallel>, #tpu.dimension_semantics<arbitrary>], iteration_bounds = array<i64: 1, 1>, scalar_prefetch = 0 : i64, scratch_operands = 1 : i64, tpu.core_type = #tpu.core_type<tc>, window_params = [{transform_indices = @transform_0, window_bounds = array<i64: 16, 32>}, {transform_indices = @transform_1, window_bounds = array<i64: 32, 64>}, {transform_indices = @transform_2, window_bounds = array<i64: 1, 64>}, {transform_indices = @transform_3, window_bounds = array<i64: 64, 32>}, {pipeline_mode = #tpu.pipeline_mode<synchronous>, transform_indices = @transform_4, window_bounds = array<i64: 1, 32>}, {transform_indices = @transform_5, window_bounds = array<i64: 16, 32>}, {pipeline_mode = #tpu.pipeline_mode<synchronous>, transform_indices = @transform_6, window_bounds = array<i64: 1, 32>}, {pipeline_mode = #tpu.pipeline_mode<synchronous>, transform_indices = @transform_7, window_bounds = array<i64: 1, 32>}, {transform_indices = @transform_8, window_bounds = array<i64: 16, 32>}]} {
    %c0_i32 = arith.constant 0 : i32
    %0 = arith.cmpi eq, %arg1, %c0_i32 : i32
    %1 = arith.extui %0 : i1 to i32
    %c0_i32_0 = arith.constant 0 : i32
    %2 = arith.cmpi ne, %1, %c0_i32_0 : i32
    scf.if %2 {
      %cst_16 = arith.constant 0.000000e+00 : f32
      %20 = vector.broadcast %cst_16 : f32 to vector<16x32xf32>
      %c0_17 = arith.constant 0 : index
      %c0_18 = arith.constant 0 : index
      %21 = vector.load %arg11[%c0_17, %c0_18] : memref<16x32xf32, #tpu.memory_space<vmem>>, vector<16x32xf32>
      tpu.vector_store %arg11[%c0_17, %c0_18], %20 {strides = array<i32>} : memref<16x32xf32, #tpu.memory_space<vmem>>, vector<16x32xf32>,
    } else {
    }
    %c0 = arith.constant 0 : index
    %c0_1 = arith.constant 0 : index
    %3 = vector.load %arg2[%c0, %c0_1] : memref<16x32xbf16, #tpu.memory_space<vmem>>, vector<16x32xbf16>
    %c0_2 = arith.constant 0 : index
    %c0_3 = arith.constant 0 : index
    %4 = vector.load %arg3[%c0_2, %c0_3] : memref<32x64xbf16, #tpu.memory_space<vmem>>, vector<32x64xbf16>
    %cst = arith.constant dense<0.000000e+00> : vector<16x64xf32>
    %5 = tpu.matmul %3, %4, %cst {dimension_numbers = #tpu.dot_dimension_numbers<[1], [0], [0], [1], [0, 0, 1, 1], [], []>} : vector<16x32xbf16>, vector<32x64xbf16>, vector<16x64xf32> -> vector<16x64xf32>
    %c0_4 = arith.constant 0 : index
    %c0_5 = arith.constant 0 : index
    %6 = vector.load %arg4[%c0_4, %c0_5] : memref<1x64xf32, #tpu.memory_space<vmem>>, vector<1x64xf32>
    %7 = vector.broadcast %6 : vector<1x64xf32> to vector<16x64xf32>
    %8 = arith.addf %5, %7 : vector<16x64xf32>
    %cst_6 = arith.constant 0.000000e+00 : f32
    %9 = vector.broadcast %cst_6 : f32 to vector<16x64xf32>
    %10 = arith.maximumf %8, %9 : vector<16x64xf32>
    %11 = arith.truncf %10 : vector<16x64xf32> to vector<16x64xbf16>
    %c0_7 = arith.constant 0 : index
    %c0_8 = arith.constant 0 : index
    %12 = vector.load %arg11[%c0_7, %c0_8] : memref<16x32xf32, #tpu.memory_space<vmem>>, vector<16x32xf32>
    %c0_9 = arith.constant 0 : index
    %c0_10 = arith.constant 0 : index
    %13 = vector.load %arg5[%c0_9, %c0_10] : memref<64x32xbf16, #tpu.memory_space<vmem>>, vector<64x32xbf16>
    %cst_11 = arith.constant dense<0.000000e+00> : vector<16x32xf32>
    %14 = tpu.matmul %11, %13, %cst_11 {dimension_numbers = #tpu.dot_dimension_numbers<[1], [0], [0], [1], [0, 0, 1, 1], [], []>} : vector<16x64xbf16>, vector<64x32xbf16>, vector<16x32xf32> -> vector<16x32xf32>
    %15 = arith.addf %12, %14 : vector<16x32xf32>
    %c0_12 = arith.constant 0 : index
    %c0_13 = arith.constant 0 : index
    %16 = vector.load %arg11[%c0_12, %c0_13] : memref<16x32xf32, #tpu.memory_space<vmem>>, vector<16x32xf32>
    tpu.vector_store %arg11[%c0_12, %c0_13], %15 {strides = array<i32>} : memref<16x32xf32, #tpu.memory_space<vmem>>, vector<16x32xf32>,
    %c0_i32_14 = arith.constant 0 : i32
    %17 = arith.cmpi eq, %arg1, %c0_i32_14 : i32
    %18 = arith.extui %17 : i1 to i32
    %c0_i32_15 = arith.constant 0 : i32
    %19 = arith.cmpi ne, %18, %c0_i32_15 : i32
    scf.if %19 {
      %c0_16 = arith.constant 0 : index
      %c0_17 = arith.constant 0 : index
      %20 = vector.load %arg11[%c0_16, %c0_17] : memref<16x32xf32, #tpu.memory_space<vmem>>, vector<16x32xf32>
      %c0_18 = arith.constant 0 : index
      %c0_19 = arith.constant 0 : index
      %21 = vector.load %arg6[%c0_18, %c0_19] : memref<1x32xf32, #tpu.memory_space<vmem>>, vector<1x32xf32>
      %22 = vector.broadcast %21 : vector<1x32xf32> to vector<16x32xf32>
      %23 = arith.addf %20, %22 : vector<16x32xf32>
      %c0_20 = arith.constant 0 : index
      %c0_21 = arith.constant 0 : index
      %24 = vector.load %arg7[%c0_20, %c0_21] : memref<16x32xbf16, #tpu.memory_space<vmem>>, vector<16x32xbf16>
      %25 = arith.extf %24 : vector<16x32xbf16> to vector<16x32xf32>
      %26 = arith.addf %23, %25 : vector<16x32xf32>
      %cst_22 = arith.constant dense<0.000000e+00> : vector<16xf32>
      %27 = vector.multi_reduction <add>, %26, %cst_22 [1] : vector<16x32xf32> to vector<16xf32>
      %28 = vector.shape_cast %27 : vector<16xf32> to vector<16x1xf32>
      %cst_23 = arith.constant 3.200000e+01 : f32
      %29 = vector.broadcast %cst_23 : f32 to vector<16x1xf32>
      %30 = arith.divf %28, %29 : vector<16x1xf32>
      %31 = vector.broadcast %30 : vector<16x1xf32> to vector<16x32xf32>
      %32 = arith.subf %26, %31 : vector<16x32xf32>
      %33 = arith.mulf %32, %32 : vector<16x32xf32>
      %cst_24 = arith.constant dense<0.000000e+00> : vector<16xf32>
      %34 = vector.multi_reduction <add>, %33, %cst_24 [1] : vector<16x32xf32> to vector<16xf32>
      %35 = vector.shape_cast %34 : vector<16xf32> to vector<16x1xf32>
      %cst_25 = arith.constant 3.200000e+01 : f32
      %36 = vector.broadcast %cst_25 : f32 to vector<16x1xf32>
      %37 = arith.divf %35, %36 : vector<16x1xf32>
      %38 = vector.broadcast %30 : vector<16x1xf32> to vector<16x32xf32>
      %39 = arith.subf %26, %38 : vector<16x32xf32>
      %cst_26 = arith.constant 9.99999996E-13 : f32
      %40 = vector.broadcast %cst_26 : f32 to vector<16x1xf32>
      %41 = arith.addf %37, %40 : vector<16x1xf32>
      %42 = math.rsqrt %41 : vector<16x1xf32>
      %43 = vector.broadcast %42 : vector<16x1xf32> to vector<16x32xf32>
      %44 = arith.mulf %39, %43 : vector<16x32xf32>
      %c0_27 = arith.constant 0 : index
      %c0_28 = arith.constant 0 : index
      %45 = vector.load %arg8[%c0_27, %c0_28] : memref<1x32xf32, #tpu.memory_space<vmem>>, vector<1x32xf32>
      %46 = vector.broadcast %45 : vector<1x32xf32> to vector<16x32xf32>
      %47 = arith.mulf %46, %44 : vector<16x32xf32>
      %c0_29 = arith.constant 0 : index
      %c0_30 = arith.constant 0 : index
      %48 = vector.load %arg9[%c0_29, %c0_30] : memref<1x32xf32, #tpu.memory_space<vmem>>, vector<1x32xf32>
      %49 = vector.broadcast %48 : vector<1x32xf32> to vector<16x32xf32>
      %50 = arith.addf %47, %49 : vector<16x32xf32>
      %51 = arith.truncf %50 : vector<16x32xf32> to vector<16x32xbf16>
      %c0_31 = arith.constant 0 : index
      %c0_32 = arith.constant 0 : index
      %52 = vector.load %arg10[%c0_31, %c0_32] : memref<16x32xbf16, #tpu.memory_space<vmem>>, vector<16x32xbf16>
      tpu.vector_store %arg10[%c0_31, %c0_32], %51 {strides = array<i32>} : memref<16x32xbf16, #tpu.memory_space<vmem>>, vector<16x32xbf16>,
    } else {
    }
    return
  }
  func.func @transform_0(%arg0: i32, %arg1: i32) -> (i32, i32) {
    %c0_i32 = arith.constant 0 : i32
    %c0_i32_0 = arith.constant 0 : i32
    return %arg0, %c0_i32 : i32, i32
  }
  func.func @transform_1(%arg0: i32, %arg1: i32) -> (i32, i32) {
    %c0_i32 = arith.constant 0 : i32
    %c0_i32_0 = arith.constant 0 : i32
    return %c0_i32, %arg1 : i32, i32
  }
  func.func @transform_2(%arg0: i32, %arg1: i32) -> (i32, i32) {
    %c0_i32 = arith.constant 0 : i32
    %c0_i32_0 = arith.constant 0 : i32
    return %c0_i32, %arg1 : i32, i32
  }
  func.func @transform_3(%arg0: i32, %arg1: i32) -> (i32, i32) {
    %c0_i32 = arith.constant 0 : i32
    %c0_i32_0 = arith.constant 0 : i32
    return %arg1, %c0_i32 : i32, i32
  }
  func.func @transform_4(%arg0: i32, %arg1: i32) -> (i32, i32) {
    %c0_i32 = arith.constant 0 : i32
    %c0_i32_0 = arith.constant 0 : i32
    %c0_i32_1 = arith.constant 0 : i32
    return %c0_i32, %c0_i32_0 : i32, i32
  }
  func.func @transform_5(%arg0: i32, %arg1: i32) -> (i32, i32) {
    %c0_i32 = arith.constant 0 : i32
    %c0_i32_0 = arith.constant 0 : i32
    return %arg0, %c0_i32 : i32, i32
  }
  func.func @transform_6(%arg0: i32, %arg1: i32) -> (i32, i32) {
    %c0_i32 = arith.constant 0 : i32
    %c0_i32_0 = arith.constant 0 : i32
    %c0_i32_1 = arith.constant 0 : i32
    return %c0_i32, %c0_i32_0 : i32, i32
  }
  func.func @transform_7(%arg0: i32, %arg1: i32) -> (i32, i32) {
    %c0_i32 = arith.constant 0 : i32
    %c0_i32_0 = arith.constant 0 : i32
    %c0_i32_1 = arith.constant 0 : i32
    return %c0_i32, %c0_i32_0 : i32, i32
  }
  func.func @transform_8(%arg0: i32, %arg1: i32) -> (i32, i32) {
    %c0_i32 = arith.constant 0 : i32
    %c0_i32_0 = arith.constant 0 : i32
    return %arg0, %c0_i32 : i32, i32
  }
}

module attributes {stable_mosaic.version = 11 : i64} {
  func.func @_linear_kernel(%arg0: i32, %arg1: i32, %arg2: i32, %arg3: memref<16x32xbf16, #tpu.memory_space<vmem>>, %arg4: memref<32x96xbf16, #tpu.memory_space<vmem>>, %arg5: memref<1x96xf32, #tpu.memory_space<vmem>>, %arg6: memref<16x96xbf16, #tpu.memory_space<vmem>>, %arg7: memref<16x96xf32, #tpu.memory_space<vmem>>) attributes {dimension_semantics = [#tpu.dimension_semantics<parallel>, #tpu.dimension_semantics<parallel>, #tpu.dimension_semantics<arbitrary>], iteration_bounds = array<i64: 1, 1, 1>, scalar_prefetch = 0 : i64, scratch_operands = 1 : i64, tpu.core_type = #tpu.core_type<tc>, window_params = [{transform_indices = @transform_0, window_bounds = array<i64: 16, 32>}, {transform_indices = @transform_1, window_bounds = array<i64: 32, 96>}, {transform_indices = @transform_2, window_bounds = array<i64: 1, 96>}, {transform_indices = @transform_3, window_bounds = array<i64: 16, 96>}]} {
    %c0_i32 = arith.constant 0 : i32
    %0 = arith.cmpi eq, %arg2, %c0_i32 : i32
    %1 = arith.extui %0 : i1 to i32
    %c0_i32_0 = arith.constant 0 : i32
    %2 = arith.cmpi ne, %1, %c0_i32_0 : i32
    scf.if %2 {
      %cst_10 = arith.constant 0.000000e+00 : f32
      %12 = vector.broadcast %cst_10 : f32 to vector<16x96xf32>
      %c0_11 = arith.constant 0 : index
      %c0_12 = arith.constant 0 : index
      %13 = vector.load %arg7[%c0_11, %c0_12] : memref<16x96xf32, #tpu.memory_space<vmem>>, vector<16x96xf32>
      tpu.vector_store %arg7[%c0_11, %c0_12], %12 {strides = array<i32>} : memref<16x96xf32, #tpu.memory_space<vmem>>, vector<16x96xf32>,
    } else {
    }
    %c0 = arith.constant 0 : index
    %c0_1 = arith.constant 0 : index
    %3 = vector.load %arg7[%c0, %c0_1] : memref<16x96xf32, #tpu.memory_space<vmem>>, vector<16x96xf32>
    %c0_2 = arith.constant 0 : index
    %c0_3 = arith.constant 0 : index
    %4 = vector.load %arg3[%c0_2, %c0_3] : memref<16x32xbf16, #tpu.memory_space<vmem>>, vector<16x32xbf16>
    %c0_4 = arith.constant 0 : index
    %c0_5 = arith.constant 0 : index
    %5 = vector.load %arg4[%c0_4, %c0_5] : memref<32x96xbf16, #tpu.memory_space<vmem>>, vector<32x96xbf16>
    %cst = arith.constant dense<0.000000e+00> : vector<16x96xf32>
    %6 = tpu.matmul %4, %5, %cst {dimension_numbers = #tpu.dot_dimension_numbers<[1], [0], [0], [1], [0, 0, 1, 1], [], []>} : vector<16x32xbf16>, vector<32x96xbf16>, vector<16x96xf32> -> vector<16x96xf32>
    %7 = arith.addf %3, %6 : vector<16x96xf32>
    %c0_6 = arith.constant 0 : index
    %c0_7 = arith.constant 0 : index
    %8 = vector.load %arg7[%c0_6, %c0_7] : memref<16x96xf32, #tpu.memory_space<vmem>>, vector<16x96xf32>
    tpu.vector_store %arg7[%c0_6, %c0_7], %7 {strides = array<i32>} : memref<16x96xf32, #tpu.memory_space<vmem>>, vector<16x96xf32>,
    %c0_i32_8 = arith.constant 0 : i32
    %9 = arith.cmpi eq, %arg2, %c0_i32_8 : i32
    %10 = arith.extui %9 : i1 to i32
    %c0_i32_9 = arith.constant 0 : i32
    %11 = arith.cmpi ne, %10, %c0_i32_9 : i32
    scf.if %11 {
      %c0_10 = arith.constant 0 : index
      %c0_11 = arith.constant 0 : index
      %12 = vector.load %arg7[%c0_10, %c0_11] : memref<16x96xf32, #tpu.memory_space<vmem>>, vector<16x96xf32>
      %c0_12 = arith.constant 0 : index
      %c0_13 = arith.constant 0 : index
      %13 = vector.load %arg5[%c0_12, %c0_13] : memref<1x96xf32, #tpu.memory_space<vmem>>, vector<1x96xf32>
      %14 = vector.broadcast %13 : vector<1x96xf32> to vector<16x96xf32>
      %15 = arith.addf %12, %14 : vector<16x96xf32>
      %16 = arith.truncf %15 : vector<16x96xf32> to vector<16x96xbf16>
      %c0_14 = arith.constant 0 : index
      %c0_15 = arith.constant 0 : index
      %17 = vector.load %arg6[%c0_14, %c0_15] : memref<16x96xbf16, #tpu.memory_space<vmem>>, vector<16x96xbf16>
      tpu.vector_store %arg6[%c0_14, %c0_15], %16 {strides = array<i32>} : memref<16x96xbf16, #tpu.memory_space<vmem>>, vector<16x96xbf16>,
    } else {
    }
    return
  }
  func.func @transform_0(%arg0: i32, %arg1: i32, %arg2: i32) -> (i32, i32) {
    %c0_i32 = arith.constant 0 : i32
    return %arg0, %arg2 : i32, i32
  }
  func.func @transform_1(%arg0: i32, %arg1: i32, %arg2: i32) -> (i32, i32) {
    %c0_i32 = arith.constant 0 : i32
    return %arg2, %arg1 : i32, i32
  }
  func.func @transform_2(%arg0: i32, %arg1: i32, %arg2: i32) -> (i32, i32) {
    %c0_i32 = arith.constant 0 : i32
    %c0_i32_0 = arith.constant 0 : i32
    return %c0_i32, %arg1 : i32, i32
  }
  func.func @transform_3(%arg0: i32, %arg1: i32, %arg2: i32) -> (i32, i32) {
    %c0_i32 = arith.constant 0 : i32
    return %arg0, %arg1 : i32, i32
  }
}

module attributes {stable_mosaic.version = 11 : i64} {
  func.func @_linear_add_ln_kernel(%arg0: i32, %arg1: i32, %arg2: memref<16x32xbf16, #tpu.memory_space<vmem>>, %arg3: memref<32x32xbf16, #tpu.memory_space<vmem>>, %arg4: memref<1x32xf32, #tpu.memory_space<vmem>>, %arg5: memref<16x32xbf16, #tpu.memory_space<vmem>>, %arg6: memref<1x32xf32, #tpu.memory_space<vmem>>, %arg7: memref<1x32xf32, #tpu.memory_space<vmem>>, %arg8: memref<16x32xbf16, #tpu.memory_space<vmem>>, %arg9: memref<16x32xf32, #tpu.memory_space<vmem>>) attributes {dimension_semantics = [#tpu.dimension_semantics<parallel>, #tpu.dimension_semantics<arbitrary>], iteration_bounds = array<i64: 1, 1>, scalar_prefetch = 0 : i64, scratch_operands = 1 : i64, tpu.core_type = #tpu.core_type<tc>, window_params = [{transform_indices = @transform_0, window_bounds = array<i64: 16, 32>}, {transform_indices = @transform_1, window_bounds = array<i64: 32, 32>}, {pipeline_mode = #tpu.pipeline_mode<synchronous>, transform_indices = @transform_2, window_bounds = array<i64: 1, 32>}, {transform_indices = @transform_3, window_bounds = array<i64: 16, 32>}, {pipeline_mode = #tpu.pipeline_mode<synchronous>, transform_indices = @transform_4, window_bounds = array<i64: 1, 32>}, {pipeline_mode = #tpu.pipeline_mode<synchronous>, transform_indices = @transform_5, window_bounds = array<i64: 1, 32>}, {transform_indices = @transform_6, window_bounds = array<i64: 16, 32>}]} {
    %c0_i32 = arith.constant 0 : i32
    %0 = arith.cmpi eq, %arg1, %c0_i32 : i32
    %1 = arith.extui %0 : i1 to i32
    %c0_i32_0 = arith.constant 0 : i32
    %2 = arith.cmpi ne, %1, %c0_i32_0 : i32
    scf.if %2 {
      %cst_10 = arith.constant 0.000000e+00 : f32
      %12 = vector.broadcast %cst_10 : f32 to vector<16x32xf32>
      %c0_11 = arith.constant 0 : index
      %c0_12 = arith.constant 0 : index
      %13 = vector.load %arg9[%c0_11, %c0_12] : memref<16x32xf32, #tpu.memory_space<vmem>>, vector<16x32xf32>
      tpu.vector_store %arg9[%c0_11, %c0_12], %12 {strides = array<i32>} : memref<16x32xf32, #tpu.memory_space<vmem>>, vector<16x32xf32>,
    } else {
    }
    %c0 = arith.constant 0 : index
    %c0_1 = arith.constant 0 : index
    %3 = vector.load %arg9[%c0, %c0_1] : memref<16x32xf32, #tpu.memory_space<vmem>>, vector<16x32xf32>
    %c0_2 = arith.constant 0 : index
    %c0_3 = arith.constant 0 : index
    %4 = vector.load %arg2[%c0_2, %c0_3] : memref<16x32xbf16, #tpu.memory_space<vmem>>, vector<16x32xbf16>
    %c0_4 = arith.constant 0 : index
    %c0_5 = arith.constant 0 : index
    %5 = vector.load %arg3[%c0_4, %c0_5] : memref<32x32xbf16, #tpu.memory_space<vmem>>, vector<32x32xbf16>
    %cst = arith.constant dense<0.000000e+00> : vector<16x32xf32>
    %6 = tpu.matmul %4, %5, %cst {dimension_numbers = #tpu.dot_dimension_numbers<[1], [0], [0], [1], [0, 0, 1, 1], [], []>} : vector<16x32xbf16>, vector<32x32xbf16>, vector<16x32xf32> -> vector<16x32xf32>
    %7 = arith.addf %3, %6 : vector<16x32xf32>
    %c0_6 = arith.constant 0 : index
    %c0_7 = arith.constant 0 : index
    %8 = vector.load %arg9[%c0_6, %c0_7] : memref<16x32xf32, #tpu.memory_space<vmem>>, vector<16x32xf32>
    tpu.vector_store %arg9[%c0_6, %c0_7], %7 {strides = array<i32>} : memref<16x32xf32, #tpu.memory_space<vmem>>, vector<16x32xf32>,
    %c0_i32_8 = arith.constant 0 : i32
    %9 = arith.cmpi eq, %arg1, %c0_i32_8 : i32
    %10 = arith.extui %9 : i1 to i32
    %c0_i32_9 = arith.constant 0 : i32
    %11 = arith.cmpi ne, %10, %c0_i32_9 : i32
    scf.if %11 {
      %c0_10 = arith.constant 0 : index
      %c0_11 = arith.constant 0 : index
      %12 = vector.load %arg9[%c0_10, %c0_11] : memref<16x32xf32, #tpu.memory_space<vmem>>, vector<16x32xf32>
      %c0_12 = arith.constant 0 : index
      %c0_13 = arith.constant 0 : index
      %13 = vector.load %arg4[%c0_12, %c0_13] : memref<1x32xf32, #tpu.memory_space<vmem>>, vector<1x32xf32>
      %14 = vector.broadcast %13 : vector<1x32xf32> to vector<16x32xf32>
      %15 = arith.addf %12, %14 : vector<16x32xf32>
      %c0_14 = arith.constant 0 : index
      %c0_15 = arith.constant 0 : index
      %16 = vector.load %arg5[%c0_14, %c0_15] : memref<16x32xbf16, #tpu.memory_space<vmem>>, vector<16x32xbf16>
      %17 = arith.extf %16 : vector<16x32xbf16> to vector<16x32xf32>
      %18 = arith.addf %15, %17 : vector<16x32xf32>
      %cst_16 = arith.constant dense<0.000000e+00> : vector<16xf32>
      %19 = vector.multi_reduction <add>, %18, %cst_16 [1] : vector<16x32xf32> to vector<16xf32>
      %20 = vector.shape_cast %19 : vector<16xf32> to vector<16x1xf32>
      %cst_17 = arith.constant 3.200000e+01 : f32
      %21 = vector.broadcast %cst_17 : f32 to vector<16x1xf32>
      %22 = arith.divf %20, %21 : vector<16x1xf32>
      %23 = vector.broadcast %22 : vector<16x1xf32> to vector<16x32xf32>
      %24 = arith.subf %18, %23 : vector<16x32xf32>
      %25 = arith.mulf %24, %24 : vector<16x32xf32>
      %cst_18 = arith.constant dense<0.000000e+00> : vector<16xf32>
      %26 = vector.multi_reduction <add>, %25, %cst_18 [1] : vector<16x32xf32> to vector<16xf32>
      %27 = vector.shape_cast %26 : vector<16xf32> to vector<16x1xf32>
      %cst_19 = arith.constant 3.200000e+01 : f32
      %28 = vector.broadcast %cst_19 : f32 to vector<16x1xf32>
      %29 = arith.divf %27, %28 : vector<16x1xf32>
      %30 = vector.broadcast %22 : vector<16x1xf32> to vector<16x32xf32>
      %31 = arith.subf %18, %30 : vector<16x32xf32>
      %cst_20 = arith.constant 9.99999996E-13 : f32
      %32 = vector.broadcast %cst_20 : f32 to vector<16x1xf32>
      %33 = arith.addf %29, %32 : vector<16x1xf32>
      %34 = math.rsqrt %33 : vector<16x1xf32>
      %35 = vector.broadcast %34 : vector<16x1xf32> to vector<16x32xf32>
      %36 = arith.mulf %31, %35 : vector<16x32xf32>
      %c0_21 = arith.constant 0 : index
      %c0_22 = arith.constant 0 : index
      %37 = vector.load %arg6[%c0_21, %c0_22] : memref<1x32xf32, #tpu.memory_space<vmem>>, vector<1x32xf32>
      %38 = vector.broadcast %37 : vector<1x32xf32> to vector<16x32xf32>
      %39 = arith.mulf %38, %36 : vector<16x32xf32>
      %c0_23 = arith.constant 0 : index
      %c0_24 = arith.constant 0 : index
      %40 = vector.load %arg7[%c0_23, %c0_24] : memref<1x32xf32, #tpu.memory_space<vmem>>, vector<1x32xf32>
      %41 = vector.broadcast %40 : vector<1x32xf32> to vector<16x32xf32>
      %42 = arith.addf %39, %41 : vector<16x32xf32>
      %43 = arith.truncf %42 : vector<16x32xf32> to vector<16x32xbf16>
      %c0_25 = arith.constant 0 : index
      %c0_26 = arith.constant 0 : index
      %44 = vector.load %arg8[%c0_25, %c0_26] : memref<16x32xbf16, #tpu.memory_space<vmem>>, vector<16x32xbf16>
      tpu.vector_store %arg8[%c0_25, %c0_26], %43 {strides = array<i32>} : memref<16x32xbf16, #tpu.memory_space<vmem>>, vector<16x32xbf16>,
    } else {
    }
    return
  }
  func.func @transform_0(%arg0: i32, %arg1: i32) -> (i32, i32) {
    %c0_i32 = arith.constant 0 : i32
    return %arg0, %arg1 : i32, i32
  }
  func.func @transform_1(%arg0: i32, %arg1: i32) -> (i32, i32) {
    %c0_i32 = arith.constant 0 : i32
    %c0_i32_0 = arith.constant 0 : i32
    return %arg1, %c0_i32 : i32, i32
  }
  func.func @transform_2(%arg0: i32, %arg1: i32) -> (i32, i32) {
    %c0_i32 = arith.constant 0 : i32
    %c0_i32_0 = arith.constant 0 : i32
    %c0_i32_1 = arith.constant 0 : i32
    return %c0_i32, %c0_i32_0 : i32, i32
  }
  func.func @transform_3(%arg0: i32, %arg1: i32) -> (i32, i32) {
    %c0_i32 = arith.constant 0 : i32
    %c0_i32_0 = arith.constant 0 : i32
    return %arg0, %c0_i32 : i32, i32
  }
  func.func @transform_4(%arg0: i32, %arg1: i32) -> (i32, i32) {
    %c0_i32 = arith.constant 0 : i32
    %c0_i32_0 = arith.constant 0 : i32
    %c0_i32_1 = arith.constant 0 : i32
    return %c0_i32, %c0_i32_0 : i32, i32
  }
  func.func @transform_5(%arg0: i32, %arg1: i32) -> (i32, i32) {
    %c0_i32 = arith.constant 0 : i32
    %c0_i32_0 = arith.constant 0 : i32
    %c0_i32_1 = arith.constant 0 : i32
    return %c0_i32, %c0_i32_0 : i32, i32
  }
  func.func @transform_6(%arg0: i32, %arg1: i32) -> (i32, i32) {
    %c0_i32 = arith.constant 0 : i32
    %c0_i32_0 = arith.constant 0 : i32
    return %arg0, %c0_i32 : i32, i32
  }
}

module attributes {stable_mosaic.version = 11 : i64} {
  func.func @_linear_kernel(%arg0: i32, %arg1: i32, %arg2: i32, %arg3: memref<16x32xbf16, #tpu.memory_space<vmem>>, %arg4: memref<32x60xbf16, #tpu.memory_space<vmem>>, %arg5: memref<1x60xf32, #tpu.memory_space<vmem>>, %arg6: memref<16x60xf32, #tpu.memory_space<vmem>>, %arg7: memref<16x60xf32, #tpu.memory_space<vmem>>) attributes {dimension_semantics = [#tpu.dimension_semantics<parallel>, #tpu.dimension_semantics<parallel>, #tpu.dimension_semantics<arbitrary>], iteration_bounds = array<i64: 1, 1, 1>, scalar_prefetch = 0 : i64, scratch_operands = 1 : i64, tpu.core_type = #tpu.core_type<tc>, window_params = [{transform_indices = @transform_0, window_bounds = array<i64: 16, 32>}, {transform_indices = @transform_1, window_bounds = array<i64: 32, 60>}, {transform_indices = @transform_2, window_bounds = array<i64: 1, 60>}, {transform_indices = @transform_3, window_bounds = array<i64: 16, 60>}]} {
    %c0_i32 = arith.constant 0 : i32
    %0 = arith.cmpi eq, %arg2, %c0_i32 : i32
    %1 = arith.extui %0 : i1 to i32
    %c0_i32_0 = arith.constant 0 : i32
    %2 = arith.cmpi ne, %1, %c0_i32_0 : i32
    scf.if %2 {
      %cst_10 = arith.constant 0.000000e+00 : f32
      %12 = vector.broadcast %cst_10 : f32 to vector<16x60xf32>
      %c0_11 = arith.constant 0 : index
      %c0_12 = arith.constant 0 : index
      %13 = vector.load %arg7[%c0_11, %c0_12] : memref<16x60xf32, #tpu.memory_space<vmem>>, vector<16x60xf32>
      tpu.vector_store %arg7[%c0_11, %c0_12], %12 {strides = array<i32>} : memref<16x60xf32, #tpu.memory_space<vmem>>, vector<16x60xf32>,
    } else {
    }
    %c0 = arith.constant 0 : index
    %c0_1 = arith.constant 0 : index
    %3 = vector.load %arg7[%c0, %c0_1] : memref<16x60xf32, #tpu.memory_space<vmem>>, vector<16x60xf32>
    %c0_2 = arith.constant 0 : index
    %c0_3 = arith.constant 0 : index
    %4 = vector.load %arg3[%c0_2, %c0_3] : memref<16x32xbf16, #tpu.memory_space<vmem>>, vector<16x32xbf16>
    %c0_4 = arith.constant 0 : index
    %c0_5 = arith.constant 0 : index
    %5 = vector.load %arg4[%c0_4, %c0_5] : memref<32x60xbf16, #tpu.memory_space<vmem>>, vector<32x60xbf16>
    %cst = arith.constant dense<0.000000e+00> : vector<16x60xf32>
    %6 = tpu.matmul %4, %5, %cst {dimension_numbers = #tpu.dot_dimension_numbers<[1], [0], [0], [1], [0, 0, 1, 1], [], []>} : vector<16x32xbf16>, vector<32x60xbf16>, vector<16x60xf32> -> vector<16x60xf32>
    %7 = arith.addf %3, %6 : vector<16x60xf32>
    %c0_6 = arith.constant 0 : index
    %c0_7 = arith.constant 0 : index
    %8 = vector.load %arg7[%c0_6, %c0_7] : memref<16x60xf32, #tpu.memory_space<vmem>>, vector<16x60xf32>
    tpu.vector_store %arg7[%c0_6, %c0_7], %7 {strides = array<i32>} : memref<16x60xf32, #tpu.memory_space<vmem>>, vector<16x60xf32>,
    %c0_i32_8 = arith.constant 0 : i32
    %9 = arith.cmpi eq, %arg2, %c0_i32_8 : i32
    %10 = arith.extui %9 : i1 to i32
    %c0_i32_9 = arith.constant 0 : i32
    %11 = arith.cmpi ne, %10, %c0_i32_9 : i32
    scf.if %11 {
      %c0_10 = arith.constant 0 : index
      %c0_11 = arith.constant 0 : index
      %12 = vector.load %arg7[%c0_10, %c0_11] : memref<16x60xf32, #tpu.memory_space<vmem>>, vector<16x60xf32>
      %c0_12 = arith.constant 0 : index
      %c0_13 = arith.constant 0 : index
      %13 = vector.load %arg5[%c0_12, %c0_13] : memref<1x60xf32, #tpu.memory_space<vmem>>, vector<1x60xf32>
      %14 = vector.broadcast %13 : vector<1x60xf32> to vector<16x60xf32>
      %15 = arith.addf %12, %14 : vector<16x60xf32>
      %c0_14 = arith.constant 0 : index
      %c0_15 = arith.constant 0 : index
      %16 = vector.load %arg6[%c0_14, %c0_15] : memref<16x60xf32, #tpu.memory_space<vmem>>, vector<16x60xf32>
      tpu.vector_store %arg6[%c0_14, %c0_15], %15 {strides = array<i32>} : memref<16x60xf32, #tpu.memory_space<vmem>>, vector<16x60xf32>,
    } else {
    }
    return
  }
  func.func @transform_0(%arg0: i32, %arg1: i32, %arg2: i32) -> (i32, i32) {
    %c0_i32 = arith.constant 0 : i32
    return %arg0, %arg2 : i32, i32
  }
  func.func @transform_1(%arg0: i32, %arg1: i32, %arg2: i32) -> (i32, i32) {
    %c0_i32 = arith.constant 0 : i32
    return %arg2, %arg1 : i32, i32
  }
  func.func @transform_2(%arg0: i32, %arg1: i32, %arg2: i32) -> (i32, i32) {
    %c0_i32 = arith.constant 0 : i32
    %c0_i32_0 = arith.constant 0 : i32
    return %c0_i32, %arg1 : i32, i32
  }
  func.func @transform_3(%arg0: i32, %arg1: i32, %arg2: i32) -> (i32, i32) {
    %c0_i32 = arith.constant 0 : i32
    return %arg0, %arg1 : i32, i32
  }
}

</mosaic_0001>

<llo_original>
// kernel: transformer_forward.28
$region0: #{transformer_forward.28}
  #allocation0 [shape = 'u32[]', space=smem, size = 0x4, offset = 0x4, fixed_abs, tag = 'smem constant byte address 0x4 - core index']
  #allocation1 [shape = 'u32[72,128]{1,0:T(1,128)}', space=vmem, size = 0x9000, scoped, tag = 'internal scratch']
  #allocation2 [shape = 'f32[16,32]{1,0:T(8,128)}', space=vmem, size = 0x2000, scoped, tag = 'scratch operand']
  %s0 = inlined_call_operand.vmem [shape: bf16[16,32], index: 0, kind: input, shape index: {}, may-alias: {0,5}]
  %s1 = inlined_call_operand.vmem [shape: bf16[32,64], index: 1, kind: input, shape index: {}]
  %s2 = inlined_call_operand.vmem [shape: f32[1,64], index: 2, kind: input, shape index: {}]
  %s3 = inlined_call_operand.vmem [shape: bf16[64,32], index: 3, kind: input, shape index: {}]
  %s4 = inlined_call_operand.vmem [shape: f32[1,32], index: 4, kind: input, shape index: {}]
  %s5 = inlined_call_operand.vmem [shape: bf16[16,32], index: 5, kind: input, shape index: {}, may-alias: {0,5}]
  %s6 = inlined_call_operand.vmem [shape: f32[1,32], index: 6, kind: input, shape index: {}]
  %s7 = inlined_call_operand.vmem [shape: f32[1,32], index: 7, kind: input, shape index: {}]
  %s8 = inlined_call_operand.vmem [shape: bf16[16,32], index: 8, kind: output, shape index: {}]
  %s9 = sld [smem:[#allocation0]]
  $region50: #{transformer_forward.28} parent=0
    _
  %s11 = ssub.s32 1, %s9
  %s12 = scalar_select 0, %s11, %s9
  // Predicated region
  $region2: #{transformer_forward.28} parent=0 // pred_check
    _
  $region3: #{transformer_forward.28} parent=0 // pred_check_branch
    %14 = sbr.rel (0) target = $region5
  $region4: #{transformer_forward.28} parent=0 // pred_region
    _
  $region5: #{transformer_forward.28} parent=0 // pred_fallthru
    _
  // Predicated region
  $region6: #{transformer_forward.28} parent=0 // pred_check
    _
  $region7: #{transformer_forward.28} parent=0 // pred_check_branch
    %16 = sbr.rel (0) target = $region9
  $region8: #{transformer_forward.28} parent=0 // pred_region
    _
  $region9: #{transformer_forward.28} parent=0 // pred_fallthru
    _
  // Predicated region
  $region10: #{transformer_forward.28} parent=0 // pred_check
    _
  $region11: #{transformer_forward.28} parent=0 // pred_check_branch
    %18 = sbr.rel (0) target = $region13
  $region12: #{transformer_forward.28} parent=0 // pred_region
    _
  $region13: #{transformer_forward.28} parent=0 // pred_fallthru
    _
  // Predicated region
  $region14: #{transformer_forward.28} parent=0 // pred_check
    _
  $region15: #{transformer_forward.28} parent=0 // pred_check_branch
    %20 = sbr.rel (0) target = $region17
  $region16: #{transformer_forward.28} parent=0 // pred_region
    _
  $region17: #{transformer_forward.28} parent=0 // pred_fallthru
    _
  // Predicated region
  $region18: #{transformer_forward.28} parent=0 // pred_check
    _
  $region19: #{transformer_forward.28} parent=0 // pred_check_branch
    %22 = sbr.rel (0) target = $region21
  $region20: #{transformer_forward.28} parent=0 // pred_region
    _
  $region21: #{transformer_forward.28} parent=0 // pred_fallthru
    _
  // Predicated region
  $region22: #{transformer_forward.28} parent=0 // pred_check
    _
  $region23: #{transformer_forward.28} parent=0 // pred_check_branch
    %24 = sbr.rel (0) target = $region25
  $region24: #{transformer_forward.28} parent=0 // pred_region
    _
  $region25: #{transformer_forward.28} parent=0 // pred_fallthru
    _
  // Predicated region
  $region26: #{transformer_forward.28} parent=0 // pred_check
    _
  $region27: #{transformer_forward.28} parent=0 // pred_check_branch
    %26 = sbr.rel (0) target = $region29
  $region28: #{transformer_forward.28} parent=0 // pred_region
    _
  $region29: #{transformer_forward.28} parent=0 // pred_fallthru
    _
  // Predicated region
  $region30: #{transformer_forward.28} parent=0 // pred_check
    _
  $region31: #{transformer_forward.28} parent=0 // pred_check_branch
    %28 = sbr.rel (0) target = $region33
  $region32: #{transformer_forward.28} parent=0 // pred_region
    _
  $region33: #{transformer_forward.28} parent=0 // pred_fallthru
    _
  %p30 = scmp.eq.s32.totalorder 0, 0
  // Predicated region
  $region34: #{transformer_forward.28} parent=0 // pred_check
    %p31 = pneg %p30
  $region35: #{transformer_forward.28} parent=0 // pred_check_branch
    %33 = sbr.rel (%p31) target = $region37
  $region36: #{transformer_forward.28} parent=0 // pred_region
    %vm34 = vcmask 261120
    %35 = vst.msk [vmem:[#allocation2] sm:$0xff] %vm34, 0.0
    %36 = vst.msk [vmem:[#allocation2 + $0x8] sm:$0xff] %vm34, 0.0
  $region37: #{transformer_forward.28} parent=0 // pred_fallthru
    _
  %v37 = vld [vmem:[%s0] sm:$0xf]
  %v38 = vld [vmem:[%s0 + $0x4] sm:$0xf]
  %v39 = vld [vmem:[%s1] sm:$0xf]
  %v40 = vld [vmem:[%s1 + $0x4] sm:$0xf]
  %v41 = vld [vmem:[%s1 + $0x8] sm:$0xf]
  %v42 = vld [vmem:[%s1 + $0xc] sm:$0xf]
  %v43 = vld [vmem:[%s2] sm:$0x1]
  %v45 = vperm.slane %v43, 0
  %v49 = vunpack.c.l.b16 %v37
  %v50 = vunpack.c.l.b16 %v38
  %v51 = vpack.c.b16 %v50, %v49
  %v56 = vunpack.c.l.b16 %v39
  %v57 = vunpack.c.l.b16 %v40
  %v58 = vunpack.c.l.b16 %v41
  %v59 = vunpack.c.l.b16 %v42
  %v60 = vpack.c.b16 %v57, %v56
  %v61 = vpack.c.b16 %v59, %v58
  %vm64 = vcmask 261120
  %v66 = vsel %vm64, %v51, 0
  %68 = vmatpush.bf16.msra.mxu0 0
  %69 = vmatpush.bf16.msra.mxu0 0
  %70 = vmatpush.bf16.msra.mxu0 0
  %71 = vmatpush.bf16.msra.mxu0 0
  %72 = vmatpush.bf16.msra.mxu0 0
  %73 = vmatpush.bf16.msra.mxu0 0
  %74 = vmatpush.bf16.msra.mxu0 %v61
  %75 = vmatpush.bf16.msra.mxu0 %v60
  %76 = vmatmul.bf16.gmra.mxu0 %v66
  %v77 = vpop.f32.mrf.mxu0
  %v78 = vadd.f32 %v45, %v77
  %v79 = vpop.f32.mrf.mxu0
  %v80 = vadd.f32 %v45, %v79
  %81 = vdwg.mxu0
  %v82 = vmax.f32 %v78, 0.0
  %v83 = vmax.f32 %v80, 0.0
  %v84 = vpack.c.bf16 %v83, %v82
  %v85 = vld [vmem:[#allocation2] sm:$0xff]
  %v86 = vld [vmem:[#allocation2 + $0x8] sm:$0xff]
  %v87 = vld [vmem:[%s3] sm:$0xf]
  %v88 = vld [vmem:[%s3 + $0x4] sm:$0xf]
  %v89 = vld [vmem:[%s3 + $0x8] sm:$0xf]
  %v90 = vld [vmem:[%s3 + $0xc] sm:$0xf]
  %v91 = vld [vmem:[%s3 + $0x10] sm:$0xf]
  %v92 = vld [vmem:[%s3 + $0x14] sm:$0xf]
  %v93 = vld [vmem:[%s3 + $0x18] sm:$0xf]
  %v94 = vld [vmem:[%s3 + $0x1c] sm:$0xf]
  %v103 = vunpack.c.l.b16 %v87
  %v104 = vunpack.c.l.b16 %v88
  %v105 = vunpack.c.l.b16 %v89
  %v106 = vunpack.c.l.b16 %v90
  %v107 = vunpack.c.l.b16 %v91
  %v108 = vunpack.c.l.b16 %v92
  %v109 = vunpack.c.l.b16 %v93
  %v110 = vunpack.c.l.b16 %v94
  %v111 = vpack.c.b16 %v104, %v103
  %v112 = vpack.c.b16 %v106, %v105
  %v113 = vpack.c.b16 %v108, %v107
  %v114 = vpack.c.b16 %v110, %v109
  %vm119 = vcmask 523264
  %v121 = vsel %vm119, %v84, 0
  %123 = vmatpush.bf16.msra.mxu0 0
  %124 = vmatpush.bf16.msra.mxu0 0
  %125 = vmatpush.bf16.msra.mxu0 0
  %126 = vmatpush.bf16.msra.mxu0 0
  %127 = vmatpush.bf16.msra.mxu0 %v114
  %128 = vmatpush.bf16.msra.mxu0 %v113
  %129 = vmatpush.bf16.msra.mxu0 %v112
  %130 = vmatpush.bf16.msra.mxu0 %v111
  %131 = vmatmul.bf16.gmra.mxu0 %v121
  %v132 = vpop.f32.mrf.mxu0
  %v133 = vadd.f32 0.0, %v132
  %v134 = vpop.f32.mrf.mxu0
  %v135 = vadd.f32 0.0, %v134
  %136 = vdwg.mxu0
  %v137 = vadd.f32 %v85, %v133
  %v138 = vadd.f32 %v86, %v135
  %139 = vst.msk [vmem:[#allocation2] sm:$0xff] %vm64, %v137
  %140 = vst.msk [vmem:[#allocation2 + $0x8] sm:$0xff] %vm64, %v138
  // Predicated region
  $region38: #{transformer_forward.28} parent=0 // pred_check
    %p141 = pneg %p30
  $region39: #{transformer_forward.28} parent=0 // pred_check_branch
    %143 = sbr.rel (%p141) target = $region41
  $region40: #{transformer_forward.28} parent=0 // pred_region
    %v144 = vld [vmem:[#allocation2] sm:$0xff]
    %v145 = vld [vmem:[#allocation2 + $0x8] sm:$0xff]
    %v146 = vld [vmem:[%s4] sm:$0x1]
    %v148 = vperm.slane %v146, 0
    %v150 = vadd.f32 %v144, %v148
    %v151 = vadd.f32 %v145, %v148
    %v152 = vld [vmem:[%s5] sm:$0xf]
    %v153 = vld [vmem:[%s5 + $0x4] sm:$0xf]
    %v154 = vunpack.c.l.bf16 %v152
    %v155 = vunpack.c.l.bf16 %v153
    %v156 = vadd.f32 %v150, %v154
    %v157 = vadd.f32 %v151, %v155
    %v158 = vsel %vm64, %v156, 0.0
    %159 = vadd.xlane.f32.xlu0 %v158
    %v160 = vpop.xlane.xlu0 %159
    %v161 = vsel %vm64, %v157, 0.0
    %162 = vadd.xlane.f32.xlu0 %v161
    %v163 = vpop.xlane.xlu0 %162
    %v164 = vrcp.pop 32.0
    %v165 = vmul.f32 32.0, %v164
    %v166 = vsub.f32 1.0, %v165
    %v167 = vmul.f32 %v164, %v166
    %v168 = vadd.f32 %v164, %v167
    %vm169 = vweird.f32 %v164
    %v170 = vsel %vm169, %v164, %v168
    %v171 = vmul.f32 %v160, %v170
    %v172 = vmul.f32 %v163, %v170
    %v173 = vsub.f32 %v156, %v171
    %v174 = vsub.f32 %v157, %v172
    %v175 = vmul.f32 %v173, %v173
    %v176 = vmul.f32 %v174, %v174
    %v177 = vsel %vm64, %v175, 0.0
    %178 = vadd.xlane.f32.xlu0 %v177
    %v179 = vpop.xlane.xlu0 %178
    %v180 = vsel %vm64, %v176, 0.0
    %181 = vadd.xlane.f32.xlu0 %v180
    %v182 = vpop.xlane.xlu0 %181
    %v183 = vmul.f32 %v179, %v170
    %v184 = vmul.f32 %v182, %v170
    %v185 = vadd.f32 %v183, 1e-12
    %v186 = vadd.f32 %v184, 1e-12
    %v187 = vrsqrt.pop %v185
    %v188 = vmul.f32 %v187, %v185
    %v189 = vmul.f32 %v188, %v187
    %v190 = vmul.f32 0.5, %v189
    %v191 = vsub.f32 1.5, %v190
    %v192 = vmul.f32 %v187, %v191
    %vm193 = vweird.f32 %v185
    %vm194 = vweird.f32 %v187
    %vm195 = vmor %vm193, %vm194
    %v196 = vsel %vm195, %v187, %v192
    %v197 = vrsqrt.pop %v186
    %v198 = vmul.f32 %v197, %v186
    %v199 = vmul.f32 %v198, %v197
    %v200 = vmul.f32 0.5, %v199
    %v201 = vsub.f32 1.5, %v200
    %v202 = vmul.f32 %v197, %v201
    %vm203 = vweird.f32 %v186
    %vm204 = vweird.f32 %v197
    %vm205 = vmor %vm203, %vm204
    %v206 = vsel %vm205, %v197, %v202
    %v207 = vmul.f32 %v173, %v196
    %v208 = vmul.f32 %v174, %v206
    %v209 = vld [vmem:[%s6] sm:$0x1]
    %v211 = vperm.slane %v209, 0
    %v213 = vmul.f32 %v211, %v207
    %v214 = vmul.f32 %v211, %v208
    %v215 = vld [vmem:[%s7] sm:$0x1]
    %v217 = vperm.slane %v215, 0
    %v219 = vadd.f32 %v213, %v217
    %v220 = vadd.f32 %v214, %v217
    %v221 = vpack.c.bf16 %v219, %v219
    %v222 = vpack.c.bf16 %v220, %v220
    %vm223 = vcmask 257024
    %224 = vst.msk [vmem:[%s8] sm:$0xf] %vm223, %v221
    %225 = vst.msk [vmem:[%s8 + $0x4] sm:$0xf] %vm223, %v222
  $region41: #{transformer_forward.28} parent=0 // pred_fallthru
    _
  // Predicated region
  $region42: #{transformer_forward.28} parent=0 // pred_check
    _
  $region43: #{transformer_forward.28} parent=0 // pred_check_branch
    %227 = sbr.rel (0) target = $region45
  $region44: #{transformer_forward.28} parent=0 // pred_region
    _
  $region45: #{transformer_forward.28} parent=0 // pred_fallthru
    _
  // Predicated region
  $region46: #{transformer_forward.28} parent=0 // pred_check
    _
  $region47: #{transformer_forward.28} parent=0 // pred_check_branch
    %229 = sbr.rel (0) target = $region49
  $region48: #{transformer_forward.28} parent=0 // pred_region
    _
  $region49: #{transformer_forward.28} parent=0 // pred_fallthru
    _

// kernel: transformer_forward.25
$region0: #{transformer_forward.25}
  #allocation0 [shape = 'u32[]', space=smem, size = 0x4, offset = 0x4, fixed_abs, tag = 'smem constant byte address 0x4 - core index']
  #allocation1 [shape = 'u32[72,128]{1,0:T(1,128)}', space=vmem, size = 0x9000, scoped, tag = 'internal scratch']
  #allocation2 [shape = 'f32[16,96]{1,0:T(8,128)}', space=vmem, size = 0x2000, scoped, tag = 'scratch operand']
  %s0 = inlined_call_operand.vmem [shape: bf16[16,32], index: 0, kind: input, shape index: {}]
  %s1 = inlined_call_operand.vmem [shape: bf16[32,96], index: 1, kind: input, shape index: {}]
  %s2 = inlined_call_operand.vmem [shape: f32[1,96], index: 2, kind: input, shape index: {}]
  %s3 = inlined_call_operand.vmem [shape: bf16[16,96], index: 3, kind: output, shape index: {}]
  %s4 = sld [smem:[#allocation0]]
  $region30: #{transformer_forward.25} parent=0
    _
  %s6 = ssub.s32 1, %s4
  %s7 = scalar_select 0, %s6, %s4
  // Predicated region
  $region2: #{transformer_forward.25} parent=0 // pred_check
    _
  $region3: #{transformer_forward.25} parent=0 // pred_check_branch
    %9 = sbr.rel (0) target = $region5
  $region4: #{transformer_forward.25} parent=0 // pred_region
    _
  $region5: #{transformer_forward.25} parent=0 // pred_fallthru
    _
  // Predicated region
  $region6: #{transformer_forward.25} parent=0 // pred_check
    _
  $region7: #{transformer_forward.25} parent=0 // pred_check_branch
    %11 = sbr.rel (0) target = $region9
  $region8: #{transformer_forward.25} parent=0 // pred_region
    _
  $region9: #{transformer_forward.25} parent=0 // pred_fallthru
    _
  // Predicated region
  $region10: #{transformer_forward.25} parent=0 // pred_check
    _
  $region11: #{transformer_forward.25} parent=0 // pred_check_branch
    %13 = sbr.rel (0) target = $region13
  $region12: #{transformer_forward.25} parent=0 // pred_region
    _
  $region13: #{transformer_forward.25} parent=0 // pred_fallthru
    _
  %p15 = scmp.eq.s32.totalorder 0, 0
  // Predicated region
  $region14: #{transformer_forward.25} parent=0 // pred_check
    %p16 = pneg %p15
  $region15: #{transformer_forward.25} parent=0 // pred_check_branch
    %18 = sbr.rel (%p16) target = $region17
  $region16: #{transformer_forward.25} parent=0 // pred_region
    %vm19 = vcmask 785408
    %20 = vst.msk [vmem:[#allocation2] sm:$0xff] %vm19, 0.0
    %21 = vst.msk [vmem:[#allocation2 + $0x8] sm:$0xff] %vm19, 0.0
  $region17: #{transformer_forward.25} parent=0 // pred_fallthru
    _
  %v22 = vld [vmem:[#allocation2] sm:$0xff]
  %v23 = vld [vmem:[#allocation2 + $0x8] sm:$0xff]
  %v24 = vld [vmem:[%s0] sm:$0xf]
  %v25 = vld [vmem:[%s0 + $0x4] sm:$0xf]
  %v26 = vld [vmem:[%s1] sm:$0xf]
  %v27 = vld [vmem:[%s1 + $0x4] sm:$0xf]
  %v28 = vld [vmem:[%s1 + $0x8] sm:$0xf]
  %v29 = vld [vmem:[%s1 + $0xc] sm:$0xf]
  %v32 = vunpack.c.l.b16 %v24
  %v33 = vunpack.c.l.b16 %v25
  %v34 = vpack.c.b16 %v33, %v32
  %v39 = vunpack.c.l.b16 %v26
  %v40 = vunpack.c.l.b16 %v27
  %v41 = vunpack.c.l.b16 %v28
  %v42 = vunpack.c.l.b16 %v29
  %v43 = vpack.c.b16 %v40, %v39
  %v44 = vpack.c.b16 %v42, %v41
  %vm47 = vcmask 261120
  %v49 = vsel %vm47, %v34, 0
  %51 = vmatpush.bf16.msra.mxu0 0
  %52 = vmatpush.bf16.msra.mxu0 0
  %53 = vmatpush.bf16.msra.mxu0 0
  %54 = vmatpush.bf16.msra.mxu0 0
  %55 = vmatpush.bf16.msra.mxu0 0
  %56 = vmatpush.bf16.msra.mxu0 0
  %57 = vmatpush.bf16.msra.mxu0 %v44
  %58 = vmatpush.bf16.msra.mxu0 %v43
  %59 = vmatmul.bf16.gmra.mxu0 %v49
  %v60 = vpop.f32.mrf.mxu0
  %v61 = vadd.f32 0.0, %v60
  %v62 = vpop.f32.mrf.mxu0
  %v63 = vadd.f32 0.0, %v62
  %64 = vdwg.mxu0
  %v65 = vadd.f32 %v22, %v61
  %v66 = vadd.f32 %v23, %v63
  %vm67 = vcmask 785408
  %68 = vst.msk [vmem:[#allocation2] sm:$0xff] %vm67, %v65
  %69 = vst.msk [vmem:[#allocation2 + $0x8] sm:$0xff] %vm67, %v66
  // Predicated region
  $region18: #{transformer_forward.25} parent=0 // pred_check
    %p70 = pneg %p15
  $region19: #{transformer_forward.25} parent=0 // pred_check_branch
    %72 = sbr.rel (%p70) target = $region21
  $region20: #{transformer_forward.25} parent=0 // pred_region
    %v73 = vld [vmem:[#allocation2] sm:$0xff]
    %v74 = vld [vmem:[#allocation2 + $0x8] sm:$0xff]
    %v75 = vld [vmem:[%s2] sm:$0x1]
    %v77 = vperm.slane %v75, 0
    %v79 = vadd.f32 %v73, %v77
    %v80 = vadd.f32 %v74, %v77
    %v81 = vpack.c.bf16 %v79, %v79
    %v82 = vpack.c.bf16 %v80, %v80
    %vm83 = vcmask 781312
    %84 = vst.msk [vmem:[%s3] sm:$0xf] %vm83, %v81
    %85 = vst.msk [vmem:[%s3 + $0x4] sm:$0xf] %vm83, %v82
  $region21: #{transformer_forward.25} parent=0 // pred_fallthru
    _
  // Predicated region
  $region22: #{transformer_forward.25} parent=0 // pred_check
    _
  $region23: #{transformer_forward.25} parent=0 // pred_check_branch
    %87 = sbr.rel (0) target = $region25
  $region24: #{transformer_forward.25} parent=0 // pred_region
    _
  $region25: #{transformer_forward.25} parent=0 // pred_fallthru
    _
  // Predicated region
  $region26: #{transformer_forward.25} parent=0 // pred_check
    _
  $region27: #{transformer_forward.25} parent=0 // pred_check_branch
    %89 = sbr.rel (0) target = $region29
  $region28: #{transformer_forward.25} parent=0 // pred_region
    _
  $region29: #{transformer_forward.25} parent=0 // pred_fallthru
    _

// kernel: transformer_forward.27
$region0: #{transformer_forward.27}
  #allocation0 [shape = 'u32[]', space=smem, size = 0x4, offset = 0x4, fixed_abs, tag = 'smem constant byte address 0x4 - core index']
  #allocation1 [shape = 'u32[72,128]{1,0:T(1,128)}', space=vmem, size = 0x9000, scoped, tag = 'internal scratch']
  #allocation2 [shape = 'f32[16,32]{1,0:T(8,128)}', space=vmem, size = 0x2000, scoped, tag = 'scratch operand']
  %s0 = inlined_call_operand.vmem [shape: bf16[16,32], index: 0, kind: input, shape index: {}]
  %s1 = inlined_call_operand.vmem [shape: bf16[32,32], index: 1, kind: input, shape index: {}]
  %s2 = inlined_call_operand.vmem [shape: f32[1,32], index: 2, kind: input, shape index: {}]
  %s3 = inlined_call_operand.vmem [shape: bf16[16,32], index: 3, kind: input, shape index: {}]
  %s4 = inlined_call_operand.vmem [shape: f32[1,32], index: 4, kind: input, shape index: {}]
  %s5 = inlined_call_operand.vmem [shape: f32[1,32], index: 5, kind: input, shape index: {}]
  %s6 = inlined_call_operand.vmem [shape: bf16[16,32], index: 6, kind: output, shape index: {}]
  %s7 = sld [smem:[#allocation0]]
  $region42: #{transformer_forward.27} parent=0
    _
  %s9 = ssub.s32 1, %s7
  %s10 = scalar_select 0, %s9, %s7
  // Predicated region
  $region2: #{transformer_forward.27} parent=0 // pred_check
    _
  $region3: #{transformer_forward.27} parent=0 // pred_check_branch
    %12 = sbr.rel (0) target = $region5
  $region4: #{transformer_forward.27} parent=0 // pred_region
    _
  $region5: #{transformer_forward.27} parent=0 // pred_fallthru
    _
  // Predicated region
  $region6: #{transformer_forward.27} parent=0 // pred_check
    _
  $region7: #{transformer_forward.27} parent=0 // pred_check_branch
    %14 = sbr.rel (0) target = $region9
  $region8: #{transformer_forward.27} parent=0 // pred_region
    _
  $region9: #{transformer_forward.27} parent=0 // pred_fallthru
    _
  // Predicated region
  $region10: #{transformer_forward.27} parent=0 // pred_check
    _
  $region11: #{transformer_forward.27} parent=0 // pred_check_branch
    %16 = sbr.rel (0) target = $region13
  $region12: #{transformer_forward.27} parent=0 // pred_region
    _
  $region13: #{transformer_forward.27} parent=0 // pred_fallthru
    _
  // Predicated region
  $region14: #{transformer_forward.27} parent=0 // pred_check
    _
  $region15: #{transformer_forward.27} parent=0 // pred_check_branch
    %18 = sbr.rel (0) target = $region17
  $region16: #{transformer_forward.27} parent=0 // pred_region
    _
  $region17: #{transformer_forward.27} parent=0 // pred_fallthru
    _
  // Predicated region
  $region18: #{transformer_forward.27} parent=0 // pred_check
    _
  $region19: #{transformer_forward.27} parent=0 // pred_check_branch
    %20 = sbr.rel (0) target = $region21
  $region20: #{transformer_forward.27} parent=0 // pred_region
    _
  $region21: #{transformer_forward.27} parent=0 // pred_fallthru
    _
  // Predicated region
  $region22: #{transformer_forward.27} parent=0 // pred_check
    _
  $region23: #{transformer_forward.27} parent=0 // pred_check_branch
    %22 = sbr.rel (0) target = $region25
  $region24: #{transformer_forward.27} parent=0 // pred_region
    _
  $region25: #{transformer_forward.27} parent=0 // pred_fallthru
    _
  %p24 = scmp.eq.s32.totalorder 0, 0
  // Predicated region
  $region26: #{transformer_forward.27} parent=0 // pred_check
    %p25 = pneg %p24
  $region27: #{transformer_forward.27} parent=0 // pred_check_branch
    %27 = sbr.rel (%p25) target = $region29
  $region28: #{transformer_forward.27} parent=0 // pred_region
    %vm28 = vcmask 261120
    %29 = vst.msk [vmem:[#allocation2] sm:$0xff] %vm28, 0.0
    %30 = vst.msk [vmem:[#allocation2 + $0x8] sm:$0xff] %vm28, 0.0
  $region29: #{transformer_forward.27} parent=0 // pred_fallthru
    _
  %v31 = vld [vmem:[#allocation2] sm:$0xff]
  %v32 = vld [vmem:[#allocation2 + $0x8] sm:$0xff]
  %v33 = vld [vmem:[%s0] sm:$0xf]
  %v34 = vld [vmem:[%s0 + $0x4] sm:$0xf]
  %v35 = vld [vmem:[%s1] sm:$0xf]
  %v36 = vld [vmem:[%s1 + $0x4] sm:$0xf]
  %v37 = vld [vmem:[%s1 + $0x8] sm:$0xf]
  %v38 = vld [vmem:[%s1 + $0xc] sm:$0xf]
  %v41 = vunpack.c.l.b16 %v33
  %v42 = vunpack.c.l.b16 %v34
  %v43 = vpack.c.b16 %v42, %v41
  %v48 = vunpack.c.l.b16 %v35
  %v49 = vunpack.c.l.b16 %v36
  %v50 = vunpack.c.l.b16 %v37
  %v51 = vunpack.c.l.b16 %v38
  %v52 = vpack.c.b16 %v49, %v48
  %v53 = vpack.c.b16 %v51, %v50
  %vm56 = vcmask 261120
  %v58 = vsel %vm56, %v43, 0
  %60 = vmatpush.bf16.msra.mxu0 0
  %61 = vmatpush.bf16.msra.mxu0 0
  %62 = vmatpush.bf16.msra.mxu0 0
  %63 = vmatpush.bf16.msra.mxu0 0
  %64 = vmatpush.bf16.msra.mxu0 0
  %65 = vmatpush.bf16.msra.mxu0 0
  %66 = vmatpush.bf16.msra.mxu0 %v53
  %67 = vmatpush.bf16.msra.mxu0 %v52
  %68 = vmatmul.bf16.gmra.mxu0 %v58
  %v69 = vpop.f32.mrf.mxu0
  %v70 = vadd.f32 0.0, %v69
  %v71 = vpop.f32.mrf.mxu0
  %v72 = vadd.f32 0.0, %v71
  %73 = vdwg.mxu0
  %v74 = vadd.f32 %v31, %v70
  %v75 = vadd.f32 %v32, %v72
  %76 = vst.msk [vmem:[#allocation2] sm:$0xff] %vm56, %v74
  %77 = vst.msk [vmem:[#allocation2 + $0x8] sm:$0xff] %vm56, %v75
  // Predicated region
  $region30: #{transformer_forward.27} parent=0 // pred_check
    %p78 = pneg %p24
  $region31: #{transformer_forward.27} parent=0 // pred_check_branch
    %80 = sbr.rel (%p78) target = $region33
  $region32: #{transformer_forward.27} parent=0 // pred_region
    %v81 = vld [vmem:[#allocation2] sm:$0xff]
    %v82 = vld [vmem:[#allocation2 + $0x8] sm:$0xff]
    %v83 = vld [vmem:[%s2] sm:$0x1]
    %v85 = vperm.slane %v83, 0
    %v87 = vadd.f32 %v81, %v85
    %v88 = vadd.f32 %v82, %v85
    %v89 = vld [vmem:[%s3] sm:$0xf]
    %v90 = vld [vmem:[%s3 + $0x4] sm:$0xf]
    %v91 = vunpack.c.l.bf16 %v89
    %v92 = vunpack.c.l.bf16 %v90
    %v93 = vadd.f32 %v87, %v91
    %v94 = vadd.f32 %v88, %v92
    %v95 = vsel %vm56, %v93, 0.0
    %96 = vadd.xlane.f32.xlu0 %v95
    %v97 = vpop.xlane.xlu0 %96
    %v98 = vsel %vm56, %v94, 0.0
    %99 = vadd.xlane.f32.xlu0 %v98
    %v100 = vpop.xlane.xlu0 %99
    %v101 = vrcp.pop 32.0
    %v102 = vmul.f32 32.0, %v101
    %v103 = vsub.f32 1.0, %v102
    %v104 = vmul.f32 %v101, %v103
    %v105 = vadd.f32 %v101, %v104
    %vm106 = vweird.f32 %v101
    %v107 = vsel %vm106, %v101, %v105
    %v108 = vmul.f32 %v97, %v107
    %v109 = vmul.f32 %v100, %v107
    %v110 = vsub.f32 %v93, %v108
    %v111 = vsub.f32 %v94, %v109
    %v112 = vmul.f32 %v110, %v110
    %v113 = vmul.f32 %v111, %v111
    %v114 = vsel %vm56, %v112, 0.0
    %115 = vadd.xlane.f32.xlu0 %v114
    %v116 = vpop.xlane.xlu0 %115
    %v117 = vsel %vm56, %v113, 0.0
    %118 = vadd.xlane.f32.xlu0 %v117
    %v119 = vpop.xlane.xlu0 %118
    %v120 = vmul.f32 %v116, %v107
    %v121 = vmul.f32 %v119, %v107
    %v122 = vadd.f32 %v120, 1e-12
    %v123 = vadd.f32 %v121, 1e-12
    %v124 = vrsqrt.pop %v122
    %v125 = vmul.f32 %v124, %v122
    %v126 = vmul.f32 %v125, %v124
    %v127 = vmul.f32 0.5, %v126
    %v128 = vsub.f32 1.5, %v127
    %v129 = vmul.f32 %v124, %v128
    %vm130 = vweird.f32 %v122
    %vm131 = vweird.f32 %v124
    %vm132 = vmor %vm130, %vm131
    %v133 = vsel %vm132, %v124, %v129
    %v134 = vrsqrt.pop %v123
    %v135 = vmul.f32 %v134, %v123
    %v136 = vmul.f32 %v135, %v134
    %v137 = vmul.f32 0.5, %v136
    %v138 = vsub.f32 1.5, %v137
    %v139 = vmul.f32 %v134, %v138
    %vm140 = vweird.f32 %v123
    %vm141 = vweird.f32 %v134
    %vm142 = vmor %vm140, %vm141
    %v143 = vsel %vm142, %v134, %v139
    %v144 = vmul.f32 %v110, %v133
    %v145 = vmul.f32 %v111, %v143
    %v146 = vld [vmem:[%s4] sm:$0x1]
    %v148 = vperm.slane %v146, 0
    %v150 = vmul.f32 %v148, %v144
    %v151 = vmul.f32 %v148, %v145
    %v152 = vld [vmem:[%s5] sm:$0x1]
    %v154 = vperm.slane %v152, 0
    %v156 = vadd.f32 %v150, %v154
    %v157 = vadd.f32 %v151, %v154
    %v158 = vpack.c.bf16 %v156, %v156
    %v159 = vpack.c.bf16 %v157, %v157
    %vm160 = vcmask 257024
    %161 = vst.msk [vmem:[%s6] sm:$0xf] %vm160, %v158
    %162 = vst.msk [vmem:[%s6 + $0x4] sm:$0xf] %vm160, %v159
  $region33: #{transformer_forward.27} parent=0 // pred_fallthru
    _
  // Predicated region
  $region34: #{transformer_forward.27} parent=0 // pred_check
    _
  $region35: #{transformer_forward.27} parent=0 // pred_check_branch
    %164 = sbr.rel (0) target = $region37
  $region36: #{transformer_forward.27} parent=0 // pred_region
    _
  $region37: #{transformer_forward.27} parent=0 // pred_fallthru
    _
  // Predicated region
  $region38: #{transformer_forward.27} parent=0 // pred_check
    _
  $region39: #{transformer_forward.27} parent=0 // pred_check_branch
    %166 = sbr.rel (0) target = $region41
  $region40: #{transformer_forward.27} parent=0 // pred_region
    _
  $region41: #{transformer_forward.27} parent=0 // pred_fallthru
    _

// kernel: transformer_forward.26
$region0: #{transformer_forward.26}
  #allocation0 [shape = 'u32[]', space=smem, size = 0x4, offset = 0x4, fixed_abs, tag = 'smem constant byte address 0x4 - core index']
  #allocation1 [shape = 'u32[72,128]{1,0:T(1,128)}', space=vmem, size = 0x9000, scoped, tag = 'internal scratch']
  #allocation2 [shape = 'f32[4,8,1]{2,1,0:T(8,128)}', space=vmem, size = 0x4000, scoped, tag = 'scratch operand']
  #allocation3 [shape = 'f32[4,8,1]{2,1,0:T(8,128)}', space=vmem, size = 0x4000, scoped, tag = 'scratch operand']
  #allocation4 [shape = 'f32[8,32]{1,0:T(8,128)}', space=vmem, size = 0x1000, scoped, tag = 'scratch operand']
  %s0 = inlined_call_operand.vmem [shape: bf16[2,8,96], index: 0, kind: input, shape index: {}, may-alias: {0,1}]
  %s1 = inlined_call_operand.vmem [shape: bf16[2,8,96], index: 1, kind: input, shape index: {}, may-alias: {0,1}]
  %s2 = inlined_call_operand.vmem [shape: s32[2,1,8], index: 2, kind: input, shape index: {}]
  %s3 = inlined_call_operand.vmem [shape: bf16[2,8,32], index: 3, kind: output, shape index: {}]
  %s4 = sld [smem:[#allocation0]]
  $region53: #{transformer_forward.26} parent=0
    _
  %s6 = ssub.s32 1, %s4
  %s7 = scalar_select 0, %s6, %s4
  loop: start=0, step=1, limit=4
  $region2: #{transformer_forward.26} parent=0 // loop_pre_header
    _
  $region3: #{transformer_forward.26} parent=0 // loop_header
    %s9 = sphi 0, %s13
    %p10 = scmp.ge.s32.totalorder %s9, 4
    %s16 = sphi 0, %s28
    %s17 = sphi 0, %s24
    %s18 = sphi 0, %s16
    %s19 = sphi 0, %s17
    %s20 = sphi 0, %s18
    %s21 = sphi 0, %s19
    %s31 = sphi 0, %s33
    %s34 = sphi 0, %s31
    %s35 = sphi 0, %s34
    %s51 = sphi 0, %s35
    %s59 = sphi 0, %s61
    %s62 = sphi 0, %s59
    %s63 = sphi 0, %s62
    %s79 = sphi 0, %s63
    %s87 = sphi 0, %s89
    %s90 = sphi 0, %s87
    %s91 = sphi 0, %s90
    %s107 = sphi 0, %s91
    %s113 = sphi 0, %s115
    %s116 = sphi 0, %s113
    %s117 = sphi 0, %s116
    %s133 = sphi 0, %s117
  $region4: #{transformer_forward.26} parent=0 // loop_header_branch
    %12 = sbr.rel (%p10) target = $region8
  $region5: #{transformer_forward.26} parent=0 // loop_body
    %s14 = ssub.s32 %s9, 1
    %s15 = ssub.s32 %s9, 2
    %s22 = sadd.s32 1, %s17
    %p23 = scmp.ge.s32.totalorder %s22, 1
    %s24 = scalar_select %p23, 0, %s22
    %s25 = sadd.s32 1, %s16
    %s26 = scalar_select %p23, %s25, %s16
    %p27 = scmp.ge.s32.totalorder %s26, 2
    %s28 = scalar_select %p27, 0, %s26
    %s29 = ssub.s32 %s16, %s28
    %p30 = scmp.eq.s32.totalorder %s29, 0
    %s32 = sadd.s32 %s31, 1
    %s33 = scalar_select %p30, %s31, %s32
    %p36 = pneg %p30
    %p37 = scmp.eq.s32.totalorder %s9, 1
    %p38 = por %p36, %p37
    %p39 = scmp.ne.s32.totalorder %s31, %s34
    %p40 = scmp.eq.s32.totalorder %s9, 0
    %p41 = por %p39, %p40
    %p42 = scmp.ne.s32.totalorder %s31, %s34
    %p43 = scmp.eq.s32.totalorder %s14, 1
    %p44 = por %p42, %p43
    %p45 = scmp.ne.s32.totalorder %s34, %s35
    %p46 = scmp.eq.s32.totalorder %s14, 0
    %p47 = por %p45, %p46
    %p48 = scmp.ne.s32.totalorder %s34, %s35
    %p49 = scmp.eq.s32.totalorder %s15, 1
    %p50 = por %p48, %p49
    %p52 = scmp.ne.s32.totalorder %s35, %s51
    %p53 = scmp.eq.s32.totalorder %s15, 0
    %p54 = por %p52, %p53
    %s55 = ssub.s32 %s16, %s28
    %s56 = ssub.s32 %s17, %s24
    %s57 = sor.u32 %s55, %s56
    %p58 = scmp.eq.s32.totalorder %s57, 0
    %s60 = sadd.s32 %s59, 1
    %s61 = scalar_select %p58, %s59, %s60
    %p64 = pneg %p58
    %p65 = scmp.eq.s32.totalorder %s9, 1
    %p66 = por %p64, %p65
    %p67 = scmp.ne.s32.totalorder %s59, %s62
    %p68 = scmp.eq.s32.totalorder %s9, 0
    %p69 = por %p67, %p68
    %p70 = scmp.ne.s32.totalorder %s59, %s62
    %p71 = scmp.eq.s32.totalorder %s14, 1
    %p72 = por %p70, %p71
    %p73 = scmp.ne.s32.totalorder %s62, %s63
    %p74 = scmp.eq.s32.totalorder %s14, 0
    %p75 = por %p73, %p74
    %p76 = scmp.ne.s32.totalorder %s62, %s63
    %p77 = scmp.eq.s32.totalorder %s15, 1
    %p78 = por %p76, %p77
    %p80 = scmp.ne.s32.totalorder %s63, %s79
    %p81 = scmp.eq.s32.totalorder %s15, 0
    %p82 = por %p80, %p81
    %s83 = ssub.s32 %s16, %s28
    %s84 = ssub.s32 %s17, %s24
    %s85 = sor.u32 %s83, %s84
    %p86 = scmp.eq.s32.totalorder %s85, 0
    %s88 = sadd.s32 %s87, 1
    %s89 = scalar_select %p86, %s87, %s88
    %p92 = pneg %p86
    %p93 = scmp.eq.s32.totalorder %s9, 1
    %p94 = por %p92, %p93
    %p95 = scmp.ne.s32.totalorder %s87, %s90
    %p96 = scmp.eq.s32.totalorder %s9, 0
    %p97 = por %p95, %p96
    %p98 = scmp.ne.s32.totalorder %s87, %s90
    %p99 = scmp.eq.s32.totalorder %s14, 1
    %p100 = por %p98, %p99
    %p101 = scmp.ne.s32.totalorder %s90, %s91
    %p102 = scmp.eq.s32.totalorder %s14, 0
    %p103 = por %p101, %p102
    %p104 = scmp.ne.s32.totalorder %s90, %s91
    %p105 = scmp.eq.s32.totalorder %s15, 1
    %p106 = por %p104, %p105
    %p108 = scmp.ne.s32.totalorder %s91, %s107
    %p109 = scmp.eq.s32.totalorder %s15, 0
    %p110 = por %p108, %p109
    %s111 = ssub.s32 %s16, %s28
    %p112 = scmp.eq.s32.totalorder %s111, 0
    %s114 = sadd.s32 %s113, 1
    %s115 = scalar_select %p112, %s113, %s114
    %p118 = pneg %p112
    %p119 = scmp.eq.s32.totalorder %s9, 1
    %p120 = por %p118, %p119
    %p121 = scmp.ne.s32.totalorder %s113, %s116
    %p122 = scmp.eq.s32.totalorder %s9, 0
    %p123 = por %p121, %p122
    %p124 = scmp.ne.s32.totalorder %s113, %s116
    %p125 = scmp.eq.s32.totalorder %s14, 1
    %p126 = por %p124, %p125
    %p127 = scmp.ne.s32.totalorder %s116, %s117
    %p128 = scmp.eq.s32.totalorder %s14, 0
    %p129 = por %p127, %p128
    %p130 = scmp.ne.s32.totalorder %s116, %s117
    %p131 = scmp.eq.s32.totalorder %s15, 1
    %p132 = por %p130, %p131
    %p134 = scmp.ne.s32.totalorder %s117, %s133
    %p135 = scmp.eq.s32.totalorder %s15, 0
    %p136 = por %p134, %p135
    %p137 = scmp.le.s32.totalorder 1, %s9
    %p138 = scmp.lt.s32.totalorder %s9, 3
    %p139 = pnand %p137, %p138
    %p140 = pneg %p139
    // Predicated region
    $region9: #{transformer_forward.26} parent=5 // pred_check
      _
    $region10: #{transformer_forward.26} parent=5 // pred_check_branch
      %142 = sbr.rel (%p139) target = $region12
    $region11: #{transformer_forward.26} parent=5 // pred_region
      %s143 = ssub.s32 %s9, 1
    $region12: #{transformer_forward.26} parent=5 // pred_fallthru
      _
    %p144 = scmp.lt.s32.totalorder %s9, 2
    // Predicated region
    $region13: #{transformer_forward.26} parent=5 // pred_check
      %p145 = pneg %p144
    $region14: #{transformer_forward.26} parent=5 // pred_check_branch
      %147 = sbr.rel (%p145) target = $region16
    $region15: #{transformer_forward.26} parent=5 // pred_region
      // Predicated region
      $region17: #{transformer_forward.26} parent=15 // pred_check
        %p148 = pneg %p41
      $region18: #{transformer_forward.26} parent=15 // pred_check_branch
        %150 = sbr.rel (%p148) target = $region20
      $region19: #{transformer_forward.26} parent=15 // pred_region
        %p151 = scmp.lt.s32.totalorder %s16, 1
        %s152 = scalar_select %p151, %s16, 1
        %s153 = smul.addr %s152, 4
        %s154 = scalar_lea.vmem %s0, %s153
      $region20: #{transformer_forward.26} parent=15 // pred_fallthru
        _
      // Predicated region
      $region21: #{transformer_forward.26} parent=15 // pred_check
        %p155 = pneg %p69
      $region22: #{transformer_forward.26} parent=15 // pred_check_branch
        %157 = sbr.rel (%p155) target = $region24
      $region23: #{transformer_forward.26} parent=15 // pred_region
        %p158 = scmp.lt.s32.totalorder %s16, 1
        %s159 = scalar_select %p158, %s16, 1
        %p160 = scmp.lt.s32.totalorder %s17, 0
        %s161 = scalar_select %p160, %s17, 0
        %s162 = sadd.s32 %s161, %s159
        %s163 = smul.addr %s162, 4
        %s164 = scalar_lea.vmem %s1, %s163
      $region24: #{transformer_forward.26} parent=15 // pred_fallthru
        _
      // Predicated region
      $region25: #{transformer_forward.26} parent=15 // pred_check
        %p165 = pneg %p97
      $region26: #{transformer_forward.26} parent=15 // pred_check_branch
        %167 = sbr.rel (%p165) target = $region28
      $region27: #{transformer_forward.26} parent=15 // pred_region
        %p168 = scmp.lt.s32.totalorder %s16, 1
        %s169 = scalar_select %p168, %s16, 1
        %p170 = scmp.lt.s32.totalorder %s17, 0
        %s171 = scalar_select %p170, %s17, 0
        %s172 = sadd.s32 %s171, %s169
        %s173 = scalar_lea.vmem %s2, %s172
      $region28: #{transformer_forward.26} parent=15 // pred_fallthru
        _
    $region16: #{transformer_forward.26} parent=5 // pred_fallthru
      _
    %p174 = scmp.le.s32.totalorder 1, %s9
    %p175 = scmp.lt.s32.totalorder %s9, 3
    %p176 = pnand %p174, %p175
    %p177 = pneg %p176
    // Predicated region
    $region29: #{transformer_forward.26} parent=5 // pred_check
      _
    $region30: #{transformer_forward.26} parent=5 // pred_check_branch
      %179 = sbr.rel (%p176) target = $region32
    $region31: #{transformer_forward.26} parent=5 // pred_region
      %s180 = ssub.s32 %s9, 1
      %p181 = scmp.lt.s32.totalorder %s18, 1
      %s182 = scalar_select %p181, %s18, 1
      %s183 = smul.addr %s182, 4
      %s184 = scalar_lea.vmem %s0, %s183
      %p185 = pneg %p47
      %p186 = pneg %p44
      %p187 = scmp.lt.s32.totalorder %s18, 1
      %s188 = scalar_select %p187, %s18, 1
      %p189 = scmp.lt.s32.totalorder %s19, 0
      %s190 = scalar_select %p189, %s19, 0
      %s191 = sadd.s32 %s190, %s188
      %s192 = smul.addr %s191, 4
      %s193 = scalar_lea.vmem %s1, %s192
      %p194 = pneg %p75
      %p195 = pneg %p72
      %p196 = scmp.lt.s32.totalorder %s18, 1
      %s197 = scalar_select %p196, %s18, 1
      %p198 = scmp.lt.s32.totalorder %s19, 0
      %s199 = scalar_select %p198, %s19, 0
      %s200 = sadd.s32 %s199, %s197
      %s201 = scalar_lea.vmem %s2, %s200
      %p202 = pneg %p103
      %p203 = pneg %p100
      %p204 = pneg %p129
      %p205 = pneg %p126
      %p206 = scmp.lt.s32.totalorder %s18, 1
      %s207 = scalar_select %p206, %s18, 1
      %s208 = smul.addr %s207, 4
      %s209 = scalar_lea.vmem %s3, %s208
      %p210 = scmp.lt.s32.totalorder %s18, 1
      %s211 = scalar_select %p210, %s18, 1
      %s212 = smul.addr %s211, 4
      %s213 = scalar_lea.vmem %s0, %s212
      %p214 = scmp.lt.s32.totalorder %s18, 1
      %s215 = scalar_select %p214, %s18, 1
      %p216 = scmp.lt.s32.totalorder %s19, 0
      %s217 = scalar_select %p216, %s19, 0
      %s218 = sadd.s32 %s217, %s215
      %s219 = smul.addr %s218, 4
      %s220 = scalar_lea.vmem %s1, %s219
      %p221 = scmp.lt.s32.totalorder %s18, 1
      %s222 = scalar_select %p221, %s18, 1
      %p223 = scmp.lt.s32.totalorder %s19, 0
      %s224 = scalar_select %p223, %s19, 0
      %s225 = sadd.s32 %s224, %s222
      %s226 = scalar_lea.vmem %s2, %s225
      %p227 = scmp.lt.s32.totalorder %s18, 1
      %s228 = scalar_select %p227, %s18, 1
      %s229 = smul.addr %s228, 4
      %s230 = scalar_lea.vmem %s3, %s229
      %p232 = scmp.eq.s32.totalorder %s19, 0
      // Predicated region
      $region33: #{transformer_forward.26} parent=31 // pred_check
        %p233 = pneg %p232
      $region34: #{transformer_forward.26} parent=31 // pred_check_branch
        %235 = sbr.rel (%p233) target = $region36
      $region35: #{transformer_forward.26} parent=31 // pred_region
        %vm236 = vcmask 7168
        %237 = vst.msk [vmem:[#allocation2] sm:$0xff] %vm236, -1e+30
        %238 = vst.msk [vmem:[#allocation2 + $0x8] sm:$0xff] %vm236, -1e+30
        %239 = vst.msk [vmem:[#allocation2 + $0x10] sm:$0xff] %vm236, -1e+30
        %240 = vst.msk [vmem:[#allocation2 + $0x18] sm:$0xff] %vm236, -1e+30
        %241 = vst.msk [vmem:[#allocation3] sm:$0xff] %vm236, 0.0
        %242 = vst.msk [vmem:[#allocation3 + $0x8] sm:$0xff] %vm236, 0.0
        %243 = vst.msk [vmem:[#allocation3 + $0x10] sm:$0xff] %vm236, 0.0
        %244 = vst.msk [vmem:[#allocation3 + $0x18] sm:$0xff] %vm236, 0.0
        %vm245 = vcmask 261120
        %246 = vst.msk [vmem:[#allocation4] sm:$0xff] %vm245, 0.0
      $region36: #{transformer_forward.26} parent=31 // pred_fallthru
        _
      %v247 = vld [vmem:[%s213] sm:$0xf]
      %v248 = vld [vmem:[%s220] sm:$0xf]
      %v249 = vld [vmem:[%s226] sm:$0x1]
      %v251 = vunpack.c.l.b16 %v248
      %v252 = vpack.c.b16 %v251, %v251
      %253 = vrot.lane.b32.xlu0 %v252, 96
      %v254 = vpop.permute.xlu0 %253
      %vm255 = vcmask 64512
      %v257 = vsel %vm255, %v247, 0
      %v260 = vsel %vm255, %v254, 0
      %262 = vmatpush.bf16.xpose.msra.mxu0 0
      %263 = vmatpush.bf16.xpose.msra.mxu0 0
      %264 = vmatpush.bf16.xpose.msra.mxu0 0
      %265 = vmatpush.bf16.xpose.msra.mxu0 0
      %266 = vmatpush.bf16.xpose.msra.mxu0 0
      %267 = vmatpush.bf16.xpose.msra.mxu0 0
      %268 = vmatpush.bf16.xpose.msra.mxu0 0
      %269 = vmatpush.bf16.xpose.msra.mxu0 %v260
      %270 = vmatmul.bf16.gmra.mxu0 %v257
      %v271 = vpop.f32.mrf.mxu0
      %v272 = vadd.f32 0.0, %v271
      %v273 = vpop.f32.mrf.mxu0
      %274 = vdwg.mxu0
      %v275 = vmul.f32 %v272, 0.35355338
      %vm276 = vcmp.eq.s32.totalorder %v249, 0
      %v277 = vsel %vm276, 1, 0
      %v278 = vperm.slane %v277, 0
      %vm279 = vcmp.eq.s32.totalorder %v278, 1
      %v280 = vsel %vm279, -10000.0, %v275
      %v281 = vld [vmem:[#allocation2] sm:$0xff]
      %v282 = vsel %vm255, %v280, -inf
      %283 = vmax.xlane.f32.xlu0 %v282
      %v284 = vpop.xlane.xlu0 %283
      %v285 = vmax.f32 %v281, %v284
      %v286 = vsub.f32 %v281, %v285
      %v287 = vmul.f32 %v286, 1.442695
      %v288 = vpow.pop %v287
      %290 = vset.pattern.permute.xlu0 0
      %291 = vperm.xlu0 %290, %v285
      %v292 = vpop.permute.xlu0 %291
      %v294 = vsub.f32 %v280, %v292
      %v295 = vmul.f32 %v294, 1.442695
      %v296 = vpow.pop %v295
      %v297 = vld [vmem:[#allocation3] sm:$0xff]
      %v298 = vmul.f32 %v288, %v297
      %v299 = vsel %vm255, %v296, 0.0
      %300 = vadd.xlane.f32.xlu0 %v299
      %v301 = vpop.xlane.xlu0 %300
      %v302 = vadd.f32 %v298, %v301
      %vm303 = vcmask 7168
      %304 = vst.msk [vmem:[#allocation3] sm:$0xff] %vm303, %v302
      %v305 = vld [vmem:[#allocation4] sm:$0xff]
      %307 = vset.pattern.permute.xlu0 0
      %308 = vperm.xlu0 %307, %v288
      %v309 = vpop.permute.xlu0 %308
      %v311 = vmul.f32 %v309, %v305
      %v312 = vpack.c.bf16 %v296, %v296
      %313 = vrot.lane.b32.xlu0 %v252, 64
      %v314 = vpop.permute.xlu0 %313
      %v316 = vsel %vm255, %v312, 0
      %vm318 = vcmask 1043456
      %v320 = vsel %vm318, %v314, 0
      %322 = vmatpush.bf16.msra.mxu0 0
      %323 = vmatpush.bf16.msra.mxu0 0
      %324 = vmatpush.bf16.msra.mxu0 0
      %325 = vmatpush.bf16.msra.mxu0 0
      %326 = vmatpush.bf16.msra.mxu0 0
      %327 = vmatpush.bf16.msra.mxu0 0
      %328 = vmatpush.bf16.msra.mxu0 0
      %329 = vmatpush.bf16.msra.mxu0 %v320
      %330 = vmatmul.bf16.gmra.mxu0 %v316
      %v331 = vpop.f32.mrf.mxu0
      %v332 = vadd.f32 0.0, %v331
      %v333 = vpop.f32.mrf.mxu0
      %334 = vdwg.mxu0
      %v335 = vadd.f32 %v311, %v332
      %336 = vst.msk [vmem:[#allocation4] sm:$0xff] %vm255, %v335
      %337 = vst.msk [vmem:[#allocation2] sm:$0xff] %vm303, %v285
      %v339 = vunpack.c.l.b16 %v247
      %v340 = vpack.c.b16 %v339, %v339
      %341 = vrot.lane.b32.xlu0 %v340, 120
      %v342 = vpop.permute.xlu0 %341
      %343 = vrot.lane.b32.xlu0 %v252, 88
      %v344 = vpop.permute.xlu0 %343
      %v346 = vsel %vm255, %v342, 0
      %v349 = vsel %vm255, %v344, 0
      %351 = vmatpush.bf16.xpose.msra.mxu0 0
      %352 = vmatpush.bf16.xpose.msra.mxu0 0
      %353 = vmatpush.bf16.xpose.msra.mxu0 0
      %354 = vmatpush.bf16.xpose.msra.mxu0 0
      %355 = vmatpush.bf16.xpose.msra.mxu0 0
      %356 = vmatpush.bf16.xpose.msra.mxu0 0
      %357 = vmatpush.bf16.xpose.msra.mxu0 0
      %358 = vmatpush.bf16.xpose.msra.mxu0 %v349
      %359 = vmatmul.bf16.gmra.mxu0 %v346
      %v360 = vpop.f32.mrf.mxu0
      %v361 = vadd.f32 0.0, %v360
      %v362 = vpop.f32.mrf.mxu0
      %363 = vdwg.mxu0
      %v364 = vmul.f32 %v361, 0.35355338
      %v365 = vsel %vm279, -10000.0, %v364
      %s366 = scalar_lea.vmem [#allocation2], 8
      %v367 = vld [vmem:[%s366] sm:$0xff]
      %v368 = vsel %vm255, %v365, -inf
      %369 = vmax.xlane.f32.xlu0 %v368
      %v370 = vpop.xlane.xlu0 %369
      %v371 = vmax.f32 %v367, %v370
      %v372 = vsub.f32 %v367, %v371
      %v373 = vmul.f32 %v372, 1.442695
      %v374 = vpow.pop %v373
      %376 = vset.pattern.permute.xlu0 0
      %377 = vperm.xlu0 %376, %v371
      %v378 = vpop.permute.xlu0 %377
      %v380 = vsub.f32 %v365, %v378
      %v381 = vmul.f32 %v380, 1.442695
      %v382 = vpow.pop %v381
      %s383 = scalar_lea.vmem [#allocation3], 8
      %v384 = vld [vmem:[%s383] sm:$0xff]
      %v385 = vmul.f32 %v374, %v384
      %v386 = vsel %vm255, %v382, 0.0
      %387 = vadd.xlane.f32.xlu0 %v386
      %v388 = vpop.xlane.xlu0 %387
      %v389 = vadd.f32 %v385, %v388
      %390 = vst.msk [vmem:[%s383] sm:$0xff] %vm303, %v389
      %v391 = vld [vmem:[#allocation4] sm:$0xff]
      %393 = vset.pattern.permute.xlu0 0
      %394 = vperm.xlu0 %393, %v374
      %v395 = vpop.permute.xlu0 %394
      %v397 = vmul.f32 %v395, %v391
      %v398 = vpack.c.bf16 %v382, %v382
      %399 = vrot.lane.b32.xlu0 %v252, 56
      %v400 = vpop.permute.xlu0 %399
      %v402 = vsel %vm255, %v398, 0
      %v405 = vsel %vm318, %v400, 0
      %407 = vmatpush.bf16.msra.mxu0 0
      %408 = vmatpush.bf16.msra.mxu0 0
      %409 = vmatpush.bf16.msra.mxu0 0
      %410 = vmatpush.bf16.msra.mxu0 0
      %411 = vmatpush.bf16.msra.mxu0 0
      %412 = vmatpush.bf16.msra.mxu0 0
      %413 = vmatpush.bf16.msra.mxu0 0
      %414 = vmatpush.bf16.msra.mxu0 %v405
      %415 = vmatmul.bf16.gmra.mxu0 %v402
      %v416 = vpop.f32.mrf.mxu0
      %v417 = vadd.f32 0.0, %v416
      %v418 = vpop.f32.mrf.mxu0
      %419 = vdwg.mxu0
      %421 = vrot.lane.b32.xlu0 %v417, 8
      %v422 = vpop.permute.xlu0 %421
      %v424 = vadd.f32 %v397, %v422
      %vm425 = vcmask 130112
      %426 = vst.msk [vmem:[#allocation4] sm:$0xff] %vm425, %v424
      %427 = vst.msk [vmem:[%s366] sm:$0xff] %vm303, %v371
      %428 = vrot.lane.b32.xlu0 %v340, 112
      %v429 = vpop.permute.xlu0 %428
      %430 = vrot.lane.b32.xlu0 %v252, 80
      %v431 = vpop.permute.xlu0 %430
      %v433 = vsel %vm255, %v429, 0
      %v436 = vsel %vm255, %v431, 0
      %438 = vmatpush.bf16.xpose.msra.mxu0 0
      %439 = vmatpush.bf16.xpose.msra.mxu0 0
      %440 = vmatpush.bf16.xpose.msra.mxu0 0
      %441 = vmatpush.bf16.xpose.msra.mxu0 0
      %442 = vmatpush.bf16.xpose.msra.mxu0 0
      %443 = vmatpush.bf16.xpose.msra.mxu0 0
      %444 = vmatpush.bf16.xpose.msra.mxu0 0
      %445 = vmatpush.bf16.xpose.msra.mxu0 %v436
      %446 = vmatmul.bf16.gmra.mxu0 %v433
      %v447 = vpop.f32.mrf.mxu0
      %v448 = vadd.f32 0.0, %v447
      %v449 = vpop.f32.mrf.mxu0
      %450 = vdwg.mxu0
      %v451 = vmul.f32 %v448, 0.35355338
      %v452 = vsel %vm279, -10000.0, %v451
      %s453 = scalar_lea.vmem [#allocation2], 16
      %v454 = vld [vmem:[%s453] sm:$0xff]
      %v455 = vsel %vm255, %v452, -inf
      %456 = vmax.xlane.f32.xlu0 %v455
      %v457 = vpop.xlane.xlu0 %456
      %v458 = vmax.f32 %v454, %v457
      %v459 = vsub.f32 %v454, %v458
      %v460 = vmul.f32 %v459, 1.442695
      %v461 = vpow.pop %v460
      %463 = vset.pattern.permute.xlu0 0
      %464 = vperm.xlu0 %463, %v458
      %v465 = vpop.permute.xlu0 %464
      %v467 = vsub.f32 %v452, %v465
      %v468 = vmul.f32 %v467, 1.442695
      %v469 = vpow.pop %v468
      %s470 = scalar_lea.vmem [#allocation3], 16
      %v471 = vld [vmem:[%s470] sm:$0xff]
      %v472 = vmul.f32 %v461, %v471
      %v473 = vsel %vm255, %v469, 0.0
      %474 = vadd.xlane.f32.xlu0 %v473
      %v475 = vpop.xlane.xlu0 %474
      %v476 = vadd.f32 %v472, %v475
      %477 = vst.msk [vmem:[%s470] sm:$0xff] %vm303, %v476
      %v478 = vld [vmem:[#allocation4] sm:$0xff]
      %480 = vset.pattern.permute.xlu0 0
      %481 = vperm.xlu0 %480, %v461
      %v482 = vpop.permute.xlu0 %481
      %v484 = vmul.f32 %v482, %v478
      %v485 = vpack.c.bf16 %v469, %v469
      %486 = vrot.lane.b32.xlu0 %v252, 48
      %v487 = vpop.permute.xlu0 %486
      %v489 = vsel %vm255, %v485, 0
      %v492 = vsel %vm318, %v487, 0
      %494 = vmatpush.bf16.msra.mxu0 0
      %495 = vmatpush.bf16.msra.mxu0 0
      %496 = vmatpush.bf16.msra.mxu0 0
      %497 = vmatpush.bf16.msra.mxu0 0
      %498 = vmatpush.bf16.msra.mxu0 0
      %499 = vmatpush.bf16.msra.mxu0 0
      %500 = vmatpush.bf16.msra.mxu0 0
      %501 = vmatpush.bf16.msra.mxu0 %v492
      %502 = vmatmul.bf16.gmra.mxu0 %v489
      %v503 = vpop.f32.mrf.mxu0
      %v504 = vadd.f32 0.0, %v503
      %v505 = vpop.f32.mrf.mxu0
      %506 = vdwg.mxu0
      %508 = vrot.lane.b32.xlu0 %v504, 16
      %v509 = vpop.permute.xlu0 %508
      %v511 = vadd.f32 %v484, %v509
      %vm512 = vcmask 195712
      %513 = vst.msk [vmem:[#allocation4] sm:$0xff] %vm512, %v511
      %514 = vst.msk [vmem:[%s453] sm:$0xff] %vm303, %v458
      %515 = vrot.lane.b32.xlu0 %v340, 104
      %v516 = vpop.permute.xlu0 %515
      %517 = vrot.lane.b32.xlu0 %v252, 72
      %v518 = vpop.permute.xlu0 %517
      %v520 = vsel %vm255, %v516, 0
      %v523 = vsel %vm255, %v518, 0
      %525 = vmatpush.bf16.xpose.msra.mxu0 0
      %526 = vmatpush.bf16.xpose.msra.mxu0 0
      %527 = vmatpush.bf16.xpose.msra.mxu0 0
      %528 = vmatpush.bf16.xpose.msra.mxu0 0
      %529 = vmatpush.bf16.xpose.msra.mxu0 0
      %530 = vmatpush.bf16.xpose.msra.mxu0 0
      %531 = vmatpush.bf16.xpose.msra.mxu0 0
      %532 = vmatpush.bf16.xpose.msra.mxu0 %v523
      %533 = vmatmul.bf16.gmra.mxu0 %v520
      %v534 = vpop.f32.mrf.mxu0
      %v535 = vadd.f32 0.0, %v534
      %v536 = vpop.f32.mrf.mxu0
      %537 = vdwg.mxu0
      %v538 = vmul.f32 %v535, 0.35355338
      %v539 = vsel %vm279, -10000.0, %v538
      %s540 = scalar_lea.vmem [#allocation2], 24
      %v541 = vld [vmem:[%s540] sm:$0xff]
      %v542 = vsel %vm255, %v539, -inf
      %543 = vmax.xlane.f32.xlu0 %v542
      %v544 = vpop.xlane.xlu0 %543
      %v545 = vmax.f32 %v541, %v544
      %v546 = vsub.f32 %v541, %v545
      %v547 = vmul.f32 %v546, 1.442695
      %v548 = vpow.pop %v547
      %550 = vset.pattern.permute.xlu0 0
      %551 = vperm.xlu0 %550, %v545
      %v552 = vpop.permute.xlu0 %551
      %v554 = vsub.f32 %v539, %v552
      %v555 = vmul.f32 %v554, 1.442695
      %v556 = vpow.pop %v555
      %s557 = scalar_lea.vmem [#allocation3], 24
      %v558 = vld [vmem:[%s557] sm:$0xff]
      %v559 = vmul.f32 %v548, %v558
      %v560 = vsel %vm255, %v556, 0.0
      %561 = vadd.xlane.f32.xlu0 %v560
      %v562 = vpop.xlane.xlu0 %561
      %v563 = vadd.f32 %v559, %v562
      %564 = vst.msk [vmem:[%s557] sm:$0xff] %vm303, %v563
      %v565 = vld [vmem:[#allocation4] sm:$0xff]
      %567 = vset.pattern.permute.xlu0 0
      %568 = vperm.xlu0 %567, %v548
      %v569 = vpop.permute.xlu0 %568
      %v571 = vmul.f32 %v569, %v565
      %v572 = vpack.c.bf16 %v556, %v556
      %573 = vrot.lane.b32.xlu0 %v252, 40
      %v574 = vpop.permute.xlu0 %573
      %v576 = vsel %vm255, %v572, 0
      %v579 = vsel %vm318, %v574, 0
      %581 = vmatpush.bf16.msra.mxu0 0
      %582 = vmatpush.bf16.msra.mxu0 0
      %583 = vmatpush.bf16.msra.mxu0 0
      %584 = vmatpush.bf16.msra.mxu0 0
      %585 = vmatpush.bf16.msra.mxu0 0
      %586 = vmatpush.bf16.msra.mxu0 0
      %587 = vmatpush.bf16.msra.mxu0 0
      %588 = vmatpush.bf16.msra.mxu0 %v579
      %589 = vmatmul.bf16.gmra.mxu0 %v576
      %v590 = vpop.f32.mrf.mxu0
      %v591 = vadd.f32 0.0, %v590
      %v592 = vpop.f32.mrf.mxu0
      %593 = vdwg.mxu0
      %595 = vrot.lane.b32.xlu0 %v591, 24
      %v596 = vpop.permute.xlu0 %595
      %v598 = vadd.f32 %v571, %v596
      %vm599 = vcmask 261312
      %600 = vst.msk [vmem:[#allocation4] sm:$0xff] %vm599, %v598
      %601 = vst.msk [vmem:[%s540] sm:$0xff] %vm303, %v545
      // Predicated region
      $region37: #{transformer_forward.26} parent=31 // pred_check
        %p602 = pneg %p232
      $region38: #{transformer_forward.26} parent=31 // pred_check_branch
        %604 = sbr.rel (%p602) target = $region40
      $region39: #{transformer_forward.26} parent=31 // pred_region
        %v605 = vld [vmem:[#allocation3] sm:$0xff]
        %v606 = vrcp.pop %v605
        %v607 = vld [vmem:[#allocation4] sm:$0xff]
        %609 = vset.pattern.permute.xlu0 0
        %610 = vperm.xlu0 %609, %v606
        %v611 = vpop.permute.xlu0 %610
        %v613 = vmul.f32 %v607, %v611
        %614 = vst.msk [vmem:[#allocation4] sm:$0xff] %vm255, %v613
        %v615 = vld [vmem:[%s383] sm:$0xff]
        %v616 = vrcp.pop %v615
        %v617 = vld [vmem:[#allocation4] sm:$0xff]
        %619 = vset.pattern.permute.xlu0 0
        %620 = vperm.xlu0 %619, %v616
        %v621 = vpop.permute.xlu0 %620
        %v623 = vmul.f32 %v617, %v621
        %624 = vst.msk [vmem:[#allocation4] sm:$0xff] %vm425, %v623
        %v625 = vld [vmem:[%s470] sm:$0xff]
        %v626 = vrcp.pop %v625
        %v627 = vld [vmem:[#allocation4] sm:$0xff]
        %629 = vset.pattern.permute.xlu0 0
        %630 = vperm.xlu0 %629, %v626
        %v631 = vpop.permute.xlu0 %630
        %v633 = vmul.f32 %v627, %v631
        %634 = vst.msk [vmem:[#allocation4] sm:$0xff] %vm512, %v633
        %v635 = vld [vmem:[%s557] sm:$0xff]
        %v636 = vrcp.pop %v635
        %v637 = vld [vmem:[#allocation4] sm:$0xff]
        %639 = vset.pattern.permute.xlu0 0
        %640 = vperm.xlu0 %639, %v636
        %v641 = vpop.permute.xlu0 %640
        %v643 = vmul.f32 %v637, %v641
        %644 = vst.msk [vmem:[#allocation4] sm:$0xff] %vm599, %v643
        %v645 = vld [vmem:[#allocation4] sm:$0xff]
        %v646 = vpack.c.bf16 %v645, %v645
        %vm647 = vcmask 257024
        %648 = vst.msk [vmem:[%s230] sm:$0xf] %vm647, %v646
      $region40: #{transformer_forward.26} parent=31 // pred_fallthru
        _
      %p649 = scmp.lt.s32.totalorder %s18, 1
      %s650 = scalar_select %p649, %s18, 1
      %s651 = smul.addr %s650, 4
      %s652 = scalar_lea.vmem %s3, %s651
      // Predicated region
      $region41: #{transformer_forward.26} parent=31 // pred_check
        %p653 = pneg %p126
      $region42: #{transformer_forward.26} parent=31 // pred_check_branch
        %655 = sbr.rel (%p653) target = $region44
      $region43: #{transformer_forward.26} parent=31 // pred_region
        _
      $region44: #{transformer_forward.26} parent=31 // pred_fallthru
        _
    $region32: #{transformer_forward.26} parent=5 // pred_fallthru
      _
    %p656 = scmp.le.s32.totalorder 2, %s9
    // Predicated region
    $region45: #{transformer_forward.26} parent=5 // pred_check
      %p657 = pneg %p656
    $region46: #{transformer_forward.26} parent=5 // pred_check_branch
      %659 = sbr.rel (%p657) target = $region48
    $region47: #{transformer_forward.26} parent=5 // pred_region
      %s660 = ssub.s32 %s9, 2
      // Predicated region
      $region49: #{transformer_forward.26} parent=47 // pred_check
        %p661 = pneg %p132
      $region50: #{transformer_forward.26} parent=47 // pred_check_branch
        %663 = sbr.rel (%p661) target = $region52
      $region51: #{transformer_forward.26} parent=47 // pred_region
        %p664 = scmp.lt.s32.totalorder %s20, 1
        %s665 = scalar_select %p664, %s20, 1
        %s666 = smul.addr %s665, 4
        %s667 = scalar_lea.vmem %s3, %s666
      $region52: #{transformer_forward.26} parent=47 // pred_fallthru
        _
    $region48: #{transformer_forward.26} parent=5 // pred_fallthru
      _
  $region6: #{transformer_forward.26} parent=0 // loop_footer
    %s13 = sadd.s32 1, %s9
  $region7: #{transformer_forward.26} parent=0 // loop_footer_branch
    %8 = sbr.rel target = $region3
  $region8: #{transformer_forward.26} parent=0 // loop_exit
    _

// kernel: transformer_forward.37
$region0: #{transformer_forward.37}
  #allocation0 [shape = 'u32[]', space=smem, size = 0x4, offset = 0x4, fixed_abs, tag = 'smem constant byte address 0x4 - core index']
  #allocation1 [shape = 'u32[72,128]{1,0:T(1,128)}', space=vmem, size = 0x9000, scoped, tag = 'internal scratch']
  #allocation2 [shape = 'f32[16,64]{1,0:T(8,128)}', space=vmem, size = 0x2000, scoped, tag = 'scratch operand']
  %s0 = inlined_call_operand.vmem [shape: bf16[16,32], index: 0, kind: input, shape index: {}]
  %s1 = inlined_call_operand.vmem [shape: bf16[32,64], index: 1, kind: input, shape index: {}]
  %s2 = inlined_call_operand.vmem [shape: f32[1,64], index: 2, kind: input, shape index: {}]
  %s3 = inlined_call_operand.vmem [shape: bf16[16,64], index: 3, kind: output, shape index: {}]
  %s4 = sld [smem:[#allocation0]]
  $region30: #{transformer_forward.37} parent=0
    _
  %s6 = ssub.s32 1, %s4
  %s7 = scalar_select 0, %s6, %s4
  // Predicated region
  $region2: #{transformer_forward.37} parent=0 // pred_check
    _
  $region3: #{transformer_forward.37} parent=0 // pred_check_branch
    %9 = sbr.rel (0) target = $region5
  $region4: #{transformer_forward.37} parent=0 // pred_region
    _
  $region5: #{transformer_forward.37} parent=0 // pred_fallthru
    _
  // Predicated region
  $region6: #{transformer_forward.37} parent=0 // pred_check
    _
  $region7: #{transformer_forward.37} parent=0 // pred_check_branch
    %11 = sbr.rel (0) target = $region9
  $region8: #{transformer_forward.37} parent=0 // pred_region
    _
  $region9: #{transformer_forward.37} parent=0 // pred_fallthru
    _
  // Predicated region
  $region10: #{transformer_forward.37} parent=0 // pred_check
    _
  $region11: #{transformer_forward.37} parent=0 // pred_check_branch
    %13 = sbr.rel (0) target = $region13
  $region12: #{transformer_forward.37} parent=0 // pred_region
    _
  $region13: #{transformer_forward.37} parent=0 // pred_fallthru
    _
  %p15 = scmp.eq.s32.totalorder 0, 0
  // Predicated region
  $region14: #{transformer_forward.37} parent=0 // pred_check
    %p16 = pneg %p15
  $region15: #{transformer_forward.37} parent=0 // pred_check_branch
    %18 = sbr.rel (%p16) target = $region17
  $region16: #{transformer_forward.37} parent=0 // pred_region
    %vm19 = vcmask 523264
    %20 = vst.msk [vmem:[#allocation2] sm:$0xff] %vm19, 0.0
    %21 = vst.msk [vmem:[#allocation2 + $0x8] sm:$0xff] %vm19, 0.0
  $region17: #{transformer_forward.37} parent=0 // pred_fallthru
    _
  %v22 = vld [vmem:[#allocation2] sm:$0xff]
  %v23 = vld [vmem:[#allocation2 + $0x8] sm:$0xff]
  %v24 = vld [vmem:[%s0] sm:$0xf]
  %v25 = vld [vmem:[%s0 + $0x4] sm:$0xf]
  %v26 = vld [vmem:[%s1] sm:$0xf]
  %v27 = vld [vmem:[%s1 + $0x4] sm:$0xf]
  %v28 = vld [vmem:[%s1 + $0x8] sm:$0xf]
  %v29 = vld [vmem:[%s1 + $0xc] sm:$0xf]
  %v32 = vunpack.c.l.b16 %v24
  %v33 = vunpack.c.l.b16 %v25
  %v34 = vpack.c.b16 %v33, %v32
  %v39 = vunpack.c.l.b16 %v26
  %v40 = vunpack.c.l.b16 %v27
  %v41 = vunpack.c.l.b16 %v28
  %v42 = vunpack.c.l.b16 %v29
  %v43 = vpack.c.b16 %v40, %v39
  %v44 = vpack.c.b16 %v42, %v41
  %vm47 = vcmask 261120
  %v49 = vsel %vm47, %v34, 0
  %51 = vmatpush.bf16.msra.mxu0 0
  %52 = vmatpush.bf16.msra.mxu0 0
  %53 = vmatpush.bf16.msra.mxu0 0
  %54 = vmatpush.bf16.msra.mxu0 0
  %55 = vmatpush.bf16.msra.mxu0 0
  %56 = vmatpush.bf16.msra.mxu0 0
  %57 = vmatpush.bf16.msra.mxu0 %v44
  %58 = vmatpush.bf16.msra.mxu0 %v43
  %59 = vmatmul.bf16.gmra.mxu0 %v49
  %v60 = vpop.f32.mrf.mxu0
  %v61 = vadd.f32 0.0, %v60
  %v62 = vpop.f32.mrf.mxu0
  %v63 = vadd.f32 0.0, %v62
  %64 = vdwg.mxu0
  %v65 = vadd.f32 %v22, %v61
  %v66 = vadd.f32 %v23, %v63
  %vm67 = vcmask 523264
  %68 = vst.msk [vmem:[#allocation2] sm:$0xff] %vm67, %v65
  %69 = vst.msk [vmem:[#allocation2 + $0x8] sm:$0xff] %vm67, %v66
  // Predicated region
  $region18: #{transformer_forward.37} parent=0 // pred_check
    %p70 = pneg %p15
  $region19: #{transformer_forward.37} parent=0 // pred_check_branch
    %72 = sbr.rel (%p70) target = $region21
  $region20: #{transformer_forward.37} parent=0 // pred_region
    %v73 = vld [vmem:[#allocation2] sm:$0xff]
    %v74 = vld [vmem:[#allocation2 + $0x8] sm:$0xff]
    %v75 = vld [vmem:[%s2] sm:$0x1]
    %v77 = vperm.slane %v75, 0
    %v79 = vadd.f32 %v73, %v77
    %v80 = vadd.f32 %v74, %v77
    %v81 = vpack.c.bf16 %v79, %v79
    %v82 = vpack.c.bf16 %v80, %v80
    %vm83 = vcmask 519168
    %84 = vst.msk [vmem:[%s3] sm:$0xf] %vm83, %v81
    %85 = vst.msk [vmem:[%s3 + $0x4] sm:$0xf] %vm83, %v82
  $region21: #{transformer_forward.37} parent=0 // pred_fallthru
    _
  // Predicated region
  $region22: #{transformer_forward.37} parent=0 // pred_check
    _
  $region23: #{transformer_forward.37} parent=0 // pred_check_branch
    %87 = sbr.rel (0) target = $region25
  $region24: #{transformer_forward.37} parent=0 // pred_region
    _
  $region25: #{transformer_forward.37} parent=0 // pred_fallthru
    _
  // Predicated region
  $region26: #{transformer_forward.37} parent=0 // pred_check
    _
  $region27: #{transformer_forward.37} parent=0 // pred_check_branch
    %89 = sbr.rel (0) target = $region29
  $region28: #{transformer_forward.37} parent=0 // pred_region
    _
  $region29: #{transformer_forward.37} parent=0 // pred_fallthru
    _

// kernel: transformer_forward.36
$region0: #{transformer_forward.36}
  #allocation0 [shape = 'u32[]', space=smem, size = 0x4, offset = 0x4, fixed_abs, tag = 'smem constant byte address 0x4 - core index']
  #allocation1 [shape = 'u32[72,128]{1,0:T(1,128)}', space=vmem, size = 0x9000, scoped, tag = 'internal scratch']
  #allocation2 [shape = 'f32[16,32]{1,0:T(8,128)}', space=vmem, size = 0x2000, scoped, tag = 'scratch operand']
  %s0 = inlined_call_operand.vmem [shape: bf16[16,32], index: 0, kind: input, shape index: {}]
  %s1 = inlined_call_operand.vmem [shape: bf16[32,32], index: 1, kind: input, shape index: {}]
  %s2 = inlined_call_operand.vmem [shape: f32[1,32], index: 2, kind: input, shape index: {}]
  %s3 = inlined_call_operand.vmem [shape: bf16[16,32], index: 3, kind: output, shape index: {}]
  %s4 = sld [smem:[#allocation0]]
  $region30: #{transformer_forward.36} parent=0
    _
  %s6 = ssub.s32 1, %s4
  %s7 = scalar_select 0, %s6, %s4
  // Predicated region
  $region2: #{transformer_forward.36} parent=0 // pred_check
    _
  $region3: #{transformer_forward.36} parent=0 // pred_check_branch
    %9 = sbr.rel (0) target = $region5
  $region4: #{transformer_forward.36} parent=0 // pred_region
    _
  $region5: #{transformer_forward.36} parent=0 // pred_fallthru
    _
  // Predicated region
  $region6: #{transformer_forward.36} parent=0 // pred_check
    _
  $region7: #{transformer_forward.36} parent=0 // pred_check_branch
    %11 = sbr.rel (0) target = $region9
  $region8: #{transformer_forward.36} parent=0 // pred_region
    _
  $region9: #{transformer_forward.36} parent=0 // pred_fallthru
    _
  // Predicated region
  $region10: #{transformer_forward.36} parent=0 // pred_check
    _
  $region11: #{transformer_forward.36} parent=0 // pred_check_branch
    %13 = sbr.rel (0) target = $region13
  $region12: #{transformer_forward.36} parent=0 // pred_region
    _
  $region13: #{transformer_forward.36} parent=0 // pred_fallthru
    _
  %p15 = scmp.eq.s32.totalorder 0, 0
  // Predicated region
  $region14: #{transformer_forward.36} parent=0 // pred_check
    %p16 = pneg %p15
  $region15: #{transformer_forward.36} parent=0 // pred_check_branch
    %18 = sbr.rel (%p16) target = $region17
  $region16: #{transformer_forward.36} parent=0 // pred_region
    %vm19 = vcmask 261120
    %20 = vst.msk [vmem:[#allocation2] sm:$0xff] %vm19, 0.0
    %21 = vst.msk [vmem:[#allocation2 + $0x8] sm:$0xff] %vm19, 0.0
  $region17: #{transformer_forward.36} parent=0 // pred_fallthru
    _
  %v22 = vld [vmem:[#allocation2] sm:$0xff]
  %v23 = vld [vmem:[#allocation2 + $0x8] sm:$0xff]
  %v24 = vld [vmem:[%s0] sm:$0xf]
  %v25 = vld [vmem:[%s0 + $0x4] sm:$0xf]
  %v26 = vld [vmem:[%s1] sm:$0xf]
  %v27 = vld [vmem:[%s1 + $0x4] sm:$0xf]
  %v28 = vld [vmem:[%s1 + $0x8] sm:$0xf]
  %v29 = vld [vmem:[%s1 + $0xc] sm:$0xf]
  %v32 = vunpack.c.l.b16 %v24
  %v33 = vunpack.c.l.b16 %v25
  %v34 = vpack.c.b16 %v33, %v32
  %v39 = vunpack.c.l.b16 %v26
  %v40 = vunpack.c.l.b16 %v27
  %v41 = vunpack.c.l.b16 %v28
  %v42 = vunpack.c.l.b16 %v29
  %v43 = vpack.c.b16 %v40, %v39
  %v44 = vpack.c.b16 %v42, %v41
  %vm47 = vcmask 261120
  %v49 = vsel %vm47, %v34, 0
  %51 = vmatpush.bf16.msra.mxu0 0
  %52 = vmatpush.bf16.msra.mxu0 0
  %53 = vmatpush.bf16.msra.mxu0 0
  %54 = vmatpush.bf16.msra.mxu0 0
  %55 = vmatpush.bf16.msra.mxu0 0
  %56 = vmatpush.bf16.msra.mxu0 0
  %57 = vmatpush.bf16.msra.mxu0 %v44
  %58 = vmatpush.bf16.msra.mxu0 %v43
  %59 = vmatmul.bf16.gmra.mxu0 %v49
  %v60 = vpop.f32.mrf.mxu0
  %v61 = vadd.f32 0.0, %v60
  %v62 = vpop.f32.mrf.mxu0
  %v63 = vadd.f32 0.0, %v62
  %64 = vdwg.mxu0
  %v65 = vadd.f32 %v22, %v61
  %v66 = vadd.f32 %v23, %v63
  %67 = vst.msk [vmem:[#allocation2] sm:$0xff] %vm47, %v65
  %68 = vst.msk [vmem:[#allocation2 + $0x8] sm:$0xff] %vm47, %v66
  // Predicated region
  $region18: #{transformer_forward.36} parent=0 // pred_check
    %p69 = pneg %p15
  $region19: #{transformer_forward.36} parent=0 // pred_check_branch
    %71 = sbr.rel (%p69) target = $region21
  $region20: #{transformer_forward.36} parent=0 // pred_region
    %v72 = vld [vmem:[#allocation2] sm:$0xff]
    %v73 = vld [vmem:[#allocation2 + $0x8] sm:$0xff]
    %v74 = vld [vmem:[%s2] sm:$0x1]
    %v76 = vperm.slane %v74, 0
    %v78 = vadd.f32 %v72, %v76
    %v79 = vadd.f32 %v73, %v76
    %v80 = vpack.c.bf16 %v78, %v78
    %v81 = vpack.c.bf16 %v79, %v79
    %vm82 = vcmask 257024
    %83 = vst.msk [vmem:[%s3] sm:$0xf] %vm82, %v80
    %84 = vst.msk [vmem:[%s3 + $0x4] sm:$0xf] %vm82, %v81
  $region21: #{transformer_forward.36} parent=0 // pred_fallthru
    _
  // Predicated region
  $region22: #{transformer_forward.36} parent=0 // pred_check
    _
  $region23: #{transformer_forward.36} parent=0 // pred_check_branch
    %86 = sbr.rel (0) target = $region25
  $region24: #{transformer_forward.36} parent=0 // pred_region
    _
  $region25: #{transformer_forward.36} parent=0 // pred_fallthru
    _
  // Predicated region
  $region26: #{transformer_forward.36} parent=0 // pred_check
    _
  $region27: #{transformer_forward.36} parent=0 // pred_check_branch
    %88 = sbr.rel (0) target = $region29
  $region28: #{transformer_forward.36} parent=0 // pred_region
    _
  $region29: #{transformer_forward.36} parent=0 // pred_fallthru
    _

// kernel: transformer_forward.34
$region0: #{transformer_forward.34}
  #allocation0 [shape = 'u32[]', space=smem, size = 0x4, offset = 0x4, fixed_abs, tag = 'smem constant byte address 0x4 - core index']
  #allocation1 [shape = 'u32[72,128]{1,0:T(1,128)}', space=vmem, size = 0x9000, scoped, tag = 'internal scratch']
  #allocation2 [shape = 'f32[4,8,1]{2,1,0:T(8,128)}', space=vmem, size = 0x4000, scoped, tag = 'scratch operand']
  #allocation3 [shape = 'f32[4,8,1]{2,1,0:T(8,128)}', space=vmem, size = 0x4000, scoped, tag = 'scratch operand']
  #allocation4 [shape = 'f32[8,32]{1,0:T(8,128)}', space=vmem, size = 0x1000, scoped, tag = 'scratch operand']
  %s0 = inlined_call_operand.vmem [shape: bf16[2,8,96], index: 0, kind: input, shape index: {}, may-alias: {0,1}]
  %s1 = inlined_call_operand.vmem [shape: bf16[2,8,96], index: 1, kind: input, shape index: {}, may-alias: {0,1}]
  %s2 = inlined_call_operand.vmem [shape: s32[2,8,8], index: 2, kind: input, shape index: {}]
  %s3 = inlined_call_operand.vmem [shape: bf16[2,8,32], index: 3, kind: output, shape index: {}]
  %s4 = sld [smem:[#allocation0]]
  $region53: #{transformer_forward.34} parent=0
    _
  %s6 = ssub.s32 1, %s4
  %s7 = scalar_select 0, %s6, %s4
  loop: start=0, step=1, limit=4
  $region2: #{transformer_forward.34} parent=0 // loop_pre_header
    _
  $region3: #{transformer_forward.34} parent=0 // loop_header
    %s9 = sphi 0, %s13
    %p10 = scmp.ge.s32.totalorder %s9, 4
    %s16 = sphi 0, %s28
    %s17 = sphi 0, %s24
    %s18 = sphi 0, %s16
    %s19 = sphi 0, %s17
    %s20 = sphi 0, %s18
    %s21 = sphi 0, %s19
    %s31 = sphi 0, %s33
    %s34 = sphi 0, %s31
    %s35 = sphi 0, %s34
    %s51 = sphi 0, %s35
    %s59 = sphi 0, %s61
    %s62 = sphi 0, %s59
    %s63 = sphi 0, %s62
    %s79 = sphi 0, %s63
    %s87 = sphi 0, %s89
    %s90 = sphi 0, %s87
    %s91 = sphi 0, %s90
    %s107 = sphi 0, %s91
    %s113 = sphi 0, %s115
    %s116 = sphi 0, %s113
    %s117 = sphi 0, %s116
    %s133 = sphi 0, %s117
  $region4: #{transformer_forward.34} parent=0 // loop_header_branch
    %12 = sbr.rel (%p10) target = $region8
  $region5: #{transformer_forward.34} parent=0 // loop_body
    %s14 = ssub.s32 %s9, 1
    %s15 = ssub.s32 %s9, 2
    %s22 = sadd.s32 1, %s17
    %p23 = scmp.ge.s32.totalorder %s22, 1
    %s24 = scalar_select %p23, 0, %s22
    %s25 = sadd.s32 1, %s16
    %s26 = scalar_select %p23, %s25, %s16
    %p27 = scmp.ge.s32.totalorder %s26, 2
    %s28 = scalar_select %p27, 0, %s26
    %s29 = ssub.s32 %s16, %s28
    %p30 = scmp.eq.s32.totalorder %s29, 0
    %s32 = sadd.s32 %s31, 1
    %s33 = scalar_select %p30, %s31, %s32
    %p36 = pneg %p30
    %p37 = scmp.eq.s32.totalorder %s9, 1
    %p38 = por %p36, %p37
    %p39 = scmp.ne.s32.totalorder %s31, %s34
    %p40 = scmp.eq.s32.totalorder %s9, 0
    %p41 = por %p39, %p40
    %p42 = scmp.ne.s32.totalorder %s31, %s34
    %p43 = scmp.eq.s32.totalorder %s14, 1
    %p44 = por %p42, %p43
    %p45 = scmp.ne.s32.totalorder %s34, %s35
    %p46 = scmp.eq.s32.totalorder %s14, 0
    %p47 = por %p45, %p46
    %p48 = scmp.ne.s32.totalorder %s34, %s35
    %p49 = scmp.eq.s32.totalorder %s15, 1
    %p50 = por %p48, %p49
    %p52 = scmp.ne.s32.totalorder %s35, %s51
    %p53 = scmp.eq.s32.totalorder %s15, 0
    %p54 = por %p52, %p53
    %s55 = ssub.s32 %s16, %s28
    %s56 = ssub.s32 %s17, %s24
    %s57 = sor.u32 %s55, %s56
    %p58 = scmp.eq.s32.totalorder %s57, 0
    %s60 = sadd.s32 %s59, 1
    %s61 = scalar_select %p58, %s59, %s60
    %p64 = pneg %p58
    %p65 = scmp.eq.s32.totalorder %s9, 1
    %p66 = por %p64, %p65
    %p67 = scmp.ne.s32.totalorder %s59, %s62
    %p68 = scmp.eq.s32.totalorder %s9, 0
    %p69 = por %p67, %p68
    %p70 = scmp.ne.s32.totalorder %s59, %s62
    %p71 = scmp.eq.s32.totalorder %s14, 1
    %p72 = por %p70, %p71
    %p73 = scmp.ne.s32.totalorder %s62, %s63
    %p74 = scmp.eq.s32.totalorder %s14, 0
    %p75 = por %p73, %p74
    %p76 = scmp.ne.s32.totalorder %s62, %s63
    %p77 = scmp.eq.s32.totalorder %s15, 1
    %p78 = por %p76, %p77
    %p80 = scmp.ne.s32.totalorder %s63, %s79
    %p81 = scmp.eq.s32.totalorder %s15, 0
    %p82 = por %p80, %p81
    %s83 = ssub.s32 %s16, %s28
    %s84 = ssub.s32 %s17, %s24
    %s85 = sor.u32 %s83, %s84
    %p86 = scmp.eq.s32.totalorder %s85, 0
    %s88 = sadd.s32 %s87, 1
    %s89 = scalar_select %p86, %s87, %s88
    %p92 = pneg %p86
    %p93 = scmp.eq.s32.totalorder %s9, 1
    %p94 = por %p92, %p93
    %p95 = scmp.ne.s32.totalorder %s87, %s90
    %p96 = scmp.eq.s32.totalorder %s9, 0
    %p97 = por %p95, %p96
    %p98 = scmp.ne.s32.totalorder %s87, %s90
    %p99 = scmp.eq.s32.totalorder %s14, 1
    %p100 = por %p98, %p99
    %p101 = scmp.ne.s32.totalorder %s90, %s91
    %p102 = scmp.eq.s32.totalorder %s14, 0
    %p103 = por %p101, %p102
    %p104 = scmp.ne.s32.totalorder %s90, %s91
    %p105 = scmp.eq.s32.totalorder %s15, 1
    %p106 = por %p104, %p105
    %p108 = scmp.ne.s32.totalorder %s91, %s107
    %p109 = scmp.eq.s32.totalorder %s15, 0
    %p110 = por %p108, %p109
    %s111 = ssub.s32 %s16, %s28
    %p112 = scmp.eq.s32.totalorder %s111, 0
    %s114 = sadd.s32 %s113, 1
    %s115 = scalar_select %p112, %s113, %s114
    %p118 = pneg %p112
    %p119 = scmp.eq.s32.totalorder %s9, 1
    %p120 = por %p118, %p119
    %p121 = scmp.ne.s32.totalorder %s113, %s116
    %p122 = scmp.eq.s32.totalorder %s9, 0
    %p123 = por %p121, %p122
    %p124 = scmp.ne.s32.totalorder %s113, %s116
    %p125 = scmp.eq.s32.totalorder %s14, 1
    %p126 = por %p124, %p125
    %p127 = scmp.ne.s32.totalorder %s116, %s117
    %p128 = scmp.eq.s32.totalorder %s14, 0
    %p129 = por %p127, %p128
    %p130 = scmp.ne.s32.totalorder %s116, %s117
    %p131 = scmp.eq.s32.totalorder %s15, 1
    %p132 = por %p130, %p131
    %p134 = scmp.ne.s32.totalorder %s117, %s133
    %p135 = scmp.eq.s32.totalorder %s15, 0
    %p136 = por %p134, %p135
    %p137 = scmp.le.s32.totalorder 1, %s9
    %p138 = scmp.lt.s32.totalorder %s9, 3
    %p139 = pnand %p137, %p138
    %p140 = pneg %p139
    // Predicated region
    $region9: #{transformer_forward.34} parent=5 // pred_check
      _
    $region10: #{transformer_forward.34} parent=5 // pred_check_branch
      %142 = sbr.rel (%p139) target = $region12
    $region11: #{transformer_forward.34} parent=5 // pred_region
      %s143 = ssub.s32 %s9, 1
    $region12: #{transformer_forward.34} parent=5 // pred_fallthru
      _
    %p144 = scmp.lt.s32.totalorder %s9, 2
    // Predicated region
    $region13: #{transformer_forward.34} parent=5 // pred_check
      %p145 = pneg %p144
    $region14: #{transformer_forward.34} parent=5 // pred_check_branch
      %147 = sbr.rel (%p145) target = $region16
    $region15: #{transformer_forward.34} parent=5 // pred_region
      // Predicated region
      $region17: #{transformer_forward.34} parent=15 // pred_check
        %p148 = pneg %p41
      $region18: #{transformer_forward.34} parent=15 // pred_check_branch
        %150 = sbr.rel (%p148) target = $region20
      $region19: #{transformer_forward.34} parent=15 // pred_region
        %p151 = scmp.lt.s32.totalorder %s16, 1
        %s152 = scalar_select %p151, %s16, 1
        %s153 = smul.addr %s152, 4
        %s154 = scalar_lea.vmem %s0, %s153
      $region20: #{transformer_forward.34} parent=15 // pred_fallthru
        _
      // Predicated region
      $region21: #{transformer_forward.34} parent=15 // pred_check
        %p155 = pneg %p69
      $region22: #{transformer_forward.34} parent=15 // pred_check_branch
        %157 = sbr.rel (%p155) target = $region24
      $region23: #{transformer_forward.34} parent=15 // pred_region
        %p158 = scmp.lt.s32.totalorder %s16, 1
        %s159 = scalar_select %p158, %s16, 1
        %p160 = scmp.lt.s32.totalorder %s17, 0
        %s161 = scalar_select %p160, %s17, 0
        %s162 = sadd.s32 %s161, %s159
        %s163 = smul.addr %s162, 4
        %s164 = scalar_lea.vmem %s1, %s163
      $region24: #{transformer_forward.34} parent=15 // pred_fallthru
        _
      // Predicated region
      $region25: #{transformer_forward.34} parent=15 // pred_check
        %p165 = pneg %p97
      $region26: #{transformer_forward.34} parent=15 // pred_check_branch
        %167 = sbr.rel (%p165) target = $region28
      $region27: #{transformer_forward.34} parent=15 // pred_region
        %p168 = scmp.lt.s32.totalorder %s16, 1
        %s169 = scalar_select %p168, %s16, 1
        %p170 = scmp.lt.s32.totalorder %s17, 0
        %s171 = scalar_select %p170, %s17, 0
        %s172 = sadd.s32 %s171, %s169
        %s173 = smul.addr %s172, 8
        %s174 = scalar_lea.vmem %s2, %s173
      $region28: #{transformer_forward.34} parent=15 // pred_fallthru
        _
    $region16: #{transformer_forward.34} parent=5 // pred_fallthru
      _
    %p175 = scmp.le.s32.totalorder 1, %s9
    %p176 = scmp.lt.s32.totalorder %s9, 3
    %p177 = pnand %p175, %p176
    %p178 = pneg %p177
    // Predicated region
    $region29: #{transformer_forward.34} parent=5 // pred_check
      _
    $region30: #{transformer_forward.34} parent=5 // pred_check_branch
      %180 = sbr.rel (%p177) target = $region32
    $region31: #{transformer_forward.34} parent=5 // pred_region
      %s181 = ssub.s32 %s9, 1
      %p182 = scmp.lt.s32.totalorder %s18, 1
      %s183 = scalar_select %p182, %s18, 1
      %s184 = smul.addr %s183, 4
      %s185 = scalar_lea.vmem %s0, %s184
      %p186 = pneg %p47
      %p187 = pneg %p44
      %p188 = scmp.lt.s32.totalorder %s18, 1
      %s189 = scalar_select %p188, %s18, 1
      %p190 = scmp.lt.s32.totalorder %s19, 0
      %s191 = scalar_select %p190, %s19, 0
      %s192 = sadd.s32 %s191, %s189
      %s193 = smul.addr %s192, 4
      %s194 = scalar_lea.vmem %s1, %s193
      %p195 = pneg %p75
      %p196 = pneg %p72
      %p197 = scmp.lt.s32.totalorder %s18, 1
      %s198 = scalar_select %p197, %s18, 1
      %p199 = scmp.lt.s32.totalorder %s19, 0
      %s200 = scalar_select %p199, %s19, 0
      %s201 = sadd.s32 %s200, %s198
      %s202 = smul.addr %s201, 8
      %s203 = scalar_lea.vmem %s2, %s202
      %p204 = pneg %p103
      %p205 = pneg %p100
      %p206 = pneg %p129
      %p207 = pneg %p126
      %p208 = scmp.lt.s32.totalorder %s18, 1
      %s209 = scalar_select %p208, %s18, 1
      %s210 = smul.addr %s209, 4
      %s211 = scalar_lea.vmem %s3, %s210
      %p212 = scmp.lt.s32.totalorder %s18, 1
      %s213 = scalar_select %p212, %s18, 1
      %s214 = smul.addr %s213, 4
      %s215 = scalar_lea.vmem %s0, %s214
      %p216 = scmp.lt.s32.totalorder %s18, 1
      %s217 = scalar_select %p216, %s18, 1
      %p218 = scmp.lt.s32.totalorder %s19, 0
      %s219 = scalar_select %p218, %s19, 0
      %s220 = sadd.s32 %s219, %s217
      %s221 = smul.addr %s220, 4
      %s222 = scalar_lea.vmem %s1, %s221
      %p223 = scmp.lt.s32.totalorder %s18, 1
      %s224 = scalar_select %p223, %s18, 1
      %p225 = scmp.lt.s32.totalorder %s19, 0
      %s226 = scalar_select %p225, %s19, 0
      %s227 = sadd.s32 %s226, %s224
      %s228 = smul.addr %s227, 8
      %s229 = scalar_lea.vmem %s2, %s228
      %p230 = scmp.lt.s32.totalorder %s18, 1
      %s231 = scalar_select %p230, %s18, 1
      %s232 = smul.addr %s231, 4
      %s233 = scalar_lea.vmem %s3, %s232
      %p235 = scmp.eq.s32.totalorder %s19, 0
      // Predicated region
      $region33: #{transformer_forward.34} parent=31 // pred_check
        %p236 = pneg %p235
      $region34: #{transformer_forward.34} parent=31 // pred_check_branch
        %238 = sbr.rel (%p236) target = $region36
      $region35: #{transformer_forward.34} parent=31 // pred_region
        %vm239 = vcmask 7168
        %240 = vst.msk [vmem:[#allocation2] sm:$0xff] %vm239, -1e+30
        %241 = vst.msk [vmem:[#allocation2 + $0x8] sm:$0xff] %vm239, -1e+30
        %242 = vst.msk [vmem:[#allocation2 + $0x10] sm:$0xff] %vm239, -1e+30
        %243 = vst.msk [vmem:[#allocation2 + $0x18] sm:$0xff] %vm239, -1e+30
        %244 = vst.msk [vmem:[#allocation3] sm:$0xff] %vm239, 0.0
        %245 = vst.msk [vmem:[#allocation3 + $0x8] sm:$0xff] %vm239, 0.0
        %246 = vst.msk [vmem:[#allocation3 + $0x10] sm:$0xff] %vm239, 0.0
        %247 = vst.msk [vmem:[#allocation3 + $0x18] sm:$0xff] %vm239, 0.0
        %vm248 = vcmask 261120
        %249 = vst.msk [vmem:[#allocation4] sm:$0xff] %vm248, 0.0
      $region36: #{transformer_forward.34} parent=31 // pred_fallthru
        _
      %v250 = vld [vmem:[%s215] sm:$0xf]
      %v251 = vld [vmem:[%s222] sm:$0xf]
      %v252 = vld [vmem:[%s229] sm:$0xff]
      %v254 = vunpack.c.l.b16 %v251
      %v255 = vpack.c.b16 %v254, %v254
      %256 = vrot.lane.b32.xlu0 %v255, 96
      %v257 = vpop.permute.xlu0 %256
      %vm258 = vcmask 64512
      %v260 = vsel %vm258, %v250, 0
      %v263 = vsel %vm258, %v257, 0
      %265 = vmatpush.bf16.xpose.msra.mxu0 0
      %266 = vmatpush.bf16.xpose.msra.mxu0 0
      %267 = vmatpush.bf16.xpose.msra.mxu0 0
      %268 = vmatpush.bf16.xpose.msra.mxu0 0
      %269 = vmatpush.bf16.xpose.msra.mxu0 0
      %270 = vmatpush.bf16.xpose.msra.mxu0 0
      %271 = vmatpush.bf16.xpose.msra.mxu0 0
      %272 = vmatpush.bf16.xpose.msra.mxu0 %v263
      %273 = vmatmul.bf16.gmra.mxu0 %v260
      %v274 = vpop.f32.mrf.mxu0
      %v275 = vadd.f32 0.0, %v274
      %v276 = vpop.f32.mrf.mxu0
      %277 = vdwg.mxu0
      %v278 = vmul.f32 %v275, 0.35355338
      %vm279 = vcmp.eq.s32.totalorder %v252, 0
      %v280 = vsel %vm279, -10000.0, %v278
      %v281 = vld [vmem:[#allocation2] sm:$0xff]
      %v282 = vsel %vm258, %v280, -inf
      %283 = vmax.xlane.f32.xlu0 %v282
      %v284 = vpop.xlane.xlu0 %283
      %v285 = vmax.f32 %v281, %v284
      %v286 = vsub.f32 %v281, %v285
      %v287 = vmul.f32 %v286, 1.442695
      %v288 = vpow.pop %v287
      %290 = vset.pattern.permute.xlu0 0
      %291 = vperm.xlu0 %290, %v285
      %v292 = vpop.permute.xlu0 %291
      %v294 = vsub.f32 %v280, %v292
      %v295 = vmul.f32 %v294, 1.442695
      %v296 = vpow.pop %v295
      %v297 = vld [vmem:[#allocation3] sm:$0xff]
      %v298 = vmul.f32 %v288, %v297
      %v299 = vsel %vm258, %v296, 0.0
      %300 = vadd.xlane.f32.xlu0 %v299
      %v301 = vpop.xlane.xlu0 %300
      %v302 = vadd.f32 %v298, %v301
      %vm303 = vcmask 7168
      %304 = vst.msk [vmem:[#allocation3] sm:$0xff] %vm303, %v302
      %v305 = vld [vmem:[#allocation4] sm:$0xff]
      %307 = vset.pattern.permute.xlu0 0
      %308 = vperm.xlu0 %307, %v288
      %v309 = vpop.permute.xlu0 %308
      %v311 = vmul.f32 %v309, %v305
      %v312 = vpack.c.bf16 %v296, %v296
      %313 = vrot.lane.b32.xlu0 %v255, 64
      %v314 = vpop.permute.xlu0 %313
      %v316 = vsel %vm258, %v312, 0
      %vm318 = vcmask 1043456
      %v320 = vsel %vm318, %v314, 0
      %322 = vmatpush.bf16.msra.mxu0 0
      %323 = vmatpush.bf16.msra.mxu0 0
      %324 = vmatpush.bf16.msra.mxu0 0
      %325 = vmatpush.bf16.msra.mxu0 0
      %326 = vmatpush.bf16.msra.mxu0 0
      %327 = vmatpush.bf16.msra.mxu0 0
      %328 = vmatpush.bf16.msra.mxu0 0
      %329 = vmatpush.bf16.msra.mxu0 %v320
      %330 = vmatmul.bf16.gmra.mxu0 %v316
      %v331 = vpop.f32.mrf.mxu0
      %v332 = vadd.f32 0.0, %v331
      %v333 = vpop.f32.mrf.mxu0
      %334 = vdwg.mxu0
      %v335 = vadd.f32 %v311, %v332
      %336 = vst.msk [vmem:[#allocation4] sm:$0xff] %vm258, %v335
      %337 = vst.msk [vmem:[#allocation2] sm:$0xff] %vm303, %v285
      %v339 = vunpack.c.l.b16 %v250
      %v340 = vpack.c.b16 %v339, %v339
      %341 = vrot.lane.b32.xlu0 %v340, 120
      %v342 = vpop.permute.xlu0 %341
      %343 = vrot.lane.b32.xlu0 %v255, 88
      %v344 = vpop.permute.xlu0 %343
      %v346 = vsel %vm258, %v342, 0
      %v349 = vsel %vm258, %v344, 0
      %351 = vmatpush.bf16.xpose.msra.mxu0 0
      %352 = vmatpush.bf16.xpose.msra.mxu0 0
      %353 = vmatpush.bf16.xpose.msra.mxu0 0
      %354 = vmatpush.bf16.xpose.msra.mxu0 0
      %355 = vmatpush.bf16.xpose.msra.mxu0 0
      %356 = vmatpush.bf16.xpose.msra.mxu0 0
      %357 = vmatpush.bf16.xpose.msra.mxu0 0
      %358 = vmatpush.bf16.xpose.msra.mxu0 %v349
      %359 = vmatmul.bf16.gmra.mxu0 %v346
      %v360 = vpop.f32.mrf.mxu0
      %v361 = vadd.f32 0.0, %v360
      %v362 = vpop.f32.mrf.mxu0
      %363 = vdwg.mxu0
      %v364 = vmul.f32 %v361, 0.35355338
      %v365 = vsel %vm279, -10000.0, %v364
      %s366 = scalar_lea.vmem [#allocation2], 8
      %v367 = vld [vmem:[%s366] sm:$0xff]
      %v368 = vsel %vm258, %v365, -inf
      %369 = vmax.xlane.f32.xlu0 %v368
      %v370 = vpop.xlane.xlu0 %369
      %v371 = vmax.f32 %v367, %v370
      %v372 = vsub.f32 %v367, %v371
      %v373 = vmul.f32 %v372, 1.442695
      %v374 = vpow.pop %v373
      %376 = vset.pattern.permute.xlu0 0
      %377 = vperm.xlu0 %376, %v371
      %v378 = vpop.permute.xlu0 %377
      %v380 = vsub.f32 %v365, %v378
      %v381 = vmul.f32 %v380, 1.442695
      %v382 = vpow.pop %v381
      %s383 = scalar_lea.vmem [#allocation3], 8
      %v384 = vld [vmem:[%s383] sm:$0xff]
      %v385 = vmul.f32 %v374, %v384
      %v386 = vsel %vm258, %v382, 0.0
      %387 = vadd.xlane.f32.xlu0 %v386
      %v388 = vpop.xlane.xlu0 %387
      %v389 = vadd.f32 %v385, %v388
      %390 = vst.msk [vmem:[%s383] sm:$0xff] %vm303, %v389
      %v391 = vld [vmem:[#allocation4] sm:$0xff]
      %393 = vset.pattern.permute.xlu0 0
      %394 = vperm.xlu0 %393, %v374
      %v395 = vpop.permute.xlu0 %394
      %v397 = vmul.f32 %v395, %v391
      %v398 = vpack.c.bf16 %v382, %v382
      %399 = vrot.lane.b32.xlu0 %v255, 56
      %v400 = vpop.permute.xlu0 %399
      %v402 = vsel %vm258, %v398, 0
      %v405 = vsel %vm318, %v400, 0
      %407 = vmatpush.bf16.msra.mxu0 0
      %408 = vmatpush.bf16.msra.mxu0 0
      %409 = vmatpush.bf16.msra.mxu0 0
      %410 = vmatpush.bf16.msra.mxu0 0
      %411 = vmatpush.bf16.msra.mxu0 0
      %412 = vmatpush.bf16.msra.mxu0 0
      %413 = vmatpush.bf16.msra.mxu0 0
      %414 = vmatpush.bf16.msra.mxu0 %v405
      %415 = vmatmul.bf16.gmra.mxu0 %v402
      %v416 = vpop.f32.mrf.mxu0
      %v417 = vadd.f32 0.0, %v416
      %v418 = vpop.f32.mrf.mxu0
      %419 = vdwg.mxu0
      %421 = vrot.lane.b32.xlu0 %v417, 8
      %v422 = vpop.permute.xlu0 %421
      %v424 = vadd.f32 %v397, %v422
      %vm425 = vcmask 130112
      %426 = vst.msk [vmem:[#allocation4] sm:$0xff] %vm425, %v424
      %427 = vst.msk [vmem:[%s366] sm:$0xff] %vm303, %v371
      %428 = vrot.lane.b32.xlu0 %v340, 112
      %v429 = vpop.permute.xlu0 %428
      %430 = vrot.lane.b32.xlu0 %v255, 80
      %v431 = vpop.permute.xlu0 %430
      %v433 = vsel %vm258, %v429, 0
      %v436 = vsel %vm258, %v431, 0
      %438 = vmatpush.bf16.xpose.msra.mxu0 0
      %439 = vmatpush.bf16.xpose.msra.mxu0 0
      %440 = vmatpush.bf16.xpose.msra.mxu0 0
      %441 = vmatpush.bf16.xpose.msra.mxu0 0
      %442 = vmatpush.bf16.xpose.msra.mxu0 0
      %443 = vmatpush.bf16.xpose.msra.mxu0 0
      %444 = vmatpush.bf16.xpose.msra.mxu0 0
      %445 = vmatpush.bf16.xpose.msra.mxu0 %v436
      %446 = vmatmul.bf16.gmra.mxu0 %v433
      %v447 = vpop.f32.mrf.mxu0
      %v448 = vadd.f32 0.0, %v447
      %v449 = vpop.f32.mrf.mxu0
      %450 = vdwg.mxu0
      %v451 = vmul.f32 %v448, 0.35355338
      %v452 = vsel %vm279, -10000.0, %v451
      %s453 = scalar_lea.vmem [#allocation2], 16
      %v454 = vld [vmem:[%s453] sm:$0xff]
      %v455 = vsel %vm258, %v452, -inf
      %456 = vmax.xlane.f32.xlu0 %v455
      %v457 = vpop.xlane.xlu0 %456
      %v458 = vmax.f32 %v454, %v457
      %v459 = vsub.f32 %v454, %v458
      %v460 = vmul.f32 %v459, 1.442695
      %v461 = vpow.pop %v460
      %463 = vset.pattern.permute.xlu0 0
      %464 = vperm.xlu0 %463, %v458
      %v465 = vpop.permute.xlu0 %464
      %v467 = vsub.f32 %v452, %v465
      %v468 = vmul.f32 %v467, 1.442695
      %v469 = vpow.pop %v468
      %s470 = scalar_lea.vmem [#allocation3], 16
      %v471 = vld [vmem:[%s470] sm:$0xff]
      %v472 = vmul.f32 %v461, %v471
      %v473 = vsel %vm258, %v469, 0.0
      %474 = vadd.xlane.f32.xlu0 %v473
      %v475 = vpop.xlane.xlu0 %474
      %v476 = vadd.f32 %v472, %v475
      %477 = vst.msk [vmem:[%s470] sm:$0xff] %vm303, %v476
      %v478 = vld [vmem:[#allocation4] sm:$0xff]
      %480 = vset.pattern.permute.xlu0 0
      %481 = vperm.xlu0 %480, %v461
      %v482 = vpop.permute.xlu0 %481
      %v484 = vmul.f32 %v482, %v478
      %v485 = vpack.c.bf16 %v469, %v469
      %486 = vrot.lane.b32.xlu0 %v255, 48
      %v487 = vpop.permute.xlu0 %486
      %v489 = vsel %vm258, %v485, 0
      %v492 = vsel %vm318, %v487, 0
      %494 = vmatpush.bf16.msra.mxu0 0
      %495 = vmatpush.bf16.msra.mxu0 0
      %496 = vmatpush.bf16.msra.mxu0 0
      %497 = vmatpush.bf16.msra.mxu0 0
      %498 = vmatpush.bf16.msra.mxu0 0
      %499 = vmatpush.bf16.msra.mxu0 0
      %500 = vmatpush.bf16.msra.mxu0 0
      %501 = vmatpush.bf16.msra.mxu0 %v492
      %502 = vmatmul.bf16.gmra.mxu0 %v489
      %v503 = vpop.f32.mrf.mxu0
      %v504 = vadd.f32 0.0, %v503
      %v505 = vpop.f32.mrf.mxu0
      %506 = vdwg.mxu0
      %508 = vrot.lane.b32.xlu0 %v504, 16
      %v509 = vpop.permute.xlu0 %508
      %v511 = vadd.f32 %v484, %v509
      %vm512 = vcmask 195712
      %513 = vst.msk [vmem:[#allocation4] sm:$0xff] %vm512, %v511
      %514 = vst.msk [vmem:[%s453] sm:$0xff] %vm303, %v458
      %515 = vrot.lane.b32.xlu0 %v340, 104
      %v516 = vpop.permute.xlu0 %515
      %517 = vrot.lane.b32.xlu0 %v255, 72
      %v518 = vpop.permute.xlu0 %517
      %v520 = vsel %vm258, %v516, 0
      %v523 = vsel %vm258, %v518, 0
      %525 = vmatpush.bf16.xpose.msra.mxu0 0
      %526 = vmatpush.bf16.xpose.msra.mxu0 0
      %527 = vmatpush.bf16.xpose.msra.mxu0 0
      %528 = vmatpush.bf16.xpose.msra.mxu0 0
      %529 = vmatpush.bf16.xpose.msra.mxu0 0
      %530 = vmatpush.bf16.xpose.msra.mxu0 0
      %531 = vmatpush.bf16.xpose.msra.mxu0 0
      %532 = vmatpush.bf16.xpose.msra.mxu0 %v523
      %533 = vmatmul.bf16.gmra.mxu0 %v520
      %v534 = vpop.f32.mrf.mxu0
      %v535 = vadd.f32 0.0, %v534
      %v536 = vpop.f32.mrf.mxu0
      %537 = vdwg.mxu0
      %v538 = vmul.f32 %v535, 0.35355338
      %v539 = vsel %vm279, -10000.0, %v538
      %s540 = scalar_lea.vmem [#allocation2], 24
      %v541 = vld [vmem:[%s540] sm:$0xff]
      %v542 = vsel %vm258, %v539, -inf
      %543 = vmax.xlane.f32.xlu0 %v542
      %v544 = vpop.xlane.xlu0 %543
      %v545 = vmax.f32 %v541, %v544
      %v546 = vsub.f32 %v541, %v545
      %v547 = vmul.f32 %v546, 1.442695
      %v548 = vpow.pop %v547
      %550 = vset.pattern.permute.xlu0 0
      %551 = vperm.xlu0 %550, %v545
      %v552 = vpop.permute.xlu0 %551
      %v554 = vsub.f32 %v539, %v552
      %v555 = vmul.f32 %v554, 1.442695
      %v556 = vpow.pop %v555
      %s557 = scalar_lea.vmem [#allocation3], 24
      %v558 = vld [vmem:[%s557] sm:$0xff]
      %v559 = vmul.f32 %v548, %v558
      %v560 = vsel %vm258, %v556, 0.0
      %561 = vadd.xlane.f32.xlu0 %v560
      %v562 = vpop.xlane.xlu0 %561
      %v563 = vadd.f32 %v559, %v562
      %564 = vst.msk [vmem:[%s557] sm:$0xff] %vm303, %v563
      %v565 = vld [vmem:[#allocation4] sm:$0xff]
      %567 = vset.pattern.permute.xlu0 0
      %568 = vperm.xlu0 %567, %v548
      %v569 = vpop.permute.xlu0 %568
      %v571 = vmul.f32 %v569, %v565
      %v572 = vpack.c.bf16 %v556, %v556
      %573 = vrot.lane.b32.xlu0 %v255, 40
      %v574 = vpop.permute.xlu0 %573
      %v576 = vsel %vm258, %v572, 0
      %v579 = vsel %vm318, %v574, 0
      %581 = vmatpush.bf16.msra.mxu0 0
      %582 = vmatpush.bf16.msra.mxu0 0
      %583 = vmatpush.bf16.msra.mxu0 0
      %584 = vmatpush.bf16.msra.mxu0 0
      %585 = vmatpush.bf16.msra.mxu0 0
      %586 = vmatpush.bf16.msra.mxu0 0
      %587 = vmatpush.bf16.msra.mxu0 0
      %588 = vmatpush.bf16.msra.mxu0 %v579
      %589 = vmatmul.bf16.gmra.mxu0 %v576
      %v590 = vpop.f32.mrf.mxu0
      %v591 = vadd.f32 0.0, %v590
      %v592 = vpop.f32.mrf.mxu0
      %593 = vdwg.mxu0
      %595 = vrot.lane.b32.xlu0 %v591, 24
      %v596 = vpop.permute.xlu0 %595
      %v598 = vadd.f32 %v571, %v596
      %vm599 = vcmask 261312
      %600 = vst.msk [vmem:[#allocation4] sm:$0xff] %vm599, %v598
      %601 = vst.msk [vmem:[%s540] sm:$0xff] %vm303, %v545
      // Predicated region
      $region37: #{transformer_forward.34} parent=31 // pred_check
        %p602 = pneg %p235
      $region38: #{transformer_forward.34} parent=31 // pred_check_branch
        %604 = sbr.rel (%p602) target = $region40
      $region39: #{transformer_forward.34} parent=31 // pred_region
        %v605 = vld [vmem:[#allocation3] sm:$0xff]
        %v606 = vrcp.pop %v605
        %v607 = vld [vmem:[#allocation4] sm:$0xff]
        %609 = vset.pattern.permute.xlu0 0
        %610 = vperm.xlu0 %609, %v606
        %v611 = vpop.permute.xlu0 %610
        %v613 = vmul.f32 %v607, %v611
        %614 = vst.msk [vmem:[#allocation4] sm:$0xff] %vm258, %v613
        %v615 = vld [vmem:[%s383] sm:$0xff]
        %v616 = vrcp.pop %v615
        %v617 = vld [vmem:[#allocation4] sm:$0xff]
        %619 = vset.pattern.permute.xlu0 0
        %620 = vperm.xlu0 %619, %v616
        %v621 = vpop.permute.xlu0 %620
        %v623 = vmul.f32 %v617, %v621
        %624 = vst.msk [vmem:[#allocation4] sm:$0xff] %vm425, %v623
        %v625 = vld [vmem:[%s470] sm:$0xff]
        %v626 = vrcp.pop %v625
        %v627 = vld [vmem:[#allocation4] sm:$0xff]
        %629 = vset.pattern.permute.xlu0 0
        %630 = vperm.xlu0 %629, %v626
        %v631 = vpop.permute.xlu0 %630
        %v633 = vmul.f32 %v627, %v631
        %634 = vst.msk [vmem:[#allocation4] sm:$0xff] %vm512, %v633
        %v635 = vld [vmem:[%s557] sm:$0xff]
        %v636 = vrcp.pop %v635
        %v637 = vld [vmem:[#allocation4] sm:$0xff]
        %639 = vset.pattern.permute.xlu0 0
        %640 = vperm.xlu0 %639, %v636
        %v641 = vpop.permute.xlu0 %640
        %v643 = vmul.f32 %v637, %v641
        %644 = vst.msk [vmem:[#allocation4] sm:$0xff] %vm599, %v643
        %v645 = vld [vmem:[#allocation4] sm:$0xff]
        %v646 = vpack.c.bf16 %v645, %v645
        %vm647 = vcmask 257024
        %648 = vst.msk [vmem:[%s233] sm:$0xf] %vm647, %v646
      $region40: #{transformer_forward.34} parent=31 // pred_fallthru
        _
      %p649 = scmp.lt.s32.totalorder %s18, 1
      %s650 = scalar_select %p649, %s18, 1
      %s651 = smul.addr %s650, 4
      %s652 = scalar_lea.vmem %s3, %s651
      // Predicated region
      $region41: #{transformer_forward.34} parent=31 // pred_check
        %p653 = pneg %p126
      $region42: #{transformer_forward.34} parent=31 // pred_check_branch
        %655 = sbr.rel (%p653) target = $region44
      $region43: #{transformer_forward.34} parent=31 // pred_region
        _
      $region44: #{transformer_forward.34} parent=31 // pred_fallthru
        _
    $region32: #{transformer_forward.34} parent=5 // pred_fallthru
      _
    %p656 = scmp.le.s32.totalorder 2, %s9
    // Predicated region
    $region45: #{transformer_forward.34} parent=5 // pred_check
      %p657 = pneg %p656
    $region46: #{transformer_forward.34} parent=5 // pred_check_branch
      %659 = sbr.rel (%p657) target = $region48
    $region47: #{transformer_forward.34} parent=5 // pred_region
      %s660 = ssub.s32 %s9, 2
      // Predicated region
      $region49: #{transformer_forward.34} parent=47 // pred_check
        %p661 = pneg %p132
      $region50: #{transformer_forward.34} parent=47 // pred_check_branch
        %663 = sbr.rel (%p661) target = $region52
      $region51: #{transformer_forward.34} parent=47 // pred_region
        %p664 = scmp.lt.s32.totalorder %s20, 1
        %s665 = scalar_select %p664, %s20, 1
        %s666 = smul.addr %s665, 4
        %s667 = scalar_lea.vmem %s3, %s666
      $region52: #{transformer_forward.34} parent=47 // pred_fallthru
        _
    $region48: #{transformer_forward.34} parent=5 // pred_fallthru
      _
  $region6: #{transformer_forward.34} parent=0 // loop_footer
    %s13 = sadd.s32 1, %s9
  $region7: #{transformer_forward.34} parent=0 // loop_footer_branch
    %8 = sbr.rel target = $region3
  $region8: #{transformer_forward.34} parent=0 // loop_exit
    _

// kernel: transformer_forward.41
$region0: #{transformer_forward.41}
  #allocation0 [shape = 'u32[]', space=smem, size = 0x4, offset = 0x4, fixed_abs, tag = 'smem constant byte address 0x4 - core index']
  #allocation1 [shape = 'u32[72,128]{1,0:T(1,128)}', space=vmem, size = 0x9000, scoped, tag = 'internal scratch']
  #allocation2 [shape = 'f32[16,96]{1,0:T(8,128)}', space=vmem, size = 0x2000, scoped, tag = 'scratch operand']
  %s0 = inlined_call_operand.vmem [shape: bf16[16,32], index: 0, kind: input, shape index: {}]
  %s1 = inlined_call_operand.vmem [shape: bf16[32,96], index: 1, kind: input, shape index: {}]
  %s2 = inlined_call_operand.hbm [shape: f32[1,96], index: 2, kind: input, shape index: {}]
  %s3 = inlined_call_operand.vmem [shape: bf16[16,96], index: 3, kind: output, shape index: {}]
  %s4 = sld [smem:[#allocation0]]
  $region34: #{transformer_forward.41} parent=0
    _
  %s6 = ssub.s32 1, %s4
  %s7 = scalar_select 0, %s6, %s4
  $region1: #{transformer_forward.41} parent=0
    #allocation3 [shape = 'u8[512]{0}', space=vmem, size = 0x400, scoped, tag = 'input window, operand 2, single buffered']
    #allocation4 [shape = 's32[1]{0}', space=sflag, size = 0x4, scoped, tag = 'scoped memory for transformer_forward.41']
    %8 = vsyncpa [#allocation4], 0
    // Predicated region
    $region2: #{transformer_forward.41} parent=1 // pred_check
      _
    $region3: #{transformer_forward.41} parent=1 // pred_check_branch
      %10 = sbr.rel (0) target = $region5
    $region4: #{transformer_forward.41} parent=1 // pred_region
      _
    $region5: #{transformer_forward.41} parent=1 // pred_fallthru
      _
    // Predicated region
    $region6: #{transformer_forward.41} parent=1 // pred_check
      _
    $region7: #{transformer_forward.41} parent=1 // pred_check_branch
      %12 = sbr.rel (0) target = $region9
    $region8: #{transformer_forward.41} parent=1 // pred_region
      _
    $region9: #{transformer_forward.41} parent=1 // pred_fallthru
      _
    // Predicated region
    $region10: #{transformer_forward.41} parent=1 // pred_check
      _
    $region11: #{transformer_forward.41} parent=1 // pred_check_branch
      %14 = sbr.rel (0) target = $region13
    $region12: #{transformer_forward.41} parent=1 // pred_region
      %16 = vsyncadd [#allocation4], 0
      %s18 = sshll.u32 %s2, 4
      %s19 = int_to_ptr.hbm [resolvable:$true] %s18
      %s20 = sshll.u32 [#allocation3], 4
      %s21 = int_to_ptr.vmem [resolvable:$true] %s20
      %23 = dma.hbm_to_vmem [thread:$0]  %s19, 16, %s21, [#allocation4]
    $region13: #{transformer_forward.41} parent=1 // pred_fallthru
      _
    // Predicated region
    $region14: #{transformer_forward.41} parent=1 // pred_check
      _
    $region15: #{transformer_forward.41} parent=1 // pred_check_branch
      %25 = sbr.rel (0) target = $region17
    $region16: #{transformer_forward.41} parent=1 // pred_region
      %27 = dma.done [#allocation4], 16
    $region17: #{transformer_forward.41} parent=1 // pred_fallthru
      _
    %p29 = scmp.eq.s32.totalorder 0, 0
    // Predicated region
    $region18: #{transformer_forward.41} parent=1 // pred_check
      %p30 = pneg %p29
    $region19: #{transformer_forward.41} parent=1 // pred_check_branch
      %32 = sbr.rel (%p30) target = $region21
    $region20: #{transformer_forward.41} parent=1 // pred_region
      %vm33 = vcmask 785408
      %34 = vst.msk [vmem:[#allocation2] sm:$0xff] %vm33, 0.0
      %35 = vst.msk [vmem:[#allocation2 + $0x8] sm:$0xff] %vm33, 0.0
    $region21: #{transformer_forward.41} parent=1 // pred_fallthru
      _
    %v36 = vld [vmem:[#allocation2] sm:$0xff]
    %v37 = vld [vmem:[#allocation2 + $0x8] sm:$0xff]
    %v38 = vld [vmem:[%s0] sm:$0xf]
    %v39 = vld [vmem:[%s0 + $0x4] sm:$0xf]
    %v40 = vld [vmem:[%s1] sm:$0xf]
    %v41 = vld [vmem:[%s1 + $0x4] sm:$0xf]
    %v42 = vld [vmem:[%s1 + $0x8] sm:$0xf]
    %v43 = vld [vmem:[%s1 + $0xc] sm:$0xf]
    %v46 = vunpack.c.l.b16 %v38
    %v47 = vunpack.c.l.b16 %v39
    %v48 = vpack.c.b16 %v47, %v46
    %v53 = vunpack.c.l.b16 %v40
    %v54 = vunpack.c.l.b16 %v41
    %v55 = vunpack.c.l.b16 %v42
    %v56 = vunpack.c.l.b16 %v43
    %v57 = vpack.c.b16 %v54, %v53
    %v58 = vpack.c.b16 %v56, %v55
    %vm61 = vcmask 261120
    %v63 = vsel %vm61, %v48, 0
    %65 = vmatpush.bf16.msra.mxu0 0
    %66 = vmatpush.bf16.msra.mxu0 0
    %67 = vmatpush.bf16.msra.mxu0 0
    %68 = vmatpush.bf16.msra.mxu0 0
    %69 = vmatpush.bf16.msra.mxu0 0
    %70 = vmatpush.bf16.msra.mxu0 0
    %71 = vmatpush.bf16.msra.mxu0 %v58
    %72 = vmatpush.bf16.msra.mxu0 %v57
    %73 = vmatmul.bf16.gmra.mxu0 %v63
    %v74 = vpop.f32.mrf.mxu0
    %v75 = vadd.f32 0.0, %v74
    %v76 = vpop.f32.mrf.mxu0
    %v77 = vadd.f32 0.0, %v76
    %78 = vdwg.mxu0
    %v79 = vadd.f32 %v36, %v75
    %v80 = vadd.f32 %v37, %v77
    %vm81 = vcmask 785408
    %82 = vst.msk [vmem:[#allocation2] sm:$0xff] %vm81, %v79
    %83 = vst.msk [vmem:[#allocation2 + $0x8] sm:$0xff] %vm81, %v80
    // Predicated region
    $region22: #{transformer_forward.41} parent=1 // pred_check
      %p84 = pneg %p29
    $region23: #{transformer_forward.41} parent=1 // pred_check_branch
      %86 = sbr.rel (%p84) target = $region25
    $region24: #{transformer_forward.41} parent=1 // pred_region
      %v87 = vld [vmem:[#allocation2] sm:$0xff]
      %v88 = vld [vmem:[#allocation2 + $0x8] sm:$0xff]
      %v89 = vld [vmem:[#allocation3] sm:$0x1]
      %v91 = vperm.slane %v89, 0
      %v93 = vadd.f32 %v87, %v91
      %v94 = vadd.f32 %v88, %v91
      %v95 = vpack.c.bf16 %v93, %v93
      %v96 = vpack.c.bf16 %v94, %v94
      %vm97 = vcmask 781312
      %98 = vst.msk [vmem:[%s3] sm:$0xf] %vm97, %v95
      %99 = vst.msk [vmem:[%s3 + $0x4] sm:$0xf] %vm97, %v96
    $region25: #{transformer_forward.41} parent=1 // pred_fallthru
      _
    // Predicated region
    $region26: #{transformer_forward.41} parent=1 // pred_check
      _
    $region27: #{transformer_forward.41} parent=1 // pred_check_branch
      %101 = sbr.rel (0) target = $region29
    $region28: #{transformer_forward.41} parent=1 // pred_region
      _
    $region29: #{transformer_forward.41} parent=1 // pred_fallthru
      _
    // Predicated region
    $region30: #{transformer_forward.41} parent=1 // pred_check
      _
    $region31: #{transformer_forward.41} parent=1 // pred_check_branch
      %103 = sbr.rel (0) target = $region33
    $region32: #{transformer_forward.41} parent=1 // pred_region
      _
    $region33: #{transformer_forward.41} parent=1 // pred_fallthru
      _
    %104 = vsyncpa [#allocation4], 1

// kernel: transformer_forward.40
$region0: #{transformer_forward.40}
  #allocation0 [shape = 'u32[]', space=smem, size = 0x4, offset = 0x4, fixed_abs, tag = 'smem constant byte address 0x4 - core index']
  #allocation1 [shape = 'u32[72,128]{1,0:T(1,128)}', space=vmem, size = 0x9000, scoped, tag = 'internal scratch']
  #allocation2 [shape = 'f32[16,32]{1,0:T(8,128)}', space=vmem, size = 0x2000, scoped, tag = 'scratch operand']
  %s0 = inlined_call_operand.vmem [shape: bf16[16,32], index: 0, kind: input, shape index: {}, may-alias: {0,5}]
  %s1 = inlined_call_operand.vmem [shape: bf16[32,64], index: 1, kind: input, shape index: {}]
  %s2 = inlined_call_operand.vmem [shape: f32[1,64], index: 2, kind: input, shape index: {}]
  %s3 = inlined_call_operand.vmem [shape: bf16[64,32], index: 3, kind: input, shape index: {}]
  %s4 = inlined_call_operand.hbm [shape: f32[1,32], index: 4, kind: input, shape index: {}]
  %s5 = inlined_call_operand.vmem [shape: bf16[16,32], index: 5, kind: input, shape index: {}, may-alias: {0,5}]
  %s6 = inlined_call_operand.hbm [shape: f32[1,32], index: 6, kind: input, shape index: {}]
  %s7 = inlined_call_operand.hbm [shape: f32[1,32], index: 7, kind: input, shape index: {}]
  %s8 = inlined_call_operand.vmem [shape: bf16[16,32], index: 8, kind: output, shape index: {}]
  %s9 = sld [smem:[#allocation0]]
  $region62: #{transformer_forward.40} parent=0
    _
  %s11 = ssub.s32 1, %s9
  %s12 = scalar_select 0, %s11, %s9
  $region1: #{transformer_forward.40} parent=0
    #allocation3 [shape = 'u8[512]{0}', space=vmem, size = 0x400, scoped, tag = 'input window, operand 4, single buffered']
    #allocation4 [shape = 's32[1]{0}', space=sflag, size = 0x4, scoped, tag = 'scoped memory for transformer_forward.40']
    #allocation5 [shape = 'u8[512]{0}', space=vmem, size = 0x400, scoped, tag = 'input window, operand 6, single buffered']
    #allocation6 [shape = 's32[1]{0}', space=sflag, size = 0x4, scoped, tag = 'scoped memory for transformer_forward.40']
    #allocation7 [shape = 'u8[512]{0}', space=vmem, size = 0x400, scoped, tag = 'input window, operand 7, single buffered']
    %13 = vsyncpa [#allocation4], 0
    %14 = vsyncpa [#allocation6], 0
    // Predicated region
    $region2: #{transformer_forward.40} parent=1 // pred_check
      _
    $region3: #{transformer_forward.40} parent=1 // pred_check_branch
      %16 = sbr.rel (0) target = $region5
    $region4: #{transformer_forward.40} parent=1 // pred_region
      _
    $region5: #{transformer_forward.40} parent=1 // pred_fallthru
      _
    // Predicated region
    $region6: #{transformer_forward.40} parent=1 // pred_check
      _
    $region7: #{transformer_forward.40} parent=1 // pred_check_branch
      %18 = sbr.rel (0) target = $region9
    $region8: #{transformer_forward.40} parent=1 // pred_region
      _
    $region9: #{transformer_forward.40} parent=1 // pred_fallthru
      _
    // Predicated region
    $region10: #{transformer_forward.40} parent=1 // pred_check
      _
    $region11: #{transformer_forward.40} parent=1 // pred_check_branch
      %20 = sbr.rel (0) target = $region13
    $region12: #{transformer_forward.40} parent=1 // pred_region
      _
    $region13: #{transformer_forward.40} parent=1 // pred_fallthru
      _
    // Predicated region
    $region14: #{transformer_forward.40} parent=1 // pred_check
      _
    $region15: #{transformer_forward.40} parent=1 // pred_check_branch
      %22 = sbr.rel (0) target = $region17
    $region16: #{transformer_forward.40} parent=1 // pred_region
      _
    $region17: #{transformer_forward.40} parent=1 // pred_fallthru
      _
    // Predicated region
    $region18: #{transformer_forward.40} parent=1 // pred_check
      _
    $region19: #{transformer_forward.40} parent=1 // pred_check_branch
      %24 = sbr.rel (0) target = $region21
    $region20: #{transformer_forward.40} parent=1 // pred_region
      %26 = vsyncadd [#allocation4], 0
      %s28 = sshll.u32 %s4, 4
      %s29 = int_to_ptr.hbm [resolvable:$true] %s28
      %s30 = sshll.u32 [#allocation3], 4
      %s31 = int_to_ptr.vmem [resolvable:$true] %s30
      %33 = dma.hbm_to_vmem [thread:$0]  %s29, 16, %s31, [#allocation4]
    $region21: #{transformer_forward.40} parent=1 // pred_fallthru
      _
    // Predicated region
    $region22: #{transformer_forward.40} parent=1 // pred_check
      _
    $region23: #{transformer_forward.40} parent=1 // pred_check_branch
      %35 = sbr.rel (0) target = $region25
    $region24: #{transformer_forward.40} parent=1 // pred_region
      _
    $region25: #{transformer_forward.40} parent=1 // pred_fallthru
      _
    // Predicated region
    $region26: #{transformer_forward.40} parent=1 // pred_check
      _
    $region27: #{transformer_forward.40} parent=1 // pred_check_branch
      %37 = sbr.rel (0) target = $region29
    $region28: #{transformer_forward.40} parent=1 // pred_region
      %39 = vsyncadd [#allocation6], 0
      %s41 = sshll.u32 %s6, 4
      %s42 = int_to_ptr.hbm [resolvable:$true] %s41
      %s43 = sshll.u32 [#allocation5], 4
      %s44 = int_to_ptr.vmem [resolvable:$true] %s43
      %46 = dma.hbm_to_vmem [thread:$0]  %s42, 16, %s44, [#allocation6]
    $region29: #{transformer_forward.40} parent=1 // pred_fallthru
      _
    // Predicated region
    $region30: #{transformer_forward.40} parent=1 // pred_check
      _
    $region31: #{transformer_forward.40} parent=1 // pred_check_branch
      %48 = sbr.rel (0) target = $region33
    $region32: #{transformer_forward.40} parent=1 // pred_region
      %50 = vsyncadd [#allocation6], 0
      %s52 = sshll.u32 %s7, 4
      %s53 = int_to_ptr.hbm [resolvable:$true] %s52
      %s54 = sshll.u32 [#allocation7], 4
      %s55 = int_to_ptr.vmem [resolvable:$true] %s54
      %57 = dma.hbm_to_vmem [thread:$0]  %s53, 16, %s55, [#allocation6]
    $region33: #{transformer_forward.40} parent=1 // pred_fallthru
      _
    // Predicated region
    $region34: #{transformer_forward.40} parent=1 // pred_check
      _
    $region35: #{transformer_forward.40} parent=1 // pred_check_branch
      %59 = sbr.rel (0) target = $region37
    $region36: #{transformer_forward.40} parent=1 // pred_region
      %61 = dma.done [#allocation4], 16
    $region37: #{transformer_forward.40} parent=1 // pred_fallthru
      _
    // Predicated region
    $region38: #{transformer_forward.40} parent=1 // pred_check
      _
    $region39: #{transformer_forward.40} parent=1 // pred_check_branch
      %63 = sbr.rel (0) target = $region41
    $region40: #{transformer_forward.40} parent=1 // pred_region
      %65 = dma.done [#allocation6], 16
    $region41: #{transformer_forward.40} parent=1 // pred_fallthru
      _
    // Predicated region
    $region42: #{transformer_forward.40} parent=1 // pred_check
      _
    $region43: #{transformer_forward.40} parent=1 // pred_check_branch
      %67 = sbr.rel (0) target = $region45
    $region44: #{transformer_forward.40} parent=1 // pred_region
      %69 = dma.done [#allocation6], 16
    $region45: #{transformer_forward.40} parent=1 // pred_fallthru
      _
    %p71 = scmp.eq.s32.totalorder 0, 0
    // Predicated region
    $region46: #{transformer_forward.40} parent=1 // pred_check
      %p72 = pneg %p71
    $region47: #{transformer_forward.40} parent=1 // pred_check_branch
      %74 = sbr.rel (%p72) target = $region49
    $region48: #{transformer_forward.40} parent=1 // pred_region
      %vm75 = vcmask 261120
      %76 = vst.msk [vmem:[#allocation2] sm:$0xff] %vm75, 0.0
      %77 = vst.msk [vmem:[#allocation2 + $0x8] sm:$0xff] %vm75, 0.0
    $region49: #{transformer_forward.40} parent=1 // pred_fallthru
      _
    %v78 = vld [vmem:[%s0] sm:$0xf]
    %v79 = vld [vmem:[%s0 + $0x4] sm:$0xf]
    %v80 = vld [vmem:[%s1] sm:$0xf]
    %v81 = vld [vmem:[%s1 + $0x4] sm:$0xf]
    %v82 = vld [vmem:[%s1 + $0x8] sm:$0xf]
    %v83 = vld [vmem:[%s1 + $0xc] sm:$0xf]
    %v84 = vld [vmem:[%s2] sm:$0x1]
    %v86 = vperm.slane %v84, 0
    %v90 = vunpack.c.l.b16 %v78
    %v91 = vunpack.c.l.b16 %v79
    %v92 = vpack.c.b16 %v91, %v90
    %v97 = vunpack.c.l.b16 %v80
    %v98 = vunpack.c.l.b16 %v81
    %v99 = vunpack.c.l.b16 %v82
    %v100 = vunpack.c.l.b16 %v83
    %v101 = vpack.c.b16 %v98, %v97
    %v102 = vpack.c.b16 %v100, %v99
    %vm105 = vcmask 261120
    %v107 = vsel %vm105, %v92, 0
    %109 = vmatpush.bf16.msra.mxu0 0
    %110 = vmatpush.bf16.msra.mxu0 0
    %111 = vmatpush.bf16.msra.mxu0 0
    %112 = vmatpush.bf16.msra.mxu0 0
    %113 = vmatpush.bf16.msra.mxu0 0
    %114 = vmatpush.bf16.msra.mxu0 0
    %115 = vmatpush.bf16.msra.mxu0 %v102
    %116 = vmatpush.bf16.msra.mxu0 %v101
    %117 = vmatmul.bf16.gmra.mxu0 %v107
    %v118 = vpop.f32.mrf.mxu0
    %v119 = vadd.f32 %v86, %v118
    %v120 = vpop.f32.mrf.mxu0
    %v121 = vadd.f32 %v86, %v120
    %122 = vdwg.mxu0
    %v123 = vmax.f32 %v119, 0.0
    %v124 = vmax.f32 %v121, 0.0
    %v125 = vpack.c.bf16 %v124, %v123
    %v126 = vld [vmem:[#allocation2] sm:$0xff]
    %v127 = vld [vmem:[#allocation2 + $0x8] sm:$0xff]
    %v128 = vld [vmem:[%s3] sm:$0xf]
    %v129 = vld [vmem:[%s3 + $0x4] sm:$0xf]
    %v130 = vld [vmem:[%s3 + $0x8] sm:$0xf]
    %v131 = vld [vmem:[%s3 + $0xc] sm:$0xf]
    %v132 = vld [vmem:[%s3 + $0x10] sm:$0xf]
    %v133 = vld [vmem:[%s3 + $0x14] sm:$0xf]
    %v134 = vld [vmem:[%s3 + $0x18] sm:$0xf]
    %v135 = vld [vmem:[%s3 + $0x1c] sm:$0xf]
    %v144 = vunpack.c.l.b16 %v128
    %v145 = vunpack.c.l.b16 %v129
    %v146 = vunpack.c.l.b16 %v130
    %v147 = vunpack.c.l.b16 %v131
    %v148 = vunpack.c.l.b16 %v132
    %v149 = vunpack.c.l.b16 %v133
    %v150 = vunpack.c.l.b16 %v134
    %v151 = vunpack.c.l.b16 %v135
    %v152 = vpack.c.b16 %v145, %v144
    %v153 = vpack.c.b16 %v147, %v146
    %v154 = vpack.c.b16 %v149, %v148
    %v155 = vpack.c.b16 %v151, %v150
    %vm160 = vcmask 523264
    %v162 = vsel %vm160, %v125, 0
    %164 = vmatpush.bf16.msra.mxu0 0
    %165 = vmatpush.bf16.msra.mxu0 0
    %166 = vmatpush.bf16.msra.mxu0 0
    %167 = vmatpush.bf16.msra.mxu0 0
    %168 = vmatpush.bf16.msra.mxu0 %v155
    %169 = vmatpush.bf16.msra.mxu0 %v154
    %170 = vmatpush.bf16.msra.mxu0 %v153
    %171 = vmatpush.bf16.msra.mxu0 %v152
    %172 = vmatmul.bf16.gmra.mxu0 %v162
    %v173 = vpop.f32.mrf.mxu0
    %v174 = vadd.f32 0.0, %v173
    %v175 = vpop.f32.mrf.mxu0
    %v176 = vadd.f32 0.0, %v175
    %177 = vdwg.mxu0
    %v178 = vadd.f32 %v126, %v174
    %v179 = vadd.f32 %v127, %v176
    %180 = vst.msk [vmem:[#allocation2] sm:$0xff] %vm105, %v178
    %181 = vst.msk [vmem:[#allocation2 + $0x8] sm:$0xff] %vm105, %v179
    // Predicated region
    $region50: #{transformer_forward.40} parent=1 // pred_check
      %p182 = pneg %p71
    $region51: #{transformer_forward.40} parent=1 // pred_check_branch
      %184 = sbr.rel (%p182) target = $region53
    $region52: #{transformer_forward.40} parent=1 // pred_region
      %v185 = vld [vmem:[#allocation2] sm:$0xff]
      %v186 = vld [vmem:[#allocation2 + $0x8] sm:$0xff]
      %v187 = vld [vmem:[#allocation3] sm:$0x1]
      %v189 = vperm.slane %v187, 0
      %v191 = vadd.f32 %v185, %v189
      %v192 = vadd.f32 %v186, %v189
      %v193 = vld [vmem:[%s5] sm:$0xf]
      %v194 = vld [vmem:[%s5 + $0x4] sm:$0xf]
      %v195 = vunpack.c.l.bf16 %v193
      %v196 = vunpack.c.l.bf16 %v194
      %v197 = vadd.f32 %v191, %v195
      %v198 = vadd.f32 %v192, %v196
      %v199 = vsel %vm105, %v197, 0.0
      %200 = vadd.xlane.f32.xlu0 %v199
      %v201 = vpop.xlane.xlu0 %200
      %v202 = vsel %vm105, %v198, 0.0
      %203 = vadd.xlane.f32.xlu0 %v202
      %v204 = vpop.xlane.xlu0 %203
      %v205 = vrcp.pop 32.0
      %v206 = vmul.f32 32.0, %v205
      %v207 = vsub.f32 1.0, %v206
      %v208 = vmul.f32 %v205, %v207
      %v209 = vadd.f32 %v205, %v208
      %vm210 = vweird.f32 %v205
      %v211 = vsel %vm210, %v205, %v209
      %v212 = vmul.f32 %v201, %v211
      %v213 = vmul.f32 %v204, %v211
      %v214 = vsub.f32 %v197, %v212
      %v215 = vsub.f32 %v198, %v213
      %v216 = vmul.f32 %v214, %v214
      %v217 = vmul.f32 %v215, %v215
      %v218 = vsel %vm105, %v216, 0.0
      %219 = vadd.xlane.f32.xlu0 %v218
      %v220 = vpop.xlane.xlu0 %219
      %v221 = vsel %vm105, %v217, 0.0
      %222 = vadd.xlane.f32.xlu0 %v221
      %v223 = vpop.xlane.xlu0 %222
      %v224 = vmul.f32 %v220, %v211
      %v225 = vmul.f32 %v223, %v211
      %v226 = vadd.f32 %v224, 1e-12
      %v227 = vadd.f32 %v225, 1e-12
      %v228 = vrsqrt.pop %v226
      %v229 = vmul.f32 %v228, %v226
      %v230 = vmul.f32 %v229, %v228
      %v231 = vmul.f32 0.5, %v230
      %v232 = vsub.f32 1.5, %v231
      %v233 = vmul.f32 %v228, %v232
      %vm234 = vweird.f32 %v226
      %vm235 = vweird.f32 %v228
      %vm236 = vmor %vm234, %vm235
      %v237 = vsel %vm236, %v228, %v233
      %v238 = vrsqrt.pop %v227
      %v239 = vmul.f32 %v238, %v227
      %v240 = vmul.f32 %v239, %v238
      %v241 = vmul.f32 0.5, %v240
      %v242 = vsub.f32 1.5, %v241
      %v243 = vmul.f32 %v238, %v242
      %vm244 = vweird.f32 %v227
      %vm245 = vweird.f32 %v238
      %vm246 = vmor %vm244, %vm245
      %v247 = vsel %vm246, %v238, %v243
      %v248 = vmul.f32 %v214, %v237
      %v249 = vmul.f32 %v215, %v247
      %v250 = vld [vmem:[#allocation5] sm:$0x1]
      %v252 = vperm.slane %v250, 0
      %v254 = vmul.f32 %v252, %v248
      %v255 = vmul.f32 %v252, %v249
      %v256 = vld [vmem:[#allocation7] sm:$0x1]
      %v258 = vperm.slane %v256, 0
      %v260 = vadd.f32 %v254, %v258
      %v261 = vadd.f32 %v255, %v258
      %v262 = vpack.c.bf16 %v260, %v260
      %v263 = vpack.c.bf16 %v261, %v261
      %vm264 = vcmask 257024
      %265 = vst.msk [vmem:[%s8] sm:$0xf] %vm264, %v262
      %266 = vst.msk [vmem:[%s8 + $0x4] sm:$0xf] %vm264, %v263
    $region53: #{transformer_forward.40} parent=1 // pred_fallthru
      _
    // Predicated region
    $region54: #{transformer_forward.40} parent=1 // pred_check
      _
    $region55: #{transformer_forward.40} parent=1 // pred_check_branch
      %268 = sbr.rel (0) target = $region57
    $region56: #{transformer_forward.40} parent=1 // pred_region
      _
    $region57: #{transformer_forward.40} parent=1 // pred_fallthru
      _
    // Predicated region
    $region58: #{transformer_forward.40} parent=1 // pred_check
      _
    $region59: #{transformer_forward.40} parent=1 // pred_check_branch
      %270 = sbr.rel (0) target = $region61
    $region60: #{transformer_forward.40} parent=1 // pred_region
      _
    $region61: #{transformer_forward.40} parent=1 // pred_fallthru
      _
    %271 = vsyncpa [#allocation4], 1
    %272 = vsyncpa [#allocation6], 1

// kernel: transformer_forward.38
$region0: #{transformer_forward.38}
  #allocation0 [shape = 'u32[]', space=smem, size = 0x4, offset = 0x4, fixed_abs, tag = 'smem constant byte address 0x4 - core index']
  #allocation1 [shape = 'u32[72,128]{1,0:T(1,128)}', space=vmem, size = 0x9000, scoped, tag = 'internal scratch']
  #allocation2 [shape = 'f32[4,8,1]{2,1,0:T(8,128)}', space=vmem, size = 0x4000, scoped, tag = 'scratch operand']
  #allocation3 [shape = 'f32[4,8,1]{2,1,0:T(8,128)}', space=vmem, size = 0x4000, scoped, tag = 'scratch operand']
  #allocation4 [shape = 'f32[8,32]{1,0:T(8,128)}', space=vmem, size = 0x1000, scoped, tag = 'scratch operand']
  %s0 = inlined_call_operand.vmem [shape: bf16[2,8,32], index: 0, kind: input, shape index: {}]
  %s1 = inlined_call_operand.vmem [shape: bf16[2,8,64], index: 1, kind: input, shape index: {}]
  %s2 = inlined_call_operand.vmem [shape: s32[2,1,8], index: 2, kind: input, shape index: {}]
  %s3 = inlined_call_operand.vmem [shape: bf16[2,8,32], index: 3, kind: output, shape index: {}]
  %s4 = sld [smem:[#allocation0]]
  $region53: #{transformer_forward.38} parent=0
    _
  %s6 = ssub.s32 1, %s4
  %s7 = scalar_select 0, %s6, %s4
  loop: start=0, step=1, limit=4
  $region2: #{transformer_forward.38} parent=0 // loop_pre_header
    _
  $region3: #{transformer_forward.38} parent=0 // loop_header
    %s9 = sphi 0, %s13
    %p10 = scmp.ge.s32.totalorder %s9, 4
    %s16 = sphi 0, %s28
    %s17 = sphi 0, %s24
    %s18 = sphi 0, %s16
    %s19 = sphi 0, %s17
    %s20 = sphi 0, %s18
    %s21 = sphi 0, %s19
    %s31 = sphi 0, %s33
    %s34 = sphi 0, %s31
    %s35 = sphi 0, %s34
    %s51 = sphi 0, %s35
    %s59 = sphi 0, %s61
    %s62 = sphi 0, %s59
    %s63 = sphi 0, %s62
    %s79 = sphi 0, %s63
    %s87 = sphi 0, %s89
    %s90 = sphi 0, %s87
    %s91 = sphi 0, %s90
    %s107 = sphi 0, %s91
    %s113 = sphi 0, %s115
    %s116 = sphi 0, %s113
    %s117 = sphi 0, %s116
    %s133 = sphi 0, %s117
  $region4: #{transformer_forward.38} parent=0 // loop_header_branch
    %12 = sbr.rel (%p10) target = $region8
  $region5: #{transformer_forward.38} parent=0 // loop_body
    %s14 = ssub.s32 %s9, 1
    %s15 = ssub.s32 %s9, 2
    %s22 = sadd.s32 1, %s17
    %p23 = scmp.ge.s32.totalorder %s22, 1
    %s24 = scalar_select %p23, 0, %s22
    %s25 = sadd.s32 1, %s16
    %s26 = scalar_select %p23, %s25, %s16
    %p27 = scmp.ge.s32.totalorder %s26, 2
    %s28 = scalar_select %p27, 0, %s26
    %s29 = ssub.s32 %s16, %s28
    %p30 = scmp.eq.s32.totalorder %s29, 0
    %s32 = sadd.s32 %s31, 1
    %s33 = scalar_select %p30, %s31, %s32
    %p36 = pneg %p30
    %p37 = scmp.eq.s32.totalorder %s9, 1
    %p38 = por %p36, %p37
    %p39 = scmp.ne.s32.totalorder %s31, %s34
    %p40 = scmp.eq.s32.totalorder %s9, 0
    %p41 = por %p39, %p40
    %p42 = scmp.ne.s32.totalorder %s31, %s34
    %p43 = scmp.eq.s32.totalorder %s14, 1
    %p44 = por %p42, %p43
    %p45 = scmp.ne.s32.totalorder %s34, %s35
    %p46 = scmp.eq.s32.totalorder %s14, 0
    %p47 = por %p45, %p46
    %p48 = scmp.ne.s32.totalorder %s34, %s35
    %p49 = scmp.eq.s32.totalorder %s15, 1
    %p50 = por %p48, %p49
    %p52 = scmp.ne.s32.totalorder %s35, %s51
    %p53 = scmp.eq.s32.totalorder %s15, 0
    %p54 = por %p52, %p53
    %s55 = ssub.s32 %s16, %s28
    %s56 = ssub.s32 %s17, %s24
    %s57 = sor.u32 %s55, %s56
    %p58 = scmp.eq.s32.totalorder %s57, 0
    %s60 = sadd.s32 %s59, 1
    %s61 = scalar_select %p58, %s59, %s60
    %p64 = pneg %p58
    %p65 = scmp.eq.s32.totalorder %s9, 1
    %p66 = por %p64, %p65
    %p67 = scmp.ne.s32.totalorder %s59, %s62
    %p68 = scmp.eq.s32.totalorder %s9, 0
    %p69 = por %p67, %p68
    %p70 = scmp.ne.s32.totalorder %s59, %s62
    %p71 = scmp.eq.s32.totalorder %s14, 1
    %p72 = por %p70, %p71
    %p73 = scmp.ne.s32.totalorder %s62, %s63
    %p74 = scmp.eq.s32.totalorder %s14, 0
    %p75 = por %p73, %p74
    %p76 = scmp.ne.s32.totalorder %s62, %s63
    %p77 = scmp.eq.s32.totalorder %s15, 1
    %p78 = por %p76, %p77
    %p80 = scmp.ne.s32.totalorder %s63, %s79
    %p81 = scmp.eq.s32.totalorder %s15, 0
    %p82 = por %p80, %p81
    %s83 = ssub.s32 %s16, %s28
    %s84 = ssub.s32 %s17, %s24
    %s85 = sor.u32 %s83, %s84
    %p86 = scmp.eq.s32.totalorder %s85, 0
    %s88 = sadd.s32 %s87, 1
    %s89 = scalar_select %p86, %s87, %s88
    %p92 = pneg %p86
    %p93 = scmp.eq.s32.totalorder %s9, 1
    %p94 = por %p92, %p93
    %p95 = scmp.ne.s32.totalorder %s87, %s90
    %p96 = scmp.eq.s32.totalorder %s9, 0
    %p97 = por %p95, %p96
    %p98 = scmp.ne.s32.totalorder %s87, %s90
    %p99 = scmp.eq.s32.totalorder %s14, 1
    %p100 = por %p98, %p99
    %p101 = scmp.ne.s32.totalorder %s90, %s91
    %p102 = scmp.eq.s32.totalorder %s14, 0
    %p103 = por %p101, %p102
    %p104 = scmp.ne.s32.totalorder %s90, %s91
    %p105 = scmp.eq.s32.totalorder %s15, 1
    %p106 = por %p104, %p105
    %p108 = scmp.ne.s32.totalorder %s91, %s107
    %p109 = scmp.eq.s32.totalorder %s15, 0
    %p110 = por %p108, %p109
    %s111 = ssub.s32 %s16, %s28
    %p112 = scmp.eq.s32.totalorder %s111, 0
    %s114 = sadd.s32 %s113, 1
    %s115 = scalar_select %p112, %s113, %s114
    %p118 = pneg %p112
    %p119 = scmp.eq.s32.totalorder %s9, 1
    %p120 = por %p118, %p119
    %p121 = scmp.ne.s32.totalorder %s113, %s116
    %p122 = scmp.eq.s32.totalorder %s9, 0
    %p123 = por %p121, %p122
    %p124 = scmp.ne.s32.totalorder %s113, %s116
    %p125 = scmp.eq.s32.totalorder %s14, 1
    %p126 = por %p124, %p125
    %p127 = scmp.ne.s32.totalorder %s116, %s117
    %p128 = scmp.eq.s32.totalorder %s14, 0
    %p129 = por %p127, %p128
    %p130 = scmp.ne.s32.totalorder %s116, %s117
    %p131 = scmp.eq.s32.totalorder %s15, 1
    %p132 = por %p130, %p131
    %p134 = scmp.ne.s32.totalorder %s117, %s133
    %p135 = scmp.eq.s32.totalorder %s15, 0
    %p136 = por %p134, %p135
    %p137 = scmp.le.s32.totalorder 1, %s9
    %p138 = scmp.lt.s32.totalorder %s9, 3
    %p139 = pnand %p137, %p138
    %p140 = pneg %p139
    // Predicated region
    $region9: #{transformer_forward.38} parent=5 // pred_check
      _
    $region10: #{transformer_forward.38} parent=5 // pred_check_branch
      %142 = sbr.rel (%p139) target = $region12
    $region11: #{transformer_forward.38} parent=5 // pred_region
      %s143 = ssub.s32 %s9, 1
    $region12: #{transformer_forward.38} parent=5 // pred_fallthru
      _
    %p144 = scmp.lt.s32.totalorder %s9, 2
    // Predicated region
    $region13: #{transformer_forward.38} parent=5 // pred_check
      %p145 = pneg %p144
    $region14: #{transformer_forward.38} parent=5 // pred_check_branch
      %147 = sbr.rel (%p145) target = $region16
    $region15: #{transformer_forward.38} parent=5 // pred_region
      // Predicated region
      $region17: #{transformer_forward.38} parent=15 // pred_check
        %p148 = pneg %p41
      $region18: #{transformer_forward.38} parent=15 // pred_check_branch
        %150 = sbr.rel (%p148) target = $region20
      $region19: #{transformer_forward.38} parent=15 // pred_region
        %p151 = scmp.lt.s32.totalorder %s16, 1
        %s152 = scalar_select %p151, %s16, 1
        %s153 = smul.addr %s152, 4
        %s154 = scalar_lea.vmem %s0, %s153
      $region20: #{transformer_forward.38} parent=15 // pred_fallthru
        _
      // Predicated region
      $region21: #{transformer_forward.38} parent=15 // pred_check
        %p155 = pneg %p69
      $region22: #{transformer_forward.38} parent=15 // pred_check_branch
        %157 = sbr.rel (%p155) target = $region24
      $region23: #{transformer_forward.38} parent=15 // pred_region
        %p158 = scmp.lt.s32.totalorder %s16, 1
        %s159 = scalar_select %p158, %s16, 1
        %p160 = scmp.lt.s32.totalorder %s17, 0
        %s161 = scalar_select %p160, %s17, 0
        %s162 = sadd.s32 %s161, %s159
        %s163 = smul.addr %s162, 4
        %s164 = scalar_lea.vmem %s1, %s163
      $region24: #{transformer_forward.38} parent=15 // pred_fallthru
        _
      // Predicated region
      $region25: #{transformer_forward.38} parent=15 // pred_check
        %p165 = pneg %p97
      $region26: #{transformer_forward.38} parent=15 // pred_check_branch
        %167 = sbr.rel (%p165) target = $region28
      $region27: #{transformer_forward.38} parent=15 // pred_region
        %p168 = scmp.lt.s32.totalorder %s16, 1
        %s169 = scalar_select %p168, %s16, 1
        %p170 = scmp.lt.s32.totalorder %s17, 0
        %s171 = scalar_select %p170, %s17, 0
        %s172 = sadd.s32 %s171, %s169
        %s173 = scalar_lea.vmem %s2, %s172
      $region28: #{transformer_forward.38} parent=15 // pred_fallthru
        _
    $region16: #{transformer_forward.38} parent=5 // pred_fallthru
      _
    %p174 = scmp.le.s32.totalorder 1, %s9
    %p175 = scmp.lt.s32.totalorder %s9, 3
    %p176 = pnand %p174, %p175
    %p177 = pneg %p176
    // Predicated region
    $region29: #{transformer_forward.38} parent=5 // pred_check
      _
    $region30: #{transformer_forward.38} parent=5 // pred_check_branch
      %179 = sbr.rel (%p176) target = $region32
    $region31: #{transformer_forward.38} parent=5 // pred_region
      %s180 = ssub.s32 %s9, 1
      %p181 = scmp.lt.s32.totalorder %s18, 1
      %s182 = scalar_select %p181, %s18, 1
      %s183 = smul.addr %s182, 4
      %s184 = scalar_lea.vmem %s0, %s183
      %p185 = pneg %p47
      %p186 = pneg %p44
      %p187 = scmp.lt.s32.totalorder %s18, 1
      %s188 = scalar_select %p187, %s18, 1
      %p189 = scmp.lt.s32.totalorder %s19, 0
      %s190 = scalar_select %p189, %s19, 0
      %s191 = sadd.s32 %s190, %s188
      %s192 = smul.addr %s191, 4
      %s193 = scalar_lea.vmem %s1, %s192
      %p194 = pneg %p75
      %p195 = pneg %p72
      %p196 = scmp.lt.s32.totalorder %s18, 1
      %s197 = scalar_select %p196, %s18, 1
      %p198 = scmp.lt.s32.totalorder %s19, 0
      %s199 = scalar_select %p198, %s19, 0
      %s200 = sadd.s32 %s199, %s197
      %s201 = scalar_lea.vmem %s2, %s200
      %p202 = pneg %p103
      %p203 = pneg %p100
      %p204 = pneg %p129
      %p205 = pneg %p126
      %p206 = scmp.lt.s32.totalorder %s18, 1
      %s207 = scalar_select %p206, %s18, 1
      %s208 = smul.addr %s207, 4
      %s209 = scalar_lea.vmem %s3, %s208
      %p210 = scmp.lt.s32.totalorder %s18, 1
      %s211 = scalar_select %p210, %s18, 1
      %s212 = smul.addr %s211, 4
      %s213 = scalar_lea.vmem %s0, %s212
      %p214 = scmp.lt.s32.totalorder %s18, 1
      %s215 = scalar_select %p214, %s18, 1
      %p216 = scmp.lt.s32.totalorder %s19, 0
      %s217 = scalar_select %p216, %s19, 0
      %s218 = sadd.s32 %s217, %s215
      %s219 = smul.addr %s218, 4
      %s220 = scalar_lea.vmem %s1, %s219
      %p221 = scmp.lt.s32.totalorder %s18, 1
      %s222 = scalar_select %p221, %s18, 1
      %p223 = scmp.lt.s32.totalorder %s19, 0
      %s224 = scalar_select %p223, %s19, 0
      %s225 = sadd.s32 %s224, %s222
      %s226 = scalar_lea.vmem %s2, %s225
      %p227 = scmp.lt.s32.totalorder %s18, 1
      %s228 = scalar_select %p227, %s18, 1
      %s229 = smul.addr %s228, 4
      %s230 = scalar_lea.vmem %s3, %s229
      %p232 = scmp.eq.s32.totalorder %s19, 0
      // Predicated region
      $region33: #{transformer_forward.38} parent=31 // pred_check
        %p233 = pneg %p232
      $region34: #{transformer_forward.38} parent=31 // pred_check_branch
        %235 = sbr.rel (%p233) target = $region36
      $region35: #{transformer_forward.38} parent=31 // pred_region
        %vm236 = vcmask 7168
        %237 = vst.msk [vmem:[#allocation2] sm:$0xff] %vm236, -1e+30
        %238 = vst.msk [vmem:[#allocation2 + $0x8] sm:$0xff] %vm236, -1e+30
        %239 = vst.msk [vmem:[#allocation2 + $0x10] sm:$0xff] %vm236, -1e+30
        %240 = vst.msk [vmem:[#allocation2 + $0x18] sm:$0xff] %vm236, -1e+30
        %241 = vst.msk [vmem:[#allocation3] sm:$0xff] %vm236, 0.0
        %242 = vst.msk [vmem:[#allocation3 + $0x8] sm:$0xff] %vm236, 0.0
        %243 = vst.msk [vmem:[#allocation3 + $0x10] sm:$0xff] %vm236, 0.0
        %244 = vst.msk [vmem:[#allocation3 + $0x18] sm:$0xff] %vm236, 0.0
        %vm245 = vcmask 261120
        %246 = vst.msk [vmem:[#allocation4] sm:$0xff] %vm245, 0.0
      $region36: #{transformer_forward.38} parent=31 // pred_fallthru
        _
      %v247 = vld [vmem:[%s213] sm:$0xf]
      %v248 = vld [vmem:[%s220] sm:$0xf]
      %v249 = vld [vmem:[%s226] sm:$0x1]
      %vm250 = vcmask 64512
      %v252 = vsel %vm250, %v247, 0
      %v255 = vsel %vm250, %v248, 0
      %257 = vmatpush.bf16.xpose.msra.mxu0 0
      %258 = vmatpush.bf16.xpose.msra.mxu0 0
      %259 = vmatpush.bf16.xpose.msra.mxu0 0
      %260 = vmatpush.bf16.xpose.msra.mxu0 0
      %261 = vmatpush.bf16.xpose.msra.mxu0 0
      %262 = vmatpush.bf16.xpose.msra.mxu0 0
      %263 = vmatpush.bf16.xpose.msra.mxu0 0
      %264 = vmatpush.bf16.xpose.msra.mxu0 %v255
      %265 = vmatmul.bf16.gmra.mxu0 %v252
      %v266 = vpop.f32.mrf.mxu0
      %v267 = vadd.f32 0.0, %v266
      %v268 = vpop.f32.mrf.mxu0
      %269 = vdwg.mxu0
      %v270 = vmul.f32 %v267, 0.35355338
      %vm271 = vcmp.eq.s32.totalorder %v249, 0
      %v272 = vsel %vm271, 1, 0
      %v273 = vperm.slane %v272, 0
      %vm274 = vcmp.eq.s32.totalorder %v273, 1
      %v275 = vsel %vm274, -10000.0, %v270
      %v276 = vld [vmem:[#allocation2] sm:$0xff]
      %v277 = vsel %vm250, %v275, -inf
      %278 = vmax.xlane.f32.xlu0 %v277
      %v279 = vpop.xlane.xlu0 %278
      %v280 = vmax.f32 %v276, %v279
      %v281 = vsub.f32 %v276, %v280
      %v282 = vmul.f32 %v281, 1.442695
      %v283 = vpow.pop %v282
      %285 = vset.pattern.permute.xlu0 0
      %286 = vperm.xlu0 %285, %v280
      %v287 = vpop.permute.xlu0 %286
      %v289 = vsub.f32 %v275, %v287
      %v290 = vmul.f32 %v289, 1.442695
      %v291 = vpow.pop %v290
      %v292 = vld [vmem:[#allocation3] sm:$0xff]
      %v293 = vmul.f32 %v283, %v292
      %v294 = vsel %vm250, %v291, 0.0
      %295 = vadd.xlane.f32.xlu0 %v294
      %v296 = vpop.xlane.xlu0 %295
      %v297 = vadd.f32 %v293, %v296
      %vm298 = vcmask 7168
      %299 = vst.msk [vmem:[#allocation3] sm:$0xff] %vm298, %v297
      %v300 = vld [vmem:[#allocation4] sm:$0xff]
      %302 = vset.pattern.permute.xlu0 0
      %303 = vperm.xlu0 %302, %v283
      %v304 = vpop.permute.xlu0 %303
      %v306 = vmul.f32 %v304, %v300
      %v307 = vpack.c.bf16 %v291, %v291
      %v309 = vunpack.c.l.b16 %v248
      %v310 = vpack.c.b16 %v309, %v309
      %311 = vrot.lane.b32.xlu0 %v310, 96
      %v312 = vpop.permute.xlu0 %311
      %v314 = vsel %vm250, %v307, 0
      %vm316 = vcmask 1043456
      %v318 = vsel %vm316, %v312, 0
      %320 = vmatpush.bf16.msra.mxu0 0
      %321 = vmatpush.bf16.msra.mxu0 0
      %322 = vmatpush.bf16.msra.mxu0 0
      %323 = vmatpush.bf16.msra.mxu0 0
      %324 = vmatpush.bf16.msra.mxu0 0
      %325 = vmatpush.bf16.msra.mxu0 0
      %326 = vmatpush.bf16.msra.mxu0 0
      %327 = vmatpush.bf16.msra.mxu0 %v318
      %328 = vmatmul.bf16.gmra.mxu0 %v314
      %v329 = vpop.f32.mrf.mxu0
      %v330 = vadd.f32 0.0, %v329
      %v331 = vpop.f32.mrf.mxu0
      %332 = vdwg.mxu0
      %v333 = vadd.f32 %v306, %v330
      %334 = vst.msk [vmem:[#allocation4] sm:$0xff] %vm250, %v333
      %335 = vst.msk [vmem:[#allocation2] sm:$0xff] %vm298, %v280
      %v337 = vunpack.c.l.b16 %v247
      %v338 = vpack.c.b16 %v337, %v337
      %339 = vrot.lane.b32.xlu0 %v338, 120
      %v340 = vpop.permute.xlu0 %339
      %341 = vrot.lane.b32.xlu0 %v310, 120
      %v342 = vpop.permute.xlu0 %341
      %v344 = vsel %vm250, %v340, 0
      %v347 = vsel %vm250, %v342, 0
      %349 = vmatpush.bf16.xpose.msra.mxu0 0
      %350 = vmatpush.bf16.xpose.msra.mxu0 0
      %351 = vmatpush.bf16.xpose.msra.mxu0 0
      %352 = vmatpush.bf16.xpose.msra.mxu0 0
      %353 = vmatpush.bf16.xpose.msra.mxu0 0
      %354 = vmatpush.bf16.xpose.msra.mxu0 0
      %355 = vmatpush.bf16.xpose.msra.mxu0 0
      %356 = vmatpush.bf16.xpose.msra.mxu0 %v347
      %357 = vmatmul.bf16.gmra.mxu0 %v344
      %v358 = vpop.f32.mrf.mxu0
      %v359 = vadd.f32 0.0, %v358
      %v360 = vpop.f32.mrf.mxu0
      %361 = vdwg.mxu0
      %v362 = vmul.f32 %v359, 0.35355338
      %v363 = vsel %vm274, -10000.0, %v362
      %s364 = scalar_lea.vmem [#allocation2], 8
      %v365 = vld [vmem:[%s364] sm:$0xff]
      %v366 = vsel %vm250, %v363, -inf
      %367 = vmax.xlane.f32.xlu0 %v366
      %v368 = vpop.xlane.xlu0 %367
      %v369 = vmax.f32 %v365, %v368
      %v370 = vsub.f32 %v365, %v369
      %v371 = vmul.f32 %v370, 1.442695
      %v372 = vpow.pop %v371
      %374 = vset.pattern.permute.xlu0 0
      %375 = vperm.xlu0 %374, %v369
      %v376 = vpop.permute.xlu0 %375
      %v378 = vsub.f32 %v363, %v376
      %v379 = vmul.f32 %v378, 1.442695
      %v380 = vpow.pop %v379
      %s381 = scalar_lea.vmem [#allocation3], 8
      %v382 = vld [vmem:[%s381] sm:$0xff]
      %v383 = vmul.f32 %v372, %v382
      %v384 = vsel %vm250, %v380, 0.0
      %385 = vadd.xlane.f32.xlu0 %v384
      %v386 = vpop.xlane.xlu0 %385
      %v387 = vadd.f32 %v383, %v386
      %388 = vst.msk [vmem:[%s381] sm:$0xff] %vm298, %v387
      %v389 = vld [vmem:[#allocation4] sm:$0xff]
      %391 = vset.pattern.permute.xlu0 0
      %392 = vperm.xlu0 %391, %v372
      %v393 = vpop.permute.xlu0 %392
      %v395 = vmul.f32 %v393, %v389
      %v396 = vpack.c.bf16 %v380, %v380
      %397 = vrot.lane.b32.xlu0 %v310, 88
      %v398 = vpop.permute.xlu0 %397
      %v400 = vsel %vm250, %v396, 0
      %v403 = vsel %vm316, %v398, 0
      %405 = vmatpush.bf16.msra.mxu0 0
      %406 = vmatpush.bf16.msra.mxu0 0
      %407 = vmatpush.bf16.msra.mxu0 0
      %408 = vmatpush.bf16.msra.mxu0 0
      %409 = vmatpush.bf16.msra.mxu0 0
      %410 = vmatpush.bf16.msra.mxu0 0
      %411 = vmatpush.bf16.msra.mxu0 0
      %412 = vmatpush.bf16.msra.mxu0 %v403
      %413 = vmatmul.bf16.gmra.mxu0 %v400
      %v414 = vpop.f32.mrf.mxu0
      %v415 = vadd.f32 0.0, %v414
      %v416 = vpop.f32.mrf.mxu0
      %417 = vdwg.mxu0
      %419 = vrot.lane.b32.xlu0 %v415, 8
      %v420 = vpop.permute.xlu0 %419
      %v422 = vadd.f32 %v395, %v420
      %vm423 = vcmask 130112
      %424 = vst.msk [vmem:[#allocation4] sm:$0xff] %vm423, %v422
      %425 = vst.msk [vmem:[%s364] sm:$0xff] %vm298, %v369
      %426 = vrot.lane.b32.xlu0 %v338, 112
      %v427 = vpop.permute.xlu0 %426
      %428 = vrot.lane.b32.xlu0 %v310, 112
      %v429 = vpop.permute.xlu0 %428
      %v431 = vsel %vm250, %v427, 0
      %v434 = vsel %vm250, %v429, 0
      %436 = vmatpush.bf16.xpose.msra.mxu0 0
      %437 = vmatpush.bf16.xpose.msra.mxu0 0
      %438 = vmatpush.bf16.xpose.msra.mxu0 0
      %439 = vmatpush.bf16.xpose.msra.mxu0 0
      %440 = vmatpush.bf16.xpose.msra.mxu0 0
      %441 = vmatpush.bf16.xpose.msra.mxu0 0
      %442 = vmatpush.bf16.xpose.msra.mxu0 0
      %443 = vmatpush.bf16.xpose.msra.mxu0 %v434
      %444 = vmatmul.bf16.gmra.mxu0 %v431
      %v445 = vpop.f32.mrf.mxu0
      %v446 = vadd.f32 0.0, %v445
      %v447 = vpop.f32.mrf.mxu0
      %448 = vdwg.mxu0
      %v449 = vmul.f32 %v446, 0.35355338
      %v450 = vsel %vm274, -10000.0, %v449
      %s451 = scalar_lea.vmem [#allocation2], 16
      %v452 = vld [vmem:[%s451] sm:$0xff]
      %v453 = vsel %vm250, %v450, -inf
      %454 = vmax.xlane.f32.xlu0 %v453
      %v455 = vpop.xlane.xlu0 %454
      %v456 = vmax.f32 %v452, %v455
      %v457 = vsub.f32 %v452, %v456
      %v458 = vmul.f32 %v457, 1.442695
      %v459 = vpow.pop %v458
      %461 = vset.pattern.permute.xlu0 0
      %462 = vperm.xlu0 %461, %v456
      %v463 = vpop.permute.xlu0 %462
      %v465 = vsub.f32 %v450, %v463
      %v466 = vmul.f32 %v465, 1.442695
      %v467 = vpow.pop %v466
      %s468 = scalar_lea.vmem [#allocation3], 16
      %v469 = vld [vmem:[%s468] sm:$0xff]
      %v470 = vmul.f32 %v459, %v469
      %v471 = vsel %vm250, %v467, 0.0
      %472 = vadd.xlane.f32.xlu0 %v471
      %v473 = vpop.xlane.xlu0 %472
      %v474 = vadd.f32 %v470, %v473
      %475 = vst.msk [vmem:[%s468] sm:$0xff] %vm298, %v474
      %v476 = vld [vmem:[#allocation4] sm:$0xff]
      %478 = vset.pattern.permute.xlu0 0
      %479 = vperm.xlu0 %478, %v459
      %v480 = vpop.permute.xlu0 %479
      %v482 = vmul.f32 %v480, %v476
      %v483 = vpack.c.bf16 %v467, %v467
      %484 = vrot.lane.b32.xlu0 %v310, 80
      %v485 = vpop.permute.xlu0 %484
      %v487 = vsel %vm250, %v483, 0
      %v490 = vsel %vm316, %v485, 0
      %492 = vmatpush.bf16.msra.mxu0 0
      %493 = vmatpush.bf16.msra.mxu0 0
      %494 = vmatpush.bf16.msra.mxu0 0
      %495 = vmatpush.bf16.msra.mxu0 0
      %496 = vmatpush.bf16.msra.mxu0 0
      %497 = vmatpush.bf16.msra.mxu0 0
      %498 = vmatpush.bf16.msra.mxu0 0
      %499 = vmatpush.bf16.msra.mxu0 %v490
      %500 = vmatmul.bf16.gmra.mxu0 %v487
      %v501 = vpop.f32.mrf.mxu0
      %v502 = vadd.f32 0.0, %v501
      %v503 = vpop.f32.mrf.mxu0
      %504 = vdwg.mxu0
      %506 = vrot.lane.b32.xlu0 %v502, 16
      %v507 = vpop.permute.xlu0 %506
      %v509 = vadd.f32 %v482, %v507
      %vm510 = vcmask 195712
      %511 = vst.msk [vmem:[#allocation4] sm:$0xff] %vm510, %v509
      %512 = vst.msk [vmem:[%s451] sm:$0xff] %vm298, %v456
      %513 = vrot.lane.b32.xlu0 %v338, 104
      %v514 = vpop.permute.xlu0 %513
      %515 = vrot.lane.b32.xlu0 %v310, 104
      %v516 = vpop.permute.xlu0 %515
      %v518 = vsel %vm250, %v514, 0
      %v521 = vsel %vm250, %v516, 0
      %523 = vmatpush.bf16.xpose.msra.mxu0 0
      %524 = vmatpush.bf16.xpose.msra.mxu0 0
      %525 = vmatpush.bf16.xpose.msra.mxu0 0
      %526 = vmatpush.bf16.xpose.msra.mxu0 0
      %527 = vmatpush.bf16.xpose.msra.mxu0 0
      %528 = vmatpush.bf16.xpose.msra.mxu0 0
      %529 = vmatpush.bf16.xpose.msra.mxu0 0
      %530 = vmatpush.bf16.xpose.msra.mxu0 %v521
      %531 = vmatmul.bf16.gmra.mxu0 %v518
      %v532 = vpop.f32.mrf.mxu0
      %v533 = vadd.f32 0.0, %v532
      %v534 = vpop.f32.mrf.mxu0
      %535 = vdwg.mxu0
      %v536 = vmul.f32 %v533, 0.35355338
      %v537 = vsel %vm274, -10000.0, %v536
      %s538 = scalar_lea.vmem [#allocation2], 24
      %v539 = vld [vmem:[%s538] sm:$0xff]
      %v540 = vsel %vm250, %v537, -inf
      %541 = vmax.xlane.f32.xlu0 %v540
      %v542 = vpop.xlane.xlu0 %541
      %v543 = vmax.f32 %v539, %v542
      %v544 = vsub.f32 %v539, %v543
      %v545 = vmul.f32 %v544, 1.442695
      %v546 = vpow.pop %v545
      %548 = vset.pattern.permute.xlu0 0
      %549 = vperm.xlu0 %548, %v543
      %v550 = vpop.permute.xlu0 %549
      %v552 = vsub.f32 %v537, %v550
      %v553 = vmul.f32 %v552, 1.442695
      %v554 = vpow.pop %v553
      %s555 = scalar_lea.vmem [#allocation3], 24
      %v556 = vld [vmem:[%s555] sm:$0xff]
      %v557 = vmul.f32 %v546, %v556
      %v558 = vsel %vm250, %v554, 0.0
      %559 = vadd.xlane.f32.xlu0 %v558
      %v560 = vpop.xlane.xlu0 %559
      %v561 = vadd.f32 %v557, %v560
      %562 = vst.msk [vmem:[%s555] sm:$0xff] %vm298, %v561
      %v563 = vld [vmem:[#allocation4] sm:$0xff]
      %565 = vset.pattern.permute.xlu0 0
      %566 = vperm.xlu0 %565, %v546
      %v567 = vpop.permute.xlu0 %566
      %v569 = vmul.f32 %v567, %v563
      %v570 = vpack.c.bf16 %v554, %v554
      %571 = vrot.lane.b32.xlu0 %v310, 72
      %v572 = vpop.permute.xlu0 %571
      %v574 = vsel %vm250, %v570, 0
      %v577 = vsel %vm316, %v572, 0
      %579 = vmatpush.bf16.msra.mxu0 0
      %580 = vmatpush.bf16.msra.mxu0 0
      %581 = vmatpush.bf16.msra.mxu0 0
      %582 = vmatpush.bf16.msra.mxu0 0
      %583 = vmatpush.bf16.msra.mxu0 0
      %584 = vmatpush.bf16.msra.mxu0 0
      %585 = vmatpush.bf16.msra.mxu0 0
      %586 = vmatpush.bf16.msra.mxu0 %v577
      %587 = vmatmul.bf16.gmra.mxu0 %v574
      %v588 = vpop.f32.mrf.mxu0
      %v589 = vadd.f32 0.0, %v588
      %v590 = vpop.f32.mrf.mxu0
      %591 = vdwg.mxu0
      %593 = vrot.lane.b32.xlu0 %v589, 24
      %v594 = vpop.permute.xlu0 %593
      %v596 = vadd.f32 %v569, %v594
      %vm597 = vcmask 261312
      %598 = vst.msk [vmem:[#allocation4] sm:$0xff] %vm597, %v596
      %599 = vst.msk [vmem:[%s538] sm:$0xff] %vm298, %v543
      // Predicated region
      $region37: #{transformer_forward.38} parent=31 // pred_check
        %p600 = pneg %p232
      $region38: #{transformer_forward.38} parent=31 // pred_check_branch
        %602 = sbr.rel (%p600) target = $region40
      $region39: #{transformer_forward.38} parent=31 // pred_region
        %v603 = vld [vmem:[#allocation3] sm:$0xff]
        %v604 = vrcp.pop %v603
        %v605 = vld [vmem:[#allocation4] sm:$0xff]
        %607 = vset.pattern.permute.xlu0 0
        %608 = vperm.xlu0 %607, %v604
        %v609 = vpop.permute.xlu0 %608
        %v611 = vmul.f32 %v605, %v609
        %612 = vst.msk [vmem:[#allocation4] sm:$0xff] %vm250, %v611
        %v613 = vld [vmem:[%s381] sm:$0xff]
        %v614 = vrcp.pop %v613
        %v615 = vld [vmem:[#allocation4] sm:$0xff]
        %617 = vset.pattern.permute.xlu0 0
        %618 = vperm.xlu0 %617, %v614
        %v619 = vpop.permute.xlu0 %618
        %v621 = vmul.f32 %v615, %v619
        %622 = vst.msk [vmem:[#allocation4] sm:$0xff] %vm423, %v621
        %v623 = vld [vmem:[%s468] sm:$0xff]
        %v624 = vrcp.pop %v623
        %v625 = vld [vmem:[#allocation4] sm:$0xff]
        %627 = vset.pattern.permute.xlu0 0
        %628 = vperm.xlu0 %627, %v624
        %v629 = vpop.permute.xlu0 %628
        %v631 = vmul.f32 %v625, %v629
        %632 = vst.msk [vmem:[#allocation4] sm:$0xff] %vm510, %v631
        %v633 = vld [vmem:[%s555] sm:$0xff]
        %v634 = vrcp.pop %v633
        %v635 = vld [vmem:[#allocation4] sm:$0xff]
        %637 = vset.pattern.permute.xlu0 0
        %638 = vperm.xlu0 %637, %v634
        %v639 = vpop.permute.xlu0 %638
        %v641 = vmul.f32 %v635, %v639
        %642 = vst.msk [vmem:[#allocation4] sm:$0xff] %vm597, %v641
        %v643 = vld [vmem:[#allocation4] sm:$0xff]
        %v644 = vpack.c.bf16 %v643, %v643
        %vm645 = vcmask 257024
        %646 = vst.msk [vmem:[%s230] sm:$0xf] %vm645, %v644
      $region40: #{transformer_forward.38} parent=31 // pred_fallthru
        _
      %p647 = scmp.lt.s32.totalorder %s18, 1
      %s648 = scalar_select %p647, %s18, 1
      %s649 = smul.addr %s648, 4
      %s650 = scalar_lea.vmem %s3, %s649
      // Predicated region
      $region41: #{transformer_forward.38} parent=31 // pred_check
        %p651 = pneg %p126
      $region42: #{transformer_forward.38} parent=31 // pred_check_branch
        %653 = sbr.rel (%p651) target = $region44
      $region43: #{transformer_forward.38} parent=31 // pred_region
        _
      $region44: #{transformer_forward.38} parent=31 // pred_fallthru
        _
    $region32: #{transformer_forward.38} parent=5 // pred_fallthru
      _
    %p654 = scmp.le.s32.totalorder 2, %s9
    // Predicated region
    $region45: #{transformer_forward.38} parent=5 // pred_check
      %p655 = pneg %p654
    $region46: #{transformer_forward.38} parent=5 // pred_check_branch
      %657 = sbr.rel (%p655) target = $region48
    $region47: #{transformer_forward.38} parent=5 // pred_region
      %s658 = ssub.s32 %s9, 2
      // Predicated region
      $region49: #{transformer_forward.38} parent=47 // pred_check
        %p659 = pneg %p132
      $region50: #{transformer_forward.38} parent=47 // pred_check_branch
        %661 = sbr.rel (%p659) target = $region52
      $region51: #{transformer_forward.38} parent=47 // pred_region
        %p662 = scmp.lt.s32.totalorder %s20, 1
        %s663 = scalar_select %p662, %s20, 1
        %s664 = smul.addr %s663, 4
        %s665 = scalar_lea.vmem %s3, %s664
      $region52: #{transformer_forward.38} parent=47 // pred_fallthru
        _
    $region48: #{transformer_forward.38} parent=5 // pred_fallthru
      _
  $region6: #{transformer_forward.38} parent=0 // loop_footer
    %s13 = sadd.s32 1, %s9
  $region7: #{transformer_forward.38} parent=0 // loop_footer_branch
    %8 = sbr.rel target = $region3
  $region8: #{transformer_forward.38} parent=0 // loop_exit
    _

// kernel: transformer_forward.47
$region0: #{transformer_forward.47}
  #allocation0 [shape = 'u32[]', space=smem, size = 0x4, offset = 0x4, fixed_abs, tag = 'smem constant byte address 0x4 - core index']
  #allocation1 [shape = 'u32[72,128]{1,0:T(1,128)}', space=vmem, size = 0x9000, scoped, tag = 'internal scratch']
  #allocation2 [shape = 'f32[16,32]{1,0:T(8,128)}', space=vmem, size = 0x2000, scoped, tag = 'scratch operand']
  %s0 = inlined_call_operand.vmem [shape: bf16[16,32], index: 0, kind: input, shape index: {}]
  %s1 = inlined_call_operand.vmem [shape: bf16[32,32], index: 1, kind: input, shape index: {}]
  %s2 = inlined_call_operand.vmem [shape: f32[1,32], index: 2, kind: input, shape index: {}]
  %s3 = inlined_call_operand.vmem [shape: bf16[16,32], index: 3, kind: input, shape index: {}]
  %s4 = inlined_call_operand.vmem [shape: f32[1,32], index: 4, kind: input, shape index: {}]
  %s5 = inlined_call_operand.hbm [shape: f32[1,32], index: 5, kind: input, shape index: {}]
  %s6 = inlined_call_operand.vmem [shape: bf16[16,32], index: 6, kind: output, shape index: {}]
  %s7 = sld [smem:[#allocation0]]
  $region46: #{transformer_forward.47} parent=0
    _
  %s9 = ssub.s32 1, %s7
  %s10 = scalar_select 0, %s9, %s7
  $region1: #{transformer_forward.47} parent=0
    #allocation3 [shape = 'u8[512]{0}', space=vmem, size = 0x400, scoped, tag = 'input window, operand 5, single buffered']
    #allocation4 [shape = 's32[1]{0}', space=sflag, size = 0x4, scoped, tag = 'scoped memory for transformer_forward.47']
    %11 = vsyncpa [#allocation4], 0
    // Predicated region
    $region2: #{transformer_forward.47} parent=1 // pred_check
      _
    $region3: #{transformer_forward.47} parent=1 // pred_check_branch
      %13 = sbr.rel (0) target = $region5
    $region4: #{transformer_forward.47} parent=1 // pred_region
      _
    $region5: #{transformer_forward.47} parent=1 // pred_fallthru
      _
    // Predicated region
    $region6: #{transformer_forward.47} parent=1 // pred_check
      _
    $region7: #{transformer_forward.47} parent=1 // pred_check_branch
      %15 = sbr.rel (0) target = $region9
    $region8: #{transformer_forward.47} parent=1 // pred_region
      _
    $region9: #{transformer_forward.47} parent=1 // pred_fallthru
      _
    // Predicated region
    $region10: #{transformer_forward.47} parent=1 // pred_check
      _
    $region11: #{transformer_forward.47} parent=1 // pred_check_branch
      %17 = sbr.rel (0) target = $region13
    $region12: #{transformer_forward.47} parent=1 // pred_region
      _
    $region13: #{transformer_forward.47} parent=1 // pred_fallthru
      _
    // Predicated region
    $region14: #{transformer_forward.47} parent=1 // pred_check
      _
    $region15: #{transformer_forward.47} parent=1 // pred_check_branch
      %19 = sbr.rel (0) target = $region17
    $region16: #{transformer_forward.47} parent=1 // pred_region
      _
    $region17: #{transformer_forward.47} parent=1 // pred_fallthru
      _
    // Predicated region
    $region18: #{transformer_forward.47} parent=1 // pred_check
      _
    $region19: #{transformer_forward.47} parent=1 // pred_check_branch
      %21 = sbr.rel (0) target = $region21
    $region20: #{transformer_forward.47} parent=1 // pred_region
      _
    $region21: #{transformer_forward.47} parent=1 // pred_fallthru
      _
    // Predicated region
    $region22: #{transformer_forward.47} parent=1 // pred_check
      _
    $region23: #{transformer_forward.47} parent=1 // pred_check_branch
      %23 = sbr.rel (0) target = $region25
    $region24: #{transformer_forward.47} parent=1 // pred_region
      %25 = vsyncadd [#allocation4], 0
      %s27 = sshll.u32 %s5, 4
      %s28 = int_to_ptr.hbm [resolvable:$true] %s27
      %s29 = sshll.u32 [#allocation3], 4
      %s30 = int_to_ptr.vmem [resolvable:$true] %s29
      %32 = dma.hbm_to_vmem [thread:$0]  %s28, 16, %s30, [#allocation4]
    $region25: #{transformer_forward.47} parent=1 // pred_fallthru
      _
    // Predicated region
    $region26: #{transformer_forward.47} parent=1 // pred_check
      _
    $region27: #{transformer_forward.47} parent=1 // pred_check_branch
      %34 = sbr.rel (0) target = $region29
    $region28: #{transformer_forward.47} parent=1 // pred_region
      %36 = dma.done [#allocation4], 16
    $region29: #{transformer_forward.47} parent=1 // pred_fallthru
      _
    %p38 = scmp.eq.s32.totalorder 0, 0
    // Predicated region
    $region30: #{transformer_forward.47} parent=1 // pred_check
      %p39 = pneg %p38
    $region31: #{transformer_forward.47} parent=1 // pred_check_branch
      %41 = sbr.rel (%p39) target = $region33
    $region32: #{transformer_forward.47} parent=1 // pred_region
      %vm42 = vcmask 261120
      %43 = vst.msk [vmem:[#allocation2] sm:$0xff] %vm42, 0.0
      %44 = vst.msk [vmem:[#allocation2 + $0x8] sm:$0xff] %vm42, 0.0
    $region33: #{transformer_forward.47} parent=1 // pred_fallthru
      _
    %v45 = vld [vmem:[#allocation2] sm:$0xff]
    %v46 = vld [vmem:[#allocation2 + $0x8] sm:$0xff]
    %v47 = vld [vmem:[%s0] sm:$0xf]
    %v48 = vld [vmem:[%s0 + $0x4] sm:$0xf]
    %v49 = vld [vmem:[%s1] sm:$0xf]
    %v50 = vld [vmem:[%s1 + $0x4] sm:$0xf]
    %v51 = vld [vmem:[%s1 + $0x8] sm:$0xf]
    %v52 = vld [vmem:[%s1 + $0xc] sm:$0xf]
    %v55 = vunpack.c.l.b16 %v47
    %v56 = vunpack.c.l.b16 %v48
    %v57 = vpack.c.b16 %v56, %v55
    %v62 = vunpack.c.l.b16 %v49
    %v63 = vunpack.c.l.b16 %v50
    %v64 = vunpack.c.l.b16 %v51
    %v65 = vunpack.c.l.b16 %v52
    %v66 = vpack.c.b16 %v63, %v62
    %v67 = vpack.c.b16 %v65, %v64
    %vm70 = vcmask 261120
    %v72 = vsel %vm70, %v57, 0
    %74 = vmatpush.bf16.msra.mxu0 0
    %75 = vmatpush.bf16.msra.mxu0 0
    %76 = vmatpush.bf16.msra.mxu0 0
    %77 = vmatpush.bf16.msra.mxu0 0
    %78 = vmatpush.bf16.msra.mxu0 0
    %79 = vmatpush.bf16.msra.mxu0 0
    %80 = vmatpush.bf16.msra.mxu0 %v67
    %81 = vmatpush.bf16.msra.mxu0 %v66
    %82 = vmatmul.bf16.gmra.mxu0 %v72
    %v83 = vpop.f32.mrf.mxu0
    %v84 = vadd.f32 0.0, %v83
    %v85 = vpop.f32.mrf.mxu0
    %v86 = vadd.f32 0.0, %v85
    %87 = vdwg.mxu0
    %v88 = vadd.f32 %v45, %v84
    %v89 = vadd.f32 %v46, %v86
    %90 = vst.msk [vmem:[#allocation2] sm:$0xff] %vm70, %v88
    %91 = vst.msk [vmem:[#allocation2 + $0x8] sm:$0xff] %vm70, %v89
    // Predicated region
    $region34: #{transformer_forward.47} parent=1 // pred_check
      %p92 = pneg %p38
    $region35: #{transformer_forward.47} parent=1 // pred_check_branch
      %94 = sbr.rel (%p92) target = $region37
    $region36: #{transformer_forward.47} parent=1 // pred_region
      %v95 = vld [vmem:[#allocation2] sm:$0xff]
      %v96 = vld [vmem:[#allocation2 + $0x8] sm:$0xff]
      %v97 = vld [vmem:[%s2] sm:$0x1]
      %v99 = vperm.slane %v97, 0
      %v101 = vadd.f32 %v95, %v99
      %v102 = vadd.f32 %v96, %v99
      %v103 = vld [vmem:[%s3] sm:$0xf]
      %v104 = vld [vmem:[%s3 + $0x4] sm:$0xf]
      %v105 = vunpack.c.l.bf16 %v103
      %v106 = vunpack.c.l.bf16 %v104
      %v107 = vadd.f32 %v101, %v105
      %v108 = vadd.f32 %v102, %v106
      %v109 = vsel %vm70, %v107, 0.0
      %110 = vadd.xlane.f32.xlu0 %v109
      %v111 = vpop.xlane.xlu0 %110
      %v112 = vsel %vm70, %v108, 0.0
      %113 = vadd.xlane.f32.xlu0 %v112
      %v114 = vpop.xlane.xlu0 %113
      %v115 = vrcp.pop 32.0
      %v116 = vmul.f32 32.0, %v115
      %v117 = vsub.f32 1.0, %v116
      %v118 = vmul.f32 %v115, %v117
      %v119 = vadd.f32 %v115, %v118
      %vm120 = vweird.f32 %v115
      %v121 = vsel %vm120, %v115, %v119
      %v122 = vmul.f32 %v111, %v121
      %v123 = vmul.f32 %v114, %v121
      %v124 = vsub.f32 %v107, %v122
      %v125 = vsub.f32 %v108, %v123
      %v126 = vmul.f32 %v124, %v124
      %v127 = vmul.f32 %v125, %v125
      %v128 = vsel %vm70, %v126, 0.0
      %129 = vadd.xlane.f32.xlu0 %v128
      %v130 = vpop.xlane.xlu0 %129
      %v131 = vsel %vm70, %v127, 0.0
      %132 = vadd.xlane.f32.xlu0 %v131
      %v133 = vpop.xlane.xlu0 %132
      %v134 = vmul.f32 %v130, %v121
      %v135 = vmul.f32 %v133, %v121
      %v136 = vadd.f32 %v134, 1e-12
      %v137 = vadd.f32 %v135, 1e-12
      %v138 = vrsqrt.pop %v136
      %v139 = vmul.f32 %v138, %v136
      %v140 = vmul.f32 %v139, %v138
      %v141 = vmul.f32 0.5, %v140
      %v142 = vsub.f32 1.5, %v141
      %v143 = vmul.f32 %v138, %v142
      %vm144 = vweird.f32 %v136
      %vm145 = vweird.f32 %v138
      %vm146 = vmor %vm144, %vm145
      %v147 = vsel %vm146, %v138, %v143
      %v148 = vrsqrt.pop %v137
      %v149 = vmul.f32 %v148, %v137
      %v150 = vmul.f32 %v149, %v148
      %v151 = vmul.f32 0.5, %v150
      %v152 = vsub.f32 1.5, %v151
      %v153 = vmul.f32 %v148, %v152
      %vm154 = vweird.f32 %v137
      %vm155 = vweird.f32 %v148
      %vm156 = vmor %vm154, %vm155
      %v157 = vsel %vm156, %v148, %v153
      %v158 = vmul.f32 %v124, %v147
      %v159 = vmul.f32 %v125, %v157
      %v160 = vld [vmem:[%s4] sm:$0x1]
      %v162 = vperm.slane %v160, 0
      %v164 = vmul.f32 %v162, %v158
      %v165 = vmul.f32 %v162, %v159
      %v166 = vld [vmem:[#allocation3] sm:$0x1]
      %v168 = vperm.slane %v166, 0
      %v170 = vadd.f32 %v164, %v168
      %v171 = vadd.f32 %v165, %v168
      %v172 = vpack.c.bf16 %v170, %v170
      %v173 = vpack.c.bf16 %v171, %v171
      %vm174 = vcmask 257024
      %175 = vst.msk [vmem:[%s6] sm:$0xf] %vm174, %v172
      %176 = vst.msk [vmem:[%s6 + $0x4] sm:$0xf] %vm174, %v173
    $region37: #{transformer_forward.47} parent=1 // pred_fallthru
      _
    // Predicated region
    $region38: #{transformer_forward.47} parent=1 // pred_check
      _
    $region39: #{transformer_forward.47} parent=1 // pred_check_branch
      %178 = sbr.rel (0) target = $region41
    $region40: #{transformer_forward.47} parent=1 // pred_region
      _
    $region41: #{transformer_forward.47} parent=1 // pred_fallthru
      _
    // Predicated region
    $region42: #{transformer_forward.47} parent=1 // pred_check
      _
    $region43: #{transformer_forward.47} parent=1 // pred_check_branch
      %180 = sbr.rel (0) target = $region45
    $region44: #{transformer_forward.47} parent=1 // pred_region
      _
    $region45: #{transformer_forward.47} parent=1 // pred_fallthru
      _
    %181 = vsyncpa [#allocation4], 1

// kernel: transformer_forward.49
$region0: #{transformer_forward.49}
  #allocation0 [shape = 'u32[]', space=smem, size = 0x4, offset = 0x4, fixed_abs, tag = 'smem constant byte address 0x4 - core index']
  #allocation1 [shape = 'u32[72,128]{1,0:T(1,128)}', space=vmem, size = 0x9000, scoped, tag = 'internal scratch']
  #allocation2 [shape = 'f32[16,60]{1,0:T(8,128)}', space=vmem, size = 0x2000, scoped, tag = 'scratch operand']
  %s0 = inlined_call_operand.vmem [shape: bf16[16,32], index: 0, kind: input, shape index: {}]
  %s1 = inlined_call_operand.vmem [shape: bf16[32,60], index: 1, kind: input, shape index: {}]
  %s2 = inlined_call_operand.vmem [shape: f32[1,60], index: 2, kind: input, shape index: {}]
  %s3 = inlined_call_operand.hbm [shape: f32[16,60], index: 3, kind: output, shape index: {}]
  %s4 = sld [smem:[#allocation0]]
  $region30: #{transformer_forward.49} parent=0
    _
  %s6 = ssub.s32 1, %s4
  %s7 = scalar_select 0, %s6, %s4
  $region1: #{transformer_forward.49} parent=0
    #allocation3 [shape = 'u8[8192]{0}', space=vmem, size = 0x2000, scoped, tag = 'output window, operand 0, single buffered']
    #allocation4 [shape = 's32[1]{0}', space=sflag, size = 0x4, scoped, tag = 'scoped memory for transformer_forward.49']
    %8 = vsyncpa [#allocation4], 0
    // Predicated region
    $region2: #{transformer_forward.49} parent=1 // pred_check
      _
    $region3: #{transformer_forward.49} parent=1 // pred_check_branch
      %10 = sbr.rel (0) target = $region5
    $region4: #{transformer_forward.49} parent=1 // pred_region
      _
    $region5: #{transformer_forward.49} parent=1 // pred_fallthru
      _
    // Predicated region
    $region6: #{transformer_forward.49} parent=1 // pred_check
      _
    $region7: #{transformer_forward.49} parent=1 // pred_check_branch
      %12 = sbr.rel (0) target = $region9
    $region8: #{transformer_forward.49} parent=1 // pred_region
      _
    $region9: #{transformer_forward.49} parent=1 // pred_fallthru
      _
    // Predicated region
    $region10: #{transformer_forward.49} parent=1 // pred_check
      _
    $region11: #{transformer_forward.49} parent=1 // pred_check_branch
      %14 = sbr.rel (0) target = $region13
    $region12: #{transformer_forward.49} parent=1 // pred_region
      _
    $region13: #{transformer_forward.49} parent=1 // pred_fallthru
      _
    %p16 = scmp.eq.s32.totalorder 0, 0
    // Predicated region
    $region14: #{transformer_forward.49} parent=1 // pred_check
      %p17 = pneg %p16
    $region15: #{transformer_forward.49} parent=1 // pred_check_branch
      %19 = sbr.rel (%p17) target = $region17
    $region16: #{transformer_forward.49} parent=1 // pred_region
      %vm20 = vcmask 490496
      %21 = vst.msk [vmem:[#allocation2] sm:$0xff] %vm20, 0.0
      %22 = vst.msk [vmem:[#allocation2 + $0x8] sm:$0xff] %vm20, 0.0
    $region17: #{transformer_forward.49} parent=1 // pred_fallthru
      _
    %v23 = vld [vmem:[#allocation2] sm:$0xff]
    %v24 = vld [vmem:[#allocation2 + $0x8] sm:$0xff]
    %v25 = vld [vmem:[%s0] sm:$0xf]
    %v26 = vld [vmem:[%s0 + $0x4] sm:$0xf]
    %v27 = vld [vmem:[%s1] sm:$0xf]
    %v28 = vld [vmem:[%s1 + $0x4] sm:$0xf]
    %v29 = vld [vmem:[%s1 + $0x8] sm:$0xf]
    %v30 = vld [vmem:[%s1 + $0xc] sm:$0xf]
    %v33 = vunpack.c.l.b16 %v25
    %v34 = vunpack.c.l.b16 %v26
    %v35 = vpack.c.b16 %v34, %v33
    %v40 = vunpack.c.l.b16 %v27
    %v41 = vunpack.c.l.b16 %v28
    %v42 = vunpack.c.l.b16 %v29
    %v43 = vunpack.c.l.b16 %v30
    %v44 = vpack.c.b16 %v41, %v40
    %v45 = vpack.c.b16 %v43, %v42
    %vm48 = vcmask 261120
    %v50 = vsel %vm48, %v35, 0
    %52 = vmatpush.bf16.msra.mxu0 0
    %53 = vmatpush.bf16.msra.mxu0 0
    %54 = vmatpush.bf16.msra.mxu0 0
    %55 = vmatpush.bf16.msra.mxu0 0
    %56 = vmatpush.bf16.msra.mxu0 0
    %57 = vmatpush.bf16.msra.mxu0 0
    %58 = vmatpush.bf16.msra.mxu0 %v45
    %59 = vmatpush.bf16.msra.mxu0 %v44
    %60 = vmatmul.bf16.gmra.mxu0 %v50
    %v61 = vpop.f32.mrf.mxu0
    %v62 = vadd.f32 0.0, %v61
    %v63 = vpop.f32.mrf.mxu0
    %v64 = vadd.f32 0.0, %v63
    %65 = vdwg.mxu0
    %v66 = vadd.f32 %v23, %v62
    %v67 = vadd.f32 %v24, %v64
    %vm68 = vcmask 490496
    %69 = vst.msk [vmem:[#allocation2] sm:$0xff] %vm68, %v66
    %70 = vst.msk [vmem:[#allocation2 + $0x8] sm:$0xff] %vm68, %v67
    // Predicated region
    $region18: #{transformer_forward.49} parent=1 // pred_check
      %p71 = pneg %p16
    $region19: #{transformer_forward.49} parent=1 // pred_check_branch
      %73 = sbr.rel (%p71) target = $region21
    $region20: #{transformer_forward.49} parent=1 // pred_region
      %v74 = vld [vmem:[#allocation2] sm:$0xff]
      %v75 = vld [vmem:[#allocation2 + $0x8] sm:$0xff]
      %v76 = vld [vmem:[%s2] sm:$0x1]
      %v78 = vperm.slane %v76, 0
      %v80 = vadd.f32 %v74, %v78
      %v81 = vadd.f32 %v75, %v78
      %82 = vst.msk [vmem:[#allocation3] sm:$0xff] %vm68, %v80
      %83 = vst.msk [vmem:[#allocation3 + $0x8] sm:$0xff] %vm68, %v81
    $region21: #{transformer_forward.49} parent=1 // pred_fallthru
      _
    // Predicated region
    $region22: #{transformer_forward.49} parent=1 // pred_check
      _
    $region23: #{transformer_forward.49} parent=1 // pred_check_branch
      %85 = sbr.rel (0) target = $region25
    $region24: #{transformer_forward.49} parent=1 // pred_region
      %87 = vsyncadd [#allocation4], 0
      %s88 = sshll.u32 [#allocation3], 4
      %s89 = int_to_ptr.vmem [resolvable:$true] %s88
      %s90 = sshll.u32 %s3, 4
      %s91 = int_to_ptr.hbm [resolvable:$true] %s90
      %96 = dma.vmem_to_hbm [thread:$0]  %s89, 256, %s91, [#allocation4], 128, 128, 8
    $region25: #{transformer_forward.49} parent=1 // pred_fallthru
      _
    // Predicated region
    $region26: #{transformer_forward.49} parent=1 // pred_check
      _
    $region27: #{transformer_forward.49} parent=1 // pred_check_branch
      %98 = sbr.rel (0) target = $region29
    $region28: #{transformer_forward.49} parent=1 // pred_region
      %100 = dma.done [#allocation4], 256
    $region29: #{transformer_forward.49} parent=1 // pred_fallthru
      _
    %101 = vsyncpa [#allocation4], 1

</llo_original>
